<compile_context>
chip_gen: v7x
topology: tpu7x:2x2x1
jax: 0.10.0
libtpu: 0.0.40
codegen_flags: <defaults>
</compile_context>

<pallas_src>
import functools

import jax
import jax.numpy as jnp
from jax import lax
from jax.experimental import pallas as pl
from jax.experimental.pallas import tpu as pltpu

EPS = 1e-5
F32 = jnp.float32
BF16 = jnp.bfloat16

WEIGHT_NAMES = [
    "sa_wqk", "sa_bqk", "sa_wv", "sa_bv", "sa_wo", "sa_bo",
    "ca_wq", "ca_bq", "ca_wk", "ca_bk", "ca_wv", "ca_bv", "ca_wo", "ca_bo",
    "w1", "b1", "w2", "b2", "ln_g", "ln_b",
]


# ------------------------------ kernel helpers -------------------------------
def _layernorm(x, g, b):
    # x: (L, D) f32, g/b: (1, D) f32
    mu = jnp.mean(x, axis=-1, keepdims=True)
    var = jnp.mean((x - mu) ** 2, axis=-1, keepdims=True)
    return (x - mu) * lax.rsqrt(var + EPS) * g + b


def _mha_core(q, k, v, w_o, b_o, bias, nhead):
    """Batched-head attention core.

    q: (Lq, D) f32, already scaled by 1/sqrt(hd) (folded into the projection).
    k, v: (Lk, D) f32.  w_o: (D, D) bf16, b_o: (1, D) f32.
    bias: None or (1, Lk) additive f32 key-padding bias.
    """
    Lq, D = q.shape
    Lk = k.shape[0]
    hd = D // nhead

    # (L, D) -> (L, H, hd) -> (H, L, hd); relayout in f32, cast to bf16 for MXU.
    qh = pltpu.einshape("mhd->hmd", q.reshape(Lq, nhead, hd)).astype(BF16)
    kh = pltpu.einshape("mhd->hmd", k.reshape(Lk, nhead, hd)).astype(BF16)
    vh = pltpu.einshape("mhd->hmd", v.reshape(Lk, nhead, hd)).astype(BF16)

    # scores: (H, Lq, Lk), f32 accumulation
    s = lax.dot_general(qh, kh, (((2,), (2,)), ((0,), (0,))),
                        preferred_element_type=jnp.float32)
    if bias is not None:
        s = s + bias                     # (1, Lk) broadcast over (H, Lq, Lk)
    s = s - jnp.max(s, axis=-1, keepdims=True)
    p = jnp.exp(s)
    p = p * pl.reciprocal(jnp.sum(p, axis=-1, keepdims=True), approx=True)

    # context: (H, Lq, hd)
    ctx = lax.dot_general(p.astype(BF16), vh, (((2,), (1,)), ((0,), (0,))),
                          preferred_element_type=jnp.float32)
    ctx = pltpu.einshape("hmd->mhd", ctx).reshape(Lq, D)
    return jnp.dot(ctx.astype(BF16), w_o, preferred_element_type=jnp.float32) + b_o


# ------------------------------ fused decoder kernel -------------------------
def decoder_kernel(tgt_ref, qpos_ref, memk_ref, memv_ref, kpm_ref,
                   sa_wqk_ref, sa_bqk_ref, sa_wv_ref, sa_bv_ref, sa_wo_ref, sa_bo_ref,
                   ca_wq_ref, ca_bq_ref, ca_wk_ref, ca_bk_ref, ca_wv_ref, ca_bv_ref,
                   ca_wo_ref, ca_bo_ref,
                   w1_ref, b1_ref, w2_ref, b2_ref,
                   ln_g_ref, ln_b_ref, fn_g_ref, fn_b_ref,
                   out_ref, tgt_state,
                   *, nhead, apply_final_norm):
    layer = pl.program_id(1)

    # First layer of each batch element: seed the carried activation state.
    @pl.when(layer == 0)
    def _():
        tgt_state[...] = tgt_ref[0]

    D = tgt_state.shape[-1]
    tgt = tgt_state[...]              # (Q, D) f32, carried across the layer axis
    qpos = qpos_ref[0]                # (Q, D) f32
    ln_g = ln_g_ref[0]                # (3, D) f32
    ln_b = ln_b_ref[0]

    # ---- self attention: q = k = tgt + query_pos, v = tgt (fused Q+K matmul) ----
    qk_in = (tgt + qpos).astype(BF16)
    qk = jnp.dot(qk_in, sa_wqk_ref[0],
                 preferred_element_type=jnp.float32) + sa_bqk_ref[0]       # (Q, 2D)
    v_sa = jnp.dot(tgt.astype(BF16), sa_wv_ref[0],
                   preferred_element_type=jnp.float32) + sa_bv_ref[0]      # (Q, D)
    sa = _mha_core(qk[:, :D], qk[:, D:], v_sa,
                   sa_wo_ref[0], sa_bo_ref[0], None, nhead)
    tgt = _layernorm(tgt + sa, ln_g[0:1], ln_b[0:1])

    # ---- cross attention: q = tgt + query_pos, k = memory + pos, v = memory ----
    q_ca = jnp.dot((tgt + qpos).astype(BF16), ca_wq_ref[0],
                   preferred_element_type=jnp.float32) + ca_bq_ref[0]
    k_ca = jnp.dot(memk_ref[0], ca_wk_ref[0],
                   preferred_element_type=jnp.float32) + ca_bk_ref[0]
    v_ca = jnp.dot(memv_ref[0], ca_wv_ref[0],
                   preferred_element_type=jnp.float32) + ca_bv_ref[0]
    ca = _mha_core(q_ca, k_ca, v_ca, ca_wo_ref[0], ca_bo_ref[0],
                   kpm_ref[0], nhead)
    tgt = _layernorm(tgt + ca, ln_g[1:2], ln_b[1:2])

    # ---- feed forward: linear1 -> ReLU -> linear2 (dropout = identity) ----
    h = jnp.maximum(jnp.dot(tgt.astype(BF16), w1_ref[0],
                            preferred_element_type=jnp.float32) + b1_ref[0], 0.0)
    ff = jnp.dot(h.astype(BF16), w2_ref[0],
                 preferred_element_type=jnp.float32) + b2_ref[0]
    tgt = _layernorm(tgt + ff, ln_g[2:3], ln_b[2:3])

    tgt_state[...] = tgt
    if apply_final_norm:
        out_ref[0, 0] = _layernorm(tgt, fn_g_ref[...], fn_b_ref[...])
    else:
        out_ref[0, 0] = tgt


# ------------------------------ parameter packing ----------------------------
def pack_params(layer_params, nhead):
    """Stack per-layer params along a leading layer axis, fuse self-attn Q+K,
    fold the 1/sqrt(head_dim) scale into the Q projections, cast weights to bf16."""
    d_model = layer_params[0]["sa_wq"].shape[0]
    hd = d_model // nhead
    scale = jnp.float32(1.0 / float(hd) ** 0.5)

    def stack(fn, dtype):
        return jnp.stack([fn(p) for p in layer_params]).astype(dtype)

    return {
        "sa_wqk": stack(lambda p: jnp.concatenate(
            [p["sa_wq"] * scale, p["sa_wk"]], axis=-1), BF16),
        "sa_bqk": stack(lambda p: jnp.concatenate(
            [p["sa_bq"] * scale, p["sa_bk"]], axis=-1), F32),
        "sa_wv": stack(lambda p: p["sa_wv"], BF16),
        "sa_bv": stack(lambda p: p["sa_bv"], F32),
        "sa_wo": stack(lambda p: p["sa_wo"], BF16),
        "sa_bo": stack(lambda p: p["sa_bo"], F32),
        "ca_wq": stack(lambda p: p["ca_wq"] * scale, BF16),
        "ca_bq": stack(lambda p: p["ca_bq"] * scale, F32),
        "ca_wk": stack(lambda p: p["ca_wk"], BF16),
        "ca_bk": stack(lambda p: p["ca_bk"], F32),
        "ca_wv": stack(lambda p: p["ca_wv"], BF16),
        "ca_bv": stack(lambda p: p["ca_bv"], F32),
        "ca_wo": stack(lambda p: p["ca_wo"], BF16),
        "ca_bo": stack(lambda p: p["ca_bo"], F32),
        "w1": stack(lambda p: p["w1"], BF16),
        "b1": stack(lambda p: p["b1"], F32),
        "w2": stack(lambda p: p["w2"], BF16),
        "b2": stack(lambda p: p["b2"], F32),
        "ln_g": stack(lambda p: p["ln_g"], F32),
        "ln_b": stack(lambda p: p["ln_b"], F32),
    }


# ------------------------- TransformerDecoder forward ------------------------
def transformer_decoder_forward(tgt, memory, layer_params, norm_params,
                                memory_key_padding_mask, pos, query_pos,
                                nhead, return_intermediate=True):
    B, Q, D = tgt.shape
    S = memory.shape[1]
    L = len(layer_params)

    # Pad the memory (key/value) length to a lane-dense multiple of 128; padded
    # positions are killed by the additive key-padding bias.
    S_pad = ((S + 127) // 128) * 128
    pad = S_pad - S
    memory_p = jnp.pad(memory.astype(F32), ((0, 0), (0, pad), (0, 0)))
    pos_p = jnp.pad(pos.astype(F32), ((0, 0), (0, pad), (0, 0)))
    mask_p = jnp.pad(memory_key_padding_mask, ((0, 0), (0, pad)),
                     constant_values=True)

    kpm_bias = jnp.where(mask_p[:, None, :], F32(-1e9), F32(0.0))   # (B, 1, S_pad)
    mem_k = (memory_p + pos_p).astype(BF16)   # cross-attn key input, layer-invariant
    mem_v = memory_p.astype(BF16)             # cross-attn value input
    qpos = query_pos.astype(F32)

    packed = pack_params(layer_params, nhead)
    weights = [packed[k] for k in WEIGHT_NAMES]

    if norm_params is not None:
        fn_g = norm_params["g"].astype(F32).reshape(1, D)
        fn_b = norm_params["b"].astype(F32).reshape(1, D)
    else:
        fn_g = jnp.ones((1, D), F32)
        fn_b = jnp.zeros((1, D), F32)

    data_specs = [
        pl.BlockSpec((1, Q, D), lambda b, l: (b, 0, 0)),        # tgt (f32)
        pl.BlockSpec((1, Q, D), lambda b, l: (b, 0, 0)),        # query_pos (f32)
        pl.BlockSpec((1, S_pad, D), lambda b, l: (b, 0, 0)),    # memory + pos (bf16)
        pl.BlockSpec((1, S_pad, D), lambda b, l: (b, 0, 0)),    # memory (bf16)
        pl.BlockSpec((1, 1, S_pad), lambda b, l: (b, 0, 0)),    # key-padding bias
    ]

    def _wspec(arr):
        nd = arr.ndim
        return pl.BlockSpec((1,) + arr.shape[1:],
                            lambda b, l, nd=nd: (l,) + (0,) * (nd - 1))

    weight_specs = [_wspec(w) for w in weights]
    fn_specs = [pl.BlockSpec((1, D), lambda b, l: (0, 0)),
                pl.BlockSpec((1, D), lambda b, l: (0, 0))]

    kernel = functools.partial(decoder_kernel, nhead=nhead,
                               apply_final_norm=norm_params is not None)

    out = pl.pallas_call(
        kernel,
        out_shape=jax.ShapeDtypeStruct((L, B, Q, D), F32),
        grid=(B, L),
        in_specs=data_specs + weight_specs + fn_specs,
        out_specs=pl.BlockSpec((1, 1, Q, D), lambda b, l: (l, b, 0, 0)),
        scratch_shapes=[pltpu.VMEM((Q, D), F32)],   # tgt carried across layers
        compiler_params=pltpu.CompilerParams(
            dimension_semantics=("parallel", "arbitrary"),
            vmem_limit_bytes=32 * 1024 * 1024),
    )(tgt.astype(F32), qpos, mem_k, mem_v, kpm_bias, *weights, fn_g, fn_b)

    if return_intermediate:
        return out            # (num_layers, B, Q, D), each = norm(layer output)
    return out[-1:]           # (1, B, Q, D)


# --------------------------------- params init --------------------------------
def init_layer_params(key, d_model, dim_ff):
    ks = jax.random.split(key, 10)
    s = 0.02

    def w(k, shape):
        return (s * jax.random.normal(k, shape)).astype(F32)

    def zb(n):
        return jnp.zeros((1, n), F32)

    return {
        "sa_wq": w(ks[0], (d_model, d_model)), "sa_bq": zb(d_model),
        "sa_wk": w(ks[1], (d_model, d_model)), "sa_bk": zb(d_model),
        "sa_wv": w(ks[2], (d_model, d_model)), "sa_bv": zb(d_model),
        "sa_wo": w(ks[3], (d_model, d_model)), "sa_bo": zb(d_model),
        "ca_wq": w(ks[4], (d_model, d_model)), "ca_bq": zb(d_model),
        "ca_wk": w(ks[5], (d_model, d_model)), "ca_bk": zb(d_model),
        "ca_wv": w(ks[6], (d_model, d_model)), "ca_bv": zb(d_model),
        "ca_wo": w(ks[7], (d_model, d_model)), "ca_bo": zb(d_model),
        "w1": w(ks[8], (d_model, dim_ff)), "b1": zb(dim_ff),
        "w2": w(ks[9], (dim_ff, d_model)), "b2": zb(d_model),
        "ln_g": jnp.ones((3, d_model), F32),
        "ln_b": jnp.zeros((3, d_model), F32),
    }


if __name__ == "__main__":
    B, Q, S, D, H, FF, L = 2, 8, 16, 32, 4, 64, 2

    key = jax.random.PRNGKey(0)
    k_mem, k_pos, k_qpos, k_params = jax.random.split(key, 4)

    # DETR: tgt is zeros shaped like query_pos
    query_pos = jax.random.normal(k_qpos, (B, Q, D), F32)
    tgt = jnp.zeros((B, Q, D), F32)
    memory = jax.random.normal(k_mem, (B, S, D), F32)
    pos = jax.random.normal(k_pos, (B, S, D), F32)
    # padding mask: batch 0 keeps all 16 positions, batch 1 pads the last 3
    lens = jnp.array([16, 13], dtype=jnp.int32)
    memory_key_padding_mask = jnp.arange(S)[None, :] >= lens[:, None]  # True = pad

    layer_keys = jax.random.split(k_params, L)
    layer_params = [init_layer_params(layer_keys[i], D, FF) for i in range(L)]
    norm_params = {"g": jnp.ones((1, D), F32), "b": jnp.zeros((1, D), F32)}

    out = transformer_decoder_forward(
        tgt, memory, layer_params, norm_params,
        memory_key_padding_mask, pos, query_pos,
        nhead=H, return_intermediate=True)
    out = jax.block_until_ready(out)

    assert out.shape == (L, B, Q, D), out.shape
    assert bool(jnp.all(jnp.isfinite(out)))
    print("KERNEL_OK")
</pallas_src>

<mosaic_0001>
module attributes {stable_mosaic.version = 11 : i64} {
  func.func @decoder_kernel(%arg0: i32, %arg1: i32, %arg2: memref<1x8x32xf32, #tpu.memory_space<vmem>>, %arg3: memref<1x8x32xf32, #tpu.memory_space<vmem>>, %arg4: memref<1x128x32xbf16, #tpu.memory_space<vmem>>, %arg5: memref<1x128x32xbf16, #tpu.memory_space<vmem>>, %arg6: memref<1x1x128xf32, #tpu.memory_space<vmem>>, %arg7: memref<1x32x64xbf16, #tpu.memory_space<vmem>>, %arg8: memref<1x1x64xf32, #tpu.memory_space<vmem>>, %arg9: memref<1x32x32xbf16, #tpu.memory_space<vmem>>, %arg10: memref<1x1x32xf32, #tpu.memory_space<vmem>>, %arg11: memref<1x32x32xbf16, #tpu.memory_space<vmem>>, %arg12: memref<1x1x32xf32, #tpu.memory_space<vmem>>, %arg13: memref<1x32x32xbf16, #tpu.memory_space<vmem>>, %arg14: memref<1x1x32xf32, #tpu.memory_space<vmem>>, %arg15: memref<1x32x32xbf16, #tpu.memory_space<vmem>>, %arg16: memref<1x1x32xf32, #tpu.memory_space<vmem>>, %arg17: memref<1x32x32xbf16, #tpu.memory_space<vmem>>, %arg18: memref<1x1x32xf32, #tpu.memory_space<vmem>>, %arg19: memref<1x32x32xbf16, #tpu.memory_space<vmem>>, %arg20: memref<1x1x32xf32, #tpu.memory_space<vmem>>, %arg21: memref<1x32x64xbf16, #tpu.memory_space<vmem>>, %arg22: memref<1x1x64xf32, #tpu.memory_space<vmem>>, %arg23: memref<1x64x32xbf16, #tpu.memory_space<vmem>>, %arg24: memref<1x1x32xf32, #tpu.memory_space<vmem>>, %arg25: memref<1x3x32xf32, #tpu.memory_space<vmem>>, %arg26: memref<1x3x32xf32, #tpu.memory_space<vmem>>, %arg27: memref<1x32xf32, #tpu.memory_space<vmem>>, %arg28: memref<1x32xf32, #tpu.memory_space<vmem>>, %arg29: memref<1x1x8x32xf32, #tpu.memory_space<vmem>>, %arg30: memref<8x32xf32, #tpu.memory_space<vmem>>) attributes {dimension_semantics = [#tpu.dimension_semantics<parallel>, #tpu.dimension_semantics<arbitrary>], iteration_bounds = array<i64: 2, 2>, scalar_prefetch = 0 : i64, scratch_operands = 1 : i64, tpu.core_type = #tpu.core_type<tc>, window_params = [{transform_indices = @transform_0, window_bounds = array<i64: 1, 8, 32>}, {transform_indices = @transform_1, window_bounds = array<i64: 1, 8, 32>}, {transform_indices = @transform_2, window_bounds = array<i64: 1, 128, 32>}, {transform_indices = @transform_3, window_bounds = array<i64: 1, 128, 32>}, {transform_indices = @transform_4, window_bounds = array<i64: 1, 1, 128>}, {transform_indices = @transform_5, window_bounds = array<i64: 1, 32, 64>}, {transform_indices = @transform_6, window_bounds = array<i64: 1, 1, 64>}, {transform_indices = @transform_7, window_bounds = array<i64: 1, 32, 32>}, {transform_indices = @transform_8, window_bounds = array<i64: 1, 1, 32>}, {transform_indices = @transform_9, window_bounds = array<i64: 1, 32, 32>}, {transform_indices = @transform_10, window_bounds = array<i64: 1, 1, 32>}, {transform_indices = @transform_11, window_bounds = array<i64: 1, 32, 32>}, {transform_indices = @transform_12, window_bounds = array<i64: 1, 1, 32>}, {transform_indices = @transform_13, window_bounds = array<i64: 1, 32, 32>}, {transform_indices = @transform_14, window_bounds = array<i64: 1, 1, 32>}, {transform_indices = @transform_15, window_bounds = array<i64: 1, 32, 32>}, {transform_indices = @transform_16, window_bounds = array<i64: 1, 1, 32>}, {transform_indices = @transform_17, window_bounds = array<i64: 1, 32, 32>}, {transform_indices = @transform_18, window_bounds = array<i64: 1, 1, 32>}, {transform_indices = @transform_19, window_bounds = array<i64: 1, 32, 64>}, {transform_indices = @transform_20, window_bounds = array<i64: 1, 1, 64>}, {transform_indices = @transform_21, window_bounds = array<i64: 1, 64, 32>}, {transform_indices = @transform_22, window_bounds = array<i64: 1, 1, 32>}, {transform_indices = @transform_23, window_bounds = array<i64: 1, 3, 32>}, {transform_indices = @transform_24, window_bounds = array<i64: 1, 3, 32>}, {pipeline_mode = #tpu.pipeline_mode<synchronous>, transform_indices = @transform_25, window_bounds = array<i64: 1, 32>}, {pipeline_mode = #tpu.pipeline_mode<synchronous>, transform_indices = @transform_26, window_bounds = array<i64: 1, 32>}, {transform_indices = @transform_27, window_bounds = array<i64: 1, 1, 8, 32>}]} {
    %c0_i32 = arith.constant 0 : i32
    %0 = arith.cmpi eq, %arg1, %c0_i32 : i32
    %1 = arith.extui %0 : i1 to i32
    %c0_i32_0 = arith.constant 0 : i32
    %2 = arith.cmpi ne, %1, %c0_i32_0 : i32
    scf.if %2 {
      %c0_121 = arith.constant 0 : index
      %c0_122 = arith.constant 0 : index
      %c0_123 = arith.constant 0 : index
      %246 = vector.load %arg2[%c0_121, %c0_122, %c0_123] : memref<1x8x32xf32, #tpu.memory_space<vmem>>, vector<1x8x32xf32>
      %247 = vector.shape_cast %246 : vector<1x8x32xf32> to vector<8x32xf32>
      %c0_124 = arith.constant 0 : index
      %c0_125 = arith.constant 0 : index
      %248 = vector.load %arg30[%c0_124, %c0_125] : memref<8x32xf32, #tpu.memory_space<vmem>>, vector<8x32xf32>
      tpu.vector_store %arg30[%c0_124, %c0_125], %247 {strides = array<i32>} : memref<8x32xf32, #tpu.memory_space<vmem>>, vector<8x32xf32>,
    } else {
    }
    %c0 = arith.constant 0 : index
    %c0_1 = arith.constant 0 : index
    %3 = vector.load %arg30[%c0, %c0_1] : memref<8x32xf32, #tpu.memory_space<vmem>>, vector<8x32xf32>
    %c0_2 = arith.constant 0 : index
    %c0_3 = arith.constant 0 : index
    %c0_4 = arith.constant 0 : index
    %4 = vector.load %arg3[%c0_2, %c0_3, %c0_4] : memref<1x8x32xf32, #tpu.memory_space<vmem>>, vector<1x8x32xf32>
    %5 = vector.shape_cast %4 : vector<1x8x32xf32> to vector<8x32xf32>
    %c0_5 = arith.constant 0 : index
    %c0_6 = arith.constant 0 : index
    %c0_7 = arith.constant 0 : index
    %6 = vector.load %arg25[%c0_5, %c0_6, %c0_7] : memref<1x3x32xf32, #tpu.memory_space<vmem>>, vector<1x3x32xf32>
    %7 = vector.shape_cast %6 : vector<1x3x32xf32> to vector<3x32xf32>
    %c0_8 = arith.constant 0 : index
    %c0_9 = arith.constant 0 : index
    %c0_10 = arith.constant 0 : index
    %8 = vector.load %arg26[%c0_8, %c0_9, %c0_10] : memref<1x3x32xf32, #tpu.memory_space<vmem>>, vector<1x3x32xf32>
    %9 = vector.shape_cast %8 : vector<1x3x32xf32> to vector<3x32xf32>
    %10 = arith.addf %3, %5 : vector<8x32xf32>
    %11 = arith.truncf %10 : vector<8x32xf32> to vector<8x32xbf16>
    %c0_11 = arith.constant 0 : index
    %c0_12 = arith.constant 0 : index
    %c0_13 = arith.constant 0 : index
    %12 = vector.load %arg7[%c0_11, %c0_12, %c0_13] : memref<1x32x64xbf16, #tpu.memory_space<vmem>>, vector<1x32x64xbf16>
    %13 = vector.shape_cast %12 : vector<1x32x64xbf16> to vector<32x64xbf16>
    %cst = arith.constant dense<0.000000e+00> : vector<8x64xf32>
    %14 = tpu.matmul %11, %13, %cst {dimension_numbers = #tpu.dot_dimension_numbers<[1], [0], [0], [1], [0, 0, 1, 1], [], []>} : vector<8x32xbf16>, vector<32x64xbf16>, vector<8x64xf32> -> vector<8x64xf32>
    %c0_14 = arith.constant 0 : index
    %c0_15 = arith.constant 0 : index
    %c0_16 = arith.constant 0 : index
    %15 = vector.load %arg8[%c0_14, %c0_15, %c0_16] : memref<1x1x64xf32, #tpu.memory_space<vmem>>, vector<1x1x64xf32>
    %16 = vector.shape_cast %15 : vector<1x1x64xf32> to vector<1x64xf32>
    %17 = vector.broadcast %16 : vector<1x64xf32> to vector<8x64xf32>
    %18 = arith.addf %14, %17 : vector<8x64xf32>
    %19 = arith.truncf %3 : vector<8x32xf32> to vector<8x32xbf16>
    %c0_17 = arith.constant 0 : index
    %c0_18 = arith.constant 0 : index
    %c0_19 = arith.constant 0 : index
    %20 = vector.load %arg9[%c0_17, %c0_18, %c0_19] : memref<1x32x32xbf16, #tpu.memory_space<vmem>>, vector<1x32x32xbf16>
    %21 = vector.shape_cast %20 : vector<1x32x32xbf16> to vector<32x32xbf16>
    %cst_20 = arith.constant dense<0.000000e+00> : vector<8x32xf32>
    %22 = tpu.matmul %19, %21, %cst_20 {dimension_numbers = #tpu.dot_dimension_numbers<[1], [0], [0], [1], [0, 0, 1, 1], [], []>} : vector<8x32xbf16>, vector<32x32xbf16>, vector<8x32xf32> -> vector<8x32xf32>
    %c0_21 = arith.constant 0 : index
    %c0_22 = arith.constant 0 : index
    %c0_23 = arith.constant 0 : index
    %23 = vector.load %arg10[%c0_21, %c0_22, %c0_23] : memref<1x1x32xf32, #tpu.memory_space<vmem>>, vector<1x1x32xf32>
    %24 = vector.shape_cast %23 : vector<1x1x32xf32> to vector<1x32xf32>
    %25 = vector.broadcast %24 : vector<1x32xf32> to vector<8x32xf32>
    %26 = arith.addf %22, %25 : vector<8x32xf32>
    %27 = vector.extract_strided_slice %18 {offsets = [0, 0], sizes = [8, 32], strides = [1, 1]} : vector<8x64xf32> to vector<8x32xf32>
    %28 = vector.extract_strided_slice %18 {offsets = [0, 32], sizes = [8, 32], strides = [1, 1]} : vector<8x64xf32> to vector<8x32xf32>
    %c0_24 = arith.constant 0 : index
    %c0_25 = arith.constant 0 : index
    %c0_26 = arith.constant 0 : index
    %29 = vector.load %arg11[%c0_24, %c0_25, %c0_26] : memref<1x32x32xbf16, #tpu.memory_space<vmem>>, vector<1x32x32xbf16>
    %30 = vector.shape_cast %29 : vector<1x32x32xbf16> to vector<32x32xbf16>
    %c0_27 = arith.constant 0 : index
    %c0_28 = arith.constant 0 : index
    %c0_29 = arith.constant 0 : index
    %31 = vector.load %arg12[%c0_27, %c0_28, %c0_29] : memref<1x1x32xf32, #tpu.memory_space<vmem>>, vector<1x1x32xf32>
    %32 = vector.shape_cast %31 : vector<1x1x32xf32> to vector<1x32xf32>
    %33 = vector.shape_cast %27 : vector<8x32xf32> to vector<8x4x8xf32>
    %34 = tpu.transpose %33, [1, 0, 2] : vector<8x4x8xf32> -> vector<4x8x8xf32>
    %35 = arith.truncf %34 : vector<4x8x8xf32> to vector<4x8x8xbf16>
    %36 = vector.shape_cast %28 : vector<8x32xf32> to vector<8x4x8xf32>
    %37 = tpu.transpose %36, [1, 0, 2] : vector<8x4x8xf32> -> vector<4x8x8xf32>
    %38 = arith.truncf %37 : vector<4x8x8xf32> to vector<4x8x8xbf16>
    %39 = vector.shape_cast %26 : vector<8x32xf32> to vector<8x4x8xf32>
    %40 = tpu.transpose %39, [1, 0, 2] : vector<8x4x8xf32> -> vector<4x8x8xf32>
    %41 = arith.truncf %40 : vector<4x8x8xf32> to vector<4x8x8xbf16>
    %cst_30 = arith.constant dense<0.000000e+00> : vector<4x8x8xf32>
    %42 = tpu.matmul %35, %38, %cst_30 {dimension_numbers = #tpu.dot_dimension_numbers<[2], [2], [1], [1], [0, 0, 0, 1, 1, 1], [0], [0]>} : vector<4x8x8xbf16>, vector<4x8x8xbf16>, vector<4x8x8xf32> -> vector<4x8x8xf32>
    %cst_31 = arith.constant dense<0xFF800000> : vector<4x8xf32>
    %43 = vector.multi_reduction <maximumf>, %42, %cst_31 [2] : vector<4x8x8xf32> to vector<4x8xf32>
    %44 = vector.shape_cast %43 : vector<4x8xf32> to vector<4x8x1xf32>
    %45 = vector.broadcast %44 : vector<4x8x1xf32> to vector<4x8x8xf32>
    %46 = arith.subf %42, %45 : vector<4x8x8xf32>
    %47 = math.exp %46 : vector<4x8x8xf32>
    %cst_32 = arith.constant dense<0.000000e+00> : vector<4x8xf32>
    %48 = vector.multi_reduction <add>, %47, %cst_32 [2] : vector<4x8x8xf32> to vector<4x8xf32>
    %49 = vector.shape_cast %48 : vector<4x8xf32> to vector<4x8x1xf32>
    %50 = tpu.reciprocal %49 {approx = true} : vector<4x8x1xf32> -> vector<4x8x1xf32>
    %51 = vector.broadcast %50 : vector<4x8x1xf32> to vector<4x8x8xf32>
    %52 = arith.mulf %47, %51 : vector<4x8x8xf32>
    %53 = arith.truncf %52 : vector<4x8x8xf32> to vector<4x8x8xbf16>
    %cst_33 = arith.constant dense<0.000000e+00> : vector<4x8x8xf32>
    %54 = tpu.matmul %53, %41, %cst_33 {dimension_numbers = #tpu.dot_dimension_numbers<[2], [1], [1], [2], [0, 0, 0, 1, 1, 2], [0], [0]>} : vector<4x8x8xbf16>, vector<4x8x8xbf16>, vector<4x8x8xf32> -> vector<4x8x8xf32>
    %55 = tpu.transpose %54, [1, 0, 2] : vector<4x8x8xf32> -> vector<8x4x8xf32>
    %56 = vector.shape_cast %55 : vector<8x4x8xf32> to vector<8x32xf32>
    %57 = arith.truncf %56 : vector<8x32xf32> to vector<8x32xbf16>
    %cst_34 = arith.constant dense<0.000000e+00> : vector<8x32xf32>
    %58 = tpu.matmul %57, %30, %cst_34 {dimension_numbers = #tpu.dot_dimension_numbers<[1], [0], [0], [1], [0, 0, 1, 1], [], []>} : vector<8x32xbf16>, vector<32x32xbf16>, vector<8x32xf32> -> vector<8x32xf32>
    %59 = vector.broadcast %32 : vector<1x32xf32> to vector<8x32xf32>
    %60 = arith.addf %58, %59 : vector<8x32xf32>
    %61 = arith.addf %3, %60 : vector<8x32xf32>
    %62 = vector.extract_strided_slice %7 {offsets = [0, 0], sizes = [1, 32], strides = [1, 1]} : vector<3x32xf32> to vector<1x32xf32>
    %63 = vector.extract_strided_slice %9 {offsets = [0, 0], sizes = [1, 32], strides = [1, 1]} : vector<3x32xf32> to vector<1x32xf32>
    %cst_35 = arith.constant dense<0.000000e+00> : vector<8xf32>
    %64 = vector.multi_reduction <add>, %61, %cst_35 [1] : vector<8x32xf32> to vector<8xf32>
    %65 = vector.shape_cast %64 : vector<8xf32> to vector<8x1xf32>
    %cst_36 = arith.constant 3.200000e+01 : f32
    %66 = vector.broadcast %cst_36 : f32 to vector<8x1xf32>
    %67 = arith.divf %65, %66 : vector<8x1xf32>
    %68 = vector.broadcast %67 : vector<8x1xf32> to vector<8x32xf32>
    %69 = arith.subf %61, %68 : vector<8x32xf32>
    %70 = arith.mulf %69, %69 : vector<8x32xf32>
    %cst_37 = arith.constant dense<0.000000e+00> : vector<8xf32>
    %71 = vector.multi_reduction <add>, %70, %cst_37 [1] : vector<8x32xf32> to vector<8xf32>
    %72 = vector.shape_cast %71 : vector<8xf32> to vector<8x1xf32>
    %cst_38 = arith.constant 3.200000e+01 : f32
    %73 = vector.broadcast %cst_38 : f32 to vector<8x1xf32>
    %74 = arith.divf %72, %73 : vector<8x1xf32>
    %75 = vector.broadcast %67 : vector<8x1xf32> to vector<8x32xf32>
    %76 = arith.subf %61, %75 : vector<8x32xf32>
    %cst_39 = arith.constant 9.99999974E-6 : f32
    %77 = vector.broadcast %cst_39 : f32 to vector<8x1xf32>
    %78 = arith.addf %74, %77 : vector<8x1xf32>
    %79 = math.rsqrt %78 : vector<8x1xf32>
    %80 = vector.broadcast %79 : vector<8x1xf32> to vector<8x32xf32>
    %81 = arith.mulf %76, %80 : vector<8x32xf32>
    %82 = vector.broadcast %62 : vector<1x32xf32> to vector<8x32xf32>
    %83 = arith.mulf %81, %82 : vector<8x32xf32>
    %84 = vector.broadcast %63 : vector<1x32xf32> to vector<8x32xf32>
    %85 = arith.addf %83, %84 : vector<8x32xf32>
    %86 = arith.addf %85, %5 : vector<8x32xf32>
    %87 = arith.truncf %86 : vector<8x32xf32> to vector<8x32xbf16>
    %c0_40 = arith.constant 0 : index
    %c0_41 = arith.constant 0 : index
    %c0_42 = arith.constant 0 : index
    %88 = vector.load %arg13[%c0_40, %c0_41, %c0_42] : memref<1x32x32xbf16, #tpu.memory_space<vmem>>, vector<1x32x32xbf16>
    %89 = vector.shape_cast %88 : vector<1x32x32xbf16> to vector<32x32xbf16>
    %cst_43 = arith.constant dense<0.000000e+00> : vector<8x32xf32>
    %90 = tpu.matmul %87, %89, %cst_43 {dimension_numbers = #tpu.dot_dimension_numbers<[1], [0], [0], [1], [0, 0, 1, 1], [], []>} : vector<8x32xbf16>, vector<32x32xbf16>, vector<8x32xf32> -> vector<8x32xf32>
    %c0_44 = arith.constant 0 : index
    %c0_45 = arith.constant 0 : index
    %c0_46 = arith.constant 0 : index
    %91 = vector.load %arg14[%c0_44, %c0_45, %c0_46] : memref<1x1x32xf32, #tpu.memory_space<vmem>>, vector<1x1x32xf32>
    %92 = vector.shape_cast %91 : vector<1x1x32xf32> to vector<1x32xf32>
    %93 = vector.broadcast %92 : vector<1x32xf32> to vector<8x32xf32>
    %94 = arith.addf %90, %93 : vector<8x32xf32>
    %c0_47 = arith.constant 0 : index
    %c0_48 = arith.constant 0 : index
    %c0_49 = arith.constant 0 : index
    %95 = vector.load %arg4[%c0_47, %c0_48, %c0_49] : memref<1x128x32xbf16, #tpu.memory_space<vmem>>, vector<1x128x32xbf16>
    %96 = vector.shape_cast %95 : vector<1x128x32xbf16> to vector<128x32xbf16>
    %c0_50 = arith.constant 0 : index
    %c0_51 = arith.constant 0 : index
    %c0_52 = arith.constant 0 : index
    %97 = vector.load %arg15[%c0_50, %c0_51, %c0_52] : memref<1x32x32xbf16, #tpu.memory_space<vmem>>, vector<1x32x32xbf16>
    %98 = vector.shape_cast %97 : vector<1x32x32xbf16> to vector<32x32xbf16>
    %cst_53 = arith.constant dense<0.000000e+00> : vector<128x32xf32>
    %99 = tpu.matmul %96, %98, %cst_53 {dimension_numbers = #tpu.dot_dimension_numbers<[1], [0], [0], [1], [0, 0, 1, 1], [], []>} : vector<128x32xbf16>, vector<32x32xbf16>, vector<128x32xf32> -> vector<128x32xf32>
    %c0_54 = arith.constant 0 : index
    %c0_55 = arith.constant 0 : index
    %c0_56 = arith.constant 0 : index
    %100 = vector.load %arg16[%c0_54, %c0_55, %c0_56] : memref<1x1x32xf32, #tpu.memory_space<vmem>>, vector<1x1x32xf32>
    %101 = vector.shape_cast %100 : vector<1x1x32xf32> to vector<1x32xf32>
    %102 = vector.broadcast %101 : vector<1x32xf32> to vector<128x32xf32>
    %103 = arith.addf %99, %102 : vector<128x32xf32>
    %c0_57 = arith.constant 0 : index
    %c0_58 = arith.constant 0 : index
    %c0_59 = arith.constant 0 : index
    %104 = vector.load %arg5[%c0_57, %c0_58, %c0_59] : memref<1x128x32xbf16, #tpu.memory_space<vmem>>, vector<1x128x32xbf16>
    %105 = vector.shape_cast %104 : vector<1x128x32xbf16> to vector<128x32xbf16>
    %c0_60 = arith.constant 0 : index
    %c0_61 = arith.constant 0 : index
    %c0_62 = arith.constant 0 : index
    %106 = vector.load %arg17[%c0_60, %c0_61, %c0_62] : memref<1x32x32xbf16, #tpu.memory_space<vmem>>, vector<1x32x32xbf16>
    %107 = vector.shape_cast %106 : vector<1x32x32xbf16> to vector<32x32xbf16>
    %cst_63 = arith.constant dense<0.000000e+00> : vector<128x32xf32>
    %108 = tpu.matmul %105, %107, %cst_63 {dimension_numbers = #tpu.dot_dimension_numbers<[1], [0], [0], [1], [0, 0, 1, 1], [], []>} : vector<128x32xbf16>, vector<32x32xbf16>, vector<128x32xf32> -> vector<128x32xf32>
    %c0_64 = arith.constant 0 : index
    %c0_65 = arith.constant 0 : index
    %c0_66 = arith.constant 0 : index
    %109 = vector.load %arg18[%c0_64, %c0_65, %c0_66] : memref<1x1x32xf32, #tpu.memory_space<vmem>>, vector<1x1x32xf32>
    %110 = vector.shape_cast %109 : vector<1x1x32xf32> to vector<1x32xf32>
    %111 = vector.broadcast %110 : vector<1x32xf32> to vector<128x32xf32>
    %112 = arith.addf %108, %111 : vector<128x32xf32>
    %c0_67 = arith.constant 0 : index
    %c0_68 = arith.constant 0 : index
    %c0_69 = arith.constant 0 : index
    %113 = vector.load %arg19[%c0_67, %c0_68, %c0_69] : memref<1x32x32xbf16, #tpu.memory_space<vmem>>, vector<1x32x32xbf16>
    %114 = vector.shape_cast %113 : vector<1x32x32xbf16> to vector<32x32xbf16>
    %c0_70 = arith.constant 0 : index
    %c0_71 = arith.constant 0 : index
    %c0_72 = arith.constant 0 : index
    %115 = vector.load %arg20[%c0_70, %c0_71, %c0_72] : memref<1x1x32xf32, #tpu.memory_space<vmem>>, vector<1x1x32xf32>
    %116 = vector.shape_cast %115 : vector<1x1x32xf32> to vector<1x32xf32>
    %c0_73 = arith.constant 0 : index
    %c0_74 = arith.constant 0 : index
    %c0_75 = arith.constant 0 : index
    %117 = vector.load %arg6[%c0_73, %c0_74, %c0_75] : memref<1x1x128xf32, #tpu.memory_space<vmem>>, vector<1x1x128xf32>
    %118 = vector.shape_cast %117 : vector<1x1x128xf32> to vector<1x128xf32>
    %119 = vector.shape_cast %94 : vector<8x32xf32> to vector<8x4x8xf32>
    %120 = tpu.transpose %119, [1, 0, 2] : vector<8x4x8xf32> -> vector<4x8x8xf32>
    %121 = arith.truncf %120 : vector<4x8x8xf32> to vector<4x8x8xbf16>
    %122 = vector.shape_cast %103 : vector<128x32xf32> to vector<128x4x8xf32>
    %123 = tpu.transpose %122, [1, 0, 2] : vector<128x4x8xf32> -> vector<4x128x8xf32>
    %124 = arith.truncf %123 : vector<4x128x8xf32> to vector<4x128x8xbf16>
    %125 = vector.shape_cast %112 : vector<128x32xf32> to vector<128x4x8xf32>
    %126 = tpu.transpose %125, [1, 0, 2] : vector<128x4x8xf32> -> vector<4x128x8xf32>
    %127 = arith.truncf %126 : vector<4x128x8xf32> to vector<4x128x8xbf16>
    %cst_76 = arith.constant dense<0.000000e+00> : vector<4x8x128xf32>
    %128 = tpu.matmul %121, %124, %cst_76 {dimension_numbers = #tpu.dot_dimension_numbers<[2], [2], [1], [1], [0, 0, 0, 1, 1, 1], [0], [0]>} : vector<4x8x8xbf16>, vector<4x128x8xbf16>, vector<4x8x128xf32> -> vector<4x8x128xf32>
    %129 = vector.shape_cast %118 : vector<1x128xf32> to vector<1x1x128xf32>
    %130 = vector.broadcast %129 : vector<1x1x128xf32> to vector<4x8x128xf32>
    %131 = arith.addf %128, %130 : vector<4x8x128xf32>
    %cst_77 = arith.constant dense<0xFF800000> : vector<4x8xf32>
    %132 = vector.multi_reduction <maximumf>, %131, %cst_77 [2] : vector<4x8x128xf32> to vector<4x8xf32>
    %133 = vector.shape_cast %132 : vector<4x8xf32> to vector<4x8x1xf32>
    %134 = vector.broadcast %133 : vector<4x8x1xf32> to vector<4x8x128xf32>
    %135 = arith.subf %131, %134 : vector<4x8x128xf32>
    %136 = math.exp %135 : vector<4x8x128xf32>
    %cst_78 = arith.constant dense<0.000000e+00> : vector<4x8xf32>
    %137 = vector.multi_reduction <add>, %136, %cst_78 [2] : vector<4x8x128xf32> to vector<4x8xf32>
    %138 = vector.shape_cast %137 : vector<4x8xf32> to vector<4x8x1xf32>
    %139 = tpu.reciprocal %138 {approx = true} : vector<4x8x1xf32> -> vector<4x8x1xf32>
    %140 = vector.broadcast %139 : vector<4x8x1xf32> to vector<4x8x128xf32>
    %141 = arith.mulf %136, %140 : vector<4x8x128xf32>
    %142 = arith.truncf %141 : vector<4x8x128xf32> to vector<4x8x128xbf16>
    %cst_79 = arith.constant dense<0.000000e+00> : vector<4x8x8xf32>
    %143 = tpu.matmul %142, %127, %cst_79 {dimension_numbers = #tpu.dot_dimension_numbers<[2], [1], [1], [2], [0, 0, 0, 1, 1, 2], [0], [0]>} : vector<4x8x128xbf16>, vector<4x128x8xbf16>, vector<4x8x8xf32> -> vector<4x8x8xf32>
    %144 = tpu.transpose %143, [1, 0, 2] : vector<4x8x8xf32> -> vector<8x4x8xf32>
    %145 = vector.shape_cast %144 : vector<8x4x8xf32> to vector<8x32xf32>
    %146 = arith.truncf %145 : vector<8x32xf32> to vector<8x32xbf16>
    %cst_80 = arith.constant dense<0.000000e+00> : vector<8x32xf32>
    %147 = tpu.matmul %146, %114, %cst_80 {dimension_numbers = #tpu.dot_dimension_numbers<[1], [0], [0], [1], [0, 0, 1, 1], [], []>} : vector<8x32xbf16>, vector<32x32xbf16>, vector<8x32xf32> -> vector<8x32xf32>
    %148 = vector.broadcast %116 : vector<1x32xf32> to vector<8x32xf32>
    %149 = arith.addf %147, %148 : vector<8x32xf32>
    %150 = arith.addf %85, %149 : vector<8x32xf32>
    %151 = vector.extract_strided_slice %7 {offsets = [1, 0], sizes = [1, 32], strides = [1, 1]} : vector<3x32xf32> to vector<1x32xf32>
    %152 = vector.extract_strided_slice %9 {offsets = [1, 0], sizes = [1, 32], strides = [1, 1]} : vector<3x32xf32> to vector<1x32xf32>
    %cst_81 = arith.constant dense<0.000000e+00> : vector<8xf32>
    %153 = vector.multi_reduction <add>, %150, %cst_81 [1] : vector<8x32xf32> to vector<8xf32>
    %154 = vector.shape_cast %153 : vector<8xf32> to vector<8x1xf32>
    %cst_82 = arith.constant 3.200000e+01 : f32
    %155 = vector.broadcast %cst_82 : f32 to vector<8x1xf32>
    %156 = arith.divf %154, %155 : vector<8x1xf32>
    %157 = vector.broadcast %156 : vector<8x1xf32> to vector<8x32xf32>
    %158 = arith.subf %150, %157 : vector<8x32xf32>
    %159 = arith.mulf %158, %158 : vector<8x32xf32>
    %cst_83 = arith.constant dense<0.000000e+00> : vector<8xf32>
    %160 = vector.multi_reduction <add>, %159, %cst_83 [1] : vector<8x32xf32> to vector<8xf32>
    %161 = vector.shape_cast %160 : vector<8xf32> to vector<8x1xf32>
    %cst_84 = arith.constant 3.200000e+01 : f32
    %162 = vector.broadcast %cst_84 : f32 to vector<8x1xf32>
    %163 = arith.divf %161, %162 : vector<8x1xf32>
    %164 = vector.broadcast %156 : vector<8x1xf32> to vector<8x32xf32>
    %165 = arith.subf %150, %164 : vector<8x32xf32>
    %cst_85 = arith.constant 9.99999974E-6 : f32
    %166 = vector.broadcast %cst_85 : f32 to vector<8x1xf32>
    %167 = arith.addf %163, %166 : vector<8x1xf32>
    %168 = math.rsqrt %167 : vector<8x1xf32>
    %169 = vector.broadcast %168 : vector<8x1xf32> to vector<8x32xf32>
    %170 = arith.mulf %165, %169 : vector<8x32xf32>
    %171 = vector.broadcast %151 : vector<1x32xf32> to vector<8x32xf32>
    %172 = arith.mulf %170, %171 : vector<8x32xf32>
    %173 = vector.broadcast %152 : vector<1x32xf32> to vector<8x32xf32>
    %174 = arith.addf %172, %173 : vector<8x32xf32>
    %175 = arith.truncf %174 : vector<8x32xf32> to vector<8x32xbf16>
    %c0_86 = arith.constant 0 : index
    %c0_87 = arith.constant 0 : index
    %c0_88 = arith.constant 0 : index
    %176 = vector.load %arg21[%c0_86, %c0_87, %c0_88] : memref<1x32x64xbf16, #tpu.memory_space<vmem>>, vector<1x32x64xbf16>
    %177 = vector.shape_cast %176 : vector<1x32x64xbf16> to vector<32x64xbf16>
    %cst_89 = arith.constant dense<0.000000e+00> : vector<8x64xf32>
    %178 = tpu.matmul %175, %177, %cst_89 {dimension_numbers = #tpu.dot_dimension_numbers<[1], [0], [0], [1], [0, 0, 1, 1], [], []>} : vector<8x32xbf16>, vector<32x64xbf16>, vector<8x64xf32> -> vector<8x64xf32>
    %c0_90 = arith.constant 0 : index
    %c0_91 = arith.constant 0 : index
    %c0_92 = arith.constant 0 : index
    %179 = vector.load %arg22[%c0_90, %c0_91, %c0_92] : memref<1x1x64xf32, #tpu.memory_space<vmem>>, vector<1x1x64xf32>
    %180 = vector.shape_cast %179 : vector<1x1x64xf32> to vector<1x64xf32>
    %181 = vector.broadcast %180 : vector<1x64xf32> to vector<8x64xf32>
    %182 = arith.addf %178, %181 : vector<8x64xf32>
    %cst_93 = arith.constant 0.000000e+00 : f32
    %183 = vector.broadcast %cst_93 : f32 to vector<8x64xf32>
    %184 = arith.maximumf %182, %183 : vector<8x64xf32>
    %185 = arith.truncf %184 : vector<8x64xf32> to vector<8x64xbf16>
    %c0_94 = arith.constant 0 : index
    %c0_95 = arith.constant 0 : index
    %c0_96 = arith.constant 0 : index
    %186 = vector.load %arg23[%c0_94, %c0_95, %c0_96] : memref<1x64x32xbf16, #tpu.memory_space<vmem>>, vector<1x64x32xbf16>
    %187 = vector.shape_cast %186 : vector<1x64x32xbf16> to vector<64x32xbf16>
    %cst_97 = arith.constant dense<0.000000e+00> : vector<8x32xf32>
    %188 = tpu.matmul %185, %187, %cst_97 {dimension_numbers = #tpu.dot_dimension_numbers<[1], [0], [0], [1], [0, 0, 1, 1], [], []>} : vector<8x64xbf16>, vector<64x32xbf16>, vector<8x32xf32> -> vector<8x32xf32>
    %c0_98 = arith.constant 0 : index
    %c0_99 = arith.constant 0 : index
    %c0_100 = arith.constant 0 : index
    %189 = vector.load %arg24[%c0_98, %c0_99, %c0_100] : memref<1x1x32xf32, #tpu.memory_space<vmem>>, vector<1x1x32xf32>
    %190 = vector.shape_cast %189 : vector<1x1x32xf32> to vector<1x32xf32>
    %191 = vector.broadcast %190 : vector<1x32xf32> to vector<8x32xf32>
    %192 = arith.addf %188, %191 : vector<8x32xf32>
    %193 = arith.addf %174, %192 : vector<8x32xf32>
    %194 = vector.extract_strided_slice %7 {offsets = [2, 0], sizes = [1, 32], strides = [1, 1]} : vector<3x32xf32> to vector<1x32xf32>
    %195 = vector.extract_strided_slice %9 {offsets = [2, 0], sizes = [1, 32], strides = [1, 1]} : vector<3x32xf32> to vector<1x32xf32>
    %cst_101 = arith.constant dense<0.000000e+00> : vector<8xf32>
    %196 = vector.multi_reduction <add>, %193, %cst_101 [1] : vector<8x32xf32> to vector<8xf32>
    %197 = vector.shape_cast %196 : vector<8xf32> to vector<8x1xf32>
    %cst_102 = arith.constant 3.200000e+01 : f32
    %198 = vector.broadcast %cst_102 : f32 to vector<8x1xf32>
    %199 = arith.divf %197, %198 : vector<8x1xf32>
    %200 = vector.broadcast %199 : vector<8x1xf32> to vector<8x32xf32>
    %201 = arith.subf %193, %200 : vector<8x32xf32>
    %202 = arith.mulf %201, %201 : vector<8x32xf32>
    %cst_103 = arith.constant dense<0.000000e+00> : vector<8xf32>
    %203 = vector.multi_reduction <add>, %202, %cst_103 [1] : vector<8x32xf32> to vector<8xf32>
    %204 = vector.shape_cast %203 : vector<8xf32> to vector<8x1xf32>
    %cst_104 = arith.constant 3.200000e+01 : f32
    %205 = vector.broadcast %cst_104 : f32 to vector<8x1xf32>
    %206 = arith.divf %204, %205 : vector<8x1xf32>
    %207 = vector.broadcast %199 : vector<8x1xf32> to vector<8x32xf32>
    %208 = arith.subf %193, %207 : vector<8x32xf32>
    %cst_105 = arith.constant 9.99999974E-6 : f32
    %209 = vector.broadcast %cst_105 : f32 to vector<8x1xf32>
    %210 = arith.addf %206, %209 : vector<8x1xf32>
    %211 = math.rsqrt %210 : vector<8x1xf32>
    %212 = vector.broadcast %211 : vector<8x1xf32> to vector<8x32xf32>
    %213 = arith.mulf %208, %212 : vector<8x32xf32>
    %214 = vector.broadcast %194 : vector<1x32xf32> to vector<8x32xf32>
    %215 = arith.mulf %213, %214 : vector<8x32xf32>
    %216 = vector.broadcast %195 : vector<1x32xf32> to vector<8x32xf32>
    %217 = arith.addf %215, %216 : vector<8x32xf32>
    %c0_106 = arith.constant 0 : index
    %c0_107 = arith.constant 0 : index
    %218 = vector.load %arg30[%c0_106, %c0_107] : memref<8x32xf32, #tpu.memory_space<vmem>>, vector<8x32xf32>
    tpu.vector_store %arg30[%c0_106, %c0_107], %217 {strides = array<i32>} : memref<8x32xf32, #tpu.memory_space<vmem>>, vector<8x32xf32>,
    %c0_108 = arith.constant 0 : index
    %c0_109 = arith.constant 0 : index
    %219 = vector.load %arg27[%c0_108, %c0_109] : memref<1x32xf32, #tpu.memory_space<vmem>>, vector<1x32xf32>
    %c0_110 = arith.constant 0 : index
    %c0_111 = arith.constant 0 : index
    %220 = vector.load %arg28[%c0_110, %c0_111] : memref<1x32xf32, #tpu.memory_space<vmem>>, vector<1x32xf32>
    %cst_112 = arith.constant dense<0.000000e+00> : vector<8xf32>
    %221 = vector.multi_reduction <add>, %217, %cst_112 [1] : vector<8x32xf32> to vector<8xf32>
    %222 = vector.shape_cast %221 : vector<8xf32> to vector<8x1xf32>
    %cst_113 = arith.constant 3.200000e+01 : f32
    %223 = vector.broadcast %cst_113 : f32 to vector<8x1xf32>
    %224 = arith.divf %222, %223 : vector<8x1xf32>
    %225 = vector.broadcast %224 : vector<8x1xf32> to vector<8x32xf32>
    %226 = arith.subf %217, %225 : vector<8x32xf32>
    %227 = arith.mulf %226, %226 : vector<8x32xf32>
    %cst_114 = arith.constant dense<0.000000e+00> : vector<8xf32>
    %228 = vector.multi_reduction <add>, %227, %cst_114 [1] : vector<8x32xf32> to vector<8xf32>
    %229 = vector.shape_cast %228 : vector<8xf32> to vector<8x1xf32>
    %cst_115 = arith.constant 3.200000e+01 : f32
    %230 = vector.broadcast %cst_115 : f32 to vector<8x1xf32>
    %231 = arith.divf %229, %230 : vector<8x1xf32>
    %232 = vector.broadcast %224 : vector<8x1xf32> to vector<8x32xf32>
    %233 = arith.subf %217, %232 : vector<8x32xf32>
    %cst_116 = arith.constant 9.99999974E-6 : f32
    %234 = vector.broadcast %cst_116 : f32 to vector<8x1xf32>
    %235 = arith.addf %231, %234 : vector<8x1xf32>
    %236 = math.rsqrt %235 : vector<8x1xf32>
    %237 = vector.broadcast %236 : vector<8x1xf32> to vector<8x32xf32>
    %238 = arith.mulf %233, %237 : vector<8x32xf32>
    %239 = vector.broadcast %219 : vector<1x32xf32> to vector<8x32xf32>
    %240 = arith.mulf %238, %239 : vector<8x32xf32>
    %241 = vector.broadcast %220 : vector<1x32xf32> to vector<8x32xf32>
    %242 = arith.addf %240, %241 : vector<8x32xf32>
    %c0_117 = arith.constant 0 : index
    %c0_118 = arith.constant 0 : index
    %c0_119 = arith.constant 0 : index
    %c0_120 = arith.constant 0 : index
    %243 = vector.load %arg29[%c0_117, %c0_118, %c0_119, %c0_120] : memref<1x1x8x32xf32, #tpu.memory_space<vmem>>, vector<1x1x8x32xf32>
    %244 = vector.shape_cast %243 : vector<1x1x8x32xf32> to vector<8x32xf32>
    %245 = vector.shape_cast %242 : vector<8x32xf32> to vector<1x1x8x32xf32>
    tpu.vector_store %arg29[%c0_117, %c0_118, %c0_119, %c0_120], %245 {strides = array<i32>} : memref<1x1x8x32xf32, #tpu.memory_space<vmem>>, vector<1x1x8x32xf32>,
    return
  }
  func.func @transform_0(%arg0: i32, %arg1: i32) -> (i32, i32, i32) {
    %c0_i32 = arith.constant 0 : i32
    %c0_i32_0 = arith.constant 0 : i32
    %c0_i32_1 = arith.constant 0 : i32
    return %arg0, %c0_i32, %c0_i32_0 : i32, i32, i32
  }
  func.func @transform_1(%arg0: i32, %arg1: i32) -> (i32, i32, i32) {
    %c0_i32 = arith.constant 0 : i32
    %c0_i32_0 = arith.constant 0 : i32
    %c0_i32_1 = arith.constant 0 : i32
    return %arg0, %c0_i32, %c0_i32_0 : i32, i32, i32
  }
  func.func @transform_2(%arg0: i32, %arg1: i32) -> (i32, i32, i32) {
    %c0_i32 = arith.constant 0 : i32
    %c0_i32_0 = arith.constant 0 : i32
    %c0_i32_1 = arith.constant 0 : i32
    return %arg0, %c0_i32, %c0_i32_0 : i32, i32, i32
  }
  func.func @transform_3(%arg0: i32, %arg1: i32) -> (i32, i32, i32) {
    %c0_i32 = arith.constant 0 : i32
    %c0_i32_0 = arith.constant 0 : i32
    %c0_i32_1 = arith.constant 0 : i32
    return %arg0, %c0_i32, %c0_i32_0 : i32, i32, i32
  }
  func.func @transform_4(%arg0: i32, %arg1: i32) -> (i32, i32, i32) {
    %c0_i32 = arith.constant 0 : i32
    %c0_i32_0 = arith.constant 0 : i32
    %c0_i32_1 = arith.constant 0 : i32
    return %arg0, %c0_i32, %c0_i32_0 : i32, i32, i32
  }
  func.func @transform_5(%arg0: i32, %arg1: i32) -> (i32, i32, i32) {
    %c0_i32 = arith.constant 0 : i32
    %c0_i32_0 = arith.constant 0 : i32
    %c0_i32_1 = arith.constant 0 : i32
    return %arg1, %c0_i32, %c0_i32_0 : i32, i32, i32
  }
  func.func @transform_6(%arg0: i32, %arg1: i32) -> (i32, i32, i32) {
    %c0_i32 = arith.constant 0 : i32
    %c0_i32_0 = arith.constant 0 : i32
    %c0_i32_1 = arith.constant 0 : i32
    return %arg1, %c0_i32, %c0_i32_0 : i32, i32, i32
  }
  func.func @transform_7(%arg0: i32, %arg1: i32) -> (i32, i32, i32) {
    %c0_i32 = arith.constant 0 : i32
    %c0_i32_0 = arith.constant 0 : i32
    %c0_i32_1 = arith.constant 0 : i32
    return %arg1, %c0_i32, %c0_i32_0 : i32, i32, i32
  }
  func.func @transform_8(%arg0: i32, %arg1: i32) -> (i32, i32, i32) {
    %c0_i32 = arith.constant 0 : i32
    %c0_i32_0 = arith.constant 0 : i32
    %c0_i32_1 = arith.constant 0 : i32
    return %arg1, %c0_i32, %c0_i32_0 : i32, i32, i32
  }
  func.func @transform_9(%arg0: i32, %arg1: i32) -> (i32, i32, i32) {
    %c0_i32 = arith.constant 0 : i32
    %c0_i32_0 = arith.constant 0 : i32
    %c0_i32_1 = arith.constant 0 : i32
    return %arg1, %c0_i32, %c0_i32_0 : i32, i32, i32
  }
  func.func @transform_10(%arg0: i32, %arg1: i32) -> (i32, i32, i32) {
    %c0_i32 = arith.constant 0 : i32
    %c0_i32_0 = arith.constant 0 : i32
    %c0_i32_1 = arith.constant 0 : i32
    return %arg1, %c0_i32, %c0_i32_0 : i32, i32, i32
  }
  func.func @transform_11(%arg0: i32, %arg1: i32) -> (i32, i32, i32) {
    %c0_i32 = arith.constant 0 : i32
    %c0_i32_0 = arith.constant 0 : i32
    %c0_i32_1 = arith.constant 0 : i32
    return %arg1, %c0_i32, %c0_i32_0 : i32, i32, i32
  }
  func.func @transform_12(%arg0: i32, %arg1: i32) -> (i32, i32, i32) {
    %c0_i32 = arith.constant 0 : i32
    %c0_i32_0 = arith.constant 0 : i32
    %c0_i32_1 = arith.constant 0 : i32
    return %arg1, %c0_i32, %c0_i32_0 : i32, i32, i32
  }
  func.func @transform_13(%arg0: i32, %arg1: i32) -> (i32, i32, i32) {
    %c0_i32 = arith.constant 0 : i32
    %c0_i32_0 = arith.constant 0 : i32
    %c0_i32_1 = arith.constant 0 : i32
    return %arg1, %c0_i32, %c0_i32_0 : i32, i32, i32
  }
  func.func @transform_14(%arg0: i32, %arg1: i32) -> (i32, i32, i32) {
    %c0_i32 = arith.constant 0 : i32
    %c0_i32_0 = arith.constant 0 : i32
    %c0_i32_1 = arith.constant 0 : i32
    return %arg1, %c0_i32, %c0_i32_0 : i32, i32, i32
  }
  func.func @transform_15(%arg0: i32, %arg1: i32) -> (i32, i32, i32) {
    %c0_i32 = arith.constant 0 : i32
    %c0_i32_0 = arith.constant 0 : i32
    %c0_i32_1 = arith.constant 0 : i32
    return %arg1, %c0_i32, %c0_i32_0 : i32, i32, i32
  }
  func.func @transform_16(%arg0: i32, %arg1: i32) -> (i32, i32, i32) {
    %c0_i32 = arith.constant 0 : i32
    %c0_i32_0 = arith.constant 0 : i32
    %c0_i32_1 = arith.constant 0 : i32
    return %arg1, %c0_i32, %c0_i32_0 : i32, i32, i32
  }
  func.func @transform_17(%arg0: i32, %arg1: i32) -> (i32, i32, i32) {
    %c0_i32 = arith.constant 0 : i32
    %c0_i32_0 = arith.constant 0 : i32
    %c0_i32_1 = arith.constant 0 : i32
    return %arg1, %c0_i32, %c0_i32_0 : i32, i32, i32
  }
  func.func @transform_18(%arg0: i32, %arg1: i32) -> (i32, i32, i32) {
    %c0_i32 = arith.constant 0 : i32
    %c0_i32_0 = arith.constant 0 : i32
    %c0_i32_1 = arith.constant 0 : i32
    return %arg1, %c0_i32, %c0_i32_0 : i32, i32, i32
  }
  func.func @transform_19(%arg0: i32, %arg1: i32) -> (i32, i32, i32) {
    %c0_i32 = arith.constant 0 : i32
    %c0_i32_0 = arith.constant 0 : i32
    %c0_i32_1 = arith.constant 0 : i32
    return %arg1, %c0_i32, %c0_i32_0 : i32, i32, i32
  }
  func.func @transform_20(%arg0: i32, %arg1: i32) -> (i32, i32, i32) {
    %c0_i32 = arith.constant 0 : i32
    %c0_i32_0 = arith.constant 0 : i32
    %c0_i32_1 = arith.constant 0 : i32
    return %arg1, %c0_i32, %c0_i32_0 : i32, i32, i32
  }
  func.func @transform_21(%arg0: i32, %arg1: i32) -> (i32, i32, i32) {
    %c0_i32 = arith.constant 0 : i32
    %c0_i32_0 = arith.constant 0 : i32
    %c0_i32_1 = arith.constant 0 : i32
    return %arg1, %c0_i32, %c0_i32_0 : i32, i32, i32
  }
  func.func @transform_22(%arg0: i32, %arg1: i32) -> (i32, i32, i32) {
    %c0_i32 = arith.constant 0 : i32
    %c0_i32_0 = arith.constant 0 : i32
    %c0_i32_1 = arith.constant 0 : i32
    return %arg1, %c0_i32, %c0_i32_0 : i32, i32, i32
  }
  func.func @transform_23(%arg0: i32, %arg1: i32) -> (i32, i32, i32) {
    %c0_i32 = arith.constant 0 : i32
    %c0_i32_0 = arith.constant 0 : i32
    %c0_i32_1 = arith.constant 0 : i32
    return %arg1, %c0_i32, %c0_i32_0 : i32, i32, i32
  }
  func.func @transform_24(%arg0: i32, %arg1: i32) -> (i32, i32, i32) {
    %c0_i32 = arith.constant 0 : i32
    %c0_i32_0 = arith.constant 0 : i32
    %c0_i32_1 = arith.constant 0 : i32
    return %arg1, %c0_i32, %c0_i32_0 : i32, i32, i32
  }
  func.func @transform_25(%arg0: i32, %arg1: i32) -> (i32, i32) {
    %c0_i32 = arith.constant 0 : i32
    %c0_i32_0 = arith.constant 0 : i32
    %c0_i32_1 = arith.constant 0 : i32
    return %c0_i32, %c0_i32_0 : i32, i32
  }
  func.func @transform_26(%arg0: i32, %arg1: i32) -> (i32, i32) {
    %c0_i32 = arith.constant 0 : i32
    %c0_i32_0 = arith.constant 0 : i32
    %c0_i32_1 = arith.constant 0 : i32
    return %c0_i32, %c0_i32_0 : i32, i32
  }
  func.func @transform_27(%arg0: i32, %arg1: i32) -> (i32, i32, i32, i32) {
    %c0_i32 = arith.constant 0 : i32
    %c0_i32_0 = arith.constant 0 : i32
    %c0_i32_1 = arith.constant 0 : i32
    return %arg1, %arg0, %c0_i32, %c0_i32_0 : i32, i32, i32, i32
  }
}

</mosaic_0001>

<llo_original>
// kernel: tpu_custom_call.1
$region0: #{tpu_custom_call.1}
  #allocation0 [shape = 'u32[]', space=smem, size = 0x4, offset = 0x4, fixed_abs, tag = 'smem constant byte address 0x4 - core index']
  #allocation1 [shape = 'u32[144,128]{1,0:T(1,128)}', space=vmem, size = 0x12000, scoped, tag = 'internal scratch']
  #allocation2 [shape = 'f32[8,32]{1,0:T(8,128)}', space=vmem, size = 0x1000, scoped, tag = 'scratch operand']
  %s0 = inlined_call_operand.vmem [shape: f32[2,8,32], index: 0, kind: input, shape index: {}]
  %s1 = inlined_call_operand.vmem [shape: f32[2,8,32], index: 1, kind: input, shape index: {}]
  %s2 = inlined_call_operand.vmem [shape: bf16[2,128,32], index: 2, kind: input, shape index: {}]
  %s3 = inlined_call_operand.vmem [shape: bf16[2,128,32], index: 3, kind: input, shape index: {}]
  %s4 = inlined_call_operand.vmem [shape: f32[2,1,128], index: 4, kind: input, shape index: {}]
  %s5 = inlined_call_operand.vmem [shape: bf16[2,32,64], index: 5, kind: input, shape index: {}]
  %s6 = inlined_call_operand.vmem [shape: f32[2,1,64], index: 6, kind: input, shape index: {}]
  %s7 = inlined_call_operand.vmem [shape: bf16[2,32,32], index: 7, kind: input, shape index: {}]
  %s8 = inlined_call_operand.vmem [shape: f32[2,1,32], index: 8, kind: input, shape index: {}]
  %s9 = inlined_call_operand.vmem [shape: bf16[2,32,32], index: 9, kind: input, shape index: {}]
  %s10 = inlined_call_operand.vmem [shape: f32[2,1,32], index: 10, kind: input, shape index: {}]
  %s11 = inlined_call_operand.vmem [shape: bf16[2,32,32], index: 11, kind: input, shape index: {}]
  %s12 = inlined_call_operand.vmem [shape: f32[2,1,32], index: 12, kind: input, shape index: {}]
  %s13 = inlined_call_operand.vmem [shape: bf16[2,32,32], index: 13, kind: input, shape index: {}]
  %s14 = inlined_call_operand.vmem [shape: f32[2,1,32], index: 14, kind: input, shape index: {}]
  %s15 = inlined_call_operand.vmem [shape: bf16[2,32,32], index: 15, kind: input, shape index: {}]
  %s16 = inlined_call_operand.vmem [shape: f32[2,1,32], index: 16, kind: input, shape index: {}]
  %s17 = inlined_call_operand.vmem [shape: bf16[2,32,32], index: 17, kind: input, shape index: {}]
  %s18 = inlined_call_operand.vmem [shape: f32[2,1,32], index: 18, kind: input, shape index: {}]
  %s19 = inlined_call_operand.vmem [shape: bf16[2,32,64], index: 19, kind: input, shape index: {}]
  %s20 = inlined_call_operand.vmem [shape: f32[2,1,64], index: 20, kind: input, shape index: {}]
  %s21 = inlined_call_operand.vmem [shape: bf16[2,64,32], index: 21, kind: input, shape index: {}]
  %s22 = inlined_call_operand.vmem [shape: f32[2,1,32], index: 22, kind: input, shape index: {}]
  %s23 = inlined_call_operand.vmem [shape: f32[2,3,32], index: 23, kind: input, shape index: {}]
  %s24 = inlined_call_operand.vmem [shape: f32[2,3,32], index: 24, kind: input, shape index: {}]
  %s25 = inlined_call_operand.vmem [shape: f32[1,32], index: 25, kind: input, shape index: {}]
  %s26 = inlined_call_operand.vmem [shape: f32[1,32], index: 26, kind: input, shape index: {}]
  %s27 = inlined_call_operand.hbm [shape: f32[2,2,8,32], index: 27, kind: output, shape index: {}]
  %s28 = sld [smem:[#allocation0]]
  $region145: #{tpu_custom_call.1} parent=0
    _
  %s30 = ssub.s32 1, %s28
  %s31 = scalar_select 0, %s30, %s28
  $region1: #{tpu_custom_call.1} parent=0
    #allocation3 [shape = 'u8[8192]{0}', space=vmem, size = 0x2000, scoped, tag = 'output window, operand 0']
    #allocation4 [shape = 's32[2]{0}', space=sflag, size = 0x8, scoped, tag = 'scoped memory for tpu_custom_call.1']
    %32 = vsyncpa [#allocation4], 0
    %s33 = scalar_lea.sflag [#allocation4], 1
    %34 = vsyncpa %s33, 0
    loop: start=0, step=1, limit=6
    $region2: #{tpu_custom_call.1} parent=1 // loop_pre_header
      _
    $region3: #{tpu_custom_call.1} parent=1 // loop_header
      %s36 = sphi 0, %s40
      %p37 = scmp.ge.s32.totalorder %s36, 6
      %s43 = sphi 0, %s55
      %s44 = sphi 0, %s51
      %s45 = sphi 0, %s43
      %s46 = sphi 0, %s44
      %s47 = sphi 0, %s45
      %s48 = sphi 0, %s46
      %s58 = sphi 0, %s60
      %s61 = sphi 0, %s58
      %s62 = sphi 0, %s61
      %s78 = sphi 0, %s62
      %s84 = sphi 0, %s86
      %s87 = sphi 0, %s84
      %s88 = sphi 0, %s87
      %s104 = sphi 0, %s88
      %s110 = sphi 0, %s112
      %s113 = sphi 0, %s110
      %s114 = sphi 0, %s113
      %s130 = sphi 0, %s114
      %s136 = sphi 0, %s138
      %s139 = sphi 0, %s136
      %s140 = sphi 0, %s139
      %s156 = sphi 0, %s140
      %s162 = sphi 0, %s164
      %s165 = sphi 0, %s162
      %s166 = sphi 0, %s165
      %s182 = sphi 0, %s166
      %s188 = sphi 0, %s190
      %s191 = sphi 0, %s188
      %s192 = sphi 0, %s191
      %s208 = sphi 0, %s192
      %s214 = sphi 0, %s216
      %s217 = sphi 0, %s214
      %s218 = sphi 0, %s217
      %s234 = sphi 0, %s218
      %s240 = sphi 0, %s242
      %s243 = sphi 0, %s240
      %s244 = sphi 0, %s243
      %s260 = sphi 0, %s244
      %s266 = sphi 0, %s268
      %s269 = sphi 0, %s266
      %s270 = sphi 0, %s269
      %s286 = sphi 0, %s270
      %s292 = sphi 0, %s294
      %s295 = sphi 0, %s292
      %s296 = sphi 0, %s295
      %s312 = sphi 0, %s296
      %s318 = sphi 0, %s320
      %s321 = sphi 0, %s318
      %s322 = sphi 0, %s321
      %s338 = sphi 0, %s322
      %s344 = sphi 0, %s346
      %s347 = sphi 0, %s344
      %s348 = sphi 0, %s347
      %s364 = sphi 0, %s348
      %s370 = sphi 0, %s372
      %s373 = sphi 0, %s370
      %s374 = sphi 0, %s373
      %s390 = sphi 0, %s374
      %s396 = sphi 0, %s398
      %s399 = sphi 0, %s396
      %s400 = sphi 0, %s399
      %s416 = sphi 0, %s400
      %s422 = sphi 0, %s424
      %s425 = sphi 0, %s422
      %s426 = sphi 0, %s425
      %s442 = sphi 0, %s426
      %s448 = sphi 0, %s450
      %s451 = sphi 0, %s448
      %s452 = sphi 0, %s451
      %s468 = sphi 0, %s452
      %s474 = sphi 0, %s476
      %s477 = sphi 0, %s474
      %s478 = sphi 0, %s477
      %s494 = sphi 0, %s478
      %s500 = sphi 0, %s502
      %s503 = sphi 0, %s500
      %s504 = sphi 0, %s503
      %s520 = sphi 0, %s504
      %s526 = sphi 0, %s528
      %s529 = sphi 0, %s526
      %s530 = sphi 0, %s529
      %s546 = sphi 0, %s530
      %s552 = sphi 0, %s554
      %s555 = sphi 0, %s552
      %s556 = sphi 0, %s555
      %s572 = sphi 0, %s556
      %s578 = sphi 0, %s580
      %s581 = sphi 0, %s578
      %s582 = sphi 0, %s581
      %s598 = sphi 0, %s582
      %s604 = sphi 0, %s606
      %s607 = sphi 0, %s604
      %s608 = sphi 0, %s607
      %s624 = sphi 0, %s608
      %s630 = sphi 0, %s632
      %s633 = sphi 0, %s630
      %s634 = sphi 0, %s633
      %s650 = sphi 0, %s634
      %s656 = sphi 0, %s658
      %s659 = sphi 0, %s656
      %s660 = sphi 0, %s659
      %s676 = sphi 0, %s660
      %s682 = sphi 0, %s684
      %s685 = sphi 0, %s682
      %s686 = sphi 0, %s685
      %s702 = sphi 0, %s686
      %s706 = sphi 0, %s706
      %s708 = sphi 0, %s706
      %s709 = sphi 0, %s708
      %s723 = sphi 0, %s709
      %s727 = sphi 0, %s727
      %s729 = sphi 0, %s727
      %s730 = sphi 0, %s729
      %s744 = sphi 0, %s730
      %s752 = sphi 0, %s754
      %s755 = sphi 0, %s752
      %s756 = sphi 0, %s755
      %s772 = sphi 0, %s756
    $region4: #{tpu_custom_call.1} parent=1 // loop_header_branch
      %39 = sbr.rel (%p37) target = $region8
    $region5: #{tpu_custom_call.1} parent=1 // loop_body
      %s41 = ssub.s32 %s36, 1
      %s42 = ssub.s32 %s36, 2
      %s49 = sadd.s32 1, %s44
      %p50 = scmp.ge.s32.totalorder %s49, 2
      %s51 = scalar_select %p50, 0, %s49
      %s52 = sadd.s32 1, %s43
      %s53 = scalar_select %p50, %s52, %s43
      %p54 = scmp.ge.s32.totalorder %s53, 2
      %s55 = scalar_select %p54, 0, %s53
      %s56 = ssub.s32 %s43, %s55
      %p57 = scmp.eq.s32.totalorder %s56, 0
      %s59 = sadd.s32 %s58, 1
      %s60 = scalar_select %p57, %s58, %s59
      %p63 = pneg %p57
      %p64 = scmp.eq.s32.totalorder %s36, 3
      %p65 = por %p63, %p64
      %p66 = scmp.ne.s32.totalorder %s58, %s61
      %p67 = scmp.eq.s32.totalorder %s36, 0
      %p68 = por %p66, %p67
      %p69 = scmp.ne.s32.totalorder %s58, %s61
      %p70 = scmp.eq.s32.totalorder %s41, 3
      %p71 = por %p69, %p70
      %p72 = scmp.ne.s32.totalorder %s61, %s62
      %p73 = scmp.eq.s32.totalorder %s41, 0
      %p74 = por %p72, %p73
      %p75 = scmp.ne.s32.totalorder %s61, %s62
      %p76 = scmp.eq.s32.totalorder %s42, 3
      %p77 = por %p75, %p76
      %p79 = scmp.ne.s32.totalorder %s62, %s78
      %p80 = scmp.eq.s32.totalorder %s42, 0
      %p81 = por %p79, %p80
      %s82 = ssub.s32 %s43, %s55
      %p83 = scmp.eq.s32.totalorder %s82, 0
      %s85 = sadd.s32 %s84, 1
      %s86 = scalar_select %p83, %s84, %s85
      %p89 = pneg %p83
      %p90 = scmp.eq.s32.totalorder %s36, 3
      %p91 = por %p89, %p90
      %p92 = scmp.ne.s32.totalorder %s84, %s87
      %p93 = scmp.eq.s32.totalorder %s36, 0
      %p94 = por %p92, %p93
      %p95 = scmp.ne.s32.totalorder %s84, %s87
      %p96 = scmp.eq.s32.totalorder %s41, 3
      %p97 = por %p95, %p96
      %p98 = scmp.ne.s32.totalorder %s87, %s88
      %p99 = scmp.eq.s32.totalorder %s41, 0
      %p100 = por %p98, %p99
      %p101 = scmp.ne.s32.totalorder %s87, %s88
      %p102 = scmp.eq.s32.totalorder %s42, 3
      %p103 = por %p101, %p102
      %p105 = scmp.ne.s32.totalorder %s88, %s104
      %p106 = scmp.eq.s32.totalorder %s42, 0
      %p107 = por %p105, %p106
      %s108 = ssub.s32 %s43, %s55
      %p109 = scmp.eq.s32.totalorder %s108, 0
      %s111 = sadd.s32 %s110, 1
      %s112 = scalar_select %p109, %s110, %s111
      %p115 = pneg %p109
      %p116 = scmp.eq.s32.totalorder %s36, 3
      %p117 = por %p115, %p116
      %p118 = scmp.ne.s32.totalorder %s110, %s113
      %p119 = scmp.eq.s32.totalorder %s36, 0
      %p120 = por %p118, %p119
      %p121 = scmp.ne.s32.totalorder %s110, %s113
      %p122 = scmp.eq.s32.totalorder %s41, 3
      %p123 = por %p121, %p122
      %p124 = scmp.ne.s32.totalorder %s113, %s114
      %p125 = scmp.eq.s32.totalorder %s41, 0
      %p126 = por %p124, %p125
      %p127 = scmp.ne.s32.totalorder %s113, %s114
      %p128 = scmp.eq.s32.totalorder %s42, 3
      %p129 = por %p127, %p128
      %p131 = scmp.ne.s32.totalorder %s114, %s130
      %p132 = scmp.eq.s32.totalorder %s42, 0
      %p133 = por %p131, %p132
      %s134 = ssub.s32 %s43, %s55
      %p135 = scmp.eq.s32.totalorder %s134, 0
      %s137 = sadd.s32 %s136, 1
      %s138 = scalar_select %p135, %s136, %s137
      %p141 = pneg %p135
      %p142 = scmp.eq.s32.totalorder %s36, 3
      %p143 = por %p141, %p142
      %p144 = scmp.ne.s32.totalorder %s136, %s139
      %p145 = scmp.eq.s32.totalorder %s36, 0
      %p146 = por %p144, %p145
      %p147 = scmp.ne.s32.totalorder %s136, %s139
      %p148 = scmp.eq.s32.totalorder %s41, 3
      %p149 = por %p147, %p148
      %p150 = scmp.ne.s32.totalorder %s139, %s140
      %p151 = scmp.eq.s32.totalorder %s41, 0
      %p152 = por %p150, %p151
      %p153 = scmp.ne.s32.totalorder %s139, %s140
      %p154 = scmp.eq.s32.totalorder %s42, 3
      %p155 = por %p153, %p154
      %p157 = scmp.ne.s32.totalorder %s140, %s156
      %p158 = scmp.eq.s32.totalorder %s42, 0
      %p159 = por %p157, %p158
      %s160 = ssub.s32 %s43, %s55
      %p161 = scmp.eq.s32.totalorder %s160, 0
      %s163 = sadd.s32 %s162, 1
      %s164 = scalar_select %p161, %s162, %s163
      %p167 = pneg %p161
      %p168 = scmp.eq.s32.totalorder %s36, 3
      %p169 = por %p167, %p168
      %p170 = scmp.ne.s32.totalorder %s162, %s165
      %p171 = scmp.eq.s32.totalorder %s36, 0
      %p172 = por %p170, %p171
      %p173 = scmp.ne.s32.totalorder %s162, %s165
      %p174 = scmp.eq.s32.totalorder %s41, 3
      %p175 = por %p173, %p174
      %p176 = scmp.ne.s32.totalorder %s165, %s166
      %p177 = scmp.eq.s32.totalorder %s41, 0
      %p178 = por %p176, %p177
      %p179 = scmp.ne.s32.totalorder %s165, %s166
      %p180 = scmp.eq.s32.totalorder %s42, 3
      %p181 = por %p179, %p180
      %p183 = scmp.ne.s32.totalorder %s166, %s182
      %p184 = scmp.eq.s32.totalorder %s42, 0
      %p185 = por %p183, %p184
      %s186 = ssub.s32 %s44, %s51
      %p187 = scmp.eq.s32.totalorder %s186, 0
      %s189 = sadd.s32 %s188, 1
      %s190 = scalar_select %p187, %s188, %s189
      %p193 = pneg %p187
      %p194 = scmp.eq.s32.totalorder %s36, 3
      %p195 = por %p193, %p194
      %p196 = scmp.ne.s32.totalorder %s188, %s191
      %p197 = scmp.eq.s32.totalorder %s36, 0
      %p198 = por %p196, %p197
      %p199 = scmp.ne.s32.totalorder %s188, %s191
      %p200 = scmp.eq.s32.totalorder %s41, 3
      %p201 = por %p199, %p200
      %p202 = scmp.ne.s32.totalorder %s191, %s192
      %p203 = scmp.eq.s32.totalorder %s41, 0
      %p204 = por %p202, %p203
      %p205 = scmp.ne.s32.totalorder %s191, %s192
      %p206 = scmp.eq.s32.totalorder %s42, 3
      %p207 = por %p205, %p206
      %p209 = scmp.ne.s32.totalorder %s192, %s208
      %p210 = scmp.eq.s32.totalorder %s42, 0
      %p211 = por %p209, %p210
      %s212 = ssub.s32 %s44, %s51
      %p213 = scmp.eq.s32.totalorder %s212, 0
      %s215 = sadd.s32 %s214, 1
      %s216 = scalar_select %p213, %s214, %s215
      %p219 = pneg %p213
      %p220 = scmp.eq.s32.totalorder %s36, 3
      %p221 = por %p219, %p220
      %p222 = scmp.ne.s32.totalorder %s214, %s217
      %p223 = scmp.eq.s32.totalorder %s36, 0
      %p224 = por %p222, %p223
      %p225 = scmp.ne.s32.totalorder %s214, %s217
      %p226 = scmp.eq.s32.totalorder %s41, 3
      %p227 = por %p225, %p226
      %p228 = scmp.ne.s32.totalorder %s217, %s218
      %p229 = scmp.eq.s32.totalorder %s41, 0
      %p230 = por %p228, %p229
      %p231 = scmp.ne.s32.totalorder %s217, %s218
      %p232 = scmp.eq.s32.totalorder %s42, 3
      %p233 = por %p231, %p232
      %p235 = scmp.ne.s32.totalorder %s218, %s234
      %p236 = scmp.eq.s32.totalorder %s42, 0
      %p237 = por %p235, %p236
      %s238 = ssub.s32 %s44, %s51
      %p239 = scmp.eq.s32.totalorder %s238, 0
      %s241 = sadd.s32 %s240, 1
      %s242 = scalar_select %p239, %s240, %s241
      %p245 = pneg %p239
      %p246 = scmp.eq.s32.totalorder %s36, 3
      %p247 = por %p245, %p246
      %p248 = scmp.ne.s32.totalorder %s240, %s243
      %p249 = scmp.eq.s32.totalorder %s36, 0
      %p250 = por %p248, %p249
      %p251 = scmp.ne.s32.totalorder %s240, %s243
      %p252 = scmp.eq.s32.totalorder %s41, 3
      %p253 = por %p251, %p252
      %p254 = scmp.ne.s32.totalorder %s243, %s244
      %p255 = scmp.eq.s32.totalorder %s41, 0
      %p256 = por %p254, %p255
      %p257 = scmp.ne.s32.totalorder %s243, %s244
      %p258 = scmp.eq.s32.totalorder %s42, 3
      %p259 = por %p257, %p258
      %p261 = scmp.ne.s32.totalorder %s244, %s260
      %p262 = scmp.eq.s32.totalorder %s42, 0
      %p263 = por %p261, %p262
      %s264 = ssub.s32 %s44, %s51
      %p265 = scmp.eq.s32.totalorder %s264, 0
      %s267 = sadd.s32 %s266, 1
      %s268 = scalar_select %p265, %s266, %s267
      %p271 = pneg %p265
      %p272 = scmp.eq.s32.totalorder %s36, 3
      %p273 = por %p271, %p272
      %p274 = scmp.ne.s32.totalorder %s266, %s269
      %p275 = scmp.eq.s32.totalorder %s36, 0
      %p276 = por %p274, %p275
      %p277 = scmp.ne.s32.totalorder %s266, %s269
      %p278 = scmp.eq.s32.totalorder %s41, 3
      %p279 = por %p277, %p278
      %p280 = scmp.ne.s32.totalorder %s269, %s270
      %p281 = scmp.eq.s32.totalorder %s41, 0
      %p282 = por %p280, %p281
      %p283 = scmp.ne.s32.totalorder %s269, %s270
      %p284 = scmp.eq.s32.totalorder %s42, 3
      %p285 = por %p283, %p284
      %p287 = scmp.ne.s32.totalorder %s270, %s286
      %p288 = scmp.eq.s32.totalorder %s42, 0
      %p289 = por %p287, %p288
      %s290 = ssub.s32 %s44, %s51
      %p291 = scmp.eq.s32.totalorder %s290, 0
      %s293 = sadd.s32 %s292, 1
      %s294 = scalar_select %p291, %s292, %s293
      %p297 = pneg %p291
      %p298 = scmp.eq.s32.totalorder %s36, 3
      %p299 = por %p297, %p298
      %p300 = scmp.ne.s32.totalorder %s292, %s295
      %p301 = scmp.eq.s32.totalorder %s36, 0
      %p302 = por %p300, %p301
      %p303 = scmp.ne.s32.totalorder %s292, %s295
      %p304 = scmp.eq.s32.totalorder %s41, 3
      %p305 = por %p303, %p304
      %p306 = scmp.ne.s32.totalorder %s295, %s296
      %p307 = scmp.eq.s32.totalorder %s41, 0
      %p308 = por %p306, %p307
      %p309 = scmp.ne.s32.totalorder %s295, %s296
      %p310 = scmp.eq.s32.totalorder %s42, 3
      %p311 = por %p309, %p310
      %p313 = scmp.ne.s32.totalorder %s296, %s312
      %p314 = scmp.eq.s32.totalorder %s42, 0
      %p315 = por %p313, %p314
      %s316 = ssub.s32 %s44, %s51
      %p317 = scmp.eq.s32.totalorder %s316, 0
      %s319 = sadd.s32 %s318, 1
      %s320 = scalar_select %p317, %s318, %s319
      %p323 = pneg %p317
      %p324 = scmp.eq.s32.totalorder %s36, 3
      %p325 = por %p323, %p324
      %p326 = scmp.ne.s32.totalorder %s318, %s321
      %p327 = scmp.eq.s32.totalorder %s36, 0
      %p328 = por %p326, %p327
      %p329 = scmp.ne.s32.totalorder %s318, %s321
      %p330 = scmp.eq.s32.totalorder %s41, 3
      %p331 = por %p329, %p330
      %p332 = scmp.ne.s32.totalorder %s321, %s322
      %p333 = scmp.eq.s32.totalorder %s41, 0
      %p334 = por %p332, %p333
      %p335 = scmp.ne.s32.totalorder %s321, %s322
      %p336 = scmp.eq.s32.totalorder %s42, 3
      %p337 = por %p335, %p336
      %p339 = scmp.ne.s32.totalorder %s322, %s338
      %p340 = scmp.eq.s32.totalorder %s42, 0
      %p341 = por %p339, %p340
      %s342 = ssub.s32 %s44, %s51
      %p343 = scmp.eq.s32.totalorder %s342, 0
      %s345 = sadd.s32 %s344, 1
      %s346 = scalar_select %p343, %s344, %s345
      %p349 = pneg %p343
      %p350 = scmp.eq.s32.totalorder %s36, 3
      %p351 = por %p349, %p350
      %p352 = scmp.ne.s32.totalorder %s344, %s347
      %p353 = scmp.eq.s32.totalorder %s36, 0
      %p354 = por %p352, %p353
      %p355 = scmp.ne.s32.totalorder %s344, %s347
      %p356 = scmp.eq.s32.totalorder %s41, 3
      %p357 = por %p355, %p356
      %p358 = scmp.ne.s32.totalorder %s347, %s348
      %p359 = scmp.eq.s32.totalorder %s41, 0
      %p360 = por %p358, %p359
      %p361 = scmp.ne.s32.totalorder %s347, %s348
      %p362 = scmp.eq.s32.totalorder %s42, 3
      %p363 = por %p361, %p362
      %p365 = scmp.ne.s32.totalorder %s348, %s364
      %p366 = scmp.eq.s32.totalorder %s42, 0
      %p367 = por %p365, %p366
      %s368 = ssub.s32 %s44, %s51
      %p369 = scmp.eq.s32.totalorder %s368, 0
      %s371 = sadd.s32 %s370, 1
      %s372 = scalar_select %p369, %s370, %s371
      %p375 = pneg %p369
      %p376 = scmp.eq.s32.totalorder %s36, 3
      %p377 = por %p375, %p376
      %p378 = scmp.ne.s32.totalorder %s370, %s373
      %p379 = scmp.eq.s32.totalorder %s36, 0
      %p380 = por %p378, %p379
      %p381 = scmp.ne.s32.totalorder %s370, %s373
      %p382 = scmp.eq.s32.totalorder %s41, 3
      %p383 = por %p381, %p382
      %p384 = scmp.ne.s32.totalorder %s373, %s374
      %p385 = scmp.eq.s32.totalorder %s41, 0
      %p386 = por %p384, %p385
      %p387 = scmp.ne.s32.totalorder %s373, %s374
      %p388 = scmp.eq.s32.totalorder %s42, 3
      %p389 = por %p387, %p388
      %p391 = scmp.ne.s32.totalorder %s374, %s390
      %p392 = scmp.eq.s32.totalorder %s42, 0
      %p393 = por %p391, %p392
      %s394 = ssub.s32 %s44, %s51
      %p395 = scmp.eq.s32.totalorder %s394, 0
      %s397 = sadd.s32 %s396, 1
      %s398 = scalar_select %p395, %s396, %s397
      %p401 = pneg %p395
      %p402 = scmp.eq.s32.totalorder %s36, 3
      %p403 = por %p401, %p402
      %p404 = scmp.ne.s32.totalorder %s396, %s399
      %p405 = scmp.eq.s32.totalorder %s36, 0
      %p406 = por %p404, %p405
      %p407 = scmp.ne.s32.totalorder %s396, %s399
      %p408 = scmp.eq.s32.totalorder %s41, 3
      %p409 = por %p407, %p408
      %p410 = scmp.ne.s32.totalorder %s399, %s400
      %p411 = scmp.eq.s32.totalorder %s41, 0
      %p412 = por %p410, %p411
      %p413 = scmp.ne.s32.totalorder %s399, %s400
      %p414 = scmp.eq.s32.totalorder %s42, 3
      %p415 = por %p413, %p414
      %p417 = scmp.ne.s32.totalorder %s400, %s416
      %p418 = scmp.eq.s32.totalorder %s42, 0
      %p419 = por %p417, %p418
      %s420 = ssub.s32 %s44, %s51
      %p421 = scmp.eq.s32.totalorder %s420, 0
      %s423 = sadd.s32 %s422, 1
      %s424 = scalar_select %p421, %s422, %s423
      %p427 = pneg %p421
      %p428 = scmp.eq.s32.totalorder %s36, 3
      %p429 = por %p427, %p428
      %p430 = scmp.ne.s32.totalorder %s422, %s425
      %p431 = scmp.eq.s32.totalorder %s36, 0
      %p432 = por %p430, %p431
      %p433 = scmp.ne.s32.totalorder %s422, %s425
      %p434 = scmp.eq.s32.totalorder %s41, 3
      %p435 = por %p433, %p434
      %p436 = scmp.ne.s32.totalorder %s425, %s426
      %p437 = scmp.eq.s32.totalorder %s41, 0
      %p438 = por %p436, %p437
      %p439 = scmp.ne.s32.totalorder %s425, %s426
      %p440 = scmp.eq.s32.totalorder %s42, 3
      %p441 = por %p439, %p440
      %p443 = scmp.ne.s32.totalorder %s426, %s442
      %p444 = scmp.eq.s32.totalorder %s42, 0
      %p445 = por %p443, %p444
      %s446 = ssub.s32 %s44, %s51
      %p447 = scmp.eq.s32.totalorder %s446, 0
      %s449 = sadd.s32 %s448, 1
      %s450 = scalar_select %p447, %s448, %s449
      %p453 = pneg %p447
      %p454 = scmp.eq.s32.totalorder %s36, 3
      %p455 = por %p453, %p454
      %p456 = scmp.ne.s32.totalorder %s448, %s451
      %p457 = scmp.eq.s32.totalorder %s36, 0
      %p458 = por %p456, %p457
      %p459 = scmp.ne.s32.totalorder %s448, %s451
      %p460 = scmp.eq.s32.totalorder %s41, 3
      %p461 = por %p459, %p460
      %p462 = scmp.ne.s32.totalorder %s451, %s452
      %p463 = scmp.eq.s32.totalorder %s41, 0
      %p464 = por %p462, %p463
      %p465 = scmp.ne.s32.totalorder %s451, %s452
      %p466 = scmp.eq.s32.totalorder %s42, 3
      %p467 = por %p465, %p466
      %p469 = scmp.ne.s32.totalorder %s452, %s468
      %p470 = scmp.eq.s32.totalorder %s42, 0
      %p471 = por %p469, %p470
      %s472 = ssub.s32 %s44, %s51
      %p473 = scmp.eq.s32.totalorder %s472, 0
      %s475 = sadd.s32 %s474, 1
      %s476 = scalar_select %p473, %s474, %s475
      %p479 = pneg %p473
      %p480 = scmp.eq.s32.totalorder %s36, 3
      %p481 = por %p479, %p480
      %p482 = scmp.ne.s32.totalorder %s474, %s477
      %p483 = scmp.eq.s32.totalorder %s36, 0
      %p484 = por %p482, %p483
      %p485 = scmp.ne.s32.totalorder %s474, %s477
      %p486 = scmp.eq.s32.totalorder %s41, 3
      %p487 = por %p485, %p486
      %p488 = scmp.ne.s32.totalorder %s477, %s478
      %p489 = scmp.eq.s32.totalorder %s41, 0
      %p490 = por %p488, %p489
      %p491 = scmp.ne.s32.totalorder %s477, %s478
      %p492 = scmp.eq.s32.totalorder %s42, 3
      %p493 = por %p491, %p492
      %p495 = scmp.ne.s32.totalorder %s478, %s494
      %p496 = scmp.eq.s32.totalorder %s42, 0
      %p497 = por %p495, %p496
      %s498 = ssub.s32 %s44, %s51
      %p499 = scmp.eq.s32.totalorder %s498, 0
      %s501 = sadd.s32 %s500, 1
      %s502 = scalar_select %p499, %s500, %s501
      %p505 = pneg %p499
      %p506 = scmp.eq.s32.totalorder %s36, 3
      %p507 = por %p505, %p506
      %p508 = scmp.ne.s32.totalorder %s500, %s503
      %p509 = scmp.eq.s32.totalorder %s36, 0
      %p510 = por %p508, %p509
      %p511 = scmp.ne.s32.totalorder %s500, %s503
      %p512 = scmp.eq.s32.totalorder %s41, 3
      %p513 = por %p511, %p512
      %p514 = scmp.ne.s32.totalorder %s503, %s504
      %p515 = scmp.eq.s32.totalorder %s41, 0
      %p516 = por %p514, %p515
      %p517 = scmp.ne.s32.totalorder %s503, %s504
      %p518 = scmp.eq.s32.totalorder %s42, 3
      %p519 = por %p517, %p518
      %p521 = scmp.ne.s32.totalorder %s504, %s520
      %p522 = scmp.eq.s32.totalorder %s42, 0
      %p523 = por %p521, %p522
      %s524 = ssub.s32 %s44, %s51
      %p525 = scmp.eq.s32.totalorder %s524, 0
      %s527 = sadd.s32 %s526, 1
      %s528 = scalar_select %p525, %s526, %s527
      %p531 = pneg %p525
      %p532 = scmp.eq.s32.totalorder %s36, 3
      %p533 = por %p531, %p532
      %p534 = scmp.ne.s32.totalorder %s526, %s529
      %p535 = scmp.eq.s32.totalorder %s36, 0
      %p536 = por %p534, %p535
      %p537 = scmp.ne.s32.totalorder %s526, %s529
      %p538 = scmp.eq.s32.totalorder %s41, 3
      %p539 = por %p537, %p538
      %p540 = scmp.ne.s32.totalorder %s529, %s530
      %p541 = scmp.eq.s32.totalorder %s41, 0
      %p542 = por %p540, %p541
      %p543 = scmp.ne.s32.totalorder %s529, %s530
      %p544 = scmp.eq.s32.totalorder %s42, 3
      %p545 = por %p543, %p544
      %p547 = scmp.ne.s32.totalorder %s530, %s546
      %p548 = scmp.eq.s32.totalorder %s42, 0
      %p549 = por %p547, %p548
      %s550 = ssub.s32 %s44, %s51
      %p551 = scmp.eq.s32.totalorder %s550, 0
      %s553 = sadd.s32 %s552, 1
      %s554 = scalar_select %p551, %s552, %s553
      %p557 = pneg %p551
      %p558 = scmp.eq.s32.totalorder %s36, 3
      %p559 = por %p557, %p558
      %p560 = scmp.ne.s32.totalorder %s552, %s555
      %p561 = scmp.eq.s32.totalorder %s36, 0
      %p562 = por %p560, %p561
      %p563 = scmp.ne.s32.totalorder %s552, %s555
      %p564 = scmp.eq.s32.totalorder %s41, 3
      %p565 = por %p563, %p564
      %p566 = scmp.ne.s32.totalorder %s555, %s556
      %p567 = scmp.eq.s32.totalorder %s41, 0
      %p568 = por %p566, %p567
      %p569 = scmp.ne.s32.totalorder %s555, %s556
      %p570 = scmp.eq.s32.totalorder %s42, 3
      %p571 = por %p569, %p570
      %p573 = scmp.ne.s32.totalorder %s556, %s572
      %p574 = scmp.eq.s32.totalorder %s42, 0
      %p575 = por %p573, %p574
      %s576 = ssub.s32 %s44, %s51
      %p577 = scmp.eq.s32.totalorder %s576, 0
      %s579 = sadd.s32 %s578, 1
      %s580 = scalar_select %p577, %s578, %s579
      %p583 = pneg %p577
      %p584 = scmp.eq.s32.totalorder %s36, 3
      %p585 = por %p583, %p584
      %p586 = scmp.ne.s32.totalorder %s578, %s581
      %p587 = scmp.eq.s32.totalorder %s36, 0
      %p588 = por %p586, %p587
      %p589 = scmp.ne.s32.totalorder %s578, %s581
      %p590 = scmp.eq.s32.totalorder %s41, 3
      %p591 = por %p589, %p590
      %p592 = scmp.ne.s32.totalorder %s581, %s582
      %p593 = scmp.eq.s32.totalorder %s41, 0
      %p594 = por %p592, %p593
      %p595 = scmp.ne.s32.totalorder %s581, %s582
      %p596 = scmp.eq.s32.totalorder %s42, 3
      %p597 = por %p595, %p596
      %p599 = scmp.ne.s32.totalorder %s582, %s598
      %p600 = scmp.eq.s32.totalorder %s42, 0
      %p601 = por %p599, %p600
      %s602 = ssub.s32 %s44, %s51
      %p603 = scmp.eq.s32.totalorder %s602, 0
      %s605 = sadd.s32 %s604, 1
      %s606 = scalar_select %p603, %s604, %s605
      %p609 = pneg %p603
      %p610 = scmp.eq.s32.totalorder %s36, 3
      %p611 = por %p609, %p610
      %p612 = scmp.ne.s32.totalorder %s604, %s607
      %p613 = scmp.eq.s32.totalorder %s36, 0
      %p614 = por %p612, %p613
      %p615 = scmp.ne.s32.totalorder %s604, %s607
      %p616 = scmp.eq.s32.totalorder %s41, 3
      %p617 = por %p615, %p616
      %p618 = scmp.ne.s32.totalorder %s607, %s608
      %p619 = scmp.eq.s32.totalorder %s41, 0
      %p620 = por %p618, %p619
      %p621 = scmp.ne.s32.totalorder %s607, %s608
      %p622 = scmp.eq.s32.totalorder %s42, 3
      %p623 = por %p621, %p622
      %p625 = scmp.ne.s32.totalorder %s608, %s624
      %p626 = scmp.eq.s32.totalorder %s42, 0
      %p627 = por %p625, %p626
      %s628 = ssub.s32 %s44, %s51
      %p629 = scmp.eq.s32.totalorder %s628, 0
      %s631 = sadd.s32 %s630, 1
      %s632 = scalar_select %p629, %s630, %s631
      %p635 = pneg %p629
      %p636 = scmp.eq.s32.totalorder %s36, 3
      %p637 = por %p635, %p636
      %p638 = scmp.ne.s32.totalorder %s630, %s633
      %p639 = scmp.eq.s32.totalorder %s36, 0
      %p640 = por %p638, %p639
      %p641 = scmp.ne.s32.totalorder %s630, %s633
      %p642 = scmp.eq.s32.totalorder %s41, 3
      %p643 = por %p641, %p642
      %p644 = scmp.ne.s32.totalorder %s633, %s634
      %p645 = scmp.eq.s32.totalorder %s41, 0
      %p646 = por %p644, %p645
      %p647 = scmp.ne.s32.totalorder %s633, %s634
      %p648 = scmp.eq.s32.totalorder %s42, 3
      %p649 = por %p647, %p648
      %p651 = scmp.ne.s32.totalorder %s634, %s650
      %p652 = scmp.eq.s32.totalorder %s42, 0
      %p653 = por %p651, %p652
      %s654 = ssub.s32 %s44, %s51
      %p655 = scmp.eq.s32.totalorder %s654, 0
      %s657 = sadd.s32 %s656, 1
      %s658 = scalar_select %p655, %s656, %s657
      %p661 = pneg %p655
      %p662 = scmp.eq.s32.totalorder %s36, 3
      %p663 = por %p661, %p662
      %p664 = scmp.ne.s32.totalorder %s656, %s659
      %p665 = scmp.eq.s32.totalorder %s36, 0
      %p666 = por %p664, %p665
      %p667 = scmp.ne.s32.totalorder %s656, %s659
      %p668 = scmp.eq.s32.totalorder %s41, 3
      %p669 = por %p667, %p668
      %p670 = scmp.ne.s32.totalorder %s659, %s660
      %p671 = scmp.eq.s32.totalorder %s41, 0
      %p672 = por %p670, %p671
      %p673 = scmp.ne.s32.totalorder %s659, %s660
      %p674 = scmp.eq.s32.totalorder %s42, 3
      %p675 = por %p673, %p674
      %p677 = scmp.ne.s32.totalorder %s660, %s676
      %p678 = scmp.eq.s32.totalorder %s42, 0
      %p679 = por %p677, %p678
      %s680 = ssub.s32 %s44, %s51
      %p681 = scmp.eq.s32.totalorder %s680, 0
      %s683 = sadd.s32 %s682, 1
      %s684 = scalar_select %p681, %s682, %s683
      %p687 = pneg %p681
      %p688 = scmp.eq.s32.totalorder %s36, 3
      %p689 = por %p687, %p688
      %p690 = scmp.ne.s32.totalorder %s682, %s685
      %p691 = scmp.eq.s32.totalorder %s36, 0
      %p692 = por %p690, %p691
      %p693 = scmp.ne.s32.totalorder %s682, %s685
      %p694 = scmp.eq.s32.totalorder %s41, 3
      %p695 = por %p693, %p694
      %p696 = scmp.ne.s32.totalorder %s685, %s686
      %p697 = scmp.eq.s32.totalorder %s41, 0
      %p698 = por %p696, %p697
      %p699 = scmp.ne.s32.totalorder %s685, %s686
      %p700 = scmp.eq.s32.totalorder %s42, 3
      %p701 = por %p699, %p700
      %p703 = scmp.ne.s32.totalorder %s686, %s702
      %p704 = scmp.eq.s32.totalorder %s42, 0
      %p705 = por %p703, %p704
      %s707 = sadd.s32 %s706, 1
      %p710 = scmp.eq.s32.totalorder %s36, 3
      %p711 = scmp.ne.s32.totalorder %s706, %s708
      %p712 = scmp.eq.s32.totalorder %s36, 0
      %p713 = por %p711, %p712
      %p714 = scmp.ne.s32.totalorder %s706, %s708
      %p715 = scmp.eq.s32.totalorder %s41, 3
      %p716 = por %p714, %p715
      %p717 = scmp.ne.s32.totalorder %s708, %s709
      %p718 = scmp.eq.s32.totalorder %s41, 0
      %p719 = por %p717, %p718
      %p720 = scmp.ne.s32.totalorder %s708, %s709
      %p721 = scmp.eq.s32.totalorder %s42, 3
      %p722 = por %p720, %p721
      %p724 = scmp.ne.s32.totalorder %s709, %s723
      %p725 = scmp.eq.s32.totalorder %s42, 0
      %p726 = por %p724, %p725
      %s728 = sadd.s32 %s727, 1
      %p731 = scmp.eq.s32.totalorder %s36, 3
      %p732 = scmp.ne.s32.totalorder %s727, %s729
      %p733 = scmp.eq.s32.totalorder %s36, 0
      %p734 = por %p732, %p733
      %p735 = scmp.ne.s32.totalorder %s727, %s729
      %p736 = scmp.eq.s32.totalorder %s41, 3
      %p737 = por %p735, %p736
      %p738 = scmp.ne.s32.totalorder %s729, %s730
      %p739 = scmp.eq.s32.totalorder %s41, 0
      %p740 = por %p738, %p739
      %p741 = scmp.ne.s32.totalorder %s729, %s730
      %p742 = scmp.eq.s32.totalorder %s42, 3
      %p743 = por %p741, %p742
      %p745 = scmp.ne.s32.totalorder %s730, %s744
      %p746 = scmp.eq.s32.totalorder %s42, 0
      %p747 = por %p745, %p746
      %s748 = ssub.s32 %s44, %s51
      %s749 = ssub.s32 %s43, %s55
      %s750 = sor.u32 %s748, %s749
      %p751 = scmp.eq.s32.totalorder %s750, 0
      %s753 = sadd.s32 %s752, 1
      %s754 = scalar_select %p751, %s752, %s753
      %p757 = pneg %p751
      %p758 = scmp.eq.s32.totalorder %s36, 3
      %p759 = por %p757, %p758
      %p760 = scmp.ne.s32.totalorder %s752, %s755
      %p761 = scmp.eq.s32.totalorder %s36, 0
      %p762 = por %p760, %p761
      %p763 = scmp.ne.s32.totalorder %s752, %s755
      %p764 = scmp.eq.s32.totalorder %s41, 3
      %p765 = por %p763, %p764
      %p766 = scmp.ne.s32.totalorder %s755, %s756
      %p767 = scmp.eq.s32.totalorder %s41, 0
      %p768 = por %p766, %p767
      %p769 = scmp.ne.s32.totalorder %s755, %s756
      %p770 = scmp.eq.s32.totalorder %s42, 3
      %p771 = por %p769, %p770
      %p773 = scmp.ne.s32.totalorder %s756, %s772
      %p774 = scmp.eq.s32.totalorder %s42, 0
      %p775 = por %p773, %p774
      %p776 = scmp.le.s32.totalorder 1, %s36
      %p777 = scmp.lt.s32.totalorder %s36, 5
      %p778 = pnand %p776, %p777
      %p779 = pneg %p778
      // Predicated region
      $region9: #{tpu_custom_call.1} parent=5 // pred_check
        _
      $region10: #{tpu_custom_call.1} parent=5 // pred_check_branch
        %781 = sbr.rel (%p778) target = $region12
      $region11: #{tpu_custom_call.1} parent=5 // pred_region
        %s782 = ssub.s32 %s36, 1
        // Predicated region
        $region13: #{tpu_custom_call.1} parent=11 // pred_check
          %p783 = pneg %p719
        $region14: #{tpu_custom_call.1} parent=11 // pred_check_branch
          %785 = sbr.rel (%p783) target = $region16
        $region15: #{tpu_custom_call.1} parent=11 // pred_region
          _
        $region16: #{tpu_custom_call.1} parent=11 // pred_fallthru
          _
        // Predicated region
        $region17: #{tpu_custom_call.1} parent=11 // pred_check
          %p786 = pneg %p740
        $region18: #{tpu_custom_call.1} parent=11 // pred_check_branch
          %788 = sbr.rel (%p786) target = $region20
        $region19: #{tpu_custom_call.1} parent=11 // pred_region
          _
        $region20: #{tpu_custom_call.1} parent=11 // pred_fallthru
          _
      $region12: #{tpu_custom_call.1} parent=5 // pred_fallthru
        _
      %p789 = scmp.lt.s32.totalorder %s36, 4
      // Predicated region
      $region21: #{tpu_custom_call.1} parent=5 // pred_check
        %p790 = pneg %p789
      $region22: #{tpu_custom_call.1} parent=5 // pred_check_branch
        %792 = sbr.rel (%p790) target = $region24
      $region23: #{tpu_custom_call.1} parent=5 // pred_region
        // Predicated region
        $region25: #{tpu_custom_call.1} parent=23 // pred_check
          %p793 = pneg %p68
        $region26: #{tpu_custom_call.1} parent=23 // pred_check_branch
          %795 = sbr.rel (%p793) target = $region28
        $region27: #{tpu_custom_call.1} parent=23 // pred_region
          %p796 = scmp.lt.s32.totalorder %s43, 1
          %s797 = scalar_select %p796, %s43, 1
          %s798 = smul.addr %s797, 8
          %s799 = scalar_lea.vmem %s0, %s798
        $region28: #{tpu_custom_call.1} parent=23 // pred_fallthru
          _
        // Predicated region
        $region29: #{tpu_custom_call.1} parent=23 // pred_check
          %p800 = pneg %p94
        $region30: #{tpu_custom_call.1} parent=23 // pred_check_branch
          %802 = sbr.rel (%p800) target = $region32
        $region31: #{tpu_custom_call.1} parent=23 // pred_region
          %p803 = scmp.lt.s32.totalorder %s43, 1
          %s804 = scalar_select %p803, %s43, 1
          %s805 = smul.addr %s804, 8
          %s806 = scalar_lea.vmem %s1, %s805
        $region32: #{tpu_custom_call.1} parent=23 // pred_fallthru
          _
        // Predicated region
        $region33: #{tpu_custom_call.1} parent=23 // pred_check
          %p807 = pneg %p120
        $region34: #{tpu_custom_call.1} parent=23 // pred_check_branch
          %809 = sbr.rel (%p807) target = $region36
        $region35: #{tpu_custom_call.1} parent=23 // pred_region
          %p810 = scmp.lt.s32.totalorder %s43, 1
          %s811 = scalar_select %p810, %s43, 1
          %s812 = smul.addr %s811, 16
          %s813 = smul.addr %s812, 4
          %s814 = scalar_lea.vmem %s2, %s813
        $region36: #{tpu_custom_call.1} parent=23 // pred_fallthru
          _
        // Predicated region
        $region37: #{tpu_custom_call.1} parent=23 // pred_check
          %p815 = pneg %p146
        $region38: #{tpu_custom_call.1} parent=23 // pred_check_branch
          %817 = sbr.rel (%p815) target = $region40
        $region39: #{tpu_custom_call.1} parent=23 // pred_region
          %p818 = scmp.lt.s32.totalorder %s43, 1
          %s819 = scalar_select %p818, %s43, 1
          %s820 = smul.addr %s819, 16
          %s821 = smul.addr %s820, 4
          %s822 = scalar_lea.vmem %s3, %s821
        $region40: #{tpu_custom_call.1} parent=23 // pred_fallthru
          _
        // Predicated region
        $region41: #{tpu_custom_call.1} parent=23 // pred_check
          %p823 = pneg %p172
        $region42: #{tpu_custom_call.1} parent=23 // pred_check_branch
          %825 = sbr.rel (%p823) target = $region44
        $region43: #{tpu_custom_call.1} parent=23 // pred_region
          %p826 = scmp.lt.s32.totalorder %s43, 1
          %s827 = scalar_select %p826, %s43, 1
          %s828 = scalar_lea.vmem %s4, %s827
        $region44: #{tpu_custom_call.1} parent=23 // pred_fallthru
          _
        // Predicated region
        $region45: #{tpu_custom_call.1} parent=23 // pred_check
          %p829 = pneg %p198
        $region46: #{tpu_custom_call.1} parent=23 // pred_check_branch
          %831 = sbr.rel (%p829) target = $region48
        $region47: #{tpu_custom_call.1} parent=23 // pred_region
          %p832 = scmp.lt.s32.totalorder %s44, 1
          %s833 = scalar_select %p832, %s44, 1
          %s834 = smul.addr %s833, 4
          %s835 = smul.addr %s834, 4
          %s836 = scalar_lea.vmem %s5, %s835
        $region48: #{tpu_custom_call.1} parent=23 // pred_fallthru
          _
        // Predicated region
        $region49: #{tpu_custom_call.1} parent=23 // pred_check
          %p837 = pneg %p224
        $region50: #{tpu_custom_call.1} parent=23 // pred_check_branch
          %839 = sbr.rel (%p837) target = $region52
        $region51: #{tpu_custom_call.1} parent=23 // pred_region
          %p840 = scmp.lt.s32.totalorder %s44, 1
          %s841 = scalar_select %p840, %s44, 1
          %s842 = scalar_lea.vmem %s6, %s841
        $region52: #{tpu_custom_call.1} parent=23 // pred_fallthru
          _
        // Predicated region
        $region53: #{tpu_custom_call.1} parent=23 // pred_check
          %p843 = pneg %p250
        $region54: #{tpu_custom_call.1} parent=23 // pred_check_branch
          %845 = sbr.rel (%p843) target = $region56
        $region55: #{tpu_custom_call.1} parent=23 // pred_region
          %p846 = scmp.lt.s32.totalorder %s44, 1
          %s847 = scalar_select %p846, %s44, 1
          %s848 = smul.addr %s847, 4
          %s849 = smul.addr %s848, 4
          %s850 = scalar_lea.vmem %s7, %s849
        $region56: #{tpu_custom_call.1} parent=23 // pred_fallthru
          _
        // Predicated region
        $region57: #{tpu_custom_call.1} parent=23 // pred_check
          %p851 = pneg %p276
        $region58: #{tpu_custom_call.1} parent=23 // pred_check_branch
          %853 = sbr.rel (%p851) target = $region60
        $region59: #{tpu_custom_call.1} parent=23 // pred_region
          %p854 = scmp.lt.s32.totalorder %s44, 1
          %s855 = scalar_select %p854, %s44, 1
          %s856 = scalar_lea.vmem %s8, %s855
        $region60: #{tpu_custom_call.1} parent=23 // pred_fallthru
          _
        // Predicated region
        $region61: #{tpu_custom_call.1} parent=23 // pred_check
          %p857 = pneg %p302
        $region62: #{tpu_custom_call.1} parent=23 // pred_check_branch
          %859 = sbr.rel (%p857) target = $region64
        $region63: #{tpu_custom_call.1} parent=23 // pred_region
          %p860 = scmp.lt.s32.totalorder %s44, 1
          %s861 = scalar_select %p860, %s44, 1
          %s862 = smul.addr %s861, 4
          %s863 = smul.addr %s862, 4
          %s864 = scalar_lea.vmem %s9, %s863
        $region64: #{tpu_custom_call.1} parent=23 // pred_fallthru
          _
        // Predicated region
        $region65: #{tpu_custom_call.1} parent=23 // pred_check
          %p865 = pneg %p328
        $region66: #{tpu_custom_call.1} parent=23 // pred_check_branch
          %867 = sbr.rel (%p865) target = $region68
        $region67: #{tpu_custom_call.1} parent=23 // pred_region
          %p868 = scmp.lt.s32.totalorder %s44, 1
          %s869 = scalar_select %p868, %s44, 1
          %s870 = scalar_lea.vmem %s10, %s869
        $region68: #{tpu_custom_call.1} parent=23 // pred_fallthru
          _
        // Predicated region
        $region69: #{tpu_custom_call.1} parent=23 // pred_check
          %p871 = pneg %p354
        $region70: #{tpu_custom_call.1} parent=23 // pred_check_branch
          %873 = sbr.rel (%p871) target = $region72
        $region71: #{tpu_custom_call.1} parent=23 // pred_region
          %p874 = scmp.lt.s32.totalorder %s44, 1
          %s875 = scalar_select %p874, %s44, 1
          %s876 = smul.addr %s875, 4
          %s877 = smul.addr %s876, 4
          %s878 = scalar_lea.vmem %s11, %s877
        $region72: #{tpu_custom_call.1} parent=23 // pred_fallthru
          _
        // Predicated region
        $region73: #{tpu_custom_call.1} parent=23 // pred_check
          %p879 = pneg %p380
        $region74: #{tpu_custom_call.1} parent=23 // pred_check_branch
          %881 = sbr.rel (%p879) target = $region76
        $region75: #{tpu_custom_call.1} parent=23 // pred_region
          %p882 = scmp.lt.s32.totalorder %s44, 1
          %s883 = scalar_select %p882, %s44, 1
          %s884 = scalar_lea.vmem %s12, %s883
        $region76: #{tpu_custom_call.1} parent=23 // pred_fallthru
          _
        // Predicated region
        $region77: #{tpu_custom_call.1} parent=23 // pred_check
          %p885 = pneg %p406
        $region78: #{tpu_custom_call.1} parent=23 // pred_check_branch
          %887 = sbr.rel (%p885) target = $region80
        $region79: #{tpu_custom_call.1} parent=23 // pred_region
          %p888 = scmp.lt.s32.totalorder %s44, 1
          %s889 = scalar_select %p888, %s44, 1
          %s890 = smul.addr %s889, 4
          %s891 = smul.addr %s890, 4
          %s892 = scalar_lea.vmem %s13, %s891
        $region80: #{tpu_custom_call.1} parent=23 // pred_fallthru
          _
        // Predicated region
        $region81: #{tpu_custom_call.1} parent=23 // pred_check
          %p893 = pneg %p432
        $region82: #{tpu_custom_call.1} parent=23 // pred_check_branch
          %895 = sbr.rel (%p893) target = $region84
        $region83: #{tpu_custom_call.1} parent=23 // pred_region
          %p896 = scmp.lt.s32.totalorder %s44, 1
          %s897 = scalar_select %p896, %s44, 1
          %s898 = scalar_lea.vmem %s14, %s897
        $region84: #{tpu_custom_call.1} parent=23 // pred_fallthru
          _
        // Predicated region
        $region85: #{tpu_custom_call.1} parent=23 // pred_check
          %p899 = pneg %p458
        $region86: #{tpu_custom_call.1} parent=23 // pred_check_branch
          %901 = sbr.rel (%p899) target = $region88
        $region87: #{tpu_custom_call.1} parent=23 // pred_region
          %p902 = scmp.lt.s32.totalorder %s44, 1
          %s903 = scalar_select %p902, %s44, 1
          %s904 = smul.addr %s903, 4
          %s905 = smul.addr %s904, 4
          %s906 = scalar_lea.vmem %s15, %s905
        $region88: #{tpu_custom_call.1} parent=23 // pred_fallthru
          _
        // Predicated region
        $region89: #{tpu_custom_call.1} parent=23 // pred_check
          %p907 = pneg %p484
        $region90: #{tpu_custom_call.1} parent=23 // pred_check_branch
          %909 = sbr.rel (%p907) target = $region92
        $region91: #{tpu_custom_call.1} parent=23 // pred_region
          %p910 = scmp.lt.s32.totalorder %s44, 1
          %s911 = scalar_select %p910, %s44, 1
          %s912 = scalar_lea.vmem %s16, %s911
        $region92: #{tpu_custom_call.1} parent=23 // pred_fallthru
          _
        // Predicated region
        $region93: #{tpu_custom_call.1} parent=23 // pred_check
          %p913 = pneg %p510
        $region94: #{tpu_custom_call.1} parent=23 // pred_check_branch
          %915 = sbr.rel (%p913) target = $region96
        $region95: #{tpu_custom_call.1} parent=23 // pred_region
          %p916 = scmp.lt.s32.totalorder %s44, 1
          %s917 = scalar_select %p916, %s44, 1
          %s918 = smul.addr %s917, 4
          %s919 = smul.addr %s918, 4
          %s920 = scalar_lea.vmem %s17, %s919
        $region96: #{tpu_custom_call.1} parent=23 // pred_fallthru
          _
        // Predicated region
        $region97: #{tpu_custom_call.1} parent=23 // pred_check
          %p921 = pneg %p536
        $region98: #{tpu_custom_call.1} parent=23 // pred_check_branch
          %923 = sbr.rel (%p921) target = $region100
        $region99: #{tpu_custom_call.1} parent=23 // pred_region
          %p924 = scmp.lt.s32.totalorder %s44, 1
          %s925 = scalar_select %p924, %s44, 1
          %s926 = scalar_lea.vmem %s18, %s925
        $region100: #{tpu_custom_call.1} parent=23 // pred_fallthru
          _
        // Predicated region
        $region101: #{tpu_custom_call.1} parent=23 // pred_check
          %p927 = pneg %p562
        $region102: #{tpu_custom_call.1} parent=23 // pred_check_branch
          %929 = sbr.rel (%p927) target = $region104
        $region103: #{tpu_custom_call.1} parent=23 // pred_region
          %p930 = scmp.lt.s32.totalorder %s44, 1
          %s931 = scalar_select %p930, %s44, 1
          %s932 = smul.addr %s931, 4
          %s933 = smul.addr %s932, 4
          %s934 = scalar_lea.vmem %s19, %s933
        $region104: #{tpu_custom_call.1} parent=23 // pred_fallthru
          _
        // Predicated region
        $region105: #{tpu_custom_call.1} parent=23 // pred_check
          %p935 = pneg %p588
        $region106: #{tpu_custom_call.1} parent=23 // pred_check_branch
          %937 = sbr.rel (%p935) target = $region108
        $region107: #{tpu_custom_call.1} parent=23 // pred_region
          %p938 = scmp.lt.s32.totalorder %s44, 1
          %s939 = scalar_select %p938, %s44, 1
          %s940 = scalar_lea.vmem %s20, %s939
        $region108: #{tpu_custom_call.1} parent=23 // pred_fallthru
          _
        // Predicated region
        $region109: #{tpu_custom_call.1} parent=23 // pred_check
          %p941 = pneg %p614
        $region110: #{tpu_custom_call.1} parent=23 // pred_check_branch
          %943 = sbr.rel (%p941) target = $region112
        $region111: #{tpu_custom_call.1} parent=23 // pred_region
          %p944 = scmp.lt.s32.totalorder %s44, 1
          %s945 = scalar_select %p944, %s44, 1
          %s946 = smul.addr %s945, 8
          %s947 = smul.addr %s946, 4
          %s948 = scalar_lea.vmem %s21, %s947
        $region112: #{tpu_custom_call.1} parent=23 // pred_fallthru
          _
        // Predicated region
        $region113: #{tpu_custom_call.1} parent=23 // pred_check
          %p949 = pneg %p640
        $region114: #{tpu_custom_call.1} parent=23 // pred_check_branch
          %951 = sbr.rel (%p949) target = $region116
        $region115: #{tpu_custom_call.1} parent=23 // pred_region
          %p952 = scmp.lt.s32.totalorder %s44, 1
          %s953 = scalar_select %p952, %s44, 1
          %s954 = scalar_lea.vmem %s22, %s953
        $region116: #{tpu_custom_call.1} parent=23 // pred_fallthru
          _
        // Predicated region
        $region117: #{tpu_custom_call.1} parent=23 // pred_check
          %p955 = pneg %p666
        $region118: #{tpu_custom_call.1} parent=23 // pred_check_branch
          %957 = sbr.rel (%p955) target = $region120
        $region119: #{tpu_custom_call.1} parent=23 // pred_region
          %p958 = scmp.lt.s32.totalorder %s44, 1
          %s959 = scalar_select %p958, %s44, 1
          %s960 = smul.addr %s959, 4
          %s961 = scalar_lea.vmem %s23, %s960
        $region120: #{tpu_custom_call.1} parent=23 // pred_fallthru
          _
        // Predicated region
        $region121: #{tpu_custom_call.1} parent=23 // pred_check
          %p962 = pneg %p692
        $region122: #{tpu_custom_call.1} parent=23 // pred_check_branch
          %964 = sbr.rel (%p962) target = $region124
        $region123: #{tpu_custom_call.1} parent=23 // pred_region
          %p965 = scmp.lt.s32.totalorder %s44, 1
          %s966 = scalar_select %p965, %s44, 1
          %s967 = smul.addr %s966, 4
          %s968 = scalar_lea.vmem %s24, %s967
        $region124: #{tpu_custom_call.1} parent=23 // pred_fallthru
          _
      $region24: #{tpu_custom_call.1} parent=5 // pred_fallthru
        _
      %p969 = scmp.le.s32.totalorder 1, %s36
      %p970 = scmp.lt.s32.totalorder %s36, 5
      %p971 = pnand %p969, %p970
      %p972 = pneg %p971
      // Predicated region
      $region125: #{tpu_custom_call.1} parent=5 // pred_check
        _
      $region126: #{tpu_custom_call.1} parent=5 // pred_check_branch
        %974 = sbr.rel (%p971) target = $region128
      $region127: #{tpu_custom_call.1} parent=5 // pred_region
        %s975 = ssub.s32 %s36, 1
        %p976 = scmp.lt.s32.totalorder %s45, 1
        %s977 = scalar_select %p976, %s45, 1
        %s978 = smul.addr %s977, 8
        %s979 = scalar_lea.vmem %s0, %s978
        %p980 = pneg %p74
        %p981 = pneg %p71
        %p982 = scmp.lt.s32.totalorder %s45, 1
        %s983 = scalar_select %p982, %s45, 1
        %s984 = smul.addr %s983, 8
        %s985 = scalar_lea.vmem %s1, %s984
        %p986 = pneg %p100
        %p987 = pneg %p97
        %p988 = scmp.lt.s32.totalorder %s45, 1
        %s989 = scalar_select %p988, %s45, 1
        %s990 = smul.addr %s989, 16
        %s991 = smul.addr %s990, 4
        %s992 = scalar_lea.vmem %s2, %s991
        %p993 = pneg %p126
        %p994 = pneg %p123
        %p995 = scmp.lt.s32.totalorder %s45, 1
        %s996 = scalar_select %p995, %s45, 1
        %s997 = smul.addr %s996, 16
        %s998 = smul.addr %s997, 4
        %s999 = scalar_lea.vmem %s3, %s998
        %p1000 = pneg %p152
        %p1001 = pneg %p149
        %p1002 = scmp.lt.s32.totalorder %s45, 1
        %s1003 = scalar_select %p1002, %s45, 1
        %s1004 = scalar_lea.vmem %s4, %s1003
        %p1005 = pneg %p178
        %p1006 = pneg %p175
        %p1007 = scmp.lt.s32.totalorder %s46, 1
        %s1008 = scalar_select %p1007, %s46, 1
        %s1009 = smul.addr %s1008, 4
        %s1010 = smul.addr %s1009, 4
        %s1011 = scalar_lea.vmem %s5, %s1010
        %p1012 = pneg %p204
        %p1013 = pneg %p201
        %p1014 = scmp.lt.s32.totalorder %s46, 1
        %s1015 = scalar_select %p1014, %s46, 1
        %s1016 = scalar_lea.vmem %s6, %s1015
        %p1017 = pneg %p230
        %p1018 = pneg %p227
        %p1019 = scmp.lt.s32.totalorder %s46, 1
        %s1020 = scalar_select %p1019, %s46, 1
        %s1021 = smul.addr %s1020, 4
        %s1022 = smul.addr %s1021, 4
        %s1023 = scalar_lea.vmem %s7, %s1022
        %p1024 = pneg %p256
        %p1025 = pneg %p253
        %p1026 = scmp.lt.s32.totalorder %s46, 1
        %s1027 = scalar_select %p1026, %s46, 1
        %s1028 = scalar_lea.vmem %s8, %s1027
        %p1029 = pneg %p282
        %p1030 = pneg %p279
        %p1031 = scmp.lt.s32.totalorder %s46, 1
        %s1032 = scalar_select %p1031, %s46, 1
        %s1033 = smul.addr %s1032, 4
        %s1034 = smul.addr %s1033, 4
        %s1035 = scalar_lea.vmem %s9, %s1034
        %p1036 = pneg %p308
        %p1037 = pneg %p305
        %p1038 = scmp.lt.s32.totalorder %s46, 1
        %s1039 = scalar_select %p1038, %s46, 1
        %s1040 = scalar_lea.vmem %s10, %s1039
        %p1041 = pneg %p334
        %p1042 = pneg %p331
        %p1043 = scmp.lt.s32.totalorder %s46, 1
        %s1044 = scalar_select %p1043, %s46, 1
        %s1045 = smul.addr %s1044, 4
        %s1046 = smul.addr %s1045, 4
        %s1047 = scalar_lea.vmem %s11, %s1046
        %p1048 = pneg %p360
        %p1049 = pneg %p357
        %p1050 = scmp.lt.s32.totalorder %s46, 1
        %s1051 = scalar_select %p1050, %s46, 1
        %s1052 = scalar_lea.vmem %s12, %s1051
        %p1053 = pneg %p386
        %p1054 = pneg %p383
        %p1055 = scmp.lt.s32.totalorder %s46, 1
        %s1056 = scalar_select %p1055, %s46, 1
        %s1057 = smul.addr %s1056, 4
        %s1058 = smul.addr %s1057, 4
        %s1059 = scalar_lea.vmem %s13, %s1058
        %p1060 = pneg %p412
        %p1061 = pneg %p409
        %p1062 = scmp.lt.s32.totalorder %s46, 1
        %s1063 = scalar_select %p1062, %s46, 1
        %s1064 = scalar_lea.vmem %s14, %s1063
        %p1065 = pneg %p438
        %p1066 = pneg %p435
        %p1067 = scmp.lt.s32.totalorder %s46, 1
        %s1068 = scalar_select %p1067, %s46, 1
        %s1069 = smul.addr %s1068, 4
        %s1070 = smul.addr %s1069, 4
        %s1071 = scalar_lea.vmem %s15, %s1070
        %p1072 = pneg %p464
        %p1073 = pneg %p461
        %p1074 = scmp.lt.s32.totalorder %s46, 1
        %s1075 = scalar_select %p1074, %s46, 1
        %s1076 = scalar_lea.vmem %s16, %s1075
        %p1077 = pneg %p490
        %p1078 = pneg %p487
        %p1079 = scmp.lt.s32.totalorder %s46, 1
        %s1080 = scalar_select %p1079, %s46, 1
        %s1081 = smul.addr %s1080, 4
        %s1082 = smul.addr %s1081, 4
        %s1083 = scalar_lea.vmem %s17, %s1082
        %p1084 = pneg %p516
        %p1085 = pneg %p513
        %p1086 = scmp.lt.s32.totalorder %s46, 1
        %s1087 = scalar_select %p1086, %s46, 1
        %s1088 = scalar_lea.vmem %s18, %s1087
        %p1089 = pneg %p542
        %p1090 = pneg %p539
        %p1091 = scmp.lt.s32.totalorder %s46, 1
        %s1092 = scalar_select %p1091, %s46, 1
        %s1093 = smul.addr %s1092, 4
        %s1094 = smul.addr %s1093, 4
        %s1095 = scalar_lea.vmem %s19, %s1094
        %p1096 = pneg %p568
        %p1097 = pneg %p565
        %p1098 = scmp.lt.s32.totalorder %s46, 1
        %s1099 = scalar_select %p1098, %s46, 1
        %s1100 = scalar_lea.vmem %s20, %s1099
        %p1101 = pneg %p594
        %p1102 = pneg %p591
        %p1103 = scmp.lt.s32.totalorder %s46, 1
        %s1104 = scalar_select %p1103, %s46, 1
        %s1105 = smul.addr %s1104, 8
        %s1106 = smul.addr %s1105, 4
        %s1107 = scalar_lea.vmem %s21, %s1106
        %p1108 = pneg %p620
        %p1109 = pneg %p617
        %p1110 = scmp.lt.s32.totalorder %s46, 1
        %s1111 = scalar_select %p1110, %s46, 1
        %s1112 = scalar_lea.vmem %s22, %s1111
        %p1113 = pneg %p646
        %p1114 = pneg %p643
        %p1115 = scmp.lt.s32.totalorder %s46, 1
        %s1116 = scalar_select %p1115, %s46, 1
        %s1117 = smul.addr %s1116, 4
        %s1118 = scalar_lea.vmem %s23, %s1117
        %p1119 = pneg %p672
        %p1120 = pneg %p669
        %p1121 = scmp.lt.s32.totalorder %s46, 1
        %s1122 = scalar_select %p1121, %s46, 1
        %s1123 = smul.addr %s1122, 4
        %s1124 = scalar_lea.vmem %s24, %s1123
        %p1125 = pneg %p698
        %p1126 = pneg %p695
        %p1127 = pneg %p719
        %p1128 = pneg %p716
        %p1129 = pneg %p740
        %p1130 = pneg %p737
        %p1131 = pneg %p768
        %p1132 = pneg %p765
        %s1133 = sand.u32 %s755, 1
        %s1134 = scalar_lea.sflag [#allocation4], %s1133
        %s1135 = sand.u32 %s755, 1
        %s1136 = smul.addr %s1135, 8
        %s1137 = scalar_lea.vmem [#allocation3], %s1136
        %p1138 = scmp.lt.s32.totalorder %s45, 1
        %s1139 = scalar_select %p1138, %s45, 1
        %s1140 = smul.addr %s1139, 8
        %s1141 = scalar_lea.vmem %s0, %s1140
        %p1142 = scmp.lt.s32.totalorder %s45, 1
        %s1143 = scalar_select %p1142, %s45, 1
        %s1144 = smul.addr %s1143, 8
        %s1145 = scalar_lea.vmem %s1, %s1144
        %p1146 = scmp.lt.s32.totalorder %s45, 1
        %s1147 = scalar_select %p1146, %s45, 1
        %s1148 = smul.addr %s1147, 16
        %s1149 = smul.addr %s1148, 4
        %s1150 = scalar_lea.vmem %s2, %s1149
        %p1151 = scmp.lt.s32.totalorder %s45, 1
        %s1152 = scalar_select %p1151, %s45, 1
        %s1153 = smul.addr %s1152, 16
        %s1154 = smul.addr %s1153, 4
        %s1155 = scalar_lea.vmem %s3, %s1154
        %p1156 = scmp.lt.s32.totalorder %s45, 1
        %s1157 = scalar_select %p1156, %s45, 1
        %s1158 = scalar_lea.vmem %s4, %s1157
        %p1159 = scmp.lt.s32.totalorder %s46, 1
        %s1160 = scalar_select %p1159, %s46, 1
        %s1161 = smul.addr %s1160, 4
        %s1162 = smul.addr %s1161, 4
        %s1163 = scalar_lea.vmem %s5, %s1162
        %p1164 = scmp.lt.s32.totalorder %s46, 1
        %s1165 = scalar_select %p1164, %s46, 1
        %s1166 = scalar_lea.vmem %s6, %s1165
        %p1167 = scmp.lt.s32.totalorder %s46, 1
        %s1168 = scalar_select %p1167, %s46, 1
        %s1169 = smul.addr %s1168, 4
        %s1170 = smul.addr %s1169, 4
        %s1171 = scalar_lea.vmem %s7, %s1170
        %p1172 = scmp.lt.s32.totalorder %s46, 1
        %s1173 = scalar_select %p1172, %s46, 1
        %s1174 = scalar_lea.vmem %s8, %s1173
        %p1175 = scmp.lt.s32.totalorder %s46, 1
        %s1176 = scalar_select %p1175, %s46, 1
        %s1177 = smul.addr %s1176, 4
        %s1178 = smul.addr %s1177, 4
        %s1179 = scalar_lea.vmem %s9, %s1178
        %p1180 = scmp.lt.s32.totalorder %s46, 1
        %s1181 = scalar_select %p1180, %s46, 1
        %s1182 = scalar_lea.vmem %s10, %s1181
        %p1183 = scmp.lt.s32.totalorder %s46, 1
        %s1184 = scalar_select %p1183, %s46, 1
        %s1185 = smul.addr %s1184, 4
        %s1186 = smul.addr %s1185, 4
        %s1187 = scalar_lea.vmem %s11, %s1186
        %p1188 = scmp.lt.s32.totalorder %s46, 1
        %s1189 = scalar_select %p1188, %s46, 1
        %s1190 = scalar_lea.vmem %s12, %s1189
        %p1191 = scmp.lt.s32.totalorder %s46, 1
        %s1192 = scalar_select %p1191, %s46, 1
        %s1193 = smul.addr %s1192, 4
        %s1194 = smul.addr %s1193, 4
        %s1195 = scalar_lea.vmem %s13, %s1194
        %p1196 = scmp.lt.s32.totalorder %s46, 1
        %s1197 = scalar_select %p1196, %s46, 1
        %s1198 = scalar_lea.vmem %s14, %s1197
        %p1199 = scmp.lt.s32.totalorder %s46, 1
        %s1200 = scalar_select %p1199, %s46, 1
        %s1201 = smul.addr %s1200, 4
        %s1202 = smul.addr %s1201, 4
        %s1203 = scalar_lea.vmem %s15, %s1202
        %p1204 = scmp.lt.s32.totalorder %s46, 1
        %s1205 = scalar_select %p1204, %s46, 1
        %s1206 = scalar_lea.vmem %s16, %s1205
        %p1207 = scmp.lt.s32.totalorder %s46, 1
        %s1208 = scalar_select %p1207, %s46, 1
        %s1209 = smul.addr %s1208, 4
        %s1210 = smul.addr %s1209, 4
        %s1211 = scalar_lea.vmem %s17, %s1210
        %p1212 = scmp.lt.s32.totalorder %s46, 1
        %s1213 = scalar_select %p1212, %s46, 1
        %s1214 = scalar_lea.vmem %s18, %s1213
        %p1215 = scmp.lt.s32.totalorder %s46, 1
        %s1216 = scalar_select %p1215, %s46, 1
        %s1217 = smul.addr %s1216, 4
        %s1218 = smul.addr %s1217, 4
        %s1219 = scalar_lea.vmem %s19, %s1218
        %p1220 = scmp.lt.s32.totalorder %s46, 1
        %s1221 = scalar_select %p1220, %s46, 1
        %s1222 = scalar_lea.vmem %s20, %s1221
        %p1223 = scmp.lt.s32.totalorder %s46, 1
        %s1224 = scalar_select %p1223, %s46, 1
        %s1225 = smul.addr %s1224, 8
        %s1226 = smul.addr %s1225, 4
        %s1227 = scalar_lea.vmem %s21, %s1226
        %p1228 = scmp.lt.s32.totalorder %s46, 1
        %s1229 = scalar_select %p1228, %s46, 1
        %s1230 = scalar_lea.vmem %s22, %s1229
        %p1231 = scmp.lt.s32.totalorder %s46, 1
        %s1232 = scalar_select %p1231, %s46, 1
        %s1233 = smul.addr %s1232, 4
        %s1234 = scalar_lea.vmem %s23, %s1233
        %p1235 = scmp.lt.s32.totalorder %s46, 1
        %s1236 = scalar_select %p1235, %s46, 1
        %s1237 = smul.addr %s1236, 4
        %s1238 = scalar_lea.vmem %s24, %s1237
        %p1240 = scmp.eq.s32.totalorder %s46, 0
        // Predicated region
        $region129: #{tpu_custom_call.1} parent=127 // pred_check
          %p1241 = pneg %p1240
        $region130: #{tpu_custom_call.1} parent=127 // pred_check_branch
          %1243 = sbr.rel (%p1241) target = $region132
        $region131: #{tpu_custom_call.1} parent=127 // pred_region
          %v1244 = vld [vmem:[%s1141] sm:$0xff]
          %vm1245 = vcmask 261120
          %1246 = vst.msk [vmem:[#allocation2] sm:$0xff] %vm1245, %v1244
        $region132: #{tpu_custom_call.1} parent=127 // pred_fallthru
          _
        %v1247 = vld [vmem:[#allocation2] sm:$0xff]
        %v1248 = vld [vmem:[%s1145] sm:$0xff]
        %v1249 = vld [vmem:[%s1234] sm:$0x7]
        %v1250 = vld [vmem:[%s1238] sm:$0x7]
        %v1251 = vadd.f32 %v1247, %v1248
        %v1252 = vpack.c.bf16 %v1251, %v1251
        %v1253 = vld [vmem:[%s1163] sm:$0xf]
        %v1254 = vld [vmem:[%s1163 + $0x4] sm:$0xf]
        %v1255 = vld [vmem:[%s1163 + $0x8] sm:$0xf]
        %v1256 = vld [vmem:[%s1163 + $0xc] sm:$0xf]
        %v1257 = vld [vmem:[%s1166] sm:$0x1]
        %v1259 = vlaneseq
        %v1260 = vshrl.u32 %v1259, 7
        %v1261 = vsub.s32 0, %v1260
        %v1262 = vrot.slane %v1257, %v1261
        %v1268 = vunpack.c.l.b16 %v1253
        %v1269 = vunpack.c.l.b16 %v1254
        %v1270 = vunpack.c.l.b16 %v1255
        %v1271 = vunpack.c.l.b16 %v1256
        %v1272 = vpack.c.b16 %v1269, %v1268
        %v1273 = vpack.c.b16 %v1271, %v1270
        %vm1276 = vcmask 261120
        %v1278 = vsel %vm1276, %v1252, 0
        %1280 = vmatprep.subr.bf16.mxu0 0
        %1281 = vmatpush1.bf16.msra.mxu0 %v1272
        %1282 = vmatprep.subr.bf16.mxu0 0
        %1283 = vmatpush1.bf16.msra.mxu0 %v1273
        %1284 = vmatprep.subr.bf16.mxu0 0
        %1285 = vmatpush1.bf16.msra.mxu0 0
        %1286 = vmatprep.subr.bf16.mxu0 0
        %1287 = vmatpush1.bf16.msra.mxu0 0
        %1288 = vmatprep.subr.bf16.mxu0 0
        %1289 = vmatpush1.bf16.msra.mxu0 0
        %1290 = vmatprep.subr.bf16.mxu0 0
        %1291 = vmatpush1.bf16.msra.mxu0 0
        %1292 = vmatprep.subr.bf16.mxu0 0
        %1293 = vmatpush1.bf16.msra.mxu0 0
        %1294 = vmatprep.subr.bf16.mxu0 0
        %1295 = vmatpush1.bf16.msra.mxu0 0
        %1296 = vmatprep.subr.bf16.mxu0 0
        %1297 = vmatpush1.bf16.msra.mxu0 0
        %1298 = vmatprep.subr.bf16.mxu0 0
        %1299 = vmatpush1.bf16.msra.mxu0 0
        %1300 = vmatprep.subr.bf16.mxu0 0
        %1301 = vmatpush1.bf16.msra.mxu0 0
        %1302 = vmatprep.subr.bf16.mxu0 0
        %1303 = vmatpush1.bf16.msra.mxu0 0
        %1304 = vmatprep.subr.bf16.mxu0 0
        %1305 = vmatpush1.bf16.msra.mxu0 0
        %1306 = vmatprep.subr.bf16.mxu0 0
        %1307 = vmatpush1.bf16.msra.mxu0 0
        %1308 = vmatprep.subr.bf16.mxu0 0
        %1309 = vmatpush1.bf16.msra.mxu0 0
        %1310 = vmatprep.subr.bf16.mxu0 0
        %1311 = vmatpush1.bf16.msra.mxu0 0
        %1312 = vmatprep.mubr.bf16.mxu0 0
        %1313 = vmatmul.mubr.bf16.gmra.mrb[0].mxu0 %v1278
        %v1314 = vpop.f32.mrb[0].mxu0
        %v1315 = vadd.f32 %v1262, %v1314
        %v1316 = vpop.f32.mrb[0].mxu0
        %v1317 = vpop.f32.mrb[0].mxu0
        %v1318 = vpop.f32.mrb[0].mxu0
        %1319 = vdwg.mxu0
        %v1320 = vpack.c.bf16 %v1247, %v1247
        %v1321 = vld [vmem:[%s1171] sm:$0xf]
        %v1322 = vld [vmem:[%s1171 + $0x4] sm:$0xf]
        %v1323 = vld [vmem:[%s1171 + $0x8] sm:$0xf]
        %v1324 = vld [vmem:[%s1171 + $0xc] sm:$0xf]
        %v1325 = vld [vmem:[%s1174] sm:$0x1]
        %v1327 = vlaneseq
        %v1328 = vshrl.u32 %v1327, 7
        %v1329 = vsub.s32 0, %v1328
        %v1330 = vrot.slane %v1325, %v1329
        %v1336 = vunpack.c.l.b16 %v1321
        %v1337 = vunpack.c.l.b16 %v1322
        %v1338 = vunpack.c.l.b16 %v1323
        %v1339 = vunpack.c.l.b16 %v1324
        %v1340 = vpack.c.b16 %v1337, %v1336
        %v1341 = vpack.c.b16 %v1339, %v1338
        %v1345 = vsel %vm1276, %v1320, 0
        %1347 = vmatprep.subr.bf16.mxu0 0
        %1348 = vmatpush1.bf16.msra.mxu0 %v1340
        %1349 = vmatprep.subr.bf16.mxu0 0
        %1350 = vmatpush1.bf16.msra.mxu0 %v1341
        %1351 = vmatprep.subr.bf16.mxu0 0
        %1352 = vmatpush1.bf16.msra.mxu0 0
        %1353 = vmatprep.subr.bf16.mxu0 0
        %1354 = vmatpush1.bf16.msra.mxu0 0
        %1355 = vmatprep.subr.bf16.mxu0 0
        %1356 = vmatpush1.bf16.msra.mxu0 0
        %1357 = vmatprep.subr.bf16.mxu0 0
        %1358 = vmatpush1.bf16.msra.mxu0 0
        %1359 = vmatprep.subr.bf16.mxu0 0
        %1360 = vmatpush1.bf16.msra.mxu0 0
        %1361 = vmatprep.subr.bf16.mxu0 0
        %1362 = vmatpush1.bf16.msra.mxu0 0
        %1363 = vmatprep.subr.bf16.mxu0 0
        %1364 = vmatpush1.bf16.msra.mxu0 0
        %1365 = vmatprep.subr.bf16.mxu0 0
        %1366 = vmatpush1.bf16.msra.mxu0 0
        %1367 = vmatprep.subr.bf16.mxu0 0
        %1368 = vmatpush1.bf16.msra.mxu0 0
        %1369 = vmatprep.subr.bf16.mxu0 0
        %1370 = vmatpush1.bf16.msra.mxu0 0
        %1371 = vmatprep.subr.bf16.mxu0 0
        %1372 = vmatpush1.bf16.msra.mxu0 0
        %1373 = vmatprep.subr.bf16.mxu0 0
        %1374 = vmatpush1.bf16.msra.mxu0 0
        %1375 = vmatprep.subr.bf16.mxu0 0
        %1376 = vmatpush1.bf16.msra.mxu0 0
        %1377 = vmatprep.subr.bf16.mxu0 0
        %1378 = vmatpush1.bf16.msra.mxu0 0
        %1379 = vmatprep.mubr.bf16.mxu0 0
        %1380 = vmatmul.mubr.bf16.gmra.mrb[0].mxu0 %v1345
        %v1381 = vpop.f32.mrb[0].mxu0
        %v1382 = vadd.f32 %v1330, %v1381
        %v1383 = vpop.f32.mrb[0].mxu0
        %v1384 = vpop.f32.mrb[0].mxu0
        %v1385 = vpop.f32.mrb[0].mxu0
        %1386 = vdwg.mxu0
        %v1387 = vld [vmem:[%s1179] sm:$0xf]
        %v1388 = vld [vmem:[%s1179 + $0x4] sm:$0xf]
        %v1389 = vld [vmem:[%s1179 + $0x8] sm:$0xf]
        %v1390 = vld [vmem:[%s1179 + $0xc] sm:$0xf]
        %v1391 = vld [vmem:[%s1182] sm:$0x1]
        %1393 = vrot.lane.b32.xlu0 %v1315, 120
        %v1394 = vpop.permute.xlu0 %1393
        %1396 = vrot.lane.b32.xlu0 %v1315, 112
        %v1397 = vpop.permute.xlu0 %1396
        %1399 = vrot.lane.b32.xlu0 %v1315, 104
        %v1400 = vpop.permute.xlu0 %1399
        %v1402 = vcombine.low %v1315, %v1397
        %v1403 = vcombine.high %v1315, %v1397
        %v1405 = vunpack.c.l.s4 1983009808
        %v1406 = vunpack.c.0.s8 %v1405
        %v1407 = vlaneseq
        %v1408 = vshrl.u32 %v1407, 7
        %v1409 = vsub.s32 %v1406, %v1408
        %v1410 = vrot.slane %v1402, %v1409
        %v1412 = vunpack.c.l.s4 1983009808
        %v1413 = vunpack.c.0.s8 %v1412
        %v1414 = vlaneseq
        %v1415 = vshrl.u32 %v1414, 7
        %v1416 = vsub.s32 %v1413, %v1415
        %v1417 = vrot.slane %v1403, %v1416
        %v1418 = vcombine.low %v1394, %v1400
        %v1419 = vcombine.high %v1394, %v1400
        %v1421 = vunpack.c.l.s4 1983009808
        %v1422 = vunpack.c.0.s8 %v1421
        %v1423 = vlaneseq
        %v1424 = vshrl.u32 %v1423, 7
        %v1425 = vsub.s32 %v1422, %v1424
        %v1426 = vrot.slane %v1418, %v1425
        %v1428 = vunpack.c.l.s4 1983009808
        %v1429 = vunpack.c.0.s8 %v1428
        %v1430 = vlaneseq
        %v1431 = vshrl.u32 %v1430, 7
        %v1432 = vsub.s32 %v1429, %v1431
        %v1433 = vrot.slane %v1419, %v1432
        %v1434 = vcombine.low %v1410, %v1426
        %v1435 = vcombine.high %v1410, %v1426
        %v1437 = vunpack.c.l.s4 1934713408
        %v1438 = vunpack.c.0.s8 %v1437
        %v1439 = vlaneseq
        %v1440 = vshrl.u32 %v1439, 7
        %v1441 = vsub.s32 %v1438, %v1440
        %v1442 = vrot.slane %v1434, %v1441
        %v1444 = vunpack.c.l.s4 1934713408
        %v1445 = vunpack.c.0.s8 %v1444
        %v1446 = vlaneseq
        %v1447 = vshrl.u32 %v1446, 7
        %v1448 = vsub.s32 %v1445, %v1447
        %v1449 = vrot.slane %v1435, %v1448
        %v1450 = vcombine.low %v1417, %v1433
        %v1451 = vcombine.high %v1417, %v1433
        %v1453 = vunpack.c.l.s4 1934713408
        %v1454 = vunpack.c.0.s8 %v1453
        %v1455 = vlaneseq
        %v1456 = vshrl.u32 %v1455, 7
        %v1457 = vsub.s32 %v1454, %v1456
        %v1458 = vrot.slane %v1450, %v1457
        %v1460 = vunpack.c.l.s4 1934713408
        %v1461 = vunpack.c.0.s8 %v1460
        %v1462 = vlaneseq
        %v1463 = vshrl.u32 %v1462, 7
        %v1464 = vsub.s32 %v1461, %v1463
        %v1465 = vrot.slane %v1451, %v1464
        %v1466 = vcombine.high %v1442, 0.0
        %v1467 = vcombine.high %v1449, 0.0
        %v1468 = vcombine.high %v1458, 0.0
        %v1469 = vcombine.high %v1465, 0.0
        %v1470 = vcombine.low %v1442, %v1449
        %v1472 = vunpack.c.l.s4 1983009808
        %v1473 = vunpack.c.0.s8 %v1472
        %v1474 = vlaneseq
        %v1475 = vshrl.u32 %v1474, 7
        %v1476 = vsub.s32 %v1473, %v1475
        %v1477 = vrot.slane %v1470, %v1476
        %v1478 = vcombine.low %v1466, %v1467
        %v1480 = vunpack.c.l.s4 1983009808
        %v1481 = vunpack.c.0.s8 %v1480
        %v1482 = vlaneseq
        %v1483 = vshrl.u32 %v1482, 7
        %v1484 = vsub.s32 %v1481, %v1483
        %v1485 = vrot.slane %v1478, %v1484
        %v1486 = vcombine.low %v1458, %v1465
        %v1488 = vunpack.c.l.s4 1983009808
        %v1489 = vunpack.c.0.s8 %v1488
        %v1490 = vlaneseq
        %v1491 = vshrl.u32 %v1490, 7
        %v1492 = vsub.s32 %v1489, %v1491
        %v1493 = vrot.slane %v1486, %v1492
        %v1494 = vcombine.low %v1468, %v1469
        %v1496 = vunpack.c.l.s4 1983009808
        %v1497 = vunpack.c.0.s8 %v1496
        %v1498 = vlaneseq
        %v1499 = vshrl.u32 %v1498, 7
        %v1500 = vsub.s32 %v1497, %v1499
        %v1501 = vrot.slane %v1494, %v1500
        %v1502 = vcombine.low %v1477, %v1485
        %v1503 = vcombine.high %v1477, %v1485
        %v1505 = vunpack.c.l.s4 1934713408
        %v1506 = vunpack.c.0.s8 %v1505
        %v1507 = vlaneseq
        %v1508 = vshrl.u32 %v1507, 7
        %v1509 = vsub.s32 %v1506, %v1508
        %v1510 = vrot.slane %v1502, %v1509
        %v1512 = vunpack.c.l.s4 1934713408
        %v1513 = vunpack.c.0.s8 %v1512
        %v1514 = vlaneseq
        %v1515 = vshrl.u32 %v1514, 7
        %v1516 = vsub.s32 %v1513, %v1515
        %v1517 = vrot.slane %v1503, %v1516
        %v1518 = vcombine.low %v1493, %v1501
        %v1519 = vcombine.high %v1493, %v1501
        %v1521 = vunpack.c.l.s4 1934713408
        %v1522 = vunpack.c.0.s8 %v1521
        %v1523 = vlaneseq
        %v1524 = vshrl.u32 %v1523, 7
        %v1525 = vsub.s32 %v1522, %v1524
        %v1526 = vrot.slane %v1518, %v1525
        %v1528 = vunpack.c.l.s4 1934713408
        %v1529 = vunpack.c.0.s8 %v1528
        %v1530 = vlaneseq
        %v1531 = vshrl.u32 %v1530, 7
        %v1532 = vsub.s32 %v1529, %v1531
        %v1533 = vrot.slane %v1519, %v1532
        %v1534 = vcombine.low %v1510, %v1526
        %v1535 = vcombine.high %v1510, %v1526
        %v1536 = vcombine.low %v1517, %v1533
        %v1537 = vcombine.high %v1517, %v1533
        %v1538 = vpack.c.bf16 %v1534, %v1534
        %v1539 = vpack.c.bf16 %v1535, %v1535
        %v1540 = vpack.c.bf16 %v1536, %v1536
        %v1541 = vpack.c.bf16 %v1537, %v1537
        %1542 = vrot.lane.b32.xlu0 %v1315, 96
        %v1543 = vpop.permute.xlu0 %1542
        %1544 = vrot.lane.b32.xlu0 %v1394, 96
        %v1545 = vpop.permute.xlu0 %1544
        %1546 = vrot.lane.b32.xlu0 %v1397, 96
        %v1547 = vpop.permute.xlu0 %1546
        %1548 = vrot.lane.b32.xlu0 %v1400, 96
        %v1549 = vpop.permute.xlu0 %1548
        %v1554 = vcombine.low %v1543, %v1547
        %v1555 = vcombine.high %v1543, %v1547
        %v1557 = vunpack.c.l.s4 1983009808
        %v1558 = vunpack.c.0.s8 %v1557
        %v1559 = vlaneseq
        %v1560 = vshrl.u32 %v1559, 7
        %v1561 = vsub.s32 %v1558, %v1560
        %v1562 = vrot.slane %v1554, %v1561
        %v1564 = vunpack.c.l.s4 1983009808
        %v1565 = vunpack.c.0.s8 %v1564
        %v1566 = vlaneseq
        %v1567 = vshrl.u32 %v1566, 7
        %v1568 = vsub.s32 %v1565, %v1567
        %v1569 = vrot.slane %v1555, %v1568
        %v1570 = vcombine.low %v1545, %v1549
        %v1571 = vcombine.high %v1545, %v1549
        %v1573 = vunpack.c.l.s4 1983009808
        %v1574 = vunpack.c.0.s8 %v1573
        %v1575 = vlaneseq
        %v1576 = vshrl.u32 %v1575, 7
        %v1577 = vsub.s32 %v1574, %v1576
        %v1578 = vrot.slane %v1570, %v1577
        %v1580 = vunpack.c.l.s4 1983009808
        %v1581 = vunpack.c.0.s8 %v1580
        %v1582 = vlaneseq
        %v1583 = vshrl.u32 %v1582, 7
        %v1584 = vsub.s32 %v1581, %v1583
        %v1585 = vrot.slane %v1571, %v1584
        %v1586 = vcombine.low %v1562, %v1578
        %v1587 = vcombine.high %v1562, %v1578
        %v1589 = vunpack.c.l.s4 1934713408
        %v1590 = vunpack.c.0.s8 %v1589
        %v1591 = vlaneseq
        %v1592 = vshrl.u32 %v1591, 7
        %v1593 = vsub.s32 %v1590, %v1592
        %v1594 = vrot.slane %v1586, %v1593
        %v1596 = vunpack.c.l.s4 1934713408
        %v1597 = vunpack.c.0.s8 %v1596
        %v1598 = vlaneseq
        %v1599 = vshrl.u32 %v1598, 7
        %v1600 = vsub.s32 %v1597, %v1599
        %v1601 = vrot.slane %v1587, %v1600
        %v1602 = vcombine.low %v1569, %v1585
        %v1603 = vcombine.high %v1569, %v1585
        %v1605 = vunpack.c.l.s4 1934713408
        %v1606 = vunpack.c.0.s8 %v1605
        %v1607 = vlaneseq
        %v1608 = vshrl.u32 %v1607, 7
        %v1609 = vsub.s32 %v1606, %v1608
        %v1610 = vrot.slane %v1602, %v1609
        %v1612 = vunpack.c.l.s4 1934713408
        %v1613 = vunpack.c.0.s8 %v1612
        %v1614 = vlaneseq
        %v1615 = vshrl.u32 %v1614, 7
        %v1616 = vsub.s32 %v1613, %v1615
        %v1617 = vrot.slane %v1603, %v1616
        %v1618 = vcombine.high %v1594, 0.0
        %v1619 = vcombine.high %v1601, 0.0
        %v1620 = vcombine.high %v1610, 0.0
        %v1621 = vcombine.high %v1617, 0.0
        %v1622 = vcombine.low %v1594, %v1601
        %v1624 = vunpack.c.l.s4 1983009808
        %v1625 = vunpack.c.0.s8 %v1624
        %v1626 = vlaneseq
        %v1627 = vshrl.u32 %v1626, 7
        %v1628 = vsub.s32 %v1625, %v1627
        %v1629 = vrot.slane %v1622, %v1628
        %v1630 = vcombine.low %v1618, %v1619
        %v1632 = vunpack.c.l.s4 1983009808
        %v1633 = vunpack.c.0.s8 %v1632
        %v1634 = vlaneseq
        %v1635 = vshrl.u32 %v1634, 7
        %v1636 = vsub.s32 %v1633, %v1635
        %v1637 = vrot.slane %v1630, %v1636
        %v1638 = vcombine.low %v1610, %v1617
        %v1640 = vunpack.c.l.s4 1983009808
        %v1641 = vunpack.c.0.s8 %v1640
        %v1642 = vlaneseq
        %v1643 = vshrl.u32 %v1642, 7
        %v1644 = vsub.s32 %v1641, %v1643
        %v1645 = vrot.slane %v1638, %v1644
        %v1646 = vcombine.low %v1620, %v1621
        %v1648 = vunpack.c.l.s4 1983009808
        %v1649 = vunpack.c.0.s8 %v1648
        %v1650 = vlaneseq
        %v1651 = vshrl.u32 %v1650, 7
        %v1652 = vsub.s32 %v1649, %v1651
        %v1653 = vrot.slane %v1646, %v1652
        %v1654 = vcombine.low %v1629, %v1637
        %v1655 = vcombine.high %v1629, %v1637
        %v1657 = vunpack.c.l.s4 1934713408
        %v1658 = vunpack.c.0.s8 %v1657
        %v1659 = vlaneseq
        %v1660 = vshrl.u32 %v1659, 7
        %v1661 = vsub.s32 %v1658, %v1660
        %v1662 = vrot.slane %v1654, %v1661
        %v1664 = vunpack.c.l.s4 1934713408
        %v1665 = vunpack.c.0.s8 %v1664
        %v1666 = vlaneseq
        %v1667 = vshrl.u32 %v1666, 7
        %v1668 = vsub.s32 %v1665, %v1667
        %v1669 = vrot.slane %v1655, %v1668
        %v1670 = vcombine.low %v1645, %v1653
        %v1671 = vcombine.high %v1645, %v1653
        %v1673 = vunpack.c.l.s4 1934713408
        %v1674 = vunpack.c.0.s8 %v1673
        %v1675 = vlaneseq
        %v1676 = vshrl.u32 %v1675, 7
        %v1677 = vsub.s32 %v1674, %v1676
        %v1678 = vrot.slane %v1670, %v1677
        %v1680 = vunpack.c.l.s4 1934713408
        %v1681 = vunpack.c.0.s8 %v1680
        %v1682 = vlaneseq
        %v1683 = vshrl.u32 %v1682, 7
        %v1684 = vsub.s32 %v1681, %v1683
        %v1685 = vrot.slane %v1671, %v1684
        %v1686 = vcombine.low %v1662, %v1678
        %v1687 = vcombine.high %v1662, %v1678
        %v1688 = vcombine.low %v1669, %v1685
        %v1689 = vcombine.high %v1669, %v1685
        %v1690 = vpack.c.bf16 %v1686, %v1686
        %v1691 = vpack.c.bf16 %v1687, %v1687
        %v1692 = vpack.c.bf16 %v1688, %v1688
        %v1693 = vpack.c.bf16 %v1689, %v1689
        %1695 = vrot.lane.b32.xlu0 %v1382, 120
        %v1696 = vpop.permute.xlu0 %1695
        %1698 = vrot.lane.b32.xlu0 %v1382, 112
        %v1699 = vpop.permute.xlu0 %1698
        %1701 = vrot.lane.b32.xlu0 %v1382, 104
        %v1702 = vpop.permute.xlu0 %1701
        %v1704 = vcombine.low %v1382, %v1699
        %v1705 = vcombine.high %v1382, %v1699
        %v1707 = vunpack.c.l.s4 1983009808
        %v1708 = vunpack.c.0.s8 %v1707
        %v1709 = vlaneseq
        %v1710 = vshrl.u32 %v1709, 7
        %v1711 = vsub.s32 %v1708, %v1710
        %v1712 = vrot.slane %v1704, %v1711
        %v1714 = vunpack.c.l.s4 1983009808
        %v1715 = vunpack.c.0.s8 %v1714
        %v1716 = vlaneseq
        %v1717 = vshrl.u32 %v1716, 7
        %v1718 = vsub.s32 %v1715, %v1717
        %v1719 = vrot.slane %v1705, %v1718
        %v1720 = vcombine.low %v1696, %v1702
        %v1721 = vcombine.high %v1696, %v1702
        %v1723 = vunpack.c.l.s4 1983009808
        %v1724 = vunpack.c.0.s8 %v1723
        %v1725 = vlaneseq
        %v1726 = vshrl.u32 %v1725, 7
        %v1727 = vsub.s32 %v1724, %v1726
        %v1728 = vrot.slane %v1720, %v1727
        %v1730 = vunpack.c.l.s4 1983009808
        %v1731 = vunpack.c.0.s8 %v1730
        %v1732 = vlaneseq
        %v1733 = vshrl.u32 %v1732, 7
        %v1734 = vsub.s32 %v1731, %v1733
        %v1735 = vrot.slane %v1721, %v1734
        %v1736 = vcombine.low %v1712, %v1728
        %v1737 = vcombine.high %v1712, %v1728
        %v1739 = vunpack.c.l.s4 1934713408
        %v1740 = vunpack.c.0.s8 %v1739
        %v1741 = vlaneseq
        %v1742 = vshrl.u32 %v1741, 7
        %v1743 = vsub.s32 %v1740, %v1742
        %v1744 = vrot.slane %v1736, %v1743
        %v1746 = vunpack.c.l.s4 1934713408
        %v1747 = vunpack.c.0.s8 %v1746
        %v1748 = vlaneseq
        %v1749 = vshrl.u32 %v1748, 7
        %v1750 = vsub.s32 %v1747, %v1749
        %v1751 = vrot.slane %v1737, %v1750
        %v1752 = vcombine.low %v1719, %v1735
        %v1753 = vcombine.high %v1719, %v1735
        %v1755 = vunpack.c.l.s4 1934713408
        %v1756 = vunpack.c.0.s8 %v1755
        %v1757 = vlaneseq
        %v1758 = vshrl.u32 %v1757, 7
        %v1759 = vsub.s32 %v1756, %v1758
        %v1760 = vrot.slane %v1752, %v1759
        %v1762 = vunpack.c.l.s4 1934713408
        %v1763 = vunpack.c.0.s8 %v1762
        %v1764 = vlaneseq
        %v1765 = vshrl.u32 %v1764, 7
        %v1766 = vsub.s32 %v1763, %v1765
        %v1767 = vrot.slane %v1753, %v1766
        %v1768 = vcombine.high %v1744, 0.0
        %v1769 = vcombine.high %v1751, 0.0
        %v1770 = vcombine.high %v1760, 0.0
        %v1771 = vcombine.high %v1767, 0.0
        %v1772 = vcombine.low %v1744, %v1751
        %v1774 = vunpack.c.l.s4 1983009808
        %v1775 = vunpack.c.0.s8 %v1774
        %v1776 = vlaneseq
        %v1777 = vshrl.u32 %v1776, 7
        %v1778 = vsub.s32 %v1775, %v1777
        %v1779 = vrot.slane %v1772, %v1778
        %v1780 = vcombine.low %v1768, %v1769
        %v1782 = vunpack.c.l.s4 1983009808
        %v1783 = vunpack.c.0.s8 %v1782
        %v1784 = vlaneseq
        %v1785 = vshrl.u32 %v1784, 7
        %v1786 = vsub.s32 %v1783, %v1785
        %v1787 = vrot.slane %v1780, %v1786
        %v1788 = vcombine.low %v1760, %v1767
        %v1790 = vunpack.c.l.s4 1983009808
        %v1791 = vunpack.c.0.s8 %v1790
        %v1792 = vlaneseq
        %v1793 = vshrl.u32 %v1792, 7
        %v1794 = vsub.s32 %v1791, %v1793
        %v1795 = vrot.slane %v1788, %v1794
        %v1796 = vcombine.low %v1770, %v1771
        %v1798 = vunpack.c.l.s4 1983009808
        %v1799 = vunpack.c.0.s8 %v1798
        %v1800 = vlaneseq
        %v1801 = vshrl.u32 %v1800, 7
        %v1802 = vsub.s32 %v1799, %v1801
        %v1803 = vrot.slane %v1796, %v1802
        %v1804 = vcombine.low %v1779, %v1787
        %v1805 = vcombine.high %v1779, %v1787
        %v1807 = vunpack.c.l.s4 1934713408
        %v1808 = vunpack.c.0.s8 %v1807
        %v1809 = vlaneseq
        %v1810 = vshrl.u32 %v1809, 7
        %v1811 = vsub.s32 %v1808, %v1810
        %v1812 = vrot.slane %v1804, %v1811
        %v1814 = vunpack.c.l.s4 1934713408
        %v1815 = vunpack.c.0.s8 %v1814
        %v1816 = vlaneseq
        %v1817 = vshrl.u32 %v1816, 7
        %v1818 = vsub.s32 %v1815, %v1817
        %v1819 = vrot.slane %v1805, %v1818
        %v1820 = vcombine.low %v1795, %v1803
        %v1821 = vcombine.high %v1795, %v1803
        %v1823 = vunpack.c.l.s4 1934713408
        %v1824 = vunpack.c.0.s8 %v1823
        %v1825 = vlaneseq
        %v1826 = vshrl.u32 %v1825, 7
        %v1827 = vsub.s32 %v1824, %v1826
        %v1828 = vrot.slane %v1820, %v1827
        %v1830 = vunpack.c.l.s4 1934713408
        %v1831 = vunpack.c.0.s8 %v1830
        %v1832 = vlaneseq
        %v1833 = vshrl.u32 %v1832, 7
        %v1834 = vsub.s32 %v1831, %v1833
        %v1835 = vrot.slane %v1821, %v1834
        %v1836 = vcombine.low %v1812, %v1828
        %v1837 = vcombine.high %v1812, %v1828
        %v1838 = vcombine.low %v1819, %v1835
        %v1839 = vcombine.high %v1819, %v1835
        %v1840 = vpack.c.bf16 %v1836, %v1836
        %v1841 = vpack.c.bf16 %v1837, %v1837
        %v1842 = vpack.c.bf16 %v1838, %v1838
        %v1843 = vpack.c.bf16 %v1839, %v1839
        %vm1844 = vcmask 64512
        %v1846 = vsel %vm1844, %v1538, 0
        %v1849 = vsel %vm1844, %v1690, 0
        %1851 = vmatprep.subr.bf16.mxu0 0
        %1852 = vmatpush1.bf16.xpose.msra.mxu0 %v1849
        %1853 = vmatprep.subr.bf16.mxu0 0
        %1854 = vmatpush1.bf16.xpose.msra.mxu0 0
        %1855 = vmatprep.subr.bf16.mxu0 0
        %1856 = vmatpush1.bf16.xpose.msra.mxu0 0
        %1857 = vmatprep.subr.bf16.mxu0 0
        %1858 = vmatpush1.bf16.xpose.msra.mxu0 0
        %1859 = vmatprep.subr.bf16.mxu0 0
        %1860 = vmatpush1.bf16.xpose.msra.mxu0 0
        %1861 = vmatprep.subr.bf16.mxu0 0
        %1862 = vmatpush1.bf16.xpose.msra.mxu0 0
        %1863 = vmatprep.subr.bf16.mxu0 0
        %1864 = vmatpush1.bf16.xpose.msra.mxu0 0
        %1865 = vmatprep.subr.bf16.mxu0 0
        %1866 = vmatpush1.bf16.xpose.msra.mxu0 0
        %1867 = vmatprep.subr.bf16.mxu0 0
        %1868 = vmatpush1.bf16.xpose.msra.mxu0 0
        %1869 = vmatprep.subr.bf16.mxu0 0
        %1870 = vmatpush1.bf16.xpose.msra.mxu0 0
        %1871 = vmatprep.subr.bf16.mxu0 0
        %1872 = vmatpush1.bf16.xpose.msra.mxu0 0
        %1873 = vmatprep.subr.bf16.mxu0 0
        %1874 = vmatpush1.bf16.xpose.msra.mxu0 0
        %1875 = vmatprep.subr.bf16.mxu0 0
        %1876 = vmatpush1.bf16.xpose.msra.mxu0 0
        %1877 = vmatprep.subr.bf16.mxu0 0
        %1878 = vmatpush1.bf16.xpose.msra.mxu0 0
        %1879 = vmatprep.subr.bf16.mxu0 0
        %1880 = vmatpush1.bf16.xpose.msra.mxu0 0
        %1881 = vmatprep.subr.bf16.mxu0 0
        %1882 = vmatpush1.bf16.xpose.msra.mxu0 0
        %1883 = vmatprep.mubr.bf16.mxu0 0
        %1884 = vmatmul.mubr.bf16.gmra.mrb[0].mxu0 %v1846
        %v1885 = vpop.f32.mrb[0].mxu0
        %v1886 = vadd.f32 0.0, %v1885
        %v1887 = vpop.f32.mrb[0].mxu0
        %v1888 = vpop.f32.mrb[0].mxu0
        %v1889 = vpop.f32.mrb[0].mxu0
        %1890 = vdwg.mxu0
        %v1892 = vsel %vm1844, %v1539, 0
        %v1895 = vsel %vm1844, %v1691, 0
        %1897 = vmatprep.subr.bf16.mxu0 0
        %1898 = vmatpush1.bf16.xpose.msra.mxu0 %v1895
        %1899 = vmatprep.subr.bf16.mxu0 0
        %1900 = vmatpush1.bf16.xpose.msra.mxu0 0
        %1901 = vmatprep.subr.bf16.mxu0 0
        %1902 = vmatpush1.bf16.xpose.msra.mxu0 0
        %1903 = vmatprep.subr.bf16.mxu0 0
        %1904 = vmatpush1.bf16.xpose.msra.mxu0 0
        %1905 = vmatprep.subr.bf16.mxu0 0
        %1906 = vmatpush1.bf16.xpose.msra.mxu0 0
        %1907 = vmatprep.subr.bf16.mxu0 0
        %1908 = vmatpush1.bf16.xpose.msra.mxu0 0
        %1909 = vmatprep.subr.bf16.mxu0 0
        %1910 = vmatpush1.bf16.xpose.msra.mxu0 0
        %1911 = vmatprep.subr.bf16.mxu0 0
        %1912 = vmatpush1.bf16.xpose.msra.mxu0 0
        %1913 = vmatprep.subr.bf16.mxu0 0
        %1914 = vmatpush1.bf16.xpose.msra.mxu0 0
        %1915 = vmatprep.subr.bf16.mxu0 0
        %1916 = vmatpush1.bf16.xpose.msra.mxu0 0
        %1917 = vmatprep.subr.bf16.mxu0 0
        %1918 = vmatpush1.bf16.xpose.msra.mxu0 0
        %1919 = vmatprep.subr.bf16.mxu0 0
        %1920 = vmatpush1.bf16.xpose.msra.mxu0 0
        %1921 = vmatprep.subr.bf16.mxu0 0
        %1922 = vmatpush1.bf16.xpose.msra.mxu0 0
        %1923 = vmatprep.subr.bf16.mxu0 0
        %1924 = vmatpush1.bf16.xpose.msra.mxu0 0
        %1925 = vmatprep.subr.bf16.mxu0 0
        %1926 = vmatpush1.bf16.xpose.msra.mxu0 0
        %1927 = vmatprep.subr.bf16.mxu0 0
        %1928 = vmatpush1.bf16.xpose.msra.mxu0 0
        %1929 = vmatprep.mubr.bf16.mxu0 0
        %1930 = vmatmul.mubr.bf16.gmra.mrb[0].mxu0 %v1892
        %v1931 = vpop.f32.mrb[0].mxu0
        %v1932 = vadd.f32 0.0, %v1931
        %v1933 = vpop.f32.mrb[0].mxu0
        %v1934 = vpop.f32.mrb[0].mxu0
        %v1935 = vpop.f32.mrb[0].mxu0
        %1936 = vdwg.mxu0
        %v1938 = vsel %vm1844, %v1540, 0
        %v1941 = vsel %vm1844, %v1692, 0
        %1943 = vmatprep.subr.bf16.mxu0 0
        %1944 = vmatpush1.bf16.xpose.msra.mxu0 %v1941
        %1945 = vmatprep.subr.bf16.mxu0 0
        %1946 = vmatpush1.bf16.xpose.msra.mxu0 0
        %1947 = vmatprep.subr.bf16.mxu0 0
        %1948 = vmatpush1.bf16.xpose.msra.mxu0 0
        %1949 = vmatprep.subr.bf16.mxu0 0
        %1950 = vmatpush1.bf16.xpose.msra.mxu0 0
        %1951 = vmatprep.subr.bf16.mxu0 0
        %1952 = vmatpush1.bf16.xpose.msra.mxu0 0
        %1953 = vmatprep.subr.bf16.mxu0 0
        %1954 = vmatpush1.bf16.xpose.msra.mxu0 0
        %1955 = vmatprep.subr.bf16.mxu0 0
        %1956 = vmatpush1.bf16.xpose.msra.mxu0 0
        %1957 = vmatprep.subr.bf16.mxu0 0
        %1958 = vmatpush1.bf16.xpose.msra.mxu0 0
        %1959 = vmatprep.subr.bf16.mxu0 0
        %1960 = vmatpush1.bf16.xpose.msra.mxu0 0
        %1961 = vmatprep.subr.bf16.mxu0 0
        %1962 = vmatpush1.bf16.xpose.msra.mxu0 0
        %1963 = vmatprep.subr.bf16.mxu0 0
        %1964 = vmatpush1.bf16.xpose.msra.mxu0 0
        %1965 = vmatprep.subr.bf16.mxu0 0
        %1966 = vmatpush1.bf16.xpose.msra.mxu0 0
        %1967 = vmatprep.subr.bf16.mxu0 0
        %1968 = vmatpush1.bf16.xpose.msra.mxu0 0
        %1969 = vmatprep.subr.bf16.mxu0 0
        %1970 = vmatpush1.bf16.xpose.msra.mxu0 0
        %1971 = vmatprep.subr.bf16.mxu0 0
        %1972 = vmatpush1.bf16.xpose.msra.mxu0 0
        %1973 = vmatprep.subr.bf16.mxu0 0
        %1974 = vmatpush1.bf16.xpose.msra.mxu0 0
        %1975 = vmatprep.mubr.bf16.mxu0 0
        %1976 = vmatmul.mubr.bf16.gmra.mrb[0].mxu0 %v1938
        %v1977 = vpop.f32.mrb[0].mxu0
        %v1978 = vadd.f32 0.0, %v1977
        %v1979 = vpop.f32.mrb[0].mxu0
        %v1980 = vpop.f32.mrb[0].mxu0
        %v1981 = vpop.f32.mrb[0].mxu0
        %1982 = vdwg.mxu0
        %v1984 = vsel %vm1844, %v1541, 0
        %v1987 = vsel %vm1844, %v1693, 0
        %1989 = vmatprep.subr.bf16.mxu0 0
        %1990 = vmatpush1.bf16.xpose.msra.mxu0 %v1987
        %1991 = vmatprep.subr.bf16.mxu0 0
        %1992 = vmatpush1.bf16.xpose.msra.mxu0 0
        %1993 = vmatprep.subr.bf16.mxu0 0
        %1994 = vmatpush1.bf16.xpose.msra.mxu0 0
        %1995 = vmatprep.subr.bf16.mxu0 0
        %1996 = vmatpush1.bf16.xpose.msra.mxu0 0
        %1997 = vmatprep.subr.bf16.mxu0 0
        %1998 = vmatpush1.bf16.xpose.msra.mxu0 0
        %1999 = vmatprep.subr.bf16.mxu0 0
        %2000 = vmatpush1.bf16.xpose.msra.mxu0 0
        %2001 = vmatprep.subr.bf16.mxu0 0
        %2002 = vmatpush1.bf16.xpose.msra.mxu0 0
        %2003 = vmatprep.subr.bf16.mxu0 0
        %2004 = vmatpush1.bf16.xpose.msra.mxu0 0
        %2005 = vmatprep.subr.bf16.mxu0 0
        %2006 = vmatpush1.bf16.xpose.msra.mxu0 0
        %2007 = vmatprep.subr.bf16.mxu0 0
        %2008 = vmatpush1.bf16.xpose.msra.mxu0 0
        %2009 = vmatprep.subr.bf16.mxu0 0
        %2010 = vmatpush1.bf16.xpose.msra.mxu0 0
        %2011 = vmatprep.subr.bf16.mxu0 0
        %2012 = vmatpush1.bf16.xpose.msra.mxu0 0
        %2013 = vmatprep.subr.bf16.mxu0 0
        %2014 = vmatpush1.bf16.xpose.msra.mxu0 0
        %2015 = vmatprep.subr.bf16.mxu0 0
        %2016 = vmatpush1.bf16.xpose.msra.mxu0 0
        %2017 = vmatprep.subr.bf16.mxu0 0
        %2018 = vmatpush1.bf16.xpose.msra.mxu0 0
        %2019 = vmatprep.subr.bf16.mxu0 0
        %2020 = vmatpush1.bf16.xpose.msra.mxu0 0
        %2021 = vmatprep.mubr.bf16.mxu0 0
        %2022 = vmatmul.mubr.bf16.gmra.mrb[0].mxu0 %v1984
        %v2023 = vpop.f32.mrb[0].mxu0
        %v2024 = vadd.f32 0.0, %v2023
        %v2025 = vpop.f32.mrb[0].mxu0
        %v2026 = vpop.f32.mrb[0].mxu0
        %v2027 = vpop.f32.mrb[0].mxu0
        %2028 = vdwg.mxu0
        %v2029 = vsel %vm1844, %v1886, -inf
        %2030 = vmax.xlane.f32.xlu0 %v2029
        %v2031 = vpop.xlane.xlu0 %2030
        %v2032 = vsel %vm1844, %v1932, -inf
        %2033 = vmax.xlane.f32.xlu0 %v2032
        %v2034 = vpop.xlane.xlu0 %2033
        %v2035 = vsel %vm1844, %v1978, -inf
        %2036 = vmax.xlane.f32.xlu0 %v2035
        %v2037 = vpop.xlane.xlu0 %2036
        %v2038 = vsel %vm1844, %v2024, -inf
        %2039 = vmax.xlane.f32.xlu0 %v2038
        %v2040 = vpop.xlane.xlu0 %2039
        %v2041 = vsub.f32 %v1886, %v2031
        %v2042 = vsub.f32 %v1932, %v2034
        %v2043 = vsub.f32 %v1978, %v2037
        %v2044 = vsub.f32 %v2024, %v2040
        %v2045 = vmul.f32 %v2041, 1.442695
        %v2046 = vpow.pop %v2045
        %v2047 = vmul.f32 %v2042, 1.442695
        %v2048 = vpow.pop %v2047
        %v2049 = vmul.f32 %v2043, 1.442695
        %v2050 = vpow.pop %v2049
        %v2051 = vmul.f32 %v2044, 1.442695
        %v2052 = vpow.pop %v2051
        %v2053 = vsel %vm1844, %v2046, 0.0
        %2054 = vadd.xlane.f32.xlu0 %v2053
        %v2055 = vpop.xlane.xlu0 %2054
        %v2056 = vsel %vm1844, %v2048, 0.0
        %2057 = vadd.xlane.f32.xlu0 %v2056
        %v2058 = vpop.xlane.xlu0 %2057
        %v2059 = vsel %vm1844, %v2050, 0.0
        %2060 = vadd.xlane.f32.xlu0 %v2059
        %v2061 = vpop.xlane.xlu0 %2060
        %v2062 = vsel %vm1844, %v2052, 0.0
        %2063 = vadd.xlane.f32.xlu0 %v2062
        %v2064 = vpop.xlane.xlu0 %2063
        %v2065 = vrcp.pop %v2055
        %v2066 = vrcp.pop %v2058
        %v2067 = vrcp.pop %v2061
        %v2068 = vrcp.pop %v2064
        %v2069 = vmul.f32 %v2046, %v2065
        %v2070 = vmul.f32 %v2048, %v2066
        %v2071 = vmul.f32 %v2050, %v2067
        %v2072 = vmul.f32 %v2052, %v2068
        %v2073 = vpack.c.bf16 %v2069, %v2069
        %v2074 = vpack.c.bf16 %v2070, %v2070
        %v2075 = vpack.c.bf16 %v2071, %v2071
        %v2076 = vpack.c.bf16 %v2072, %v2072
        %v2078 = vsel %vm1844, %v2073, 0
        %vm2080 = vcmask 1043456
        %v2082 = vsel %vm2080, %v1840, 0
        %2084 = vmatprep.subr.bf16.mxu0 0
        %2085 = vmatpush1.bf16.msra.mxu0 %v2082
        %2086 = vmatprep.subr.bf16.mxu0 0
        %2087 = vmatpush1.bf16.msra.mxu0 0
        %2088 = vmatprep.subr.bf16.mxu0 0
        %2089 = vmatpush1.bf16.msra.mxu0 0
        %2090 = vmatprep.subr.bf16.mxu0 0
        %2091 = vmatpush1.bf16.msra.mxu0 0
        %2092 = vmatprep.subr.bf16.mxu0 0
        %2093 = vmatpush1.bf16.msra.mxu0 0
        %2094 = vmatprep.subr.bf16.mxu0 0
        %2095 = vmatpush1.bf16.msra.mxu0 0
        %2096 = vmatprep.subr.bf16.mxu0 0
        %2097 = vmatpush1.bf16.msra.mxu0 0
        %2098 = vmatprep.subr.bf16.mxu0 0
        %2099 = vmatpush1.bf16.msra.mxu0 0
        %2100 = vmatprep.subr.bf16.mxu0 0
        %2101 = vmatpush1.bf16.msra.mxu0 0
        %2102 = vmatprep.subr.bf16.mxu0 0
        %2103 = vmatpush1.bf16.msra.mxu0 0
        %2104 = vmatprep.subr.bf16.mxu0 0
        %2105 = vmatpush1.bf16.msra.mxu0 0
        %2106 = vmatprep.subr.bf16.mxu0 0
        %2107 = vmatpush1.bf16.msra.mxu0 0
        %2108 = vmatprep.subr.bf16.mxu0 0
        %2109 = vmatpush1.bf16.msra.mxu0 0
        %2110 = vmatprep.subr.bf16.mxu0 0
        %2111 = vmatpush1.bf16.msra.mxu0 0
        %2112 = vmatprep.subr.bf16.mxu0 0
        %2113 = vmatpush1.bf16.msra.mxu0 0
        %2114 = vmatprep.subr.bf16.mxu0 0
        %2115 = vmatpush1.bf16.msra.mxu0 0
        %2116 = vmatprep.mubr.bf16.mxu0 0
        %2117 = vmatmul.mubr.bf16.gmra.mrb[0].mxu0 %v2078
        %v2118 = vpop.f32.mrb[0].mxu0
        %v2119 = vadd.f32 0.0, %v2118
        %v2120 = vpop.f32.mrb[0].mxu0
        %v2121 = vpop.f32.mrb[0].mxu0
        %v2122 = vpop.f32.mrb[0].mxu0
        %2123 = vdwg.mxu0
        %v2125 = vsel %vm1844, %v2074, 0
        %v2128 = vsel %vm2080, %v1841, 0
        %2130 = vmatprep.subr.bf16.mxu0 0
        %2131 = vmatpush1.bf16.msra.mxu0 %v2128
        %2132 = vmatprep.subr.bf16.mxu0 0
        %2133 = vmatpush1.bf16.msra.mxu0 0
        %2134 = vmatprep.subr.bf16.mxu0 0
        %2135 = vmatpush1.bf16.msra.mxu0 0
        %2136 = vmatprep.subr.bf16.mxu0 0
        %2137 = vmatpush1.bf16.msra.mxu0 0
        %2138 = vmatprep.subr.bf16.mxu0 0
        %2139 = vmatpush1.bf16.msra.mxu0 0
        %2140 = vmatprep.subr.bf16.mxu0 0
        %2141 = vmatpush1.bf16.msra.mxu0 0
        %2142 = vmatprep.subr.bf16.mxu0 0
        %2143 = vmatpush1.bf16.msra.mxu0 0
        %2144 = vmatprep.subr.bf16.mxu0 0
        %2145 = vmatpush1.bf16.msra.mxu0 0
        %2146 = vmatprep.subr.bf16.mxu0 0
        %2147 = vmatpush1.bf16.msra.mxu0 0
        %2148 = vmatprep.subr.bf16.mxu0 0
        %2149 = vmatpush1.bf16.msra.mxu0 0
        %2150 = vmatprep.subr.bf16.mxu0 0
        %2151 = vmatpush1.bf16.msra.mxu0 0
        %2152 = vmatprep.subr.bf16.mxu0 0
        %2153 = vmatpush1.bf16.msra.mxu0 0
        %2154 = vmatprep.subr.bf16.mxu0 0
        %2155 = vmatpush1.bf16.msra.mxu0 0
        %2156 = vmatprep.subr.bf16.mxu0 0
        %2157 = vmatpush1.bf16.msra.mxu0 0
        %2158 = vmatprep.subr.bf16.mxu0 0
        %2159 = vmatpush1.bf16.msra.mxu0 0
        %2160 = vmatprep.subr.bf16.mxu0 0
        %2161 = vmatpush1.bf16.msra.mxu0 0
        %2162 = vmatprep.mubr.bf16.mxu0 0
        %2163 = vmatmul.mubr.bf16.gmra.mrb[0].mxu0 %v2125
        %v2164 = vpop.f32.mrb[0].mxu0
        %v2165 = vadd.f32 0.0, %v2164
        %v2166 = vpop.f32.mrb[0].mxu0
        %v2167 = vpop.f32.mrb[0].mxu0
        %v2168 = vpop.f32.mrb[0].mxu0
        %2169 = vdwg.mxu0
        %v2171 = vsel %vm1844, %v2075, 0
        %v2174 = vsel %vm2080, %v1842, 0
        %2176 = vmatprep.subr.bf16.mxu0 0
        %2177 = vmatpush1.bf16.msra.mxu0 %v2174
        %2178 = vmatprep.subr.bf16.mxu0 0
        %2179 = vmatpush1.bf16.msra.mxu0 0
        %2180 = vmatprep.subr.bf16.mxu0 0
        %2181 = vmatpush1.bf16.msra.mxu0 0
        %2182 = vmatprep.subr.bf16.mxu0 0
        %2183 = vmatpush1.bf16.msra.mxu0 0
        %2184 = vmatprep.subr.bf16.mxu0 0
        %2185 = vmatpush1.bf16.msra.mxu0 0
        %2186 = vmatprep.subr.bf16.mxu0 0
        %2187 = vmatpush1.bf16.msra.mxu0 0
        %2188 = vmatprep.subr.bf16.mxu0 0
        %2189 = vmatpush1.bf16.msra.mxu0 0
        %2190 = vmatprep.subr.bf16.mxu0 0
        %2191 = vmatpush1.bf16.msra.mxu0 0
        %2192 = vmatprep.subr.bf16.mxu0 0
        %2193 = vmatpush1.bf16.msra.mxu0 0
        %2194 = vmatprep.subr.bf16.mxu0 0
        %2195 = vmatpush1.bf16.msra.mxu0 0
        %2196 = vmatprep.subr.bf16.mxu0 0
        %2197 = vmatpush1.bf16.msra.mxu0 0
        %2198 = vmatprep.subr.bf16.mxu0 0
        %2199 = vmatpush1.bf16.msra.mxu0 0
        %2200 = vmatprep.subr.bf16.mxu0 0
        %2201 = vmatpush1.bf16.msra.mxu0 0
        %2202 = vmatprep.subr.bf16.mxu0 0
        %2203 = vmatpush1.bf16.msra.mxu0 0
        %2204 = vmatprep.subr.bf16.mxu0 0
        %2205 = vmatpush1.bf16.msra.mxu0 0
        %2206 = vmatprep.subr.bf16.mxu0 0
        %2207 = vmatpush1.bf16.msra.mxu0 0
        %2208 = vmatprep.mubr.bf16.mxu0 0
        %2209 = vmatmul.mubr.bf16.gmra.mrb[0].mxu0 %v2171
        %v2210 = vpop.f32.mrb[0].mxu0
        %v2211 = vadd.f32 0.0, %v2210
        %v2212 = vpop.f32.mrb[0].mxu0
        %v2213 = vpop.f32.mrb[0].mxu0
        %v2214 = vpop.f32.mrb[0].mxu0
        %2215 = vdwg.mxu0
        %v2217 = vsel %vm1844, %v2076, 0
        %v2220 = vsel %vm2080, %v1843, 0
        %2222 = vmatprep.subr.bf16.mxu0 0
        %2223 = vmatpush1.bf16.msra.mxu0 %v2220
        %2224 = vmatprep.subr.bf16.mxu0 0
        %2225 = vmatpush1.bf16.msra.mxu0 0
        %2226 = vmatprep.subr.bf16.mxu0 0
        %2227 = vmatpush1.bf16.msra.mxu0 0
        %2228 = vmatprep.subr.bf16.mxu0 0
        %2229 = vmatpush1.bf16.msra.mxu0 0
        %2230 = vmatprep.subr.bf16.mxu0 0
        %2231 = vmatpush1.bf16.msra.mxu0 0
        %2232 = vmatprep.subr.bf16.mxu0 0
        %2233 = vmatpush1.bf16.msra.mxu0 0
        %2234 = vmatprep.subr.bf16.mxu0 0
        %2235 = vmatpush1.bf16.msra.mxu0 0
        %2236 = vmatprep.subr.bf16.mxu0 0
        %2237 = vmatpush1.bf16.msra.mxu0 0
        %2238 = vmatprep.subr.bf16.mxu0 0
        %2239 = vmatpush1.bf16.msra.mxu0 0
        %2240 = vmatprep.subr.bf16.mxu0 0
        %2241 = vmatpush1.bf16.msra.mxu0 0
        %2242 = vmatprep.subr.bf16.mxu0 0
        %2243 = vmatpush1.bf16.msra.mxu0 0
        %2244 = vmatprep.subr.bf16.mxu0 0
        %2245 = vmatpush1.bf16.msra.mxu0 0
        %2246 = vmatprep.subr.bf16.mxu0 0
        %2247 = vmatpush1.bf16.msra.mxu0 0
        %2248 = vmatprep.subr.bf16.mxu0 0
        %2249 = vmatpush1.bf16.msra.mxu0 0
        %2250 = vmatprep.subr.bf16.mxu0 0
        %2251 = vmatpush1.bf16.msra.mxu0 0
        %2252 = vmatprep.subr.bf16.mxu0 0
        %2253 = vmatpush1.bf16.msra.mxu0 0
        %2254 = vmatprep.mubr.bf16.mxu0 0
        %2255 = vmatmul.mubr.bf16.gmra.mrb[0].mxu0 %v2217
        %v2256 = vpop.f32.mrb[0].mxu0
        %v2257 = vadd.f32 0.0, %v2256
        %v2258 = vpop.f32.mrb[0].mxu0
        %v2259 = vpop.f32.mrb[0].mxu0
        %v2260 = vpop.f32.mrb[0].mxu0
        %2261 = vdwg.mxu0
        %v2262 = vcombine.low %v2119, %v2211
        %v2263 = vcombine.high %v2119, %v2211
        %v2265 = vunpack.c.l.s4 1983009808
        %v2266 = vunpack.c.0.s8 %v2265
        %v2267 = vlaneseq
        %v2268 = vshrl.u32 %v2267, 7
        %v2269 = vsub.s32 %v2266, %v2268
        %v2270 = vrot.slane %v2262, %v2269
        %v2272 = vunpack.c.l.s4 1983009808
        %v2273 = vunpack.c.0.s8 %v2272
        %v2274 = vlaneseq
        %v2275 = vshrl.u32 %v2274, 7
        %v2276 = vsub.s32 %v2273, %v2275
        %v2277 = vrot.slane %v2263, %v2276
        %v2278 = vcombine.low %v2165, %v2257
        %v2279 = vcombine.high %v2165, %v2257
        %v2281 = vunpack.c.l.s4 1983009808
        %v2282 = vunpack.c.0.s8 %v2281
        %v2283 = vlaneseq
        %v2284 = vshrl.u32 %v2283, 7
        %v2285 = vsub.s32 %v2282, %v2284
        %v2286 = vrot.slane %v2278, %v2285
        %v2288 = vunpack.c.l.s4 1983009808
        %v2289 = vunpack.c.0.s8 %v2288
        %v2290 = vlaneseq
        %v2291 = vshrl.u32 %v2290, 7
        %v2292 = vsub.s32 %v2289, %v2291
        %v2293 = vrot.slane %v2279, %v2292
        %v2294 = vcombine.low %v2270, %v2286
        %v2295 = vcombine.high %v2270, %v2286
        %v2297 = vunpack.c.l.s4 1934713408
        %v2298 = vunpack.c.0.s8 %v2297
        %v2299 = vlaneseq
        %v2300 = vshrl.u32 %v2299, 7
        %v2301 = vsub.s32 %v2298, %v2300
        %v2302 = vrot.slane %v2294, %v2301
        %v2304 = vunpack.c.l.s4 1934713408
        %v2305 = vunpack.c.0.s8 %v2304
        %v2306 = vlaneseq
        %v2307 = vshrl.u32 %v2306, 7
        %v2308 = vsub.s32 %v2305, %v2307
        %v2309 = vrot.slane %v2295, %v2308
        %v2310 = vcombine.low %v2277, %v2293
        %v2311 = vcombine.high %v2277, %v2293
        %v2313 = vunpack.c.l.s4 1934713408
        %v2314 = vunpack.c.0.s8 %v2313
        %v2315 = vlaneseq
        %v2316 = vshrl.u32 %v2315, 7
        %v2317 = vsub.s32 %v2314, %v2316
        %v2318 = vrot.slane %v2310, %v2317
        %v2320 = vunpack.c.l.s4 1934713408
        %v2321 = vunpack.c.0.s8 %v2320
        %v2322 = vlaneseq
        %v2323 = vshrl.u32 %v2322, 7
        %v2324 = vsub.s32 %v2321, %v2323
        %v2325 = vrot.slane %v2311, %v2324
        %v2326 = vcombine.high %v2302, 0.0
        %v2327 = vcombine.high %v2309, 0.0
        %v2328 = vcombine.high %v2318, 0.0
        %v2329 = vcombine.high %v2325, 0.0
        %v2330 = vcombine.low %v2302, %v2309
        %v2332 = vunpack.c.l.s4 1983009808
        %v2333 = vunpack.c.0.s8 %v2332
        %v2334 = vlaneseq
        %v2335 = vshrl.u32 %v2334, 7
        %v2336 = vsub.s32 %v2333, %v2335
        %v2337 = vrot.slane %v2330, %v2336
        %v2338 = vcombine.low %v2326, %v2327
        %v2340 = vunpack.c.l.s4 1983009808
        %v2341 = vunpack.c.0.s8 %v2340
        %v2342 = vlaneseq
        %v2343 = vshrl.u32 %v2342, 7
        %v2344 = vsub.s32 %v2341, %v2343
        %v2345 = vrot.slane %v2338, %v2344
        %v2346 = vcombine.low %v2318, %v2325
        %v2348 = vunpack.c.l.s4 1983009808
        %v2349 = vunpack.c.0.s8 %v2348
        %v2350 = vlaneseq
        %v2351 = vshrl.u32 %v2350, 7
        %v2352 = vsub.s32 %v2349, %v2351
        %v2353 = vrot.slane %v2346, %v2352
        %v2354 = vcombine.low %v2328, %v2329
        %v2356 = vunpack.c.l.s4 1983009808
        %v2357 = vunpack.c.0.s8 %v2356
        %v2358 = vlaneseq
        %v2359 = vshrl.u32 %v2358, 7
        %v2360 = vsub.s32 %v2357, %v2359
        %v2361 = vrot.slane %v2354, %v2360
        %v2362 = vcombine.low %v2337, %v2345
        %v2363 = vcombine.high %v2337, %v2345
        %v2365 = vunpack.c.l.s4 1934713408
        %v2366 = vunpack.c.0.s8 %v2365
        %v2367 = vlaneseq
        %v2368 = vshrl.u32 %v2367, 7
        %v2369 = vsub.s32 %v2366, %v2368
        %v2370 = vrot.slane %v2362, %v2369
        %v2372 = vunpack.c.l.s4 1934713408
        %v2373 = vunpack.c.0.s8 %v2372
        %v2374 = vlaneseq
        %v2375 = vshrl.u32 %v2374, 7
        %v2376 = vsub.s32 %v2373, %v2375
        %v2377 = vrot.slane %v2363, %v2376
        %v2378 = vcombine.low %v2353, %v2361
        %v2379 = vcombine.high %v2353, %v2361
        %v2381 = vunpack.c.l.s4 1934713408
        %v2382 = vunpack.c.0.s8 %v2381
        %v2383 = vlaneseq
        %v2384 = vshrl.u32 %v2383, 7
        %v2385 = vsub.s32 %v2382, %v2384
        %v2386 = vrot.slane %v2378, %v2385
        %v2388 = vunpack.c.l.s4 1934713408
        %v2389 = vunpack.c.0.s8 %v2388
        %v2390 = vlaneseq
        %v2391 = vshrl.u32 %v2390, 7
        %v2392 = vsub.s32 %v2389, %v2391
        %v2393 = vrot.slane %v2379, %v2392
        %v2394 = vcombine.low %v2370, %v2386
        %v2395 = vcombine.high %v2370, %v2386
        %v2396 = vcombine.low %v2377, %v2393
        %v2397 = vcombine.high %v2377, %v2393
        %2399 = vrot.lane.b32.xlu0 %v2395, 8
        %v2400 = vpop.permute.xlu0 %2399
        %2403 = vrot.lane.b32.xlu0 %v2396, 16
        %v2404 = vpop.permute.xlu0 %2403
        %2407 = vrot.lane.b32.xlu0 %v2397, 24
        %v2408 = vpop.permute.xlu0 %2407
        %v2410 = vsel %vm1844, %v2394, %v2400
        %vm2411 = vcmask 130048
        %v2412 = vsel %vm2411, %v2410, %v2404
        %vm2413 = vcmask 195584
        %v2414 = vsel %vm2413, %v2412, %v2408
        %v2415 = vpack.c.bf16 %v2414, %v2414
        %v2417 = vlaneseq
        %v2418 = vshrl.u32 %v2417, 7
        %v2419 = vsub.s32 0, %v2418
        %v2420 = vrot.slane %v1391, %v2419
        %v2426 = vunpack.c.l.b16 %v1387
        %v2427 = vunpack.c.l.b16 %v1388
        %v2428 = vunpack.c.l.b16 %v1389
        %v2429 = vunpack.c.l.b16 %v1390
        %v2430 = vpack.c.b16 %v2427, %v2426
        %v2431 = vpack.c.b16 %v2429, %v2428
        %v2435 = vsel %vm1276, %v2415, 0
        %2437 = vmatprep.subr.bf16.mxu0 0
        %2438 = vmatpush1.bf16.msra.mxu0 %v2430
        %2439 = vmatprep.subr.bf16.mxu0 0
        %2440 = vmatpush1.bf16.msra.mxu0 %v2431
        %2441 = vmatprep.subr.bf16.mxu0 0
        %2442 = vmatpush1.bf16.msra.mxu0 0
        %2443 = vmatprep.subr.bf16.mxu0 0
        %2444 = vmatpush1.bf16.msra.mxu0 0
        %2445 = vmatprep.subr.bf16.mxu0 0
        %2446 = vmatpush1.bf16.msra.mxu0 0
        %2447 = vmatprep.subr.bf16.mxu0 0
        %2448 = vmatpush1.bf16.msra.mxu0 0
        %2449 = vmatprep.subr.bf16.mxu0 0
        %2450 = vmatpush1.bf16.msra.mxu0 0
        %2451 = vmatprep.subr.bf16.mxu0 0
        %2452 = vmatpush1.bf16.msra.mxu0 0
        %2453 = vmatprep.subr.bf16.mxu0 0
        %2454 = vmatpush1.bf16.msra.mxu0 0
        %2455 = vmatprep.subr.bf16.mxu0 0
        %2456 = vmatpush1.bf16.msra.mxu0 0
        %2457 = vmatprep.subr.bf16.mxu0 0
        %2458 = vmatpush1.bf16.msra.mxu0 0
        %2459 = vmatprep.subr.bf16.mxu0 0
        %2460 = vmatpush1.bf16.msra.mxu0 0
        %2461 = vmatprep.subr.bf16.mxu0 0
        %2462 = vmatpush1.bf16.msra.mxu0 0
        %2463 = vmatprep.subr.bf16.mxu0 0
        %2464 = vmatpush1.bf16.msra.mxu0 0
        %2465 = vmatprep.subr.bf16.mxu0 0
        %2466 = vmatpush1.bf16.msra.mxu0 0
        %2467 = vmatprep.subr.bf16.mxu0 0
        %2468 = vmatpush1.bf16.msra.mxu0 0
        %2469 = vmatprep.mubr.bf16.mxu0 0
        %2470 = vmatmul.mubr.bf16.gmra.mrb[0].mxu0 %v2435
        %v2471 = vpop.f32.mrb[0].mxu0
        %v2472 = vadd.f32 %v2420, %v2471
        %v2473 = vpop.f32.mrb[0].mxu0
        %v2474 = vpop.f32.mrb[0].mxu0
        %v2475 = vpop.f32.mrb[0].mxu0
        %2476 = vdwg.mxu0
        %v2477 = vadd.f32 %v1247, %v2472
        %v2478 = vsel %vm1276, %v2477, 0.0
        %2479 = vadd.xlane.f32.xlu0 %v2478
        %v2480 = vpop.xlane.xlu0 %2479
        %v2481 = vrcp.pop 32.0
        %v2482 = vmul.f32 %v2480, %v2481
        %v2483 = vsub.f32 %v2477, %v2482
        %v2484 = vmul.f32 %v2483, %v2483
        %v2485 = vsel %vm1276, %v2484, 0.0
        %2486 = vadd.xlane.f32.xlu0 %v2485
        %v2487 = vpop.xlane.xlu0 %2486
        %v2488 = vmul.f32 %v2487, %v2481
        %v2489 = vadd.f32 %v2488, 1e-05
        %v2490 = vrsqrt.pop %v2489
        %v2491 = vmul.f32 %v2483, %v2490
        %v2492 = vlaneseq
        %v2493 = vshrl.u32 %v2492, 7
        %v2494 = vsub.s32 0, %v2493
        %v2495 = vrot.slane %v1249, %v2494
        %v2496 = vmul.f32 %v2491, %v2495
        %v2497 = vlaneseq
        %v2498 = vshrl.u32 %v2497, 7
        %v2499 = vsub.s32 0, %v2498
        %v2500 = vrot.slane %v1250, %v2499
        %v2501 = vadd.f32 %v2496, %v2500
        %v2502 = vadd.f32 %v2501, %v1248
        %v2503 = vpack.c.bf16 %v2502, %v2502
        %v2504 = vld [vmem:[%s1187] sm:$0xf]
        %v2505 = vld [vmem:[%s1187 + $0x4] sm:$0xf]
        %v2506 = vld [vmem:[%s1187 + $0x8] sm:$0xf]
        %v2507 = vld [vmem:[%s1187 + $0xc] sm:$0xf]
        %v2508 = vld [vmem:[%s1190] sm:$0x1]
        %v2510 = vlaneseq
        %v2511 = vshrl.u32 %v2510, 7
        %v2512 = vsub.s32 0, %v2511
        %v2513 = vrot.slane %v2508, %v2512
        %v2519 = vunpack.c.l.b16 %v2504
        %v2520 = vunpack.c.l.b16 %v2505
        %v2521 = vunpack.c.l.b16 %v2506
        %v2522 = vunpack.c.l.b16 %v2507
        %v2523 = vpack.c.b16 %v2520, %v2519
        %v2524 = vpack.c.b16 %v2522, %v2521
        %v2528 = vsel %vm1276, %v2503, 0
        %2530 = vmatprep.subr.bf16.mxu0 0
        %2531 = vmatpush1.bf16.msra.mxu0 %v2523
        %2532 = vmatprep.subr.bf16.mxu0 0
        %2533 = vmatpush1.bf16.msra.mxu0 %v2524
        %2534 = vmatprep.subr.bf16.mxu0 0
        %2535 = vmatpush1.bf16.msra.mxu0 0
        %2536 = vmatprep.subr.bf16.mxu0 0
        %2537 = vmatpush1.bf16.msra.mxu0 0
        %2538 = vmatprep.subr.bf16.mxu0 0
        %2539 = vmatpush1.bf16.msra.mxu0 0
        %2540 = vmatprep.subr.bf16.mxu0 0
        %2541 = vmatpush1.bf16.msra.mxu0 0
        %2542 = vmatprep.subr.bf16.mxu0 0
        %2543 = vmatpush1.bf16.msra.mxu0 0
        %2544 = vmatprep.subr.bf16.mxu0 0
        %2545 = vmatpush1.bf16.msra.mxu0 0
        %2546 = vmatprep.subr.bf16.mxu0 0
        %2547 = vmatpush1.bf16.msra.mxu0 0
        %2548 = vmatprep.subr.bf16.mxu0 0
        %2549 = vmatpush1.bf16.msra.mxu0 0
        %2550 = vmatprep.subr.bf16.mxu0 0
        %2551 = vmatpush1.bf16.msra.mxu0 0
        %2552 = vmatprep.subr.bf16.mxu0 0
        %2553 = vmatpush1.bf16.msra.mxu0 0
        %2554 = vmatprep.subr.bf16.mxu0 0
        %2555 = vmatpush1.bf16.msra.mxu0 0
        %2556 = vmatprep.subr.bf16.mxu0 0
        %2557 = vmatpush1.bf16.msra.mxu0 0
        %2558 = vmatprep.subr.bf16.mxu0 0
        %2559 = vmatpush1.bf16.msra.mxu0 0
        %2560 = vmatprep.subr.bf16.mxu0 0
        %2561 = vmatpush1.bf16.msra.mxu0 0
        %2562 = vmatprep.mubr.bf16.mxu0 0
        %2563 = vmatmul.mubr.bf16.gmra.mrb[0].mxu0 %v2528
        %v2564 = vpop.f32.mrb[0].mxu0
        %v2565 = vadd.f32 %v2513, %v2564
        %v2566 = vpop.f32.mrb[0].mxu0
        %v2567 = vpop.f32.mrb[0].mxu0
        %v2568 = vpop.f32.mrb[0].mxu0
        %2569 = vdwg.mxu0
        %v2570 = vld [vmem:[%s1150] sm:$0xf]
        %v2571 = vld [vmem:[%s1150 + $0x4] sm:$0xf]
        %v2572 = vld [vmem:[%s1150 + $0x8] sm:$0xf]
        %v2573 = vld [vmem:[%s1150 + $0xc] sm:$0xf]
        %v2574 = vld [vmem:[%s1150 + $0x10] sm:$0xf]
        %v2575 = vld [vmem:[%s1150 + $0x14] sm:$0xf]
        %v2576 = vld [vmem:[%s1150 + $0x18] sm:$0xf]
        %v2577 = vld [vmem:[%s1150 + $0x1c] sm:$0xf]
        %v2578 = vld [vmem:[%s1150 + $0x20] sm:$0xf]
        %v2579 = vld [vmem:[%s1150 + $0x24] sm:$0xf]
        %v2580 = vld [vmem:[%s1150 + $0x28] sm:$0xf]
        %v2581 = vld [vmem:[%s1150 + $0x2c] sm:$0xf]
        %v2582 = vld [vmem:[%s1150 + $0x30] sm:$0xf]
        %v2583 = vld [vmem:[%s1150 + $0x34] sm:$0xf]
        %v2584 = vld [vmem:[%s1150 + $0x38] sm:$0xf]
        %v2585 = vld [vmem:[%s1150 + $0x3c] sm:$0xf]
        %v2586 = vld [vmem:[%s1195] sm:$0xf]
        %v2587 = vld [vmem:[%s1195 + $0x4] sm:$0xf]
        %v2588 = vld [vmem:[%s1195 + $0x8] sm:$0xf]
        %v2589 = vld [vmem:[%s1195 + $0xc] sm:$0xf]
        %v2590 = vld [vmem:[%s1198] sm:$0x1]
        %v2592 = vlaneseq
        %v2593 = vshrl.u32 %v2592, 7
        %v2594 = vsub.s32 0, %v2593
        %v2595 = vrot.slane %v2590, %v2594
        %v2613 = vunpack.c.l.b16 %v2570
        %v2614 = vunpack.c.l.b16 %v2571
        %v2615 = vunpack.c.l.b16 %v2572
        %v2616 = vunpack.c.l.b16 %v2573
        %v2617 = vunpack.c.l.b16 %v2574
        %v2618 = vunpack.c.l.b16 %v2575
        %v2619 = vunpack.c.l.b16 %v2576
        %v2620 = vunpack.c.l.b16 %v2577
        %v2621 = vunpack.c.l.b16 %v2578
        %v2622 = vunpack.c.l.b16 %v2579
        %v2623 = vunpack.c.l.b16 %v2580
        %v2624 = vunpack.c.l.b16 %v2581
        %v2625 = vunpack.c.l.b16 %v2582
        %v2626 = vunpack.c.l.b16 %v2583
        %v2627 = vunpack.c.l.b16 %v2584
        %v2628 = vunpack.c.l.b16 %v2585
        %v2629 = vpack.c.b16 %v2614, %v2613
        %v2630 = vpack.c.b16 %v2616, %v2615
        %v2631 = vpack.c.b16 %v2618, %v2617
        %v2632 = vpack.c.b16 %v2620, %v2619
        %v2633 = vpack.c.b16 %v2622, %v2621
        %v2634 = vpack.c.b16 %v2624, %v2623
        %v2635 = vpack.c.b16 %v2626, %v2625
        %v2636 = vpack.c.b16 %v2628, %v2627
        %v2641 = vunpack.c.l.b16 %v2586
        %v2642 = vunpack.c.l.b16 %v2587
        %v2643 = vunpack.c.l.b16 %v2588
        %v2644 = vunpack.c.l.b16 %v2589
        %v2645 = vpack.c.b16 %v2642, %v2641
        %v2646 = vpack.c.b16 %v2644, %v2643
        %v2650 = vsel %vm1276, %v2629, 0
        %v2653 = vsel %vm1276, %v2630, 0
        %v2656 = vsel %vm1276, %v2631, 0
        %v2659 = vsel %vm1276, %v2632, 0
        %v2662 = vsel %vm1276, %v2633, 0
        %v2665 = vsel %vm1276, %v2634, 0
        %v2668 = vsel %vm1276, %v2635, 0
        %v2671 = vsel %vm1276, %v2636, 0
        %2673 = vmatprep.subr.bf16.mxu0 0
        %2674 = vmatpush1.bf16.msra.mxu0 %v2645
        %2675 = vmatprep.subr.bf16.mxu0 0
        %2676 = vmatpush1.bf16.msra.mxu0 %v2646
        %2677 = vmatprep.subr.bf16.mxu0 0
        %2678 = vmatpush1.bf16.msra.mxu0 0
        %2679 = vmatprep.subr.bf16.mxu0 0
        %2680 = vmatpush1.bf16.msra.mxu0 0
        %2681 = vmatprep.subr.bf16.mxu0 0
        %2682 = vmatpush1.bf16.msra.mxu0 0
        %2683 = vmatprep.subr.bf16.mxu0 0
        %2684 = vmatpush1.bf16.msra.mxu0 0
        %2685 = vmatprep.subr.bf16.mxu0 0
        %2686 = vmatpush1.bf16.msra.mxu0 0
        %2687 = vmatprep.subr.bf16.mxu0 0
        %2688 = vmatpush1.bf16.msra.mxu0 0
        %2689 = vmatprep.subr.bf16.mxu0 0
        %2690 = vmatpush1.bf16.msra.mxu0 0
        %2691 = vmatprep.subr.bf16.mxu0 0
        %2692 = vmatpush1.bf16.msra.mxu0 0
        %2693 = vmatprep.subr.bf16.mxu0 0
        %2694 = vmatpush1.bf16.msra.mxu0 0
        %2695 = vmatprep.subr.bf16.mxu0 0
        %2696 = vmatpush1.bf16.msra.mxu0 0
        %2697 = vmatprep.subr.bf16.mxu0 0
        %2698 = vmatpush1.bf16.msra.mxu0 0
        %2699 = vmatprep.subr.bf16.mxu0 0
        %2700 = vmatpush1.bf16.msra.mxu0 0
        %2701 = vmatprep.subr.bf16.mxu0 0
        %2702 = vmatpush1.bf16.msra.mxu0 0
        %2703 = vmatprep.subr.bf16.mxu0 0
        %2704 = vmatpush1.bf16.msra.mxu0 0
        %2705 = vmatprep.mubr.bf16.mxu0 0
        %2706 = vmatmul.mubr.bf16.gmra.mrb[0].mxu0 %v2650
        %v2707 = vpop.f32.mrb[0].mxu0
        %v2708 = vadd.f32 %v2595, %v2707
        %v2709 = vpop.f32.mrb[0].mxu0
        %v2710 = vpop.f32.mrb[0].mxu0
        %v2711 = vadd.f32 %v2595, %v2710
        %v2712 = vpop.f32.mrb[0].mxu0
        %2713 = vmatprep.mubr.bf16.mxu0 0
        %2714 = vmatmul.mubr.bf16.gmra.mrb[0].mxu0 %v2653
        %v2715 = vpop.f32.mrb[0].mxu0
        %v2716 = vadd.f32 %v2595, %v2715
        %v2717 = vpop.f32.mrb[0].mxu0
        %v2718 = vpop.f32.mrb[0].mxu0
        %v2719 = vadd.f32 %v2595, %v2718
        %v2720 = vpop.f32.mrb[0].mxu0
        %2721 = vmatprep.mubr.bf16.mxu0 0
        %2722 = vmatmul.mubr.bf16.gmra.mrb[0].mxu0 %v2656
        %v2723 = vpop.f32.mrb[0].mxu0
        %v2724 = vadd.f32 %v2595, %v2723
        %v2725 = vpop.f32.mrb[0].mxu0
        %v2726 = vpop.f32.mrb[0].mxu0
        %v2727 = vadd.f32 %v2595, %v2726
        %v2728 = vpop.f32.mrb[0].mxu0
        %2729 = vmatprep.mubr.bf16.mxu0 0
        %2730 = vmatmul.mubr.bf16.gmra.mrb[0].mxu0 %v2659
        %v2731 = vpop.f32.mrb[0].mxu0
        %v2732 = vadd.f32 %v2595, %v2731
        %v2733 = vpop.f32.mrb[0].mxu0
        %v2734 = vpop.f32.mrb[0].mxu0
        %v2735 = vadd.f32 %v2595, %v2734
        %v2736 = vpop.f32.mrb[0].mxu0
        %2737 = vmatprep.mubr.bf16.mxu0 0
        %2738 = vmatmul.mubr.bf16.gmra.mrb[0].mxu0 %v2662
        %v2739 = vpop.f32.mrb[0].mxu0
        %v2740 = vadd.f32 %v2595, %v2739
        %v2741 = vpop.f32.mrb[0].mxu0
        %v2742 = vpop.f32.mrb[0].mxu0
        %v2743 = vadd.f32 %v2595, %v2742
        %v2744 = vpop.f32.mrb[0].mxu0
        %2745 = vmatprep.mubr.bf16.mxu0 0
        %2746 = vmatmul.mubr.bf16.gmra.mrb[0].mxu0 %v2665
        %v2747 = vpop.f32.mrb[0].mxu0
        %v2748 = vadd.f32 %v2595, %v2747
        %v2749 = vpop.f32.mrb[0].mxu0
        %v2750 = vpop.f32.mrb[0].mxu0
        %v2751 = vadd.f32 %v2595, %v2750
        %v2752 = vpop.f32.mrb[0].mxu0
        %2753 = vmatprep.mubr.bf16.mxu0 0
        %2754 = vmatmul.mubr.bf16.gmra.mrb[0].mxu0 %v2668
        %v2755 = vpop.f32.mrb[0].mxu0
        %v2756 = vadd.f32 %v2595, %v2755
        %v2757 = vpop.f32.mrb[0].mxu0
        %v2758 = vpop.f32.mrb[0].mxu0
        %v2759 = vadd.f32 %v2595, %v2758
        %v2760 = vpop.f32.mrb[0].mxu0
        %2761 = vmatprep.mubr.bf16.mxu0 0
        %2762 = vmatmul.mubr.bf16.gmra.mrb[0].mxu0 %v2671
        %v2763 = vpop.f32.mrb[0].mxu0
        %v2764 = vadd.f32 %v2595, %v2763
        %v2765 = vpop.f32.mrb[0].mxu0
        %v2766 = vpop.f32.mrb[0].mxu0
        %v2767 = vadd.f32 %v2595, %v2766
        %v2768 = vpop.f32.mrb[0].mxu0
        %2769 = vdwg.mxu0
        %v2770 = vld [vmem:[%s1155] sm:$0xf]
        %v2771 = vld [vmem:[%s1155 + $0x4] sm:$0xf]
        %v2772 = vld [vmem:[%s1155 + $0x8] sm:$0xf]
        %v2773 = vld [vmem:[%s1155 + $0xc] sm:$0xf]
        %v2774 = vld [vmem:[%s1155 + $0x10] sm:$0xf]
        %v2775 = vld [vmem:[%s1155 + $0x14] sm:$0xf]
        %v2776 = vld [vmem:[%s1155 + $0x18] sm:$0xf]
        %v2777 = vld [vmem:[%s1155 + $0x1c] sm:$0xf]
        %v2778 = vld [vmem:[%s1155 + $0x20] sm:$0xf]
        %v2779 = vld [vmem:[%s1155 + $0x24] sm:$0xf]
        %v2780 = vld [vmem:[%s1155 + $0x28] sm:$0xf]
        %v2781 = vld [vmem:[%s1155 + $0x2c] sm:$0xf]
        %v2782 = vld [vmem:[%s1155 + $0x30] sm:$0xf]
        %v2783 = vld [vmem:[%s1155 + $0x34] sm:$0xf]
        %v2784 = vld [vmem:[%s1155 + $0x38] sm:$0xf]
        %v2785 = vld [vmem:[%s1155 + $0x3c] sm:$0xf]
        %v2786 = vld [vmem:[%s1203] sm:$0xf]
        %v2787 = vld [vmem:[%s1203 + $0x4] sm:$0xf]
        %v2788 = vld [vmem:[%s1203 + $0x8] sm:$0xf]
        %v2789 = vld [vmem:[%s1203 + $0xc] sm:$0xf]
        %v2790 = vld [vmem:[%s1206] sm:$0x1]
        %v2792 = vlaneseq
        %v2793 = vshrl.u32 %v2792, 7
        %v2794 = vsub.s32 0, %v2793
        %v2795 = vrot.slane %v2790, %v2794
        %v2813 = vunpack.c.l.b16 %v2770
        %v2814 = vunpack.c.l.b16 %v2771
        %v2815 = vunpack.c.l.b16 %v2772
        %v2816 = vunpack.c.l.b16 %v2773
        %v2817 = vunpack.c.l.b16 %v2774
        %v2818 = vunpack.c.l.b16 %v2775
        %v2819 = vunpack.c.l.b16 %v2776
        %v2820 = vunpack.c.l.b16 %v2777
        %v2821 = vunpack.c.l.b16 %v2778
        %v2822 = vunpack.c.l.b16 %v2779
        %v2823 = vunpack.c.l.b16 %v2780
        %v2824 = vunpack.c.l.b16 %v2781
        %v2825 = vunpack.c.l.b16 %v2782
        %v2826 = vunpack.c.l.b16 %v2783
        %v2827 = vunpack.c.l.b16 %v2784
        %v2828 = vunpack.c.l.b16 %v2785
        %v2829 = vpack.c.b16 %v2814, %v2813
        %v2830 = vpack.c.b16 %v2816, %v2815
        %v2831 = vpack.c.b16 %v2818, %v2817
        %v2832 = vpack.c.b16 %v2820, %v2819
        %v2833 = vpack.c.b16 %v2822, %v2821
        %v2834 = vpack.c.b16 %v2824, %v2823
        %v2835 = vpack.c.b16 %v2826, %v2825
        %v2836 = vpack.c.b16 %v2828, %v2827
        %v2841 = vunpack.c.l.b16 %v2786
        %v2842 = vunpack.c.l.b16 %v2787
        %v2843 = vunpack.c.l.b16 %v2788
        %v2844 = vunpack.c.l.b16 %v2789
        %v2845 = vpack.c.b16 %v2842, %v2841
        %v2846 = vpack.c.b16 %v2844, %v2843
        %v2850 = vsel %vm1276, %v2829, 0
        %v2853 = vsel %vm1276, %v2830, 0
        %v2856 = vsel %vm1276, %v2831, 0
        %v2859 = vsel %vm1276, %v2832, 0
        %v2862 = vsel %vm1276, %v2833, 0
        %v2865 = vsel %vm1276, %v2834, 0
        %v2868 = vsel %vm1276, %v2835, 0
        %v2871 = vsel %vm1276, %v2836, 0
        %2873 = vmatprep.subr.bf16.mxu0 0
        %2874 = vmatpush1.bf16.msra.mxu0 %v2845
        %2875 = vmatprep.subr.bf16.mxu0 0
        %2876 = vmatpush1.bf16.msra.mxu0 %v2846
        %2877 = vmatprep.subr.bf16.mxu0 0
        %2878 = vmatpush1.bf16.msra.mxu0 0
        %2879 = vmatprep.subr.bf16.mxu0 0
        %2880 = vmatpush1.bf16.msra.mxu0 0
        %2881 = vmatprep.subr.bf16.mxu0 0
        %2882 = vmatpush1.bf16.msra.mxu0 0
        %2883 = vmatprep.subr.bf16.mxu0 0
        %2884 = vmatpush1.bf16.msra.mxu0 0
        %2885 = vmatprep.subr.bf16.mxu0 0
        %2886 = vmatpush1.bf16.msra.mxu0 0
        %2887 = vmatprep.subr.bf16.mxu0 0
        %2888 = vmatpush1.bf16.msra.mxu0 0
        %2889 = vmatprep.subr.bf16.mxu0 0
        %2890 = vmatpush1.bf16.msra.mxu0 0
        %2891 = vmatprep.subr.bf16.mxu0 0
        %2892 = vmatpush1.bf16.msra.mxu0 0
        %2893 = vmatprep.subr.bf16.mxu0 0
        %2894 = vmatpush1.bf16.msra.mxu0 0
        %2895 = vmatprep.subr.bf16.mxu0 0
        %2896 = vmatpush1.bf16.msra.mxu0 0
        %2897 = vmatprep.subr.bf16.mxu0 0
        %2898 = vmatpush1.bf16.msra.mxu0 0
        %2899 = vmatprep.subr.bf16.mxu0 0
        %2900 = vmatpush1.bf16.msra.mxu0 0
        %2901 = vmatprep.subr.bf16.mxu0 0
        %2902 = vmatpush1.bf16.msra.mxu0 0
        %2903 = vmatprep.subr.bf16.mxu0 0
        %2904 = vmatpush1.bf16.msra.mxu0 0
        %2905 = vmatprep.mubr.bf16.mxu0 0
        %2906 = vmatmul.mubr.bf16.gmra.mrb[0].mxu0 %v2850
        %v2907 = vpop.f32.mrb[0].mxu0
        %v2908 = vadd.f32 %v2795, %v2907
        %v2909 = vpop.f32.mrb[0].mxu0
        %v2910 = vpop.f32.mrb[0].mxu0
        %v2911 = vadd.f32 %v2795, %v2910
        %v2912 = vpop.f32.mrb[0].mxu0
        %2913 = vmatprep.mubr.bf16.mxu0 0
        %2914 = vmatmul.mubr.bf16.gmra.mrb[0].mxu0 %v2853
        %v2915 = vpop.f32.mrb[0].mxu0
        %v2916 = vadd.f32 %v2795, %v2915
        %v2917 = vpop.f32.mrb[0].mxu0
        %v2918 = vpop.f32.mrb[0].mxu0
        %v2919 = vadd.f32 %v2795, %v2918
        %v2920 = vpop.f32.mrb[0].mxu0
        %2921 = vmatprep.mubr.bf16.mxu0 0
        %2922 = vmatmul.mubr.bf16.gmra.mrb[0].mxu0 %v2856
        %v2923 = vpop.f32.mrb[0].mxu0
        %v2924 = vadd.f32 %v2795, %v2923
        %v2925 = vpop.f32.mrb[0].mxu0
        %v2926 = vpop.f32.mrb[0].mxu0
        %v2927 = vadd.f32 %v2795, %v2926
        %v2928 = vpop.f32.mrb[0].mxu0
        %2929 = vmatprep.mubr.bf16.mxu0 0
        %2930 = vmatmul.mubr.bf16.gmra.mrb[0].mxu0 %v2859
        %v2931 = vpop.f32.mrb[0].mxu0
        %v2932 = vadd.f32 %v2795, %v2931
        %v2933 = vpop.f32.mrb[0].mxu0
        %v2934 = vpop.f32.mrb[0].mxu0
        %v2935 = vadd.f32 %v2795, %v2934
        %v2936 = vpop.f32.mrb[0].mxu0
        %2937 = vmatprep.mubr.bf16.mxu0 0
        %2938 = vmatmul.mubr.bf16.gmra.mrb[0].mxu0 %v2862
        %v2939 = vpop.f32.mrb[0].mxu0
        %v2940 = vadd.f32 %v2795, %v2939
        %v2941 = vpop.f32.mrb[0].mxu0
        %v2942 = vpop.f32.mrb[0].mxu0
        %v2943 = vadd.f32 %v2795, %v2942
        %v2944 = vpop.f32.mrb[0].mxu0
        %2945 = vmatprep.mubr.bf16.mxu0 0
        %2946 = vmatmul.mubr.bf16.gmra.mrb[0].mxu0 %v2865
        %v2947 = vpop.f32.mrb[0].mxu0
        %v2948 = vadd.f32 %v2795, %v2947
        %v2949 = vpop.f32.mrb[0].mxu0
        %v2950 = vpop.f32.mrb[0].mxu0
        %v2951 = vadd.f32 %v2795, %v2950
        %v2952 = vpop.f32.mrb[0].mxu0
        %2953 = vmatprep.mubr.bf16.mxu0 0
        %2954 = vmatmul.mubr.bf16.gmra.mrb[0].mxu0 %v2868
        %v2955 = vpop.f32.mrb[0].mxu0
        %v2956 = vadd.f32 %v2795, %v2955
        %v2957 = vpop.f32.mrb[0].mxu0
        %v2958 = vpop.f32.mrb[0].mxu0
        %v2959 = vadd.f32 %v2795, %v2958
        %v2960 = vpop.f32.mrb[0].mxu0
        %2961 = vmatprep.mubr.bf16.mxu0 0
        %2962 = vmatmul.mubr.bf16.gmra.mrb[0].mxu0 %v2871
        %v2963 = vpop.f32.mrb[0].mxu0
        %v2964 = vadd.f32 %v2795, %v2963
        %v2965 = vpop.f32.mrb[0].mxu0
        %v2966 = vpop.f32.mrb[0].mxu0
        %v2967 = vadd.f32 %v2795, %v2966
        %v2968 = vpop.f32.mrb[0].mxu0
        %2969 = vdwg.mxu0
        %v2970 = vld [vmem:[%s1211] sm:$0xf]
        %v2971 = vld [vmem:[%s1211 + $0x4] sm:$0xf]
        %v2972 = vld [vmem:[%s1211 + $0x8] sm:$0xf]
        %v2973 = vld [vmem:[%s1211 + $0xc] sm:$0xf]
        %v2974 = vld [vmem:[%s1214] sm:$0x1]
        %v2975 = vld [vmem:[%s1158] sm:$0x1]
        %2977 = vrot.lane.b32.xlu0 %v2565, 120
        %v2978 = vpop.permute.xlu0 %2977
        %2980 = vrot.lane.b32.xlu0 %v2565, 112
        %v2981 = vpop.permute.xlu0 %2980
        %2983 = vrot.lane.b32.xlu0 %v2565, 104
        %v2984 = vpop.permute.xlu0 %2983
        %v2986 = vcombine.low %v2565, %v2981
        %v2987 = vcombine.high %v2565, %v2981
        %v2989 = vunpack.c.l.s4 1983009808
        %v2990 = vunpack.c.0.s8 %v2989
        %v2991 = vlaneseq
        %v2992 = vshrl.u32 %v2991, 7
        %v2993 = vsub.s32 %v2990, %v2992
        %v2994 = vrot.slane %v2986, %v2993
        %v2996 = vunpack.c.l.s4 1983009808
        %v2997 = vunpack.c.0.s8 %v2996
        %v2998 = vlaneseq
        %v2999 = vshrl.u32 %v2998, 7
        %v3000 = vsub.s32 %v2997, %v2999
        %v3001 = vrot.slane %v2987, %v3000
        %v3002 = vcombine.low %v2978, %v2984
        %v3003 = vcombine.high %v2978, %v2984
        %v3005 = vunpack.c.l.s4 1983009808
        %v3006 = vunpack.c.0.s8 %v3005
        %v3007 = vlaneseq
        %v3008 = vshrl.u32 %v3007, 7
        %v3009 = vsub.s32 %v3006, %v3008
        %v3010 = vrot.slane %v3002, %v3009
        %v3012 = vunpack.c.l.s4 1983009808
        %v3013 = vunpack.c.0.s8 %v3012
        %v3014 = vlaneseq
        %v3015 = vshrl.u32 %v3014, 7
        %v3016 = vsub.s32 %v3013, %v3015
        %v3017 = vrot.slane %v3003, %v3016
        %v3018 = vcombine.low %v2994, %v3010
        %v3019 = vcombine.high %v2994, %v3010
        %v3021 = vunpack.c.l.s4 1934713408
        %v3022 = vunpack.c.0.s8 %v3021
        %v3023 = vlaneseq
        %v3024 = vshrl.u32 %v3023, 7
        %v3025 = vsub.s32 %v3022, %v3024
        %v3026 = vrot.slane %v3018, %v3025
        %v3028 = vunpack.c.l.s4 1934713408
        %v3029 = vunpack.c.0.s8 %v3028
        %v3030 = vlaneseq
        %v3031 = vshrl.u32 %v3030, 7
        %v3032 = vsub.s32 %v3029, %v3031
        %v3033 = vrot.slane %v3019, %v3032
        %v3034 = vcombine.low %v3001, %v3017
        %v3035 = vcombine.high %v3001, %v3017
        %v3037 = vunpack.c.l.s4 1934713408
        %v3038 = vunpack.c.0.s8 %v3037
        %v3039 = vlaneseq
        %v3040 = vshrl.u32 %v3039, 7
        %v3041 = vsub.s32 %v3038, %v3040
        %v3042 = vrot.slane %v3034, %v3041
        %v3044 = vunpack.c.l.s4 1934713408
        %v3045 = vunpack.c.0.s8 %v3044
        %v3046 = vlaneseq
        %v3047 = vshrl.u32 %v3046, 7
        %v3048 = vsub.s32 %v3045, %v3047
        %v3049 = vrot.slane %v3035, %v3048
        %v3050 = vcombine.high %v3026, 0.0
        %v3051 = vcombine.high %v3033, 0.0
        %v3052 = vcombine.high %v3042, 0.0
        %v3053 = vcombine.high %v3049, 0.0
        %v3054 = vcombine.low %v3026, %v3033
        %v3056 = vunpack.c.l.s4 1983009808
        %v3057 = vunpack.c.0.s8 %v3056
        %v3058 = vlaneseq
        %v3059 = vshrl.u32 %v3058, 7
        %v3060 = vsub.s32 %v3057, %v3059
        %v3061 = vrot.slane %v3054, %v3060
        %v3062 = vcombine.low %v3050, %v3051
        %v3064 = vunpack.c.l.s4 1983009808
        %v3065 = vunpack.c.0.s8 %v3064
        %v3066 = vlaneseq
        %v3067 = vshrl.u32 %v3066, 7
        %v3068 = vsub.s32 %v3065, %v3067
        %v3069 = vrot.slane %v3062, %v3068
        %v3070 = vcombine.low %v3042, %v3049
        %v3072 = vunpack.c.l.s4 1983009808
        %v3073 = vunpack.c.0.s8 %v3072
        %v3074 = vlaneseq
        %v3075 = vshrl.u32 %v3074, 7
        %v3076 = vsub.s32 %v3073, %v3075
        %v3077 = vrot.slane %v3070, %v3076
        %v3078 = vcombine.low %v3052, %v3053
        %v3080 = vunpack.c.l.s4 1983009808
        %v3081 = vunpack.c.0.s8 %v3080
        %v3082 = vlaneseq
        %v3083 = vshrl.u32 %v3082, 7
        %v3084 = vsub.s32 %v3081, %v3083
        %v3085 = vrot.slane %v3078, %v3084
        %v3086 = vcombine.low %v3061, %v3069
        %v3087 = vcombine.high %v3061, %v3069
        %v3089 = vunpack.c.l.s4 1934713408
        %v3090 = vunpack.c.0.s8 %v3089
        %v3091 = vlaneseq
        %v3092 = vshrl.u32 %v3091, 7
        %v3093 = vsub.s32 %v3090, %v3092
        %v3094 = vrot.slane %v3086, %v3093
        %v3096 = vunpack.c.l.s4 1934713408
        %v3097 = vunpack.c.0.s8 %v3096
        %v3098 = vlaneseq
        %v3099 = vshrl.u32 %v3098, 7
        %v3100 = vsub.s32 %v3097, %v3099
        %v3101 = vrot.slane %v3087, %v3100
        %v3102 = vcombine.low %v3077, %v3085
        %v3103 = vcombine.high %v3077, %v3085
        %v3105 = vunpack.c.l.s4 1934713408
        %v3106 = vunpack.c.0.s8 %v3105
        %v3107 = vlaneseq
        %v3108 = vshrl.u32 %v3107, 7
        %v3109 = vsub.s32 %v3106, %v3108
        %v3110 = vrot.slane %v3102, %v3109
        %v3112 = vunpack.c.l.s4 1934713408
        %v3113 = vunpack.c.0.s8 %v3112
        %v3114 = vlaneseq
        %v3115 = vshrl.u32 %v3114, 7
        %v3116 = vsub.s32 %v3113, %v3115
        %v3117 = vrot.slane %v3103, %v3116
        %v3118 = vcombine.low %v3094, %v3110
        %v3119 = vcombine.high %v3094, %v3110
        %v3120 = vcombine.low %v3101, %v3117
        %v3121 = vcombine.high %v3101, %v3117
        %v3122 = vpack.c.bf16 %v3118, %v3118
        %v3123 = vpack.c.bf16 %v3119, %v3119
        %v3124 = vpack.c.bf16 %v3120, %v3120
        %v3125 = vpack.c.bf16 %v3121, %v3121
        %3142 = vrot.lane.b32.xlu0 %v2708, 120
        %v3143 = vpop.permute.xlu0 %3142
        %3144 = vrot.lane.b32.xlu0 %v2711, 120
        %v3145 = vpop.permute.xlu0 %3144
        %3146 = vrot.lane.b32.xlu0 %v2716, 120
        %v3147 = vpop.permute.xlu0 %3146
        %3148 = vrot.lane.b32.xlu0 %v2719, 120
        %v3149 = vpop.permute.xlu0 %3148
        %3150 = vrot.lane.b32.xlu0 %v2724, 120
        %v3151 = vpop.permute.xlu0 %3150
        %3152 = vrot.lane.b32.xlu0 %v2727, 120
        %v3153 = vpop.permute.xlu0 %3152
        %3154 = vrot.lane.b32.xlu0 %v2732, 120
        %v3155 = vpop.permute.xlu0 %3154
        %3156 = vrot.lane.b32.xlu0 %v2735, 120
        %v3157 = vpop.permute.xlu0 %3156
        %3158 = vrot.lane.b32.xlu0 %v2740, 120
        %v3159 = vpop.permute.xlu0 %3158
        %3160 = vrot.lane.b32.xlu0 %v2743, 120
        %v3161 = vpop.permute.xlu0 %3160
        %3162 = vrot.lane.b32.xlu0 %v2748, 120
        %v3163 = vpop.permute.xlu0 %3162
        %3164 = vrot.lane.b32.xlu0 %v2751, 120
        %v3165 = vpop.permute.xlu0 %3164
        %3166 = vrot.lane.b32.xlu0 %v2756, 120
        %v3167 = vpop.permute.xlu0 %3166
        %3168 = vrot.lane.b32.xlu0 %v2759, 120
        %v3169 = vpop.permute.xlu0 %3168
        %3170 = vrot.lane.b32.xlu0 %v2764, 120
        %v3171 = vpop.permute.xlu0 %3170
        %3172 = vrot.lane.b32.xlu0 %v2767, 120
        %v3173 = vpop.permute.xlu0 %3172
        %3190 = vrot.lane.b32.xlu0 %v2708, 112
        %v3191 = vpop.permute.xlu0 %3190
        %3192 = vrot.lane.b32.xlu0 %v2711, 112
        %v3193 = vpop.permute.xlu0 %3192
        %3194 = vrot.lane.b32.xlu0 %v2716, 112
        %v3195 = vpop.permute.xlu0 %3194
        %3196 = vrot.lane.b32.xlu0 %v2719, 112
        %v3197 = vpop.permute.xlu0 %3196
        %3198 = vrot.lane.b32.xlu0 %v2724, 112
        %v3199 = vpop.permute.xlu0 %3198
        %3200 = vrot.lane.b32.xlu0 %v2727, 112
        %v3201 = vpop.permute.xlu0 %3200
        %3202 = vrot.lane.b32.xlu0 %v2732, 112
        %v3203 = vpop.permute.xlu0 %3202
        %3204 = vrot.lane.b32.xlu0 %v2735, 112
        %v3205 = vpop.permute.xlu0 %3204
        %3206 = vrot.lane.b32.xlu0 %v2740, 112
        %v3207 = vpop.permute.xlu0 %3206
        %3208 = vrot.lane.b32.xlu0 %v2743, 112
        %v3209 = vpop.permute.xlu0 %3208
        %3210 = vrot.lane.b32.xlu0 %v2748, 112
        %v3211 = vpop.permute.xlu0 %3210
        %3212 = vrot.lane.b32.xlu0 %v2751, 112
        %v3213 = vpop.permute.xlu0 %3212
        %3214 = vrot.lane.b32.xlu0 %v2756, 112
        %v3215 = vpop.permute.xlu0 %3214
        %3216 = vrot.lane.b32.xlu0 %v2759, 112
        %v3217 = vpop.permute.xlu0 %3216
        %3218 = vrot.lane.b32.xlu0 %v2764, 112
        %v3219 = vpop.permute.xlu0 %3218
        %3220 = vrot.lane.b32.xlu0 %v2767, 112
        %v3221 = vpop.permute.xlu0 %3220
        %3238 = vrot.lane.b32.xlu0 %v2708, 104
        %v3239 = vpop.permute.xlu0 %3238
        %3240 = vrot.lane.b32.xlu0 %v2711, 104
        %v3241 = vpop.permute.xlu0 %3240
        %3242 = vrot.lane.b32.xlu0 %v2716, 104
        %v3243 = vpop.permute.xlu0 %3242
        %3244 = vrot.lane.b32.xlu0 %v2719, 104
        %v3245 = vpop.permute.xlu0 %3244
        %3246 = vrot.lane.b32.xlu0 %v2724, 104
        %v3247 = vpop.permute.xlu0 %3246
        %3248 = vrot.lane.b32.xlu0 %v2727, 104
        %v3249 = vpop.permute.xlu0 %3248
        %3250 = vrot.lane.b32.xlu0 %v2732, 104
        %v3251 = vpop.permute.xlu0 %3250
        %3252 = vrot.lane.b32.xlu0 %v2735, 104
        %v3253 = vpop.permute.xlu0 %3252
        %3254 = vrot.lane.b32.xlu0 %v2740, 104
        %v3255 = vpop.permute.xlu0 %3254
        %3256 = vrot.lane.b32.xlu0 %v2743, 104
        %v3257 = vpop.permute.xlu0 %3256
        %3258 = vrot.lane.b32.xlu0 %v2748, 104
        %v3259 = vpop.permute.xlu0 %3258
        %3260 = vrot.lane.b32.xlu0 %v2751, 104
        %v3261 = vpop.permute.xlu0 %3260
        %3262 = vrot.lane.b32.xlu0 %v2756, 104
        %v3263 = vpop.permute.xlu0 %3262
        %3264 = vrot.lane.b32.xlu0 %v2759, 104
        %v3265 = vpop.permute.xlu0 %3264
        %3266 = vrot.lane.b32.xlu0 %v2764, 104
        %v3267 = vpop.permute.xlu0 %3266
        %3268 = vrot.lane.b32.xlu0 %v2767, 104
        %v3269 = vpop.permute.xlu0 %3268
        %v3286 = vcombine.low %v2708, %v3191
        %v3287 = vcombine.high %v2708, %v3191
        %v3289 = vunpack.c.l.s4 1983009808
        %v3290 = vunpack.c.0.s8 %v3289
        %v3291 = vlaneseq
        %v3292 = vshrl.u32 %v3291, 7
        %v3293 = vsub.s32 %v3290, %v3292
        %v3294 = vrot.slane %v3286, %v3293
        %v3296 = vunpack.c.l.s4 1983009808
        %v3297 = vunpack.c.0.s8 %v3296
        %v3298 = vlaneseq
        %v3299 = vshrl.u32 %v3298, 7
        %v3300 = vsub.s32 %v3297, %v3299
        %v3301 = vrot.slane %v3287, %v3300
        %v3302 = vcombine.low %v3143, %v3239
        %v3303 = vcombine.high %v3143, %v3239
        %v3305 = vunpack.c.l.s4 1983009808
        %v3306 = vunpack.c.0.s8 %v3305
        %v3307 = vlaneseq
        %v3308 = vshrl.u32 %v3307, 7
        %v3309 = vsub.s32 %v3306, %v3308
        %v3310 = vrot.slane %v3302, %v3309
        %v3312 = vunpack.c.l.s4 1983009808
        %v3313 = vunpack.c.0.s8 %v3312
        %v3314 = vlaneseq
        %v3315 = vshrl.u32 %v3314, 7
        %v3316 = vsub.s32 %v3313, %v3315
        %v3317 = vrot.slane %v3303, %v3316
        %v3318 = vcombine.low %v3294, %v3310
        %v3319 = vcombine.high %v3294, %v3310
        %v3321 = vunpack.c.l.s4 1934713408
        %v3322 = vunpack.c.0.s8 %v3321
        %v3323 = vlaneseq
        %v3324 = vshrl.u32 %v3323, 7
        %v3325 = vsub.s32 %v3322, %v3324
        %v3326 = vrot.slane %v3318, %v3325
        %v3328 = vunpack.c.l.s4 1934713408
        %v3329 = vunpack.c.0.s8 %v3328
        %v3330 = vlaneseq
        %v3331 = vshrl.u32 %v3330, 7
        %v3332 = vsub.s32 %v3329, %v3331
        %v3333 = vrot.slane %v3319, %v3332
        %v3334 = vcombine.low %v3301, %v3317
        %v3335 = vcombine.high %v3301, %v3317
        %v3337 = vunpack.c.l.s4 1934713408
        %v3338 = vunpack.c.0.s8 %v3337
        %v3339 = vlaneseq
        %v3340 = vshrl.u32 %v3339, 7
        %v3341 = vsub.s32 %v3338, %v3340
        %v3342 = vrot.slane %v3334, %v3341
        %v3344 = vunpack.c.l.s4 1934713408
        %v3345 = vunpack.c.0.s8 %v3344
        %v3346 = vlaneseq
        %v3347 = vshrl.u32 %v3346, 7
        %v3348 = vsub.s32 %v3345, %v3347
        %v3349 = vrot.slane %v3335, %v3348
        %v3350 = vcombine.high %v3326, 0.0
        %v3351 = vcombine.high %v3333, 0.0
        %v3352 = vcombine.high %v3342, 0.0
        %v3353 = vcombine.high %v3349, 0.0
        %v3354 = vcombine.low %v2711, %v3193
        %v3355 = vcombine.high %v2711, %v3193
        %v3357 = vunpack.c.l.s4 1983009808
        %v3358 = vunpack.c.0.s8 %v3357
        %v3359 = vlaneseq
        %v3360 = vshrl.u32 %v3359, 7
        %v3361 = vsub.s32 %v3358, %v3360
        %v3362 = vrot.slane %v3354, %v3361
        %v3364 = vunpack.c.l.s4 1983009808
        %v3365 = vunpack.c.0.s8 %v3364
        %v3366 = vlaneseq
        %v3367 = vshrl.u32 %v3366, 7
        %v3368 = vsub.s32 %v3365, %v3367
        %v3369 = vrot.slane %v3355, %v3368
        %v3370 = vcombine.low %v3145, %v3241
        %v3371 = vcombine.high %v3145, %v3241
        %v3373 = vunpack.c.l.s4 1983009808
        %v3374 = vunpack.c.0.s8 %v3373
        %v3375 = vlaneseq
        %v3376 = vshrl.u32 %v3375, 7
        %v3377 = vsub.s32 %v3374, %v3376
        %v3378 = vrot.slane %v3370, %v3377
        %v3380 = vunpack.c.l.s4 1983009808
        %v3381 = vunpack.c.0.s8 %v3380
        %v3382 = vlaneseq
        %v3383 = vshrl.u32 %v3382, 7
        %v3384 = vsub.s32 %v3381, %v3383
        %v3385 = vrot.slane %v3371, %v3384
        %v3386 = vcombine.low %v3362, %v3378
        %v3387 = vcombine.high %v3362, %v3378
        %v3389 = vunpack.c.l.s4 1934713408
        %v3390 = vunpack.c.0.s8 %v3389
        %v3391 = vlaneseq
        %v3392 = vshrl.u32 %v3391, 7
        %v3393 = vsub.s32 %v3390, %v3392
        %v3394 = vrot.slane %v3386, %v3393
        %v3396 = vunpack.c.l.s4 1934713408
        %v3397 = vunpack.c.0.s8 %v3396
        %v3398 = vlaneseq
        %v3399 = vshrl.u32 %v3398, 7
        %v3400 = vsub.s32 %v3397, %v3399
        %v3401 = vrot.slane %v3387, %v3400
        %v3402 = vcombine.low %v3369, %v3385
        %v3403 = vcombine.high %v3369, %v3385
        %v3405 = vunpack.c.l.s4 1934713408
        %v3406 = vunpack.c.0.s8 %v3405
        %v3407 = vlaneseq
        %v3408 = vshrl.u32 %v3407, 7
        %v3409 = vsub.s32 %v3406, %v3408
        %v3410 = vrot.slane %v3402, %v3409
        %v3412 = vunpack.c.l.s4 1934713408
        %v3413 = vunpack.c.0.s8 %v3412
        %v3414 = vlaneseq
        %v3415 = vshrl.u32 %v3414, 7
        %v3416 = vsub.s32 %v3413, %v3415
        %v3417 = vrot.slane %v3403, %v3416
        %v3418 = vcombine.high %v3394, 0.0
        %v3419 = vcombine.high %v3401, 0.0
        %v3420 = vcombine.high %v3410, 0.0
        %v3421 = vcombine.high %v3417, 0.0
        %v3422 = vcombine.low %v2716, %v3195
        %v3423 = vcombine.high %v2716, %v3195
        %v3425 = vunpack.c.l.s4 1983009808
        %v3426 = vunpack.c.0.s8 %v3425
        %v3427 = vlaneseq
        %v3428 = vshrl.u32 %v3427, 7
        %v3429 = vsub.s32 %v3426, %v3428
        %v3430 = vrot.slane %v3422, %v3429
        %v3432 = vunpack.c.l.s4 1983009808
        %v3433 = vunpack.c.0.s8 %v3432
        %v3434 = vlaneseq
        %v3435 = vshrl.u32 %v3434, 7
        %v3436 = vsub.s32 %v3433, %v3435
        %v3437 = vrot.slane %v3423, %v3436
        %v3438 = vcombine.low %v3147, %v3243
        %v3439 = vcombine.high %v3147, %v3243
        %v3441 = vunpack.c.l.s4 1983009808
        %v3442 = vunpack.c.0.s8 %v3441
        %v3443 = vlaneseq
        %v3444 = vshrl.u32 %v3443, 7
        %v3445 = vsub.s32 %v3442, %v3444
        %v3446 = vrot.slane %v3438, %v3445
        %v3448 = vunpack.c.l.s4 1983009808
        %v3449 = vunpack.c.0.s8 %v3448
        %v3450 = vlaneseq
        %v3451 = vshrl.u32 %v3450, 7
        %v3452 = vsub.s32 %v3449, %v3451
        %v3453 = vrot.slane %v3439, %v3452
        %v3454 = vcombine.low %v3430, %v3446
        %v3455 = vcombine.high %v3430, %v3446
        %v3457 = vunpack.c.l.s4 1934713408
        %v3458 = vunpack.c.0.s8 %v3457
        %v3459 = vlaneseq
        %v3460 = vshrl.u32 %v3459, 7
        %v3461 = vsub.s32 %v3458, %v3460
        %v3462 = vrot.slane %v3454, %v3461
        %v3464 = vunpack.c.l.s4 1934713408
        %v3465 = vunpack.c.0.s8 %v3464
        %v3466 = vlaneseq
        %v3467 = vshrl.u32 %v3466, 7
        %v3468 = vsub.s32 %v3465, %v3467
        %v3469 = vrot.slane %v3455, %v3468
        %v3470 = vcombine.low %v3437, %v3453
        %v3471 = vcombine.high %v3437, %v3453
        %v3473 = vunpack.c.l.s4 1934713408
        %v3474 = vunpack.c.0.s8 %v3473
        %v3475 = vlaneseq
        %v3476 = vshrl.u32 %v3475, 7
        %v3477 = vsub.s32 %v3474, %v3476
        %v3478 = vrot.slane %v3470, %v3477
        %v3480 = vunpack.c.l.s4 1934713408
        %v3481 = vunpack.c.0.s8 %v3480
        %v3482 = vlaneseq
        %v3483 = vshrl.u32 %v3482, 7
        %v3484 = vsub.s32 %v3481, %v3483
        %v3485 = vrot.slane %v3471, %v3484
        %v3486 = vcombine.high %v3462, 0.0
        %v3487 = vcombine.high %v3469, 0.0
        %v3488 = vcombine.high %v3478, 0.0
        %v3489 = vcombine.high %v3485, 0.0
        %v3490 = vcombine.low %v2719, %v3197
        %v3491 = vcombine.high %v2719, %v3197
        %v3493 = vunpack.c.l.s4 1983009808
        %v3494 = vunpack.c.0.s8 %v3493
        %v3495 = vlaneseq
        %v3496 = vshrl.u32 %v3495, 7
        %v3497 = vsub.s32 %v3494, %v3496
        %v3498 = vrot.slane %v3490, %v3497
        %v3500 = vunpack.c.l.s4 1983009808
        %v3501 = vunpack.c.0.s8 %v3500
        %v3502 = vlaneseq
        %v3503 = vshrl.u32 %v3502, 7
        %v3504 = vsub.s32 %v3501, %v3503
        %v3505 = vrot.slane %v3491, %v3504
        %v3506 = vcombine.low %v3149, %v3245
        %v3507 = vcombine.high %v3149, %v3245
        %v3509 = vunpack.c.l.s4 1983009808
        %v3510 = vunpack.c.0.s8 %v3509
        %v3511 = vlaneseq
        %v3512 = vshrl.u32 %v3511, 7
        %v3513 = vsub.s32 %v3510, %v3512
        %v3514 = vrot.slane %v3506, %v3513
        %v3516 = vunpack.c.l.s4 1983009808
        %v3517 = vunpack.c.0.s8 %v3516
        %v3518 = vlaneseq
        %v3519 = vshrl.u32 %v3518, 7
        %v3520 = vsub.s32 %v3517, %v3519
        %v3521 = vrot.slane %v3507, %v3520
        %v3522 = vcombine.low %v3498, %v3514
        %v3523 = vcombine.high %v3498, %v3514
        %v3525 = vunpack.c.l.s4 1934713408
        %v3526 = vunpack.c.0.s8 %v3525
        %v3527 = vlaneseq
        %v3528 = vshrl.u32 %v3527, 7
        %v3529 = vsub.s32 %v3526, %v3528
        %v3530 = vrot.slane %v3522, %v3529
        %v3532 = vunpack.c.l.s4 1934713408
        %v3533 = vunpack.c.0.s8 %v3532
        %v3534 = vlaneseq
        %v3535 = vshrl.u32 %v3534, 7
        %v3536 = vsub.s32 %v3533, %v3535
        %v3537 = vrot.slane %v3523, %v3536
        %v3538 = vcombine.low %v3505, %v3521
        %v3539 = vcombine.high %v3505, %v3521
        %v3541 = vunpack.c.l.s4 1934713408
        %v3542 = vunpack.c.0.s8 %v3541
        %v3543 = vlaneseq
        %v3544 = vshrl.u32 %v3543, 7
        %v3545 = vsub.s32 %v3542, %v3544
        %v3546 = vrot.slane %v3538, %v3545
        %v3548 = vunpack.c.l.s4 1934713408
        %v3549 = vunpack.c.0.s8 %v3548
        %v3550 = vlaneseq
        %v3551 = vshrl.u32 %v3550, 7
        %v3552 = vsub.s32 %v3549, %v3551
        %v3553 = vrot.slane %v3539, %v3552
        %v3554 = vcombine.high %v3530, 0.0
        %v3555 = vcombine.high %v3537, 0.0
        %v3556 = vcombine.high %v3546, 0.0
        %v3557 = vcombine.high %v3553, 0.0
        %v3558 = vcombine.low %v2724, %v3199
        %v3559 = vcombine.high %v2724, %v3199
        %v3561 = vunpack.c.l.s4 1983009808
        %v3562 = vunpack.c.0.s8 %v3561
        %v3563 = vlaneseq
        %v3564 = vshrl.u32 %v3563, 7
        %v3565 = vsub.s32 %v3562, %v3564
        %v3566 = vrot.slane %v3558, %v3565
        %v3568 = vunpack.c.l.s4 1983009808
        %v3569 = vunpack.c.0.s8 %v3568
        %v3570 = vlaneseq
        %v3571 = vshrl.u32 %v3570, 7
        %v3572 = vsub.s32 %v3569, %v3571
        %v3573 = vrot.slane %v3559, %v3572
        %v3574 = vcombine.low %v3151, %v3247
        %v3575 = vcombine.high %v3151, %v3247
        %v3577 = vunpack.c.l.s4 1983009808
        %v3578 = vunpack.c.0.s8 %v3577
        %v3579 = vlaneseq
        %v3580 = vshrl.u32 %v3579, 7
        %v3581 = vsub.s32 %v3578, %v3580
        %v3582 = vrot.slane %v3574, %v3581
        %v3584 = vunpack.c.l.s4 1983009808
        %v3585 = vunpack.c.0.s8 %v3584
        %v3586 = vlaneseq
        %v3587 = vshrl.u32 %v3586, 7
        %v3588 = vsub.s32 %v3585, %v3587
        %v3589 = vrot.slane %v3575, %v3588
        %v3590 = vcombine.low %v3566, %v3582
        %v3591 = vcombine.high %v3566, %v3582
        %v3593 = vunpack.c.l.s4 1934713408
        %v3594 = vunpack.c.0.s8 %v3593
        %v3595 = vlaneseq
        %v3596 = vshrl.u32 %v3595, 7
        %v3597 = vsub.s32 %v3594, %v3596
        %v3598 = vrot.slane %v3590, %v3597
        %v3600 = vunpack.c.l.s4 1934713408
        %v3601 = vunpack.c.0.s8 %v3600
        %v3602 = vlaneseq
        %v3603 = vshrl.u32 %v3602, 7
        %v3604 = vsub.s32 %v3601, %v3603
        %v3605 = vrot.slane %v3591, %v3604
        %v3606 = vcombine.low %v3573, %v3589
        %v3607 = vcombine.high %v3573, %v3589
        %v3609 = vunpack.c.l.s4 1934713408
        %v3610 = vunpack.c.0.s8 %v3609
        %v3611 = vlaneseq
        %v3612 = vshrl.u32 %v3611, 7
        %v3613 = vsub.s32 %v3610, %v3612
        %v3614 = vrot.slane %v3606, %v3613
        %v3616 = vunpack.c.l.s4 1934713408
        %v3617 = vunpack.c.0.s8 %v3616
        %v3618 = vlaneseq
        %v3619 = vshrl.u32 %v3618, 7
        %v3620 = vsub.s32 %v3617, %v3619
        %v3621 = vrot.slane %v3607, %v3620
        %v3622 = vcombine.high %v3598, 0.0
        %v3623 = vcombine.high %v3605, 0.0
        %v3624 = vcombine.high %v3614, 0.0
        %v3625 = vcombine.high %v3621, 0.0
        %v3626 = vcombine.low %v2727, %v3201
        %v3627 = vcombine.high %v2727, %v3201
        %v3629 = vunpack.c.l.s4 1983009808
        %v3630 = vunpack.c.0.s8 %v3629
        %v3631 = vlaneseq
        %v3632 = vshrl.u32 %v3631, 7
        %v3633 = vsub.s32 %v3630, %v3632
        %v3634 = vrot.slane %v3626, %v3633
        %v3636 = vunpack.c.l.s4 1983009808
        %v3637 = vunpack.c.0.s8 %v3636
        %v3638 = vlaneseq
        %v3639 = vshrl.u32 %v3638, 7
        %v3640 = vsub.s32 %v3637, %v3639
        %v3641 = vrot.slane %v3627, %v3640
        %v3642 = vcombine.low %v3153, %v3249
        %v3643 = vcombine.high %v3153, %v3249
        %v3645 = vunpack.c.l.s4 1983009808
        %v3646 = vunpack.c.0.s8 %v3645
        %v3647 = vlaneseq
        %v3648 = vshrl.u32 %v3647, 7
        %v3649 = vsub.s32 %v3646, %v3648
        %v3650 = vrot.slane %v3642, %v3649
        %v3652 = vunpack.c.l.s4 1983009808
        %v3653 = vunpack.c.0.s8 %v3652
        %v3654 = vlaneseq
        %v3655 = vshrl.u32 %v3654, 7
        %v3656 = vsub.s32 %v3653, %v3655
        %v3657 = vrot.slane %v3643, %v3656
        %v3658 = vcombine.low %v3634, %v3650
        %v3659 = vcombine.high %v3634, %v3650
        %v3661 = vunpack.c.l.s4 1934713408
        %v3662 = vunpack.c.0.s8 %v3661
        %v3663 = vlaneseq
        %v3664 = vshrl.u32 %v3663, 7
        %v3665 = vsub.s32 %v3662, %v3664
        %v3666 = vrot.slane %v3658, %v3665
        %v3668 = vunpack.c.l.s4 1934713408
        %v3669 = vunpack.c.0.s8 %v3668
        %v3670 = vlaneseq
        %v3671 = vshrl.u32 %v3670, 7
        %v3672 = vsub.s32 %v3669, %v3671
        %v3673 = vrot.slane %v3659, %v3672
        %v3674 = vcombine.low %v3641, %v3657
        %v3675 = vcombine.high %v3641, %v3657
        %v3677 = vunpack.c.l.s4 1934713408
        %v3678 = vunpack.c.0.s8 %v3677
        %v3679 = vlaneseq
        %v3680 = vshrl.u32 %v3679, 7
        %v3681 = vsub.s32 %v3678, %v3680
        %v3682 = vrot.slane %v3674, %v3681
        %v3684 = vunpack.c.l.s4 1934713408
        %v3685 = vunpack.c.0.s8 %v3684
        %v3686 = vlaneseq
        %v3687 = vshrl.u32 %v3686, 7
        %v3688 = vsub.s32 %v3685, %v3687
        %v3689 = vrot.slane %v3675, %v3688
        %v3690 = vcombine.high %v3666, 0.0
        %v3691 = vcombine.high %v3673, 0.0
        %v3692 = vcombine.high %v3682, 0.0
        %v3693 = vcombine.high %v3689, 0.0
        %v3694 = vcombine.low %v2732, %v3203
        %v3695 = vcombine.high %v2732, %v3203
        %v3697 = vunpack.c.l.s4 1983009808
        %v3698 = vunpack.c.0.s8 %v3697
        %v3699 = vlaneseq
        %v3700 = vshrl.u32 %v3699, 7
        %v3701 = vsub.s32 %v3698, %v3700
        %v3702 = vrot.slane %v3694, %v3701
        %v3704 = vunpack.c.l.s4 1983009808
        %v3705 = vunpack.c.0.s8 %v3704
        %v3706 = vlaneseq
        %v3707 = vshrl.u32 %v3706, 7
        %v3708 = vsub.s32 %v3705, %v3707
        %v3709 = vrot.slane %v3695, %v3708
        %v3710 = vcombine.low %v3155, %v3251
        %v3711 = vcombine.high %v3155, %v3251
        %v3713 = vunpack.c.l.s4 1983009808
        %v3714 = vunpack.c.0.s8 %v3713
        %v3715 = vlaneseq
        %v3716 = vshrl.u32 %v3715, 7
        %v3717 = vsub.s32 %v3714, %v3716
        %v3718 = vrot.slane %v3710, %v3717
        %v3720 = vunpack.c.l.s4 1983009808
        %v3721 = vunpack.c.0.s8 %v3720
        %v3722 = vlaneseq
        %v3723 = vshrl.u32 %v3722, 7
        %v3724 = vsub.s32 %v3721, %v3723
        %v3725 = vrot.slane %v3711, %v3724
        %v3726 = vcombine.low %v3702, %v3718
        %v3727 = vcombine.high %v3702, %v3718
        %v3729 = vunpack.c.l.s4 1934713408
        %v3730 = vunpack.c.0.s8 %v3729
        %v3731 = vlaneseq
        %v3732 = vshrl.u32 %v3731, 7
        %v3733 = vsub.s32 %v3730, %v3732
        %v3734 = vrot.slane %v3726, %v3733
        %v3736 = vunpack.c.l.s4 1934713408
        %v3737 = vunpack.c.0.s8 %v3736
        %v3738 = vlaneseq
        %v3739 = vshrl.u32 %v3738, 7
        %v3740 = vsub.s32 %v3737, %v3739
        %v3741 = vrot.slane %v3727, %v3740
        %v3742 = vcombine.low %v3709, %v3725
        %v3743 = vcombine.high %v3709, %v3725
        %v3745 = vunpack.c.l.s4 1934713408
        %v3746 = vunpack.c.0.s8 %v3745
        %v3747 = vlaneseq
        %v3748 = vshrl.u32 %v3747, 7
        %v3749 = vsub.s32 %v3746, %v3748
        %v3750 = vrot.slane %v3742, %v3749
        %v3752 = vunpack.c.l.s4 1934713408
        %v3753 = vunpack.c.0.s8 %v3752
        %v3754 = vlaneseq
        %v3755 = vshrl.u32 %v3754, 7
        %v3756 = vsub.s32 %v3753, %v3755
        %v3757 = vrot.slane %v3743, %v3756
        %v3758 = vcombine.high %v3734, 0.0
        %v3759 = vcombine.high %v3741, 0.0
        %v3760 = vcombine.high %v3750, 0.0
        %v3761 = vcombine.high %v3757, 0.0
        %v3762 = vcombine.low %v2735, %v3205
        %v3763 = vcombine.high %v2735, %v3205
        %v3765 = vunpack.c.l.s4 1983009808
        %v3766 = vunpack.c.0.s8 %v3765
        %v3767 = vlaneseq
        %v3768 = vshrl.u32 %v3767, 7
        %v3769 = vsub.s32 %v3766, %v3768
        %v3770 = vrot.slane %v3762, %v3769
        %v3772 = vunpack.c.l.s4 1983009808
        %v3773 = vunpack.c.0.s8 %v3772
        %v3774 = vlaneseq
        %v3775 = vshrl.u32 %v3774, 7
        %v3776 = vsub.s32 %v3773, %v3775
        %v3777 = vrot.slane %v3763, %v3776
        %v3778 = vcombine.low %v3157, %v3253
        %v3779 = vcombine.high %v3157, %v3253
        %v3781 = vunpack.c.l.s4 1983009808
        %v3782 = vunpack.c.0.s8 %v3781
        %v3783 = vlaneseq
        %v3784 = vshrl.u32 %v3783, 7
        %v3785 = vsub.s32 %v3782, %v3784
        %v3786 = vrot.slane %v3778, %v3785
        %v3788 = vunpack.c.l.s4 1983009808
        %v3789 = vunpack.c.0.s8 %v3788
        %v3790 = vlaneseq
        %v3791 = vshrl.u32 %v3790, 7
        %v3792 = vsub.s32 %v3789, %v3791
        %v3793 = vrot.slane %v3779, %v3792
        %v3794 = vcombine.low %v3770, %v3786
        %v3795 = vcombine.high %v3770, %v3786
        %v3797 = vunpack.c.l.s4 1934713408
        %v3798 = vunpack.c.0.s8 %v3797
        %v3799 = vlaneseq
        %v3800 = vshrl.u32 %v3799, 7
        %v3801 = vsub.s32 %v3798, %v3800
        %v3802 = vrot.slane %v3794, %v3801
        %v3804 = vunpack.c.l.s4 1934713408
        %v3805 = vunpack.c.0.s8 %v3804
        %v3806 = vlaneseq
        %v3807 = vshrl.u32 %v3806, 7
        %v3808 = vsub.s32 %v3805, %v3807
        %v3809 = vrot.slane %v3795, %v3808
        %v3810 = vcombine.low %v3777, %v3793
        %v3811 = vcombine.high %v3777, %v3793
        %v3813 = vunpack.c.l.s4 1934713408
        %v3814 = vunpack.c.0.s8 %v3813
        %v3815 = vlaneseq
        %v3816 = vshrl.u32 %v3815, 7
        %v3817 = vsub.s32 %v3814, %v3816
        %v3818 = vrot.slane %v3810, %v3817
        %v3820 = vunpack.c.l.s4 1934713408
        %v3821 = vunpack.c.0.s8 %v3820
        %v3822 = vlaneseq
        %v3823 = vshrl.u32 %v3822, 7
        %v3824 = vsub.s32 %v3821, %v3823
        %v3825 = vrot.slane %v3811, %v3824
        %v3826 = vcombine.high %v3802, 0.0
        %v3827 = vcombine.high %v3809, 0.0
        %v3828 = vcombine.high %v3818, 0.0
        %v3829 = vcombine.high %v3825, 0.0
        %v3830 = vcombine.low %v2740, %v3207
        %v3831 = vcombine.high %v2740, %v3207
        %v3833 = vunpack.c.l.s4 1983009808
        %v3834 = vunpack.c.0.s8 %v3833
        %v3835 = vlaneseq
        %v3836 = vshrl.u32 %v3835, 7
        %v3837 = vsub.s32 %v3834, %v3836
        %v3838 = vrot.slane %v3830, %v3837
        %v3840 = vunpack.c.l.s4 1983009808
        %v3841 = vunpack.c.0.s8 %v3840
        %v3842 = vlaneseq
        %v3843 = vshrl.u32 %v3842, 7
        %v3844 = vsub.s32 %v3841, %v3843
        %v3845 = vrot.slane %v3831, %v3844
        %v3846 = vcombine.low %v3159, %v3255
        %v3847 = vcombine.high %v3159, %v3255
        %v3849 = vunpack.c.l.s4 1983009808
        %v3850 = vunpack.c.0.s8 %v3849
        %v3851 = vlaneseq
        %v3852 = vshrl.u32 %v3851, 7
        %v3853 = vsub.s32 %v3850, %v3852
        %v3854 = vrot.slane %v3846, %v3853
        %v3856 = vunpack.c.l.s4 1983009808
        %v3857 = vunpack.c.0.s8 %v3856
        %v3858 = vlaneseq
        %v3859 = vshrl.u32 %v3858, 7
        %v3860 = vsub.s32 %v3857, %v3859
        %v3861 = vrot.slane %v3847, %v3860
        %v3862 = vcombine.low %v3838, %v3854
        %v3863 = vcombine.high %v3838, %v3854
        %v3865 = vunpack.c.l.s4 1934713408
        %v3866 = vunpack.c.0.s8 %v3865
        %v3867 = vlaneseq
        %v3868 = vshrl.u32 %v3867, 7
        %v3869 = vsub.s32 %v3866, %v3868
        %v3870 = vrot.slane %v3862, %v3869
        %v3872 = vunpack.c.l.s4 1934713408
        %v3873 = vunpack.c.0.s8 %v3872
        %v3874 = vlaneseq
        %v3875 = vshrl.u32 %v3874, 7
        %v3876 = vsub.s32 %v3873, %v3875
        %v3877 = vrot.slane %v3863, %v3876
        %v3878 = vcombine.low %v3845, %v3861
        %v3879 = vcombine.high %v3845, %v3861
        %v3881 = vunpack.c.l.s4 1934713408
        %v3882 = vunpack.c.0.s8 %v3881
        %v3883 = vlaneseq
        %v3884 = vshrl.u32 %v3883, 7
        %v3885 = vsub.s32 %v3882, %v3884
        %v3886 = vrot.slane %v3878, %v3885
        %v3888 = vunpack.c.l.s4 1934713408
        %v3889 = vunpack.c.0.s8 %v3888
        %v3890 = vlaneseq
        %v3891 = vshrl.u32 %v3890, 7
        %v3892 = vsub.s32 %v3889, %v3891
        %v3893 = vrot.slane %v3879, %v3892
        %v3894 = vcombine.high %v3870, 0.0
        %v3895 = vcombine.high %v3877, 0.0
        %v3896 = vcombine.high %v3886, 0.0
        %v3897 = vcombine.high %v3893, 0.0
        %v3898 = vcombine.low %v2743, %v3209
        %v3899 = vcombine.high %v2743, %v3209
        %v3901 = vunpack.c.l.s4 1983009808
        %v3902 = vunpack.c.0.s8 %v3901
        %v3903 = vlaneseq
        %v3904 = vshrl.u32 %v3903, 7
        %v3905 = vsub.s32 %v3902, %v3904
        %v3906 = vrot.slane %v3898, %v3905
        %v3908 = vunpack.c.l.s4 1983009808
        %v3909 = vunpack.c.0.s8 %v3908
        %v3910 = vlaneseq
        %v3911 = vshrl.u32 %v3910, 7
        %v3912 = vsub.s32 %v3909, %v3911
        %v3913 = vrot.slane %v3899, %v3912
        %v3914 = vcombine.low %v3161, %v3257
        %v3915 = vcombine.high %v3161, %v3257
        %v3917 = vunpack.c.l.s4 1983009808
        %v3918 = vunpack.c.0.s8 %v3917
        %v3919 = vlaneseq
        %v3920 = vshrl.u32 %v3919, 7
        %v3921 = vsub.s32 %v3918, %v3920
        %v3922 = vrot.slane %v3914, %v3921
        %v3924 = vunpack.c.l.s4 1983009808
        %v3925 = vunpack.c.0.s8 %v3924
        %v3926 = vlaneseq
        %v3927 = vshrl.u32 %v3926, 7
        %v3928 = vsub.s32 %v3925, %v3927
        %v3929 = vrot.slane %v3915, %v3928
        %v3930 = vcombine.low %v3906, %v3922
        %v3931 = vcombine.high %v3906, %v3922
        %v3933 = vunpack.c.l.s4 1934713408
        %v3934 = vunpack.c.0.s8 %v3933
        %v3935 = vlaneseq
        %v3936 = vshrl.u32 %v3935, 7
        %v3937 = vsub.s32 %v3934, %v3936
        %v3938 = vrot.slane %v3930, %v3937
        %v3940 = vunpack.c.l.s4 1934713408
        %v3941 = vunpack.c.0.s8 %v3940
        %v3942 = vlaneseq
        %v3943 = vshrl.u32 %v3942, 7
        %v3944 = vsub.s32 %v3941, %v3943
        %v3945 = vrot.slane %v3931, %v3944
        %v3946 = vcombine.low %v3913, %v3929
        %v3947 = vcombine.high %v3913, %v3929
        %v3949 = vunpack.c.l.s4 1934713408
        %v3950 = vunpack.c.0.s8 %v3949
        %v3951 = vlaneseq
        %v3952 = vshrl.u32 %v3951, 7
        %v3953 = vsub.s32 %v3950, %v3952
        %v3954 = vrot.slane %v3946, %v3953
        %v3956 = vunpack.c.l.s4 1934713408
        %v3957 = vunpack.c.0.s8 %v3956
        %v3958 = vlaneseq
        %v3959 = vshrl.u32 %v3958, 7
        %v3960 = vsub.s32 %v3957, %v3959
        %v3961 = vrot.slane %v3947, %v3960
        %v3962 = vcombine.high %v3938, 0.0
        %v3963 = vcombine.high %v3945, 0.0
        %v3964 = vcombine.high %v3954, 0.0
        %v3965 = vcombine.high %v3961, 0.0
        %v3966 = vcombine.low %v2748, %v3211
        %v3967 = vcombine.high %v2748, %v3211
        %v3969 = vunpack.c.l.s4 1983009808
        %v3970 = vunpack.c.0.s8 %v3969
        %v3971 = vlaneseq
        %v3972 = vshrl.u32 %v3971, 7
        %v3973 = vsub.s32 %v3970, %v3972
        %v3974 = vrot.slane %v3966, %v3973
        %v3976 = vunpack.c.l.s4 1983009808
        %v3977 = vunpack.c.0.s8 %v3976
        %v3978 = vlaneseq
        %v3979 = vshrl.u32 %v3978, 7
        %v3980 = vsub.s32 %v3977, %v3979
        %v3981 = vrot.slane %v3967, %v3980
        %v3982 = vcombine.low %v3163, %v3259
        %v3983 = vcombine.high %v3163, %v3259
        %v3985 = vunpack.c.l.s4 1983009808
        %v3986 = vunpack.c.0.s8 %v3985
        %v3987 = vlaneseq
        %v3988 = vshrl.u32 %v3987, 7
        %v3989 = vsub.s32 %v3986, %v3988
        %v3990 = vrot.slane %v3982, %v3989
        %v3992 = vunpack.c.l.s4 1983009808
        %v3993 = vunpack.c.0.s8 %v3992
        %v3994 = vlaneseq
        %v3995 = vshrl.u32 %v3994, 7
        %v3996 = vsub.s32 %v3993, %v3995
        %v3997 = vrot.slane %v3983, %v3996
        %v3998 = vcombine.low %v3974, %v3990
        %v3999 = vcombine.high %v3974, %v3990
        %v4001 = vunpack.c.l.s4 1934713408
        %v4002 = vunpack.c.0.s8 %v4001
        %v4003 = vlaneseq
        %v4004 = vshrl.u32 %v4003, 7
        %v4005 = vsub.s32 %v4002, %v4004
        %v4006 = vrot.slane %v3998, %v4005
        %v4008 = vunpack.c.l.s4 1934713408
        %v4009 = vunpack.c.0.s8 %v4008
        %v4010 = vlaneseq
        %v4011 = vshrl.u32 %v4010, 7
        %v4012 = vsub.s32 %v4009, %v4011
        %v4013 = vrot.slane %v3999, %v4012
        %v4014 = vcombine.low %v3981, %v3997
        %v4015 = vcombine.high %v3981, %v3997
        %v4017 = vunpack.c.l.s4 1934713408
        %v4018 = vunpack.c.0.s8 %v4017
        %v4019 = vlaneseq
        %v4020 = vshrl.u32 %v4019, 7
        %v4021 = vsub.s32 %v4018, %v4020
        %v4022 = vrot.slane %v4014, %v4021
        %v4024 = vunpack.c.l.s4 1934713408
        %v4025 = vunpack.c.0.s8 %v4024
        %v4026 = vlaneseq
        %v4027 = vshrl.u32 %v4026, 7
        %v4028 = vsub.s32 %v4025, %v4027
        %v4029 = vrot.slane %v4015, %v4028
        %v4030 = vcombine.high %v4006, 0.0
        %v4031 = vcombine.high %v4013, 0.0
        %v4032 = vcombine.high %v4022, 0.0
        %v4033 = vcombine.high %v4029, 0.0
        %v4034 = vcombine.low %v2751, %v3213
        %v4035 = vcombine.high %v2751, %v3213
        %v4037 = vunpack.c.l.s4 1983009808
        %v4038 = vunpack.c.0.s8 %v4037
        %v4039 = vlaneseq
        %v4040 = vshrl.u32 %v4039, 7
        %v4041 = vsub.s32 %v4038, %v4040
        %v4042 = vrot.slane %v4034, %v4041
        %v4044 = vunpack.c.l.s4 1983009808
        %v4045 = vunpack.c.0.s8 %v4044
        %v4046 = vlaneseq
        %v4047 = vshrl.u32 %v4046, 7
        %v4048 = vsub.s32 %v4045, %v4047
        %v4049 = vrot.slane %v4035, %v4048
        %v4050 = vcombine.low %v3165, %v3261
        %v4051 = vcombine.high %v3165, %v3261
        %v4053 = vunpack.c.l.s4 1983009808
        %v4054 = vunpack.c.0.s8 %v4053
        %v4055 = vlaneseq
        %v4056 = vshrl.u32 %v4055, 7
        %v4057 = vsub.s32 %v4054, %v4056
        %v4058 = vrot.slane %v4050, %v4057
        %v4060 = vunpack.c.l.s4 1983009808
        %v4061 = vunpack.c.0.s8 %v4060
        %v4062 = vlaneseq
        %v4063 = vshrl.u32 %v4062, 7
        %v4064 = vsub.s32 %v4061, %v4063
        %v4065 = vrot.slane %v4051, %v4064
        %v4066 = vcombine.low %v4042, %v4058
        %v4067 = vcombine.high %v4042, %v4058
        %v4069 = vunpack.c.l.s4 1934713408
        %v4070 = vunpack.c.0.s8 %v4069
        %v4071 = vlaneseq
        %v4072 = vshrl.u32 %v4071, 7
        %v4073 = vsub.s32 %v4070, %v4072
        %v4074 = vrot.slane %v4066, %v4073
        %v4076 = vunpack.c.l.s4 1934713408
        %v4077 = vunpack.c.0.s8 %v4076
        %v4078 = vlaneseq
        %v4079 = vshrl.u32 %v4078, 7
        %v4080 = vsub.s32 %v4077, %v4079
        %v4081 = vrot.slane %v4067, %v4080
        %v4082 = vcombine.low %v4049, %v4065
        %v4083 = vcombine.high %v4049, %v4065
        %v4085 = vunpack.c.l.s4 1934713408
        %v4086 = vunpack.c.0.s8 %v4085
        %v4087 = vlaneseq
        %v4088 = vshrl.u32 %v4087, 7
        %v4089 = vsub.s32 %v4086, %v4088
        %v4090 = vrot.slane %v4082, %v4089
        %v4092 = vunpack.c.l.s4 1934713408
        %v4093 = vunpack.c.0.s8 %v4092
        %v4094 = vlaneseq
        %v4095 = vshrl.u32 %v4094, 7
        %v4096 = vsub.s32 %v4093, %v4095
        %v4097 = vrot.slane %v4083, %v4096
        %v4098 = vcombine.high %v4074, 0.0
        %v4099 = vcombine.high %v4081, 0.0
        %v4100 = vcombine.high %v4090, 0.0
        %v4101 = vcombine.high %v4097, 0.0
        %v4102 = vcombine.low %v2756, %v3215
        %v4103 = vcombine.high %v2756, %v3215
        %v4105 = vunpack.c.l.s4 1983009808
        %v4106 = vunpack.c.0.s8 %v4105
        %v4107 = vlaneseq
        %v4108 = vshrl.u32 %v4107, 7
        %v4109 = vsub.s32 %v4106, %v4108
        %v4110 = vrot.slane %v4102, %v4109
        %v4112 = vunpack.c.l.s4 1983009808
        %v4113 = vunpack.c.0.s8 %v4112
        %v4114 = vlaneseq
        %v4115 = vshrl.u32 %v4114, 7
        %v4116 = vsub.s32 %v4113, %v4115
        %v4117 = vrot.slane %v4103, %v4116
        %v4118 = vcombine.low %v3167, %v3263
        %v4119 = vcombine.high %v3167, %v3263
        %v4121 = vunpack.c.l.s4 1983009808
        %v4122 = vunpack.c.0.s8 %v4121
        %v4123 = vlaneseq
        %v4124 = vshrl.u32 %v4123, 7
        %v4125 = vsub.s32 %v4122, %v4124
        %v4126 = vrot.slane %v4118, %v4125
        %v4128 = vunpack.c.l.s4 1983009808
        %v4129 = vunpack.c.0.s8 %v4128
        %v4130 = vlaneseq
        %v4131 = vshrl.u32 %v4130, 7
        %v4132 = vsub.s32 %v4129, %v4131
        %v4133 = vrot.slane %v4119, %v4132
        %v4134 = vcombine.low %v4110, %v4126
        %v4135 = vcombine.high %v4110, %v4126
        %v4137 = vunpack.c.l.s4 1934713408
        %v4138 = vunpack.c.0.s8 %v4137
        %v4139 = vlaneseq
        %v4140 = vshrl.u32 %v4139, 7
        %v4141 = vsub.s32 %v4138, %v4140
        %v4142 = vrot.slane %v4134, %v4141
        %v4144 = vunpack.c.l.s4 1934713408
        %v4145 = vunpack.c.0.s8 %v4144
        %v4146 = vlaneseq
        %v4147 = vshrl.u32 %v4146, 7
        %v4148 = vsub.s32 %v4145, %v4147
        %v4149 = vrot.slane %v4135, %v4148
        %v4150 = vcombine.low %v4117, %v4133
        %v4151 = vcombine.high %v4117, %v4133
        %v4153 = vunpack.c.l.s4 1934713408
        %v4154 = vunpack.c.0.s8 %v4153
        %v4155 = vlaneseq
        %v4156 = vshrl.u32 %v4155, 7
        %v4157 = vsub.s32 %v4154, %v4156
        %v4158 = vrot.slane %v4150, %v4157
        %v4160 = vunpack.c.l.s4 1934713408
        %v4161 = vunpack.c.0.s8 %v4160
        %v4162 = vlaneseq
        %v4163 = vshrl.u32 %v4162, 7
        %v4164 = vsub.s32 %v4161, %v4163
        %v4165 = vrot.slane %v4151, %v4164
        %v4166 = vcombine.high %v4142, 0.0
        %v4167 = vcombine.high %v4149, 0.0
        %v4168 = vcombine.high %v4158, 0.0
        %v4169 = vcombine.high %v4165, 0.0
        %v4170 = vcombine.low %v2759, %v3217
        %v4171 = vcombine.high %v2759, %v3217
        %v4173 = vunpack.c.l.s4 1983009808
        %v4174 = vunpack.c.0.s8 %v4173
        %v4175 = vlaneseq
        %v4176 = vshrl.u32 %v4175, 7
        %v4177 = vsub.s32 %v4174, %v4176
        %v4178 = vrot.slane %v4170, %v4177
        %v4180 = vunpack.c.l.s4 1983009808
        %v4181 = vunpack.c.0.s8 %v4180
        %v4182 = vlaneseq
        %v4183 = vshrl.u32 %v4182, 7
        %v4184 = vsub.s32 %v4181, %v4183
        %v4185 = vrot.slane %v4171, %v4184
        %v4186 = vcombine.low %v3169, %v3265
        %v4187 = vcombine.high %v3169, %v3265
        %v4189 = vunpack.c.l.s4 1983009808
        %v4190 = vunpack.c.0.s8 %v4189
        %v4191 = vlaneseq
        %v4192 = vshrl.u32 %v4191, 7
        %v4193 = vsub.s32 %v4190, %v4192
        %v4194 = vrot.slane %v4186, %v4193
        %v4196 = vunpack.c.l.s4 1983009808
        %v4197 = vunpack.c.0.s8 %v4196
        %v4198 = vlaneseq
        %v4199 = vshrl.u32 %v4198, 7
        %v4200 = vsub.s32 %v4197, %v4199
        %v4201 = vrot.slane %v4187, %v4200
        %v4202 = vcombine.low %v4178, %v4194
        %v4203 = vcombine.high %v4178, %v4194
        %v4205 = vunpack.c.l.s4 1934713408
        %v4206 = vunpack.c.0.s8 %v4205
        %v4207 = vlaneseq
        %v4208 = vshrl.u32 %v4207, 7
        %v4209 = vsub.s32 %v4206, %v4208
        %v4210 = vrot.slane %v4202, %v4209
        %v4212 = vunpack.c.l.s4 1934713408
        %v4213 = vunpack.c.0.s8 %v4212
        %v4214 = vlaneseq
        %v4215 = vshrl.u32 %v4214, 7
        %v4216 = vsub.s32 %v4213, %v4215
        %v4217 = vrot.slane %v4203, %v4216
        %v4218 = vcombine.low %v4185, %v4201
        %v4219 = vcombine.high %v4185, %v4201
        %v4221 = vunpack.c.l.s4 1934713408
        %v4222 = vunpack.c.0.s8 %v4221
        %v4223 = vlaneseq
        %v4224 = vshrl.u32 %v4223, 7
        %v4225 = vsub.s32 %v4222, %v4224
        %v4226 = vrot.slane %v4218, %v4225
        %v4228 = vunpack.c.l.s4 1934713408
        %v4229 = vunpack.c.0.s8 %v4228
        %v4230 = vlaneseq
        %v4231 = vshrl.u32 %v4230, 7
        %v4232 = vsub.s32 %v4229, %v4231
        %v4233 = vrot.slane %v4219, %v4232
        %v4234 = vcombine.high %v4210, 0.0
        %v4235 = vcombine.high %v4217, 0.0
        %v4236 = vcombine.high %v4226, 0.0
        %v4237 = vcombine.high %v4233, 0.0
        %v4238 = vcombine.low %v2764, %v3219
        %v4239 = vcombine.high %v2764, %v3219
        %v4241 = vunpack.c.l.s4 1983009808
        %v4242 = vunpack.c.0.s8 %v4241
        %v4243 = vlaneseq
        %v4244 = vshrl.u32 %v4243, 7
        %v4245 = vsub.s32 %v4242, %v4244
        %v4246 = vrot.slane %v4238, %v4245
        %v4248 = vunpack.c.l.s4 1983009808
        %v4249 = vunpack.c.0.s8 %v4248
        %v4250 = vlaneseq
        %v4251 = vshrl.u32 %v4250, 7
        %v4252 = vsub.s32 %v4249, %v4251
        %v4253 = vrot.slane %v4239, %v4252
        %v4254 = vcombine.low %v3171, %v3267
        %v4255 = vcombine.high %v3171, %v3267
        %v4257 = vunpack.c.l.s4 1983009808
        %v4258 = vunpack.c.0.s8 %v4257
        %v4259 = vlaneseq
        %v4260 = vshrl.u32 %v4259, 7
        %v4261 = vsub.s32 %v4258, %v4260
        %v4262 = vrot.slane %v4254, %v4261
        %v4264 = vunpack.c.l.s4 1983009808
        %v4265 = vunpack.c.0.s8 %v4264
        %v4266 = vlaneseq
        %v4267 = vshrl.u32 %v4266, 7
        %v4268 = vsub.s32 %v4265, %v4267
        %v4269 = vrot.slane %v4255, %v4268
        %v4270 = vcombine.low %v4246, %v4262
        %v4271 = vcombine.high %v4246, %v4262
        %v4273 = vunpack.c.l.s4 1934713408
        %v4274 = vunpack.c.0.s8 %v4273
        %v4275 = vlaneseq
        %v4276 = vshrl.u32 %v4275, 7
        %v4277 = vsub.s32 %v4274, %v4276
        %v4278 = vrot.slane %v4270, %v4277
        %v4280 = vunpack.c.l.s4 1934713408
        %v4281 = vunpack.c.0.s8 %v4280
        %v4282 = vlaneseq
        %v4283 = vshrl.u32 %v4282, 7
        %v4284 = vsub.s32 %v4281, %v4283
        %v4285 = vrot.slane %v4271, %v4284
        %v4286 = vcombine.low %v4253, %v4269
        %v4287 = vcombine.high %v4253, %v4269
        %v4289 = vunpack.c.l.s4 1934713408
        %v4290 = vunpack.c.0.s8 %v4289
        %v4291 = vlaneseq
        %v4292 = vshrl.u32 %v4291, 7
        %v4293 = vsub.s32 %v4290, %v4292
        %v4294 = vrot.slane %v4286, %v4293
        %v4296 = vunpack.c.l.s4 1934713408
        %v4297 = vunpack.c.0.s8 %v4296
        %v4298 = vlaneseq
        %v4299 = vshrl.u32 %v4298, 7
        %v4300 = vsub.s32 %v4297, %v4299
        %v4301 = vrot.slane %v4287, %v4300
        %v4302 = vcombine.high %v4278, 0.0
        %v4303 = vcombine.high %v4285, 0.0
        %v4304 = vcombine.high %v4294, 0.0
        %v4305 = vcombine.high %v4301, 0.0
        %v4306 = vcombine.low %v2767, %v3221
        %v4307 = vcombine.high %v2767, %v3221
        %v4309 = vunpack.c.l.s4 1983009808
        %v4310 = vunpack.c.0.s8 %v4309
        %v4311 = vlaneseq
        %v4312 = vshrl.u32 %v4311, 7
        %v4313 = vsub.s32 %v4310, %v4312
        %v4314 = vrot.slane %v4306, %v4313
        %v4316 = vunpack.c.l.s4 1983009808
        %v4317 = vunpack.c.0.s8 %v4316
        %v4318 = vlaneseq
        %v4319 = vshrl.u32 %v4318, 7
        %v4320 = vsub.s32 %v4317, %v4319
        %v4321 = vrot.slane %v4307, %v4320
        %v4322 = vcombine.low %v3173, %v3269
        %v4323 = vcombine.high %v3173, %v3269
        %v4325 = vunpack.c.l.s4 1983009808
        %v4326 = vunpack.c.0.s8 %v4325
        %v4327 = vlaneseq
        %v4328 = vshrl.u32 %v4327, 7
        %v4329 = vsub.s32 %v4326, %v4328
        %v4330 = vrot.slane %v4322, %v4329
        %v4332 = vunpack.c.l.s4 1983009808
        %v4333 = vunpack.c.0.s8 %v4332
        %v4334 = vlaneseq
        %v4335 = vshrl.u32 %v4334, 7
        %v4336 = vsub.s32 %v4333, %v4335
        %v4337 = vrot.slane %v4323, %v4336
        %v4338 = vcombine.low %v4314, %v4330
        %v4339 = vcombine.high %v4314, %v4330
        %v4341 = vunpack.c.l.s4 1934713408
        %v4342 = vunpack.c.0.s8 %v4341
        %v4343 = vlaneseq
        %v4344 = vshrl.u32 %v4343, 7
        %v4345 = vsub.s32 %v4342, %v4344
        %v4346 = vrot.slane %v4338, %v4345
        %v4348 = vunpack.c.l.s4 1934713408
        %v4349 = vunpack.c.0.s8 %v4348
        %v4350 = vlaneseq
        %v4351 = vshrl.u32 %v4350, 7
        %v4352 = vsub.s32 %v4349, %v4351
        %v4353 = vrot.slane %v4339, %v4352
        %v4354 = vcombine.low %v4321, %v4337
        %v4355 = vcombine.high %v4321, %v4337
        %v4357 = vunpack.c.l.s4 1934713408
        %v4358 = vunpack.c.0.s8 %v4357
        %v4359 = vlaneseq
        %v4360 = vshrl.u32 %v4359, 7
        %v4361 = vsub.s32 %v4358, %v4360
        %v4362 = vrot.slane %v4354, %v4361
        %v4364 = vunpack.c.l.s4 1934713408
        %v4365 = vunpack.c.0.s8 %v4364
        %v4366 = vlaneseq
        %v4367 = vshrl.u32 %v4366, 7
        %v4368 = vsub.s32 %v4365, %v4367
        %v4369 = vrot.slane %v4355, %v4368
        %v4370 = vcombine.high %v4346, 0.0
        %v4371 = vcombine.high %v4353, 0.0
        %v4372 = vcombine.high %v4362, 0.0
        %v4373 = vcombine.high %v4369, 0.0
        %v4374 = vcombine.low %v3326, %v3333
        %v4376 = vunpack.c.l.s4 1983009808
        %v4377 = vunpack.c.0.s8 %v4376
        %v4378 = vlaneseq
        %v4379 = vshrl.u32 %v4378, 7
        %v4380 = vsub.s32 %v4377, %v4379
        %v4381 = vrot.slane %v4374, %v4380
        %v4382 = vcombine.low %v3350, %v3351
        %v4384 = vunpack.c.l.s4 1983009808
        %v4385 = vunpack.c.0.s8 %v4384
        %v4386 = vlaneseq
        %v4387 = vshrl.u32 %v4386, 7
        %v4388 = vsub.s32 %v4385, %v4387
        %v4389 = vrot.slane %v4382, %v4388
        %v4390 = vcombine.low %v3342, %v3349
        %v4392 = vunpack.c.l.s4 1983009808
        %v4393 = vunpack.c.0.s8 %v4392
        %v4394 = vlaneseq
        %v4395 = vshrl.u32 %v4394, 7
        %v4396 = vsub.s32 %v4393, %v4395
        %v4397 = vrot.slane %v4390, %v4396
        %v4398 = vcombine.low %v3352, %v3353
        %v4400 = vunpack.c.l.s4 1983009808
        %v4401 = vunpack.c.0.s8 %v4400
        %v4402 = vlaneseq
        %v4403 = vshrl.u32 %v4402, 7
        %v4404 = vsub.s32 %v4401, %v4403
        %v4405 = vrot.slane %v4398, %v4404
        %v4406 = vcombine.low %v4381, %v4389
        %v4407 = vcombine.high %v4381, %v4389
        %v4409 = vunpack.c.l.s4 1934713408
        %v4410 = vunpack.c.0.s8 %v4409
        %v4411 = vlaneseq
        %v4412 = vshrl.u32 %v4411, 7
        %v4413 = vsub.s32 %v4410, %v4412
        %v4414 = vrot.slane %v4406, %v4413
        %v4416 = vunpack.c.l.s4 1934713408
        %v4417 = vunpack.c.0.s8 %v4416
        %v4418 = vlaneseq
        %v4419 = vshrl.u32 %v4418, 7
        %v4420 = vsub.s32 %v4417, %v4419
        %v4421 = vrot.slane %v4407, %v4420
        %v4422 = vcombine.low %v4397, %v4405
        %v4423 = vcombine.high %v4397, %v4405
        %v4425 = vunpack.c.l.s4 1934713408
        %v4426 = vunpack.c.0.s8 %v4425
        %v4427 = vlaneseq
        %v4428 = vshrl.u32 %v4427, 7
        %v4429 = vsub.s32 %v4426, %v4428
        %v4430 = vrot.slane %v4422, %v4429
        %v4432 = vunpack.c.l.s4 1934713408
        %v4433 = vunpack.c.0.s8 %v4432
        %v4434 = vlaneseq
        %v4435 = vshrl.u32 %v4434, 7
        %v4436 = vsub.s32 %v4433, %v4435
        %v4437 = vrot.slane %v4423, %v4436
        %v4438 = vcombine.low %v4414, %v4430
        %v4439 = vcombine.high %v4414, %v4430
        %v4440 = vcombine.low %v4421, %v4437
        %v4441 = vcombine.high %v4421, %v4437
        %v4442 = vcombine.low %v3394, %v3401
        %v4444 = vunpack.c.l.s4 1983009808
        %v4445 = vunpack.c.0.s8 %v4444
        %v4446 = vlaneseq
        %v4447 = vshrl.u32 %v4446, 7
        %v4448 = vsub.s32 %v4445, %v4447
        %v4449 = vrot.slane %v4442, %v4448
        %v4450 = vcombine.low %v3418, %v3419
        %v4452 = vunpack.c.l.s4 1983009808
        %v4453 = vunpack.c.0.s8 %v4452
        %v4454 = vlaneseq
        %v4455 = vshrl.u32 %v4454, 7
        %v4456 = vsub.s32 %v4453, %v4455
        %v4457 = vrot.slane %v4450, %v4456
        %v4458 = vcombine.low %v3410, %v3417
        %v4460 = vunpack.c.l.s4 1983009808
        %v4461 = vunpack.c.0.s8 %v4460
        %v4462 = vlaneseq
        %v4463 = vshrl.u32 %v4462, 7
        %v4464 = vsub.s32 %v4461, %v4463
        %v4465 = vrot.slane %v4458, %v4464
        %v4466 = vcombine.low %v3420, %v3421
        %v4468 = vunpack.c.l.s4 1983009808
        %v4469 = vunpack.c.0.s8 %v4468
        %v4470 = vlaneseq
        %v4471 = vshrl.u32 %v4470, 7
        %v4472 = vsub.s32 %v4469, %v4471
        %v4473 = vrot.slane %v4466, %v4472
        %v4474 = vcombine.low %v4449, %v4457
        %v4475 = vcombine.high %v4449, %v4457
        %v4477 = vunpack.c.l.s4 1934713408
        %v4478 = vunpack.c.0.s8 %v4477
        %v4479 = vlaneseq
        %v4480 = vshrl.u32 %v4479, 7
        %v4481 = vsub.s32 %v4478, %v4480
        %v4482 = vrot.slane %v4474, %v4481
        %v4484 = vunpack.c.l.s4 1934713408
        %v4485 = vunpack.c.0.s8 %v4484
        %v4486 = vlaneseq
        %v4487 = vshrl.u32 %v4486, 7
        %v4488 = vsub.s32 %v4485, %v4487
        %v4489 = vrot.slane %v4475, %v4488
        %v4490 = vcombine.low %v4465, %v4473
        %v4491 = vcombine.high %v4465, %v4473
        %v4493 = vunpack.c.l.s4 1934713408
        %v4494 = vunpack.c.0.s8 %v4493
        %v4495 = vlaneseq
        %v4496 = vshrl.u32 %v4495, 7
        %v4497 = vsub.s32 %v4494, %v4496
        %v4498 = vrot.slane %v4490, %v4497
        %v4500 = vunpack.c.l.s4 1934713408
        %v4501 = vunpack.c.0.s8 %v4500
        %v4502 = vlaneseq
        %v4503 = vshrl.u32 %v4502, 7
        %v4504 = vsub.s32 %v4501, %v4503
        %v4505 = vrot.slane %v4491, %v4504
        %v4506 = vcombine.low %v4482, %v4498
        %v4507 = vcombine.high %v4482, %v4498
        %v4508 = vcombine.low %v4489, %v4505
        %v4509 = vcombine.high %v4489, %v4505
        %v4510 = vcombine.low %v3462, %v3469
        %v4512 = vunpack.c.l.s4 1983009808
        %v4513 = vunpack.c.0.s8 %v4512
        %v4514 = vlaneseq
        %v4515 = vshrl.u32 %v4514, 7
        %v4516 = vsub.s32 %v4513, %v4515
        %v4517 = vrot.slane %v4510, %v4516
        %v4518 = vcombine.low %v3486, %v3487
        %v4520 = vunpack.c.l.s4 1983009808
        %v4521 = vunpack.c.0.s8 %v4520
        %v4522 = vlaneseq
        %v4523 = vshrl.u32 %v4522, 7
        %v4524 = vsub.s32 %v4521, %v4523
        %v4525 = vrot.slane %v4518, %v4524
        %v4526 = vcombine.low %v3478, %v3485
        %v4528 = vunpack.c.l.s4 1983009808
        %v4529 = vunpack.c.0.s8 %v4528
        %v4530 = vlaneseq
        %v4531 = vshrl.u32 %v4530, 7
        %v4532 = vsub.s32 %v4529, %v4531
        %v4533 = vrot.slane %v4526, %v4532
        %v4534 = vcombine.low %v3488, %v3489
        %v4536 = vunpack.c.l.s4 1983009808
        %v4537 = vunpack.c.0.s8 %v4536
        %v4538 = vlaneseq
        %v4539 = vshrl.u32 %v4538, 7
        %v4540 = vsub.s32 %v4537, %v4539
        %v4541 = vrot.slane %v4534, %v4540
        %v4542 = vcombine.low %v4517, %v4525
        %v4543 = vcombine.high %v4517, %v4525
        %v4545 = vunpack.c.l.s4 1934713408
        %v4546 = vunpack.c.0.s8 %v4545
        %v4547 = vlaneseq
        %v4548 = vshrl.u32 %v4547, 7
        %v4549 = vsub.s32 %v4546, %v4548
        %v4550 = vrot.slane %v4542, %v4549
        %v4552 = vunpack.c.l.s4 1934713408
        %v4553 = vunpack.c.0.s8 %v4552
        %v4554 = vlaneseq
        %v4555 = vshrl.u32 %v4554, 7
        %v4556 = vsub.s32 %v4553, %v4555
        %v4557 = vrot.slane %v4543, %v4556
        %v4558 = vcombine.low %v4533, %v4541
        %v4559 = vcombine.high %v4533, %v4541
        %v4561 = vunpack.c.l.s4 1934713408
        %v4562 = vunpack.c.0.s8 %v4561
        %v4563 = vlaneseq
        %v4564 = vshrl.u32 %v4563, 7
        %v4565 = vsub.s32 %v4562, %v4564
        %v4566 = vrot.slane %v4558, %v4565
        %v4568 = vunpack.c.l.s4 1934713408
        %v4569 = vunpack.c.0.s8 %v4568
        %v4570 = vlaneseq
        %v4571 = vshrl.u32 %v4570, 7
        %v4572 = vsub.s32 %v4569, %v4571
        %v4573 = vrot.slane %v4559, %v4572
        %v4574 = vcombine.low %v4550, %v4566
        %v4575 = vcombine.high %v4550, %v4566
        %v4576 = vcombine.low %v4557, %v4573
        %v4577 = vcombine.high %v4557, %v4573
        %v4578 = vcombine.low %v3530, %v3537
        %v4580 = vunpack.c.l.s4 1983009808
        %v4581 = vunpack.c.0.s8 %v4580
        %v4582 = vlaneseq
        %v4583 = vshrl.u32 %v4582, 7
        %v4584 = vsub.s32 %v4581, %v4583
        %v4585 = vrot.slane %v4578, %v4584
        %v4586 = vcombine.low %v3554, %v3555
        %v4588 = vunpack.c.l.s4 1983009808
        %v4589 = vunpack.c.0.s8 %v4588
        %v4590 = vlaneseq
        %v4591 = vshrl.u32 %v4590, 7
        %v4592 = vsub.s32 %v4589, %v4591
        %v4593 = vrot.slane %v4586, %v4592
        %v4594 = vcombine.low %v3546, %v3553
        %v4596 = vunpack.c.l.s4 1983009808
        %v4597 = vunpack.c.0.s8 %v4596
        %v4598 = vlaneseq
        %v4599 = vshrl.u32 %v4598, 7
        %v4600 = vsub.s32 %v4597, %v4599
        %v4601 = vrot.slane %v4594, %v4600
        %v4602 = vcombine.low %v3556, %v3557
        %v4604 = vunpack.c.l.s4 1983009808
        %v4605 = vunpack.c.0.s8 %v4604
        %v4606 = vlaneseq
        %v4607 = vshrl.u32 %v4606, 7
        %v4608 = vsub.s32 %v4605, %v4607
        %v4609 = vrot.slane %v4602, %v4608
        %v4610 = vcombine.low %v4585, %v4593
        %v4611 = vcombine.high %v4585, %v4593
        %v4613 = vunpack.c.l.s4 1934713408
        %v4614 = vunpack.c.0.s8 %v4613
        %v4615 = vlaneseq
        %v4616 = vshrl.u32 %v4615, 7
        %v4617 = vsub.s32 %v4614, %v4616
        %v4618 = vrot.slane %v4610, %v4617
        %v4620 = vunpack.c.l.s4 1934713408
        %v4621 = vunpack.c.0.s8 %v4620
        %v4622 = vlaneseq
        %v4623 = vshrl.u32 %v4622, 7
        %v4624 = vsub.s32 %v4621, %v4623
        %v4625 = vrot.slane %v4611, %v4624
        %v4626 = vcombine.low %v4601, %v4609
        %v4627 = vcombine.high %v4601, %v4609
        %v4629 = vunpack.c.l.s4 1934713408
        %v4630 = vunpack.c.0.s8 %v4629
        %v4631 = vlaneseq
        %v4632 = vshrl.u32 %v4631, 7
        %v4633 = vsub.s32 %v4630, %v4632
        %v4634 = vrot.slane %v4626, %v4633
        %v4636 = vunpack.c.l.s4 1934713408
        %v4637 = vunpack.c.0.s8 %v4636
        %v4638 = vlaneseq
        %v4639 = vshrl.u32 %v4638, 7
        %v4640 = vsub.s32 %v4637, %v4639
        %v4641 = vrot.slane %v4627, %v4640
        %v4642 = vcombine.low %v4618, %v4634
        %v4643 = vcombine.high %v4618, %v4634
        %v4644 = vcombine.low %v4625, %v4641
        %v4645 = vcombine.high %v4625, %v4641
        %v4646 = vcombine.low %v3598, %v3605
        %v4648 = vunpack.c.l.s4 1983009808
        %v4649 = vunpack.c.0.s8 %v4648
        %v4650 = vlaneseq
        %v4651 = vshrl.u32 %v4650, 7
        %v4652 = vsub.s32 %v4649, %v4651
        %v4653 = vrot.slane %v4646, %v4652
        %v4654 = vcombine.low %v3622, %v3623
        %v4656 = vunpack.c.l.s4 1983009808
        %v4657 = vunpack.c.0.s8 %v4656
        %v4658 = vlaneseq
        %v4659 = vshrl.u32 %v4658, 7
        %v4660 = vsub.s32 %v4657, %v4659
        %v4661 = vrot.slane %v4654, %v4660
        %v4662 = vcombine.low %v3614, %v3621
        %v4664 = vunpack.c.l.s4 1983009808
        %v4665 = vunpack.c.0.s8 %v4664
        %v4666 = vlaneseq
        %v4667 = vshrl.u32 %v4666, 7
        %v4668 = vsub.s32 %v4665, %v4667
        %v4669 = vrot.slane %v4662, %v4668
        %v4670 = vcombine.low %v3624, %v3625
        %v4672 = vunpack.c.l.s4 1983009808
        %v4673 = vunpack.c.0.s8 %v4672
        %v4674 = vlaneseq
        %v4675 = vshrl.u32 %v4674, 7
        %v4676 = vsub.s32 %v4673, %v4675
        %v4677 = vrot.slane %v4670, %v4676
        %v4678 = vcombine.low %v4653, %v4661
        %v4679 = vcombine.high %v4653, %v4661
        %v4681 = vunpack.c.l.s4 1934713408
        %v4682 = vunpack.c.0.s8 %v4681
        %v4683 = vlaneseq
        %v4684 = vshrl.u32 %v4683, 7
        %v4685 = vsub.s32 %v4682, %v4684
        %v4686 = vrot.slane %v4678, %v4685
        %v4688 = vunpack.c.l.s4 1934713408
        %v4689 = vunpack.c.0.s8 %v4688
        %v4690 = vlaneseq
        %v4691 = vshrl.u32 %v4690, 7
        %v4692 = vsub.s32 %v4689, %v4691
        %v4693 = vrot.slane %v4679, %v4692
        %v4694 = vcombine.low %v4669, %v4677
        %v4695 = vcombine.high %v4669, %v4677
        %v4697 = vunpack.c.l.s4 1934713408
        %v4698 = vunpack.c.0.s8 %v4697
        %v4699 = vlaneseq
        %v4700 = vshrl.u32 %v4699, 7
        %v4701 = vsub.s32 %v4698, %v4700
        %v4702 = vrot.slane %v4694, %v4701
        %v4704 = vunpack.c.l.s4 1934713408
        %v4705 = vunpack.c.0.s8 %v4704
        %v4706 = vlaneseq
        %v4707 = vshrl.u32 %v4706, 7
        %v4708 = vsub.s32 %v4705, %v4707
        %v4709 = vrot.slane %v4695, %v4708
        %v4710 = vcombine.low %v4686, %v4702
        %v4711 = vcombine.high %v4686, %v4702
        %v4712 = vcombine.low %v4693, %v4709
        %v4713 = vcombine.high %v4693, %v4709
        %v4714 = vcombine.low %v3666, %v3673
        %v4716 = vunpack.c.l.s4 1983009808
        %v4717 = vunpack.c.0.s8 %v4716
        %v4718 = vlaneseq
        %v4719 = vshrl.u32 %v4718, 7
        %v4720 = vsub.s32 %v4717, %v4719
        %v4721 = vrot.slane %v4714, %v4720
        %v4722 = vcombine.low %v3690, %v3691
        %v4724 = vunpack.c.l.s4 1983009808
        %v4725 = vunpack.c.0.s8 %v4724
        %v4726 = vlaneseq
        %v4727 = vshrl.u32 %v4726, 7
        %v4728 = vsub.s32 %v4725, %v4727
        %v4729 = vrot.slane %v4722, %v4728
        %v4730 = vcombine.low %v3682, %v3689
        %v4732 = vunpack.c.l.s4 1983009808
        %v4733 = vunpack.c.0.s8 %v4732
        %v4734 = vlaneseq
        %v4735 = vshrl.u32 %v4734, 7
        %v4736 = vsub.s32 %v4733, %v4735
        %v4737 = vrot.slane %v4730, %v4736
        %v4738 = vcombine.low %v3692, %v3693
        %v4740 = vunpack.c.l.s4 1983009808
        %v4741 = vunpack.c.0.s8 %v4740
        %v4742 = vlaneseq
        %v4743 = vshrl.u32 %v4742, 7
        %v4744 = vsub.s32 %v4741, %v4743
        %v4745 = vrot.slane %v4738, %v4744
        %v4746 = vcombine.low %v4721, %v4729
        %v4747 = vcombine.high %v4721, %v4729
        %v4749 = vunpack.c.l.s4 1934713408
        %v4750 = vunpack.c.0.s8 %v4749
        %v4751 = vlaneseq
        %v4752 = vshrl.u32 %v4751, 7
        %v4753 = vsub.s32 %v4750, %v4752
        %v4754 = vrot.slane %v4746, %v4753
        %v4756 = vunpack.c.l.s4 1934713408
        %v4757 = vunpack.c.0.s8 %v4756
        %v4758 = vlaneseq
        %v4759 = vshrl.u32 %v4758, 7
        %v4760 = vsub.s32 %v4757, %v4759
        %v4761 = vrot.slane %v4747, %v4760
        %v4762 = vcombine.low %v4737, %v4745
        %v4763 = vcombine.high %v4737, %v4745
        %v4765 = vunpack.c.l.s4 1934713408
        %v4766 = vunpack.c.0.s8 %v4765
        %v4767 = vlaneseq
        %v4768 = vshrl.u32 %v4767, 7
        %v4769 = vsub.s32 %v4766, %v4768
        %v4770 = vrot.slane %v4762, %v4769
        %v4772 = vunpack.c.l.s4 1934713408
        %v4773 = vunpack.c.0.s8 %v4772
        %v4774 = vlaneseq
        %v4775 = vshrl.u32 %v4774, 7
        %v4776 = vsub.s32 %v4773, %v4775
        %v4777 = vrot.slane %v4763, %v4776
        %v4778 = vcombine.low %v4754, %v4770
        %v4779 = vcombine.high %v4754, %v4770
        %v4780 = vcombine.low %v4761, %v4777
        %v4781 = vcombine.high %v4761, %v4777
        %v4782 = vcombine.low %v3734, %v3741
        %v4784 = vunpack.c.l.s4 1983009808
        %v4785 = vunpack.c.0.s8 %v4784
        %v4786 = vlaneseq
        %v4787 = vshrl.u32 %v4786, 7
        %v4788 = vsub.s32 %v4785, %v4787
        %v4789 = vrot.slane %v4782, %v4788
        %v4790 = vcombine.low %v3758, %v3759
        %v4792 = vunpack.c.l.s4 1983009808
        %v4793 = vunpack.c.0.s8 %v4792
        %v4794 = vlaneseq
        %v4795 = vshrl.u32 %v4794, 7
        %v4796 = vsub.s32 %v4793, %v4795
        %v4797 = vrot.slane %v4790, %v4796
        %v4798 = vcombine.low %v3750, %v3757
        %v4800 = vunpack.c.l.s4 1983009808
        %v4801 = vunpack.c.0.s8 %v4800
        %v4802 = vlaneseq
        %v4803 = vshrl.u32 %v4802, 7
        %v4804 = vsub.s32 %v4801, %v4803
        %v4805 = vrot.slane %v4798, %v4804
        %v4806 = vcombine.low %v3760, %v3761
        %v4808 = vunpack.c.l.s4 1983009808
        %v4809 = vunpack.c.0.s8 %v4808
        %v4810 = vlaneseq
        %v4811 = vshrl.u32 %v4810, 7
        %v4812 = vsub.s32 %v4809, %v4811
        %v4813 = vrot.slane %v4806, %v4812
        %v4814 = vcombine.low %v4789, %v4797
        %v4815 = vcombine.high %v4789, %v4797
        %v4817 = vunpack.c.l.s4 1934713408
        %v4818 = vunpack.c.0.s8 %v4817
        %v4819 = vlaneseq
        %v4820 = vshrl.u32 %v4819, 7
        %v4821 = vsub.s32 %v4818, %v4820
        %v4822 = vrot.slane %v4814, %v4821
        %v4824 = vunpack.c.l.s4 1934713408
        %v4825 = vunpack.c.0.s8 %v4824
        %v4826 = vlaneseq
        %v4827 = vshrl.u32 %v4826, 7
        %v4828 = vsub.s32 %v4825, %v4827
        %v4829 = vrot.slane %v4815, %v4828
        %v4830 = vcombine.low %v4805, %v4813
        %v4831 = vcombine.high %v4805, %v4813
        %v4833 = vunpack.c.l.s4 1934713408
        %v4834 = vunpack.c.0.s8 %v4833
        %v4835 = vlaneseq
        %v4836 = vshrl.u32 %v4835, 7
        %v4837 = vsub.s32 %v4834, %v4836
        %v4838 = vrot.slane %v4830, %v4837
        %v4840 = vunpack.c.l.s4 1934713408
        %v4841 = vunpack.c.0.s8 %v4840
        %v4842 = vlaneseq
        %v4843 = vshrl.u32 %v4842, 7
        %v4844 = vsub.s32 %v4841, %v4843
        %v4845 = vrot.slane %v4831, %v4844
        %v4846 = vcombine.low %v4822, %v4838
        %v4847 = vcombine.high %v4822, %v4838
        %v4848 = vcombine.low %v4829, %v4845
        %v4849 = vcombine.high %v4829, %v4845
        %v4850 = vcombine.low %v3802, %v3809
        %v4852 = vunpack.c.l.s4 1983009808
        %v4853 = vunpack.c.0.s8 %v4852
        %v4854 = vlaneseq
        %v4855 = vshrl.u32 %v4854, 7
        %v4856 = vsub.s32 %v4853, %v4855
        %v4857 = vrot.slane %v4850, %v4856
        %v4858 = vcombine.low %v3826, %v3827
        %v4860 = vunpack.c.l.s4 1983009808
        %v4861 = vunpack.c.0.s8 %v4860
        %v4862 = vlaneseq
        %v4863 = vshrl.u32 %v4862, 7
        %v4864 = vsub.s32 %v4861, %v4863
        %v4865 = vrot.slane %v4858, %v4864
        %v4866 = vcombine.low %v3818, %v3825
        %v4868 = vunpack.c.l.s4 1983009808
        %v4869 = vunpack.c.0.s8 %v4868
        %v4870 = vlaneseq
        %v4871 = vshrl.u32 %v4870, 7
        %v4872 = vsub.s32 %v4869, %v4871
        %v4873 = vrot.slane %v4866, %v4872
        %v4874 = vcombine.low %v3828, %v3829
        %v4876 = vunpack.c.l.s4 1983009808
        %v4877 = vunpack.c.0.s8 %v4876
        %v4878 = vlaneseq
        %v4879 = vshrl.u32 %v4878, 7
        %v4880 = vsub.s32 %v4877, %v4879
        %v4881 = vrot.slane %v4874, %v4880
        %v4882 = vcombine.low %v4857, %v4865
        %v4883 = vcombine.high %v4857, %v4865
        %v4885 = vunpack.c.l.s4 1934713408
        %v4886 = vunpack.c.0.s8 %v4885
        %v4887 = vlaneseq
        %v4888 = vshrl.u32 %v4887, 7
        %v4889 = vsub.s32 %v4886, %v4888
        %v4890 = vrot.slane %v4882, %v4889
        %v4892 = vunpack.c.l.s4 1934713408
        %v4893 = vunpack.c.0.s8 %v4892
        %v4894 = vlaneseq
        %v4895 = vshrl.u32 %v4894, 7
        %v4896 = vsub.s32 %v4893, %v4895
        %v4897 = vrot.slane %v4883, %v4896
        %v4898 = vcombine.low %v4873, %v4881
        %v4899 = vcombine.high %v4873, %v4881
        %v4901 = vunpack.c.l.s4 1934713408
        %v4902 = vunpack.c.0.s8 %v4901
        %v4903 = vlaneseq
        %v4904 = vshrl.u32 %v4903, 7
        %v4905 = vsub.s32 %v4902, %v4904
        %v4906 = vrot.slane %v4898, %v4905
        %v4908 = vunpack.c.l.s4 1934713408
        %v4909 = vunpack.c.0.s8 %v4908
        %v4910 = vlaneseq
        %v4911 = vshrl.u32 %v4910, 7
        %v4912 = vsub.s32 %v4909, %v4911
        %v4913 = vrot.slane %v4899, %v4912
        %v4914 = vcombine.low %v4890, %v4906
        %v4915 = vcombine.high %v4890, %v4906
        %v4916 = vcombine.low %v4897, %v4913
        %v4917 = vcombine.high %v4897, %v4913
        %v4918 = vcombine.low %v3870, %v3877
        %v4920 = vunpack.c.l.s4 1983009808
        %v4921 = vunpack.c.0.s8 %v4920
        %v4922 = vlaneseq
        %v4923 = vshrl.u32 %v4922, 7
        %v4924 = vsub.s32 %v4921, %v4923
        %v4925 = vrot.slane %v4918, %v4924
        %v4926 = vcombine.low %v3894, %v3895
        %v4928 = vunpack.c.l.s4 1983009808
        %v4929 = vunpack.c.0.s8 %v4928
        %v4930 = vlaneseq
        %v4931 = vshrl.u32 %v4930, 7
        %v4932 = vsub.s32 %v4929, %v4931
        %v4933 = vrot.slane %v4926, %v4932
        %v4934 = vcombine.low %v3886, %v3893
        %v4936 = vunpack.c.l.s4 1983009808
        %v4937 = vunpack.c.0.s8 %v4936
        %v4938 = vlaneseq
        %v4939 = vshrl.u32 %v4938, 7
        %v4940 = vsub.s32 %v4937, %v4939
        %v4941 = vrot.slane %v4934, %v4940
        %v4942 = vcombine.low %v3896, %v3897
        %v4944 = vunpack.c.l.s4 1983009808
        %v4945 = vunpack.c.0.s8 %v4944
        %v4946 = vlaneseq
        %v4947 = vshrl.u32 %v4946, 7
        %v4948 = vsub.s32 %v4945, %v4947
        %v4949 = vrot.slane %v4942, %v4948
        %v4950 = vcombine.low %v4925, %v4933
        %v4951 = vcombine.high %v4925, %v4933
        %v4953 = vunpack.c.l.s4 1934713408
        %v4954 = vunpack.c.0.s8 %v4953
        %v4955 = vlaneseq
        %v4956 = vshrl.u32 %v4955, 7
        %v4957 = vsub.s32 %v4954, %v4956
        %v4958 = vrot.slane %v4950, %v4957
        %v4960 = vunpack.c.l.s4 1934713408
        %v4961 = vunpack.c.0.s8 %v4960
        %v4962 = vlaneseq
        %v4963 = vshrl.u32 %v4962, 7
        %v4964 = vsub.s32 %v4961, %v4963
        %v4965 = vrot.slane %v4951, %v4964
        %v4966 = vcombine.low %v4941, %v4949
        %v4967 = vcombine.high %v4941, %v4949
        %v4969 = vunpack.c.l.s4 1934713408
        %v4970 = vunpack.c.0.s8 %v4969
        %v4971 = vlaneseq
        %v4972 = vshrl.u32 %v4971, 7
        %v4973 = vsub.s32 %v4970, %v4972
        %v4974 = vrot.slane %v4966, %v4973
        %v4976 = vunpack.c.l.s4 1934713408
        %v4977 = vunpack.c.0.s8 %v4976
        %v4978 = vlaneseq
        %v4979 = vshrl.u32 %v4978, 7
        %v4980 = vsub.s32 %v4977, %v4979
        %v4981 = vrot.slane %v4967, %v4980
        %v4982 = vcombine.low %v4958, %v4974
        %v4983 = vcombine.high %v4958, %v4974
        %v4984 = vcombine.low %v4965, %v4981
        %v4985 = vcombine.high %v4965, %v4981
        %v4986 = vcombine.low %v3938, %v3945
        %v4988 = vunpack.c.l.s4 1983009808
        %v4989 = vunpack.c.0.s8 %v4988
        %v4990 = vlaneseq
        %v4991 = vshrl.u32 %v4990, 7
        %v4992 = vsub.s32 %v4989, %v4991
        %v4993 = vrot.slane %v4986, %v4992
        %v4994 = vcombine.low %v3962, %v3963
        %v4996 = vunpack.c.l.s4 1983009808
        %v4997 = vunpack.c.0.s8 %v4996
        %v4998 = vlaneseq
        %v4999 = vshrl.u32 %v4998, 7
        %v5000 = vsub.s32 %v4997, %v4999
        %v5001 = vrot.slane %v4994, %v5000
        %v5002 = vcombine.low %v3954, %v3961
        %v5004 = vunpack.c.l.s4 1983009808
        %v5005 = vunpack.c.0.s8 %v5004
        %v5006 = vlaneseq
        %v5007 = vshrl.u32 %v5006, 7
        %v5008 = vsub.s32 %v5005, %v5007
        %v5009 = vrot.slane %v5002, %v5008
        %v5010 = vcombine.low %v3964, %v3965
        %v5012 = vunpack.c.l.s4 1983009808
        %v5013 = vunpack.c.0.s8 %v5012
        %v5014 = vlaneseq
        %v5015 = vshrl.u32 %v5014, 7
        %v5016 = vsub.s32 %v5013, %v5015
        %v5017 = vrot.slane %v5010, %v5016
        %v5018 = vcombine.low %v4993, %v5001
        %v5019 = vcombine.high %v4993, %v5001
        %v5021 = vunpack.c.l.s4 1934713408
        %v5022 = vunpack.c.0.s8 %v5021
        %v5023 = vlaneseq
        %v5024 = vshrl.u32 %v5023, 7
        %v5025 = vsub.s32 %v5022, %v5024
        %v5026 = vrot.slane %v5018, %v5025
        %v5028 = vunpack.c.l.s4 1934713408
        %v5029 = vunpack.c.0.s8 %v5028
        %v5030 = vlaneseq
        %v5031 = vshrl.u32 %v5030, 7
        %v5032 = vsub.s32 %v5029, %v5031
        %v5033 = vrot.slane %v5019, %v5032
        %v5034 = vcombine.low %v5009, %v5017
        %v5035 = vcombine.high %v5009, %v5017
        %v5037 = vunpack.c.l.s4 1934713408
        %v5038 = vunpack.c.0.s8 %v5037
        %v5039 = vlaneseq
        %v5040 = vshrl.u32 %v5039, 7
        %v5041 = vsub.s32 %v5038, %v5040
        %v5042 = vrot.slane %v5034, %v5041
        %v5044 = vunpack.c.l.s4 1934713408
        %v5045 = vunpack.c.0.s8 %v5044
        %v5046 = vlaneseq
        %v5047 = vshrl.u32 %v5046, 7
        %v5048 = vsub.s32 %v5045, %v5047
        %v5049 = vrot.slane %v5035, %v5048
        %v5050 = vcombine.low %v5026, %v5042
        %v5051 = vcombine.high %v5026, %v5042
        %v5052 = vcombine.low %v5033, %v5049
        %v5053 = vcombine.high %v5033, %v5049
        %v5054 = vcombine.low %v4006, %v4013
        %v5056 = vunpack.c.l.s4 1983009808
        %v5057 = vunpack.c.0.s8 %v5056
        %v5058 = vlaneseq
        %v5059 = vshrl.u32 %v5058, 7
        %v5060 = vsub.s32 %v5057, %v5059
        %v5061 = vrot.slane %v5054, %v5060
        %v5062 = vcombine.low %v4030, %v4031
        %v5064 = vunpack.c.l.s4 1983009808
        %v5065 = vunpack.c.0.s8 %v5064
        %v5066 = vlaneseq
        %v5067 = vshrl.u32 %v5066, 7
        %v5068 = vsub.s32 %v5065, %v5067
        %v5069 = vrot.slane %v5062, %v5068
        %v5070 = vcombine.low %v4022, %v4029
        %v5072 = vunpack.c.l.s4 1983009808
        %v5073 = vunpack.c.0.s8 %v5072
        %v5074 = vlaneseq
        %v5075 = vshrl.u32 %v5074, 7
        %v5076 = vsub.s32 %v5073, %v5075
        %v5077 = vrot.slane %v5070, %v5076
        %v5078 = vcombine.low %v4032, %v4033
        %v5080 = vunpack.c.l.s4 1983009808
        %v5081 = vunpack.c.0.s8 %v5080
        %v5082 = vlaneseq
        %v5083 = vshrl.u32 %v5082, 7
        %v5084 = vsub.s32 %v5081, %v5083
        %v5085 = vrot.slane %v5078, %v5084
        %v5086 = vcombine.low %v5061, %v5069
        %v5087 = vcombine.high %v5061, %v5069
        %v5089 = vunpack.c.l.s4 1934713408
        %v5090 = vunpack.c.0.s8 %v5089
        %v5091 = vlaneseq
        %v5092 = vshrl.u32 %v5091, 7
        %v5093 = vsub.s32 %v5090, %v5092
        %v5094 = vrot.slane %v5086, %v5093
        %v5096 = vunpack.c.l.s4 1934713408
        %v5097 = vunpack.c.0.s8 %v5096
        %v5098 = vlaneseq
        %v5099 = vshrl.u32 %v5098, 7
        %v5100 = vsub.s32 %v5097, %v5099
        %v5101 = vrot.slane %v5087, %v5100
        %v5102 = vcombine.low %v5077, %v5085
        %v5103 = vcombine.high %v5077, %v5085
        %v5105 = vunpack.c.l.s4 1934713408
        %v5106 = vunpack.c.0.s8 %v5105
        %v5107 = vlaneseq
        %v5108 = vshrl.u32 %v5107, 7
        %v5109 = vsub.s32 %v5106, %v5108
        %v5110 = vrot.slane %v5102, %v5109
        %v5112 = vunpack.c.l.s4 1934713408
        %v5113 = vunpack.c.0.s8 %v5112
        %v5114 = vlaneseq
        %v5115 = vshrl.u32 %v5114, 7
        %v5116 = vsub.s32 %v5113, %v5115
        %v5117 = vrot.slane %v5103, %v5116
        %v5118 = vcombine.low %v5094, %v5110
        %v5119 = vcombine.high %v5094, %v5110
        %v5120 = vcombine.low %v5101, %v5117
        %v5121 = vcombine.high %v5101, %v5117
        %v5122 = vcombine.low %v4074, %v4081
        %v5124 = vunpack.c.l.s4 1983009808
        %v5125 = vunpack.c.0.s8 %v5124
        %v5126 = vlaneseq
        %v5127 = vshrl.u32 %v5126, 7
        %v5128 = vsub.s32 %v5125, %v5127
        %v5129 = vrot.slane %v5122, %v5128
        %v5130 = vcombine.low %v4098, %v4099
        %v5132 = vunpack.c.l.s4 1983009808
        %v5133 = vunpack.c.0.s8 %v5132
        %v5134 = vlaneseq
        %v5135 = vshrl.u32 %v5134, 7
        %v5136 = vsub.s32 %v5133, %v5135
        %v5137 = vrot.slane %v5130, %v5136
        %v5138 = vcombine.low %v4090, %v4097
        %v5140 = vunpack.c.l.s4 1983009808
        %v5141 = vunpack.c.0.s8 %v5140
        %v5142 = vlaneseq
        %v5143 = vshrl.u32 %v5142, 7
        %v5144 = vsub.s32 %v5141, %v5143
        %v5145 = vrot.slane %v5138, %v5144
        %v5146 = vcombine.low %v4100, %v4101
        %v5148 = vunpack.c.l.s4 1983009808
        %v5149 = vunpack.c.0.s8 %v5148
        %v5150 = vlaneseq
        %v5151 = vshrl.u32 %v5150, 7
        %v5152 = vsub.s32 %v5149, %v5151
        %v5153 = vrot.slane %v5146, %v5152
        %v5154 = vcombine.low %v5129, %v5137
        %v5155 = vcombine.high %v5129, %v5137
        %v5157 = vunpack.c.l.s4 1934713408
        %v5158 = vunpack.c.0.s8 %v5157
        %v5159 = vlaneseq
        %v5160 = vshrl.u32 %v5159, 7
        %v5161 = vsub.s32 %v5158, %v5160
        %v5162 = vrot.slane %v5154, %v5161
        %v5164 = vunpack.c.l.s4 1934713408
        %v5165 = vunpack.c.0.s8 %v5164
        %v5166 = vlaneseq
        %v5167 = vshrl.u32 %v5166, 7
        %v5168 = vsub.s32 %v5165, %v5167
        %v5169 = vrot.slane %v5155, %v5168
        %v5170 = vcombine.low %v5145, %v5153
        %v5171 = vcombine.high %v5145, %v5153
        %v5173 = vunpack.c.l.s4 1934713408
        %v5174 = vunpack.c.0.s8 %v5173
        %v5175 = vlaneseq
        %v5176 = vshrl.u32 %v5175, 7
        %v5177 = vsub.s32 %v5174, %v5176
        %v5178 = vrot.slane %v5170, %v5177
        %v5180 = vunpack.c.l.s4 1934713408
        %v5181 = vunpack.c.0.s8 %v5180
        %v5182 = vlaneseq
        %v5183 = vshrl.u32 %v5182, 7
        %v5184 = vsub.s32 %v5181, %v5183
        %v5185 = vrot.slane %v5171, %v5184
        %v5186 = vcombine.low %v5162, %v5178
        %v5187 = vcombine.high %v5162, %v5178
        %v5188 = vcombine.low %v5169, %v5185
        %v5189 = vcombine.high %v5169, %v5185
        %v5190 = vcombine.low %v4142, %v4149
        %v5192 = vunpack.c.l.s4 1983009808
        %v5193 = vunpack.c.0.s8 %v5192
        %v5194 = vlaneseq
        %v5195 = vshrl.u32 %v5194, 7
        %v5196 = vsub.s32 %v5193, %v5195
        %v5197 = vrot.slane %v5190, %v5196
        %v5198 = vcombine.low %v4166, %v4167
        %v5200 = vunpack.c.l.s4 1983009808
        %v5201 = vunpack.c.0.s8 %v5200
        %v5202 = vlaneseq
        %v5203 = vshrl.u32 %v5202, 7
        %v5204 = vsub.s32 %v5201, %v5203
        %v5205 = vrot.slane %v5198, %v5204
        %v5206 = vcombine.low %v4158, %v4165
        %v5208 = vunpack.c.l.s4 1983009808
        %v5209 = vunpack.c.0.s8 %v5208
        %v5210 = vlaneseq
        %v5211 = vshrl.u32 %v5210, 7
        %v5212 = vsub.s32 %v5209, %v5211
        %v5213 = vrot.slane %v5206, %v5212
        %v5214 = vcombine.low %v4168, %v4169
        %v5216 = vunpack.c.l.s4 1983009808
        %v5217 = vunpack.c.0.s8 %v5216
        %v5218 = vlaneseq
        %v5219 = vshrl.u32 %v5218, 7
        %v5220 = vsub.s32 %v5217, %v5219
        %v5221 = vrot.slane %v5214, %v5220
        %v5222 = vcombine.low %v5197, %v5205
        %v5223 = vcombine.high %v5197, %v5205
        %v5225 = vunpack.c.l.s4 1934713408
        %v5226 = vunpack.c.0.s8 %v5225
        %v5227 = vlaneseq
        %v5228 = vshrl.u32 %v5227, 7
        %v5229 = vsub.s32 %v5226, %v5228
        %v5230 = vrot.slane %v5222, %v5229
        %v5232 = vunpack.c.l.s4 1934713408
        %v5233 = vunpack.c.0.s8 %v5232
        %v5234 = vlaneseq
        %v5235 = vshrl.u32 %v5234, 7
        %v5236 = vsub.s32 %v5233, %v5235
        %v5237 = vrot.slane %v5223, %v5236
        %v5238 = vcombine.low %v5213, %v5221
        %v5239 = vcombine.high %v5213, %v5221
        %v5241 = vunpack.c.l.s4 1934713408
        %v5242 = vunpack.c.0.s8 %v5241
        %v5243 = vlaneseq
        %v5244 = vshrl.u32 %v5243, 7
        %v5245 = vsub.s32 %v5242, %v5244
        %v5246 = vrot.slane %v5238, %v5245
        %v5248 = vunpack.c.l.s4 1934713408
        %v5249 = vunpack.c.0.s8 %v5248
        %v5250 = vlaneseq
        %v5251 = vshrl.u32 %v5250, 7
        %v5252 = vsub.s32 %v5249, %v5251
        %v5253 = vrot.slane %v5239, %v5252
        %v5254 = vcombine.low %v5230, %v5246
        %v5255 = vcombine.high %v5230, %v5246
        %v5256 = vcombine.low %v5237, %v5253
        %v5257 = vcombine.high %v5237, %v5253
        %v5258 = vcombine.low %v4210, %v4217
        %v5260 = vunpack.c.l.s4 1983009808
        %v5261 = vunpack.c.0.s8 %v5260
        %v5262 = vlaneseq
        %v5263 = vshrl.u32 %v5262, 7
        %v5264 = vsub.s32 %v5261, %v5263
        %v5265 = vrot.slane %v5258, %v5264
        %v5266 = vcombine.low %v4234, %v4235
        %v5268 = vunpack.c.l.s4 1983009808
        %v5269 = vunpack.c.0.s8 %v5268
        %v5270 = vlaneseq
        %v5271 = vshrl.u32 %v5270, 7
        %v5272 = vsub.s32 %v5269, %v5271
        %v5273 = vrot.slane %v5266, %v5272
        %v5274 = vcombine.low %v4226, %v4233
        %v5276 = vunpack.c.l.s4 1983009808
        %v5277 = vunpack.c.0.s8 %v5276
        %v5278 = vlaneseq
        %v5279 = vshrl.u32 %v5278, 7
        %v5280 = vsub.s32 %v5277, %v5279
        %v5281 = vrot.slane %v5274, %v5280
        %v5282 = vcombine.low %v4236, %v4237
        %v5284 = vunpack.c.l.s4 1983009808
        %v5285 = vunpack.c.0.s8 %v5284
        %v5286 = vlaneseq
        %v5287 = vshrl.u32 %v5286, 7
        %v5288 = vsub.s32 %v5285, %v5287
        %v5289 = vrot.slane %v5282, %v5288
        %v5290 = vcombine.low %v5265, %v5273
        %v5291 = vcombine.high %v5265, %v5273
        %v5293 = vunpack.c.l.s4 1934713408
        %v5294 = vunpack.c.0.s8 %v5293
        %v5295 = vlaneseq
        %v5296 = vshrl.u32 %v5295, 7
        %v5297 = vsub.s32 %v5294, %v5296
        %v5298 = vrot.slane %v5290, %v5297
        %v5300 = vunpack.c.l.s4 1934713408
        %v5301 = vunpack.c.0.s8 %v5300
        %v5302 = vlaneseq
        %v5303 = vshrl.u32 %v5302, 7
        %v5304 = vsub.s32 %v5301, %v5303
        %v5305 = vrot.slane %v5291, %v5304
        %v5306 = vcombine.low %v5281, %v5289
        %v5307 = vcombine.high %v5281, %v5289
        %v5309 = vunpack.c.l.s4 1934713408
        %v5310 = vunpack.c.0.s8 %v5309
        %v5311 = vlaneseq
        %v5312 = vshrl.u32 %v5311, 7
        %v5313 = vsub.s32 %v5310, %v5312
        %v5314 = vrot.slane %v5306, %v5313
        %v5316 = vunpack.c.l.s4 1934713408
        %v5317 = vunpack.c.0.s8 %v5316
        %v5318 = vlaneseq
        %v5319 = vshrl.u32 %v5318, 7
        %v5320 = vsub.s32 %v5317, %v5319
        %v5321 = vrot.slane %v5307, %v5320
        %v5322 = vcombine.low %v5298, %v5314
        %v5323 = vcombine.high %v5298, %v5314
        %v5324 = vcombine.low %v5305, %v5321
        %v5325 = vcombine.high %v5305, %v5321
        %v5326 = vcombine.low %v4278, %v4285
        %v5328 = vunpack.c.l.s4 1983009808
        %v5329 = vunpack.c.0.s8 %v5328
        %v5330 = vlaneseq
        %v5331 = vshrl.u32 %v5330, 7
        %v5332 = vsub.s32 %v5329, %v5331
        %v5333 = vrot.slane %v5326, %v5332
        %v5334 = vcombine.low %v4302, %v4303
        %v5336 = vunpack.c.l.s4 1983009808
        %v5337 = vunpack.c.0.s8 %v5336
        %v5338 = vlaneseq
        %v5339 = vshrl.u32 %v5338, 7
        %v5340 = vsub.s32 %v5337, %v5339
        %v5341 = vrot.slane %v5334, %v5340
        %v5342 = vcombine.low %v4294, %v4301
        %v5344 = vunpack.c.l.s4 1983009808
        %v5345 = vunpack.c.0.s8 %v5344
        %v5346 = vlaneseq
        %v5347 = vshrl.u32 %v5346, 7
        %v5348 = vsub.s32 %v5345, %v5347
        %v5349 = vrot.slane %v5342, %v5348
        %v5350 = vcombine.low %v4304, %v4305
        %v5352 = vunpack.c.l.s4 1983009808
        %v5353 = vunpack.c.0.s8 %v5352
        %v5354 = vlaneseq
        %v5355 = vshrl.u32 %v5354, 7
        %v5356 = vsub.s32 %v5353, %v5355
        %v5357 = vrot.slane %v5350, %v5356
        %v5358 = vcombine.low %v5333, %v5341
        %v5359 = vcombine.high %v5333, %v5341
        %v5361 = vunpack.c.l.s4 1934713408
        %v5362 = vunpack.c.0.s8 %v5361
        %v5363 = vlaneseq
        %v5364 = vshrl.u32 %v5363, 7
        %v5365 = vsub.s32 %v5362, %v5364
        %v5366 = vrot.slane %v5358, %v5365
        %v5368 = vunpack.c.l.s4 1934713408
        %v5369 = vunpack.c.0.s8 %v5368
        %v5370 = vlaneseq
        %v5371 = vshrl.u32 %v5370, 7
        %v5372 = vsub.s32 %v5369, %v5371
        %v5373 = vrot.slane %v5359, %v5372
        %v5374 = vcombine.low %v5349, %v5357
        %v5375 = vcombine.high %v5349, %v5357
        %v5377 = vunpack.c.l.s4 1934713408
        %v5378 = vunpack.c.0.s8 %v5377
        %v5379 = vlaneseq
        %v5380 = vshrl.u32 %v5379, 7
        %v5381 = vsub.s32 %v5378, %v5380
        %v5382 = vrot.slane %v5374, %v5381
        %v5384 = vunpack.c.l.s4 1934713408
        %v5385 = vunpack.c.0.s8 %v5384
        %v5386 = vlaneseq
        %v5387 = vshrl.u32 %v5386, 7
        %v5388 = vsub.s32 %v5385, %v5387
        %v5389 = vrot.slane %v5375, %v5388
        %v5390 = vcombine.low %v5366, %v5382
        %v5391 = vcombine.high %v5366, %v5382
        %v5392 = vcombine.low %v5373, %v5389
        %v5393 = vcombine.high %v5373, %v5389
        %v5394 = vcombine.low %v4346, %v4353
        %v5396 = vunpack.c.l.s4 1983009808
        %v5397 = vunpack.c.0.s8 %v5396
        %v5398 = vlaneseq
        %v5399 = vshrl.u32 %v5398, 7
        %v5400 = vsub.s32 %v5397, %v5399
        %v5401 = vrot.slane %v5394, %v5400
        %v5402 = vcombine.low %v4370, %v4371
        %v5404 = vunpack.c.l.s4 1983009808
        %v5405 = vunpack.c.0.s8 %v5404
        %v5406 = vlaneseq
        %v5407 = vshrl.u32 %v5406, 7
        %v5408 = vsub.s32 %v5405, %v5407
        %v5409 = vrot.slane %v5402, %v5408
        %v5410 = vcombine.low %v4362, %v4369
        %v5412 = vunpack.c.l.s4 1983009808
        %v5413 = vunpack.c.0.s8 %v5412
        %v5414 = vlaneseq
        %v5415 = vshrl.u32 %v5414, 7
        %v5416 = vsub.s32 %v5413, %v5415
        %v5417 = vrot.slane %v5410, %v5416
        %v5418 = vcombine.low %v4372, %v4373
        %v5420 = vunpack.c.l.s4 1983009808
        %v5421 = vunpack.c.0.s8 %v5420
        %v5422 = vlaneseq
        %v5423 = vshrl.u32 %v5422, 7
        %v5424 = vsub.s32 %v5421, %v5423
        %v5425 = vrot.slane %v5418, %v5424
        %v5426 = vcombine.low %v5401, %v5409
        %v5427 = vcombine.high %v5401, %v5409
        %v5429 = vunpack.c.l.s4 1934713408
        %v5430 = vunpack.c.0.s8 %v5429
        %v5431 = vlaneseq
        %v5432 = vshrl.u32 %v5431, 7
        %v5433 = vsub.s32 %v5430, %v5432
        %v5434 = vrot.slane %v5426, %v5433
        %v5436 = vunpack.c.l.s4 1934713408
        %v5437 = vunpack.c.0.s8 %v5436
        %v5438 = vlaneseq
        %v5439 = vshrl.u32 %v5438, 7
        %v5440 = vsub.s32 %v5437, %v5439
        %v5441 = vrot.slane %v5427, %v5440
        %v5442 = vcombine.low %v5417, %v5425
        %v5443 = vcombine.high %v5417, %v5425
        %v5445 = vunpack.c.l.s4 1934713408
        %v5446 = vunpack.c.0.s8 %v5445
        %v5447 = vlaneseq
        %v5448 = vshrl.u32 %v5447, 7
        %v5449 = vsub.s32 %v5446, %v5448
        %v5450 = vrot.slane %v5442, %v5449
        %v5452 = vunpack.c.l.s4 1934713408
        %v5453 = vunpack.c.0.s8 %v5452
        %v5454 = vlaneseq
        %v5455 = vshrl.u32 %v5454, 7
        %v5456 = vsub.s32 %v5453, %v5455
        %v5457 = vrot.slane %v5443, %v5456
        %v5458 = vcombine.low %v5434, %v5450
        %v5459 = vcombine.high %v5434, %v5450
        %v5460 = vcombine.low %v5441, %v5457
        %v5461 = vcombine.high %v5441, %v5457
        %v5462 = vpack.c.bf16 %v4506, %v4438
        %v5463 = vpack.c.bf16 %v4642, %v4574
        %v5464 = vpack.c.bf16 %v4778, %v4710
        %v5465 = vpack.c.bf16 %v4914, %v4846
        %v5466 = vpack.c.bf16 %v5050, %v4982
        %v5467 = vpack.c.bf16 %v5186, %v5118
        %v5468 = vpack.c.bf16 %v5322, %v5254
        %v5469 = vpack.c.bf16 %v5458, %v5390
        %v5470 = vpack.c.bf16 %v4507, %v4439
        %v5471 = vpack.c.bf16 %v4643, %v4575
        %v5472 = vpack.c.bf16 %v4779, %v4711
        %v5473 = vpack.c.bf16 %v4915, %v4847
        %v5474 = vpack.c.bf16 %v5051, %v4983
        %v5475 = vpack.c.bf16 %v5187, %v5119
        %v5476 = vpack.c.bf16 %v5323, %v5255
        %v5477 = vpack.c.bf16 %v5459, %v5391
        %v5478 = vpack.c.bf16 %v4508, %v4440
        %v5479 = vpack.c.bf16 %v4644, %v4576
        %v5480 = vpack.c.bf16 %v4780, %v4712
        %v5481 = vpack.c.bf16 %v4916, %v4848
        %v5482 = vpack.c.bf16 %v5052, %v4984
        %v5483 = vpack.c.bf16 %v5188, %v5120
        %v5484 = vpack.c.bf16 %v5324, %v5256
        %v5485 = vpack.c.bf16 %v5460, %v5392
        %v5486 = vpack.c.bf16 %v4509, %v4441
        %v5487 = vpack.c.bf16 %v4645, %v4577
        %v5488 = vpack.c.bf16 %v4781, %v4713
        %v5489 = vpack.c.bf16 %v4917, %v4849
        %v5490 = vpack.c.bf16 %v5053, %v4985
        %v5491 = vpack.c.bf16 %v5189, %v5121
        %v5492 = vpack.c.bf16 %v5325, %v5257
        %v5493 = vpack.c.bf16 %v5461, %v5393
        %5510 = vrot.lane.b32.xlu0 %v2908, 120
        %v5511 = vpop.permute.xlu0 %5510
        %5512 = vrot.lane.b32.xlu0 %v2911, 120
        %v5513 = vpop.permute.xlu0 %5512
        %5514 = vrot.lane.b32.xlu0 %v2916, 120
        %v5515 = vpop.permute.xlu0 %5514
        %5516 = vrot.lane.b32.xlu0 %v2919, 120
        %v5517 = vpop.permute.xlu0 %5516
        %5518 = vrot.lane.b32.xlu0 %v2924, 120
        %v5519 = vpop.permute.xlu0 %5518
        %5520 = vrot.lane.b32.xlu0 %v2927, 120
        %v5521 = vpop.permute.xlu0 %5520
        %5522 = vrot.lane.b32.xlu0 %v2932, 120
        %v5523 = vpop.permute.xlu0 %5522
        %5524 = vrot.lane.b32.xlu0 %v2935, 120
        %v5525 = vpop.permute.xlu0 %5524
        %5526 = vrot.lane.b32.xlu0 %v2940, 120
        %v5527 = vpop.permute.xlu0 %5526
        %5528 = vrot.lane.b32.xlu0 %v2943, 120
        %v5529 = vpop.permute.xlu0 %5528
        %5530 = vrot.lane.b32.xlu0 %v2948, 120
        %v5531 = vpop.permute.xlu0 %5530
        %5532 = vrot.lane.b32.xlu0 %v2951, 120
        %v5533 = vpop.permute.xlu0 %5532
        %5534 = vrot.lane.b32.xlu0 %v2956, 120
        %v5535 = vpop.permute.xlu0 %5534
        %5536 = vrot.lane.b32.xlu0 %v2959, 120
        %v5537 = vpop.permute.xlu0 %5536
        %5538 = vrot.lane.b32.xlu0 %v2964, 120
        %v5539 = vpop.permute.xlu0 %5538
        %5540 = vrot.lane.b32.xlu0 %v2967, 120
        %v5541 = vpop.permute.xlu0 %5540
        %5558 = vrot.lane.b32.xlu0 %v2908, 112
        %v5559 = vpop.permute.xlu0 %5558
        %5560 = vrot.lane.b32.xlu0 %v2911, 112
        %v5561 = vpop.permute.xlu0 %5560
        %5562 = vrot.lane.b32.xlu0 %v2916, 112
        %v5563 = vpop.permute.xlu0 %5562
        %5564 = vrot.lane.b32.xlu0 %v2919, 112
        %v5565 = vpop.permute.xlu0 %5564
        %5566 = vrot.lane.b32.xlu0 %v2924, 112
        %v5567 = vpop.permute.xlu0 %5566
        %5568 = vrot.lane.b32.xlu0 %v2927, 112
        %v5569 = vpop.permute.xlu0 %5568
        %5570 = vrot.lane.b32.xlu0 %v2932, 112
        %v5571 = vpop.permute.xlu0 %5570
        %5572 = vrot.lane.b32.xlu0 %v2935, 112
        %v5573 = vpop.permute.xlu0 %5572
        %5574 = vrot.lane.b32.xlu0 %v2940, 112
        %v5575 = vpop.permute.xlu0 %5574
        %5576 = vrot.lane.b32.xlu0 %v2943, 112
        %v5577 = vpop.permute.xlu0 %5576
        %5578 = vrot.lane.b32.xlu0 %v2948, 112
        %v5579 = vpop.permute.xlu0 %5578
        %5580 = vrot.lane.b32.xlu0 %v2951, 112
        %v5581 = vpop.permute.xlu0 %5580
        %5582 = vrot.lane.b32.xlu0 %v2956, 112
        %v5583 = vpop.permute.xlu0 %5582
        %5584 = vrot.lane.b32.xlu0 %v2959, 112
        %v5585 = vpop.permute.xlu0 %5584
        %5586 = vrot.lane.b32.xlu0 %v2964, 112
        %v5587 = vpop.permute.xlu0 %5586
        %5588 = vrot.lane.b32.xlu0 %v2967, 112
        %v5589 = vpop.permute.xlu0 %5588
        %5606 = vrot.lane.b32.xlu0 %v2908, 104
        %v5607 = vpop.permute.xlu0 %5606
        %5608 = vrot.lane.b32.xlu0 %v2911, 104
        %v5609 = vpop.permute.xlu0 %5608
        %5610 = vrot.lane.b32.xlu0 %v2916, 104
        %v5611 = vpop.permute.xlu0 %5610
        %5612 = vrot.lane.b32.xlu0 %v2919, 104
        %v5613 = vpop.permute.xlu0 %5612
        %5614 = vrot.lane.b32.xlu0 %v2924, 104
        %v5615 = vpop.permute.xlu0 %5614
        %5616 = vrot.lane.b32.xlu0 %v2927, 104
        %v5617 = vpop.permute.xlu0 %5616
        %5618 = vrot.lane.b32.xlu0 %v2932, 104
        %v5619 = vpop.permute.xlu0 %5618
        %5620 = vrot.lane.b32.xlu0 %v2935, 104
        %v5621 = vpop.permute.xlu0 %5620
        %5622 = vrot.lane.b32.xlu0 %v2940, 104
        %v5623 = vpop.permute.xlu0 %5622
        %5624 = vrot.lane.b32.xlu0 %v2943, 104
        %v5625 = vpop.permute.xlu0 %5624
        %5626 = vrot.lane.b32.xlu0 %v2948, 104
        %v5627 = vpop.permute.xlu0 %5626
        %5628 = vrot.lane.b32.xlu0 %v2951, 104
        %v5629 = vpop.permute.xlu0 %5628
        %5630 = vrot.lane.b32.xlu0 %v2956, 104
        %v5631 = vpop.permute.xlu0 %5630
        %5632 = vrot.lane.b32.xlu0 %v2959, 104
        %v5633 = vpop.permute.xlu0 %5632
        %5634 = vrot.lane.b32.xlu0 %v2964, 104
        %v5635 = vpop.permute.xlu0 %5634
        %5636 = vrot.lane.b32.xlu0 %v2967, 104
        %v5637 = vpop.permute.xlu0 %5636
        %v5654 = vcombine.low %v2908, %v5559
        %v5655 = vcombine.high %v2908, %v5559
        %v5657 = vunpack.c.l.s4 1983009808
        %v5658 = vunpack.c.0.s8 %v5657
        %v5659 = vlaneseq
        %v5660 = vshrl.u32 %v5659, 7
        %v5661 = vsub.s32 %v5658, %v5660
        %v5662 = vrot.slane %v5654, %v5661
        %v5664 = vunpack.c.l.s4 1983009808
        %v5665 = vunpack.c.0.s8 %v5664
        %v5666 = vlaneseq
        %v5667 = vshrl.u32 %v5666, 7
        %v5668 = vsub.s32 %v5665, %v5667
        %v5669 = vrot.slane %v5655, %v5668
        %v5670 = vcombine.low %v5511, %v5607
        %v5671 = vcombine.high %v5511, %v5607
        %v5673 = vunpack.c.l.s4 1983009808
        %v5674 = vunpack.c.0.s8 %v5673
        %v5675 = vlaneseq
        %v5676 = vshrl.u32 %v5675, 7
        %v5677 = vsub.s32 %v5674, %v5676
        %v5678 = vrot.slane %v5670, %v5677
        %v5680 = vunpack.c.l.s4 1983009808
        %v5681 = vunpack.c.0.s8 %v5680
        %v5682 = vlaneseq
        %v5683 = vshrl.u32 %v5682, 7
        %v5684 = vsub.s32 %v5681, %v5683
        %v5685 = vrot.slane %v5671, %v5684
        %v5686 = vcombine.low %v5662, %v5678
        %v5687 = vcombine.high %v5662, %v5678
        %v5689 = vunpack.c.l.s4 1934713408
        %v5690 = vunpack.c.0.s8 %v5689
        %v5691 = vlaneseq
        %v5692 = vshrl.u32 %v5691, 7
        %v5693 = vsub.s32 %v5690, %v5692
        %v5694 = vrot.slane %v5686, %v5693
        %v5696 = vunpack.c.l.s4 1934713408
        %v5697 = vunpack.c.0.s8 %v5696
        %v5698 = vlaneseq
        %v5699 = vshrl.u32 %v5698, 7
        %v5700 = vsub.s32 %v5697, %v5699
        %v5701 = vrot.slane %v5687, %v5700
        %v5702 = vcombine.low %v5669, %v5685
        %v5703 = vcombine.high %v5669, %v5685
        %v5705 = vunpack.c.l.s4 1934713408
        %v5706 = vunpack.c.0.s8 %v5705
        %v5707 = vlaneseq
        %v5708 = vshrl.u32 %v5707, 7
        %v5709 = vsub.s32 %v5706, %v5708
        %v5710 = vrot.slane %v5702, %v5709
        %v5712 = vunpack.c.l.s4 1934713408
        %v5713 = vunpack.c.0.s8 %v5712
        %v5714 = vlaneseq
        %v5715 = vshrl.u32 %v5714, 7
        %v5716 = vsub.s32 %v5713, %v5715
        %v5717 = vrot.slane %v5703, %v5716
        %v5718 = vcombine.high %v5694, 0.0
        %v5719 = vcombine.high %v5701, 0.0
        %v5720 = vcombine.high %v5710, 0.0
        %v5721 = vcombine.high %v5717, 0.0
        %v5722 = vcombine.low %v2911, %v5561
        %v5723 = vcombine.high %v2911, %v5561
        %v5725 = vunpack.c.l.s4 1983009808
        %v5726 = vunpack.c.0.s8 %v5725
        %v5727 = vlaneseq
        %v5728 = vshrl.u32 %v5727, 7
        %v5729 = vsub.s32 %v5726, %v5728
        %v5730 = vrot.slane %v5722, %v5729
        %v5732 = vunpack.c.l.s4 1983009808
        %v5733 = vunpack.c.0.s8 %v5732
        %v5734 = vlaneseq
        %v5735 = vshrl.u32 %v5734, 7
        %v5736 = vsub.s32 %v5733, %v5735
        %v5737 = vrot.slane %v5723, %v5736
        %v5738 = vcombine.low %v5513, %v5609
        %v5739 = vcombine.high %v5513, %v5609
        %v5741 = vunpack.c.l.s4 1983009808
        %v5742 = vunpack.c.0.s8 %v5741
        %v5743 = vlaneseq
        %v5744 = vshrl.u32 %v5743, 7
        %v5745 = vsub.s32 %v5742, %v5744
        %v5746 = vrot.slane %v5738, %v5745
        %v5748 = vunpack.c.l.s4 1983009808
        %v5749 = vunpack.c.0.s8 %v5748
        %v5750 = vlaneseq
        %v5751 = vshrl.u32 %v5750, 7
        %v5752 = vsub.s32 %v5749, %v5751
        %v5753 = vrot.slane %v5739, %v5752
        %v5754 = vcombine.low %v5730, %v5746
        %v5755 = vcombine.high %v5730, %v5746
        %v5757 = vunpack.c.l.s4 1934713408
        %v5758 = vunpack.c.0.s8 %v5757
        %v5759 = vlaneseq
        %v5760 = vshrl.u32 %v5759, 7
        %v5761 = vsub.s32 %v5758, %v5760
        %v5762 = vrot.slane %v5754, %v5761
        %v5764 = vunpack.c.l.s4 1934713408
        %v5765 = vunpack.c.0.s8 %v5764
        %v5766 = vlaneseq
        %v5767 = vshrl.u32 %v5766, 7
        %v5768 = vsub.s32 %v5765, %v5767
        %v5769 = vrot.slane %v5755, %v5768
        %v5770 = vcombine.low %v5737, %v5753
        %v5771 = vcombine.high %v5737, %v5753
        %v5773 = vunpack.c.l.s4 1934713408
        %v5774 = vunpack.c.0.s8 %v5773
        %v5775 = vlaneseq
        %v5776 = vshrl.u32 %v5775, 7
        %v5777 = vsub.s32 %v5774, %v5776
        %v5778 = vrot.slane %v5770, %v5777
        %v5780 = vunpack.c.l.s4 1934713408
        %v5781 = vunpack.c.0.s8 %v5780
        %v5782 = vlaneseq
        %v5783 = vshrl.u32 %v5782, 7
        %v5784 = vsub.s32 %v5781, %v5783
        %v5785 = vrot.slane %v5771, %v5784
        %v5786 = vcombine.high %v5762, 0.0
        %v5787 = vcombine.high %v5769, 0.0
        %v5788 = vcombine.high %v5778, 0.0
        %v5789 = vcombine.high %v5785, 0.0
        %v5790 = vcombine.low %v2916, %v5563
        %v5791 = vcombine.high %v2916, %v5563
        %v5793 = vunpack.c.l.s4 1983009808
        %v5794 = vunpack.c.0.s8 %v5793
        %v5795 = vlaneseq
        %v5796 = vshrl.u32 %v5795, 7
        %v5797 = vsub.s32 %v5794, %v5796
        %v5798 = vrot.slane %v5790, %v5797
        %v5800 = vunpack.c.l.s4 1983009808
        %v5801 = vunpack.c.0.s8 %v5800
        %v5802 = vlaneseq
        %v5803 = vshrl.u32 %v5802, 7
        %v5804 = vsub.s32 %v5801, %v5803
        %v5805 = vrot.slane %v5791, %v5804
        %v5806 = vcombine.low %v5515, %v5611
        %v5807 = vcombine.high %v5515, %v5611
        %v5809 = vunpack.c.l.s4 1983009808
        %v5810 = vunpack.c.0.s8 %v5809
        %v5811 = vlaneseq
        %v5812 = vshrl.u32 %v5811, 7
        %v5813 = vsub.s32 %v5810, %v5812
        %v5814 = vrot.slane %v5806, %v5813
        %v5816 = vunpack.c.l.s4 1983009808
        %v5817 = vunpack.c.0.s8 %v5816
        %v5818 = vlaneseq
        %v5819 = vshrl.u32 %v5818, 7
        %v5820 = vsub.s32 %v5817, %v5819
        %v5821 = vrot.slane %v5807, %v5820
        %v5822 = vcombine.low %v5798, %v5814
        %v5823 = vcombine.high %v5798, %v5814
        %v5825 = vunpack.c.l.s4 1934713408
        %v5826 = vunpack.c.0.s8 %v5825
        %v5827 = vlaneseq
        %v5828 = vshrl.u32 %v5827, 7
        %v5829 = vsub.s32 %v5826, %v5828
        %v5830 = vrot.slane %v5822, %v5829
        %v5832 = vunpack.c.l.s4 1934713408
        %v5833 = vunpack.c.0.s8 %v5832
        %v5834 = vlaneseq
        %v5835 = vshrl.u32 %v5834, 7
        %v5836 = vsub.s32 %v5833, %v5835
        %v5837 = vrot.slane %v5823, %v5836
        %v5838 = vcombine.low %v5805, %v5821
        %v5839 = vcombine.high %v5805, %v5821
        %v5841 = vunpack.c.l.s4 1934713408
        %v5842 = vunpack.c.0.s8 %v5841
        %v5843 = vlaneseq
        %v5844 = vshrl.u32 %v5843, 7
        %v5845 = vsub.s32 %v5842, %v5844
        %v5846 = vrot.slane %v5838, %v5845
        %v5848 = vunpack.c.l.s4 1934713408
        %v5849 = vunpack.c.0.s8 %v5848
        %v5850 = vlaneseq
        %v5851 = vshrl.u32 %v5850, 7
        %v5852 = vsub.s32 %v5849, %v5851
        %v5853 = vrot.slane %v5839, %v5852
        %v5854 = vcombine.high %v5830, 0.0
        %v5855 = vcombine.high %v5837, 0.0
        %v5856 = vcombine.high %v5846, 0.0
        %v5857 = vcombine.high %v5853, 0.0
        %v5858 = vcombine.low %v2919, %v5565
        %v5859 = vcombine.high %v2919, %v5565
        %v5861 = vunpack.c.l.s4 1983009808
        %v5862 = vunpack.c.0.s8 %v5861
        %v5863 = vlaneseq
        %v5864 = vshrl.u32 %v5863, 7
        %v5865 = vsub.s32 %v5862, %v5864
        %v5866 = vrot.slane %v5858, %v5865
        %v5868 = vunpack.c.l.s4 1983009808
        %v5869 = vunpack.c.0.s8 %v5868
        %v5870 = vlaneseq
        %v5871 = vshrl.u32 %v5870, 7
        %v5872 = vsub.s32 %v5869, %v5871
        %v5873 = vrot.slane %v5859, %v5872
        %v5874 = vcombine.low %v5517, %v5613
        %v5875 = vcombine.high %v5517, %v5613
        %v5877 = vunpack.c.l.s4 1983009808
        %v5878 = vunpack.c.0.s8 %v5877
        %v5879 = vlaneseq
        %v5880 = vshrl.u32 %v5879, 7
        %v5881 = vsub.s32 %v5878, %v5880
        %v5882 = vrot.slane %v5874, %v5881
        %v5884 = vunpack.c.l.s4 1983009808
        %v5885 = vunpack.c.0.s8 %v5884
        %v5886 = vlaneseq
        %v5887 = vshrl.u32 %v5886, 7
        %v5888 = vsub.s32 %v5885, %v5887
        %v5889 = vrot.slane %v5875, %v5888
        %v5890 = vcombine.low %v5866, %v5882
        %v5891 = vcombine.high %v5866, %v5882
        %v5893 = vunpack.c.l.s4 1934713408
        %v5894 = vunpack.c.0.s8 %v5893
        %v5895 = vlaneseq
        %v5896 = vshrl.u32 %v5895, 7
        %v5897 = vsub.s32 %v5894, %v5896
        %v5898 = vrot.slane %v5890, %v5897
        %v5900 = vunpack.c.l.s4 1934713408
        %v5901 = vunpack.c.0.s8 %v5900
        %v5902 = vlaneseq
        %v5903 = vshrl.u32 %v5902, 7
        %v5904 = vsub.s32 %v5901, %v5903
        %v5905 = vrot.slane %v5891, %v5904
        %v5906 = vcombine.low %v5873, %v5889
        %v5907 = vcombine.high %v5873, %v5889
        %v5909 = vunpack.c.l.s4 1934713408
        %v5910 = vunpack.c.0.s8 %v5909
        %v5911 = vlaneseq
        %v5912 = vshrl.u32 %v5911, 7
        %v5913 = vsub.s32 %v5910, %v5912
        %v5914 = vrot.slane %v5906, %v5913
        %v5916 = vunpack.c.l.s4 1934713408
        %v5917 = vunpack.c.0.s8 %v5916
        %v5918 = vlaneseq
        %v5919 = vshrl.u32 %v5918, 7
        %v5920 = vsub.s32 %v5917, %v5919
        %v5921 = vrot.slane %v5907, %v5920
        %v5922 = vcombine.high %v5898, 0.0
        %v5923 = vcombine.high %v5905, 0.0
        %v5924 = vcombine.high %v5914, 0.0
        %v5925 = vcombine.high %v5921, 0.0
        %v5926 = vcombine.low %v2924, %v5567
        %v5927 = vcombine.high %v2924, %v5567
        %v5929 = vunpack.c.l.s4 1983009808
        %v5930 = vunpack.c.0.s8 %v5929
        %v5931 = vlaneseq
        %v5932 = vshrl.u32 %v5931, 7
        %v5933 = vsub.s32 %v5930, %v5932
        %v5934 = vrot.slane %v5926, %v5933
        %v5936 = vunpack.c.l.s4 1983009808
        %v5937 = vunpack.c.0.s8 %v5936
        %v5938 = vlaneseq
        %v5939 = vshrl.u32 %v5938, 7
        %v5940 = vsub.s32 %v5937, %v5939
        %v5941 = vrot.slane %v5927, %v5940
        %v5942 = vcombine.low %v5519, %v5615
        %v5943 = vcombine.high %v5519, %v5615
        %v5945 = vunpack.c.l.s4 1983009808
        %v5946 = vunpack.c.0.s8 %v5945
        %v5947 = vlaneseq
        %v5948 = vshrl.u32 %v5947, 7
        %v5949 = vsub.s32 %v5946, %v5948
        %v5950 = vrot.slane %v5942, %v5949
        %v5952 = vunpack.c.l.s4 1983009808
        %v5953 = vunpack.c.0.s8 %v5952
        %v5954 = vlaneseq
        %v5955 = vshrl.u32 %v5954, 7
        %v5956 = vsub.s32 %v5953, %v5955
        %v5957 = vrot.slane %v5943, %v5956
        %v5958 = vcombine.low %v5934, %v5950
        %v5959 = vcombine.high %v5934, %v5950
        %v5961 = vunpack.c.l.s4 1934713408
        %v5962 = vunpack.c.0.s8 %v5961
        %v5963 = vlaneseq
        %v5964 = vshrl.u32 %v5963, 7
        %v5965 = vsub.s32 %v5962, %v5964
        %v5966 = vrot.slane %v5958, %v5965
        %v5968 = vunpack.c.l.s4 1934713408
        %v5969 = vunpack.c.0.s8 %v5968
        %v5970 = vlaneseq
        %v5971 = vshrl.u32 %v5970, 7
        %v5972 = vsub.s32 %v5969, %v5971
        %v5973 = vrot.slane %v5959, %v5972
        %v5974 = vcombine.low %v5941, %v5957
        %v5975 = vcombine.high %v5941, %v5957
        %v5977 = vunpack.c.l.s4 1934713408
        %v5978 = vunpack.c.0.s8 %v5977
        %v5979 = vlaneseq
        %v5980 = vshrl.u32 %v5979, 7
        %v5981 = vsub.s32 %v5978, %v5980
        %v5982 = vrot.slane %v5974, %v5981
        %v5984 = vunpack.c.l.s4 1934713408
        %v5985 = vunpack.c.0.s8 %v5984
        %v5986 = vlaneseq
        %v5987 = vshrl.u32 %v5986, 7
        %v5988 = vsub.s32 %v5985, %v5987
        %v5989 = vrot.slane %v5975, %v5988
        %v5990 = vcombine.high %v5966, 0.0
        %v5991 = vcombine.high %v5973, 0.0
        %v5992 = vcombine.high %v5982, 0.0
        %v5993 = vcombine.high %v5989, 0.0
        %v5994 = vcombine.low %v2927, %v5569
        %v5995 = vcombine.high %v2927, %v5569
        %v5997 = vunpack.c.l.s4 1983009808
        %v5998 = vunpack.c.0.s8 %v5997
        %v5999 = vlaneseq
        %v6000 = vshrl.u32 %v5999, 7
        %v6001 = vsub.s32 %v5998, %v6000
        %v6002 = vrot.slane %v5994, %v6001
        %v6004 = vunpack.c.l.s4 1983009808
        %v6005 = vunpack.c.0.s8 %v6004
        %v6006 = vlaneseq
        %v6007 = vshrl.u32 %v6006, 7
        %v6008 = vsub.s32 %v6005, %v6007
        %v6009 = vrot.slane %v5995, %v6008
        %v6010 = vcombine.low %v5521, %v5617
        %v6011 = vcombine.high %v5521, %v5617
        %v6013 = vunpack.c.l.s4 1983009808
        %v6014 = vunpack.c.0.s8 %v6013
        %v6015 = vlaneseq
        %v6016 = vshrl.u32 %v6015, 7
        %v6017 = vsub.s32 %v6014, %v6016
        %v6018 = vrot.slane %v6010, %v6017
        %v6020 = vunpack.c.l.s4 1983009808
        %v6021 = vunpack.c.0.s8 %v6020
        %v6022 = vlaneseq
        %v6023 = vshrl.u32 %v6022, 7
        %v6024 = vsub.s32 %v6021, %v6023
        %v6025 = vrot.slane %v6011, %v6024
        %v6026 = vcombine.low %v6002, %v6018
        %v6027 = vcombine.high %v6002, %v6018
        %v6029 = vunpack.c.l.s4 1934713408
        %v6030 = vunpack.c.0.s8 %v6029
        %v6031 = vlaneseq
        %v6032 = vshrl.u32 %v6031, 7
        %v6033 = vsub.s32 %v6030, %v6032
        %v6034 = vrot.slane %v6026, %v6033
        %v6036 = vunpack.c.l.s4 1934713408
        %v6037 = vunpack.c.0.s8 %v6036
        %v6038 = vlaneseq
        %v6039 = vshrl.u32 %v6038, 7
        %v6040 = vsub.s32 %v6037, %v6039
        %v6041 = vrot.slane %v6027, %v6040
        %v6042 = vcombine.low %v6009, %v6025
        %v6043 = vcombine.high %v6009, %v6025
        %v6045 = vunpack.c.l.s4 1934713408
        %v6046 = vunpack.c.0.s8 %v6045
        %v6047 = vlaneseq
        %v6048 = vshrl.u32 %v6047, 7
        %v6049 = vsub.s32 %v6046, %v6048
        %v6050 = vrot.slane %v6042, %v6049
        %v6052 = vunpack.c.l.s4 1934713408
        %v6053 = vunpack.c.0.s8 %v6052
        %v6054 = vlaneseq
        %v6055 = vshrl.u32 %v6054, 7
        %v6056 = vsub.s32 %v6053, %v6055
        %v6057 = vrot.slane %v6043, %v6056
        %v6058 = vcombine.high %v6034, 0.0
        %v6059 = vcombine.high %v6041, 0.0
        %v6060 = vcombine.high %v6050, 0.0
        %v6061 = vcombine.high %v6057, 0.0
        %v6062 = vcombine.low %v2932, %v5571
        %v6063 = vcombine.high %v2932, %v5571
        %v6065 = vunpack.c.l.s4 1983009808
        %v6066 = vunpack.c.0.s8 %v6065
        %v6067 = vlaneseq
        %v6068 = vshrl.u32 %v6067, 7
        %v6069 = vsub.s32 %v6066, %v6068
        %v6070 = vrot.slane %v6062, %v6069
        %v6072 = vunpack.c.l.s4 1983009808
        %v6073 = vunpack.c.0.s8 %v6072
        %v6074 = vlaneseq
        %v6075 = vshrl.u32 %v6074, 7
        %v6076 = vsub.s32 %v6073, %v6075
        %v6077 = vrot.slane %v6063, %v6076
        %v6078 = vcombine.low %v5523, %v5619
        %v6079 = vcombine.high %v5523, %v5619
        %v6081 = vunpack.c.l.s4 1983009808
        %v6082 = vunpack.c.0.s8 %v6081
        %v6083 = vlaneseq
        %v6084 = vshrl.u32 %v6083, 7
        %v6085 = vsub.s32 %v6082, %v6084
        %v6086 = vrot.slane %v6078, %v6085
        %v6088 = vunpack.c.l.s4 1983009808
        %v6089 = vunpack.c.0.s8 %v6088
        %v6090 = vlaneseq
        %v6091 = vshrl.u32 %v6090, 7
        %v6092 = vsub.s32 %v6089, %v6091
        %v6093 = vrot.slane %v6079, %v6092
        %v6094 = vcombine.low %v6070, %v6086
        %v6095 = vcombine.high %v6070, %v6086
        %v6097 = vunpack.c.l.s4 1934713408
        %v6098 = vunpack.c.0.s8 %v6097
        %v6099 = vlaneseq
        %v6100 = vshrl.u32 %v6099, 7
        %v6101 = vsub.s32 %v6098, %v6100
        %v6102 = vrot.slane %v6094, %v6101
        %v6104 = vunpack.c.l.s4 1934713408
        %v6105 = vunpack.c.0.s8 %v6104
        %v6106 = vlaneseq
        %v6107 = vshrl.u32 %v6106, 7
        %v6108 = vsub.s32 %v6105, %v6107
        %v6109 = vrot.slane %v6095, %v6108
        %v6110 = vcombine.low %v6077, %v6093
        %v6111 = vcombine.high %v6077, %v6093
        %v6113 = vunpack.c.l.s4 1934713408
        %v6114 = vunpack.c.0.s8 %v6113
        %v6115 = vlaneseq
        %v6116 = vshrl.u32 %v6115, 7
        %v6117 = vsub.s32 %v6114, %v6116
        %v6118 = vrot.slane %v6110, %v6117
        %v6120 = vunpack.c.l.s4 1934713408
        %v6121 = vunpack.c.0.s8 %v6120
        %v6122 = vlaneseq
        %v6123 = vshrl.u32 %v6122, 7
        %v6124 = vsub.s32 %v6121, %v6123
        %v6125 = vrot.slane %v6111, %v6124
        %v6126 = vcombine.high %v6102, 0.0
        %v6127 = vcombine.high %v6109, 0.0
        %v6128 = vcombine.high %v6118, 0.0
        %v6129 = vcombine.high %v6125, 0.0
        %v6130 = vcombine.low %v2935, %v5573
        %v6131 = vcombine.high %v2935, %v5573
        %v6133 = vunpack.c.l.s4 1983009808
        %v6134 = vunpack.c.0.s8 %v6133
        %v6135 = vlaneseq
        %v6136 = vshrl.u32 %v6135, 7
        %v6137 = vsub.s32 %v6134, %v6136
        %v6138 = vrot.slane %v6130, %v6137
        %v6140 = vunpack.c.l.s4 1983009808
        %v6141 = vunpack.c.0.s8 %v6140
        %v6142 = vlaneseq
        %v6143 = vshrl.u32 %v6142, 7
        %v6144 = vsub.s32 %v6141, %v6143
        %v6145 = vrot.slane %v6131, %v6144
        %v6146 = vcombine.low %v5525, %v5621
        %v6147 = vcombine.high %v5525, %v5621
        %v6149 = vunpack.c.l.s4 1983009808
        %v6150 = vunpack.c.0.s8 %v6149
        %v6151 = vlaneseq
        %v6152 = vshrl.u32 %v6151, 7
        %v6153 = vsub.s32 %v6150, %v6152
        %v6154 = vrot.slane %v6146, %v6153
        %v6156 = vunpack.c.l.s4 1983009808
        %v6157 = vunpack.c.0.s8 %v6156
        %v6158 = vlaneseq
        %v6159 = vshrl.u32 %v6158, 7
        %v6160 = vsub.s32 %v6157, %v6159
        %v6161 = vrot.slane %v6147, %v6160
        %v6162 = vcombine.low %v6138, %v6154
        %v6163 = vcombine.high %v6138, %v6154
        %v6165 = vunpack.c.l.s4 1934713408
        %v6166 = vunpack.c.0.s8 %v6165
        %v6167 = vlaneseq
        %v6168 = vshrl.u32 %v6167, 7
        %v6169 = vsub.s32 %v6166, %v6168
        %v6170 = vrot.slane %v6162, %v6169
        %v6172 = vunpack.c.l.s4 1934713408
        %v6173 = vunpack.c.0.s8 %v6172
        %v6174 = vlaneseq
        %v6175 = vshrl.u32 %v6174, 7
        %v6176 = vsub.s32 %v6173, %v6175
        %v6177 = vrot.slane %v6163, %v6176
        %v6178 = vcombine.low %v6145, %v6161
        %v6179 = vcombine.high %v6145, %v6161
        %v6181 = vunpack.c.l.s4 1934713408
        %v6182 = vunpack.c.0.s8 %v6181
        %v6183 = vlaneseq
        %v6184 = vshrl.u32 %v6183, 7
        %v6185 = vsub.s32 %v6182, %v6184
        %v6186 = vrot.slane %v6178, %v6185
        %v6188 = vunpack.c.l.s4 1934713408
        %v6189 = vunpack.c.0.s8 %v6188
        %v6190 = vlaneseq
        %v6191 = vshrl.u32 %v6190, 7
        %v6192 = vsub.s32 %v6189, %v6191
        %v6193 = vrot.slane %v6179, %v6192
        %v6194 = vcombine.high %v6170, 0.0
        %v6195 = vcombine.high %v6177, 0.0
        %v6196 = vcombine.high %v6186, 0.0
        %v6197 = vcombine.high %v6193, 0.0
        %v6198 = vcombine.low %v2940, %v5575
        %v6199 = vcombine.high %v2940, %v5575
        %v6201 = vunpack.c.l.s4 1983009808
        %v6202 = vunpack.c.0.s8 %v6201
        %v6203 = vlaneseq
        %v6204 = vshrl.u32 %v6203, 7
        %v6205 = vsub.s32 %v6202, %v6204
        %v6206 = vrot.slane %v6198, %v6205
        %v6208 = vunpack.c.l.s4 1983009808
        %v6209 = vunpack.c.0.s8 %v6208
        %v6210 = vlaneseq
        %v6211 = vshrl.u32 %v6210, 7
        %v6212 = vsub.s32 %v6209, %v6211
        %v6213 = vrot.slane %v6199, %v6212
        %v6214 = vcombine.low %v5527, %v5623
        %v6215 = vcombine.high %v5527, %v5623
        %v6217 = vunpack.c.l.s4 1983009808
        %v6218 = vunpack.c.0.s8 %v6217
        %v6219 = vlaneseq
        %v6220 = vshrl.u32 %v6219, 7
        %v6221 = vsub.s32 %v6218, %v6220
        %v6222 = vrot.slane %v6214, %v6221
        %v6224 = vunpack.c.l.s4 1983009808
        %v6225 = vunpack.c.0.s8 %v6224
        %v6226 = vlaneseq
        %v6227 = vshrl.u32 %v6226, 7
        %v6228 = vsub.s32 %v6225, %v6227
        %v6229 = vrot.slane %v6215, %v6228
        %v6230 = vcombine.low %v6206, %v6222
        %v6231 = vcombine.high %v6206, %v6222
        %v6233 = vunpack.c.l.s4 1934713408
        %v6234 = vunpack.c.0.s8 %v6233
        %v6235 = vlaneseq
        %v6236 = vshrl.u32 %v6235, 7
        %v6237 = vsub.s32 %v6234, %v6236
        %v6238 = vrot.slane %v6230, %v6237
        %v6240 = vunpack.c.l.s4 1934713408
        %v6241 = vunpack.c.0.s8 %v6240
        %v6242 = vlaneseq
        %v6243 = vshrl.u32 %v6242, 7
        %v6244 = vsub.s32 %v6241, %v6243
        %v6245 = vrot.slane %v6231, %v6244
        %v6246 = vcombine.low %v6213, %v6229
        %v6247 = vcombine.high %v6213, %v6229
        %v6249 = vunpack.c.l.s4 1934713408
        %v6250 = vunpack.c.0.s8 %v6249
        %v6251 = vlaneseq
        %v6252 = vshrl.u32 %v6251, 7
        %v6253 = vsub.s32 %v6250, %v6252
        %v6254 = vrot.slane %v6246, %v6253
        %v6256 = vunpack.c.l.s4 1934713408
        %v6257 = vunpack.c.0.s8 %v6256
        %v6258 = vlaneseq
        %v6259 = vshrl.u32 %v6258, 7
        %v6260 = vsub.s32 %v6257, %v6259
        %v6261 = vrot.slane %v6247, %v6260
        %v6262 = vcombine.high %v6238, 0.0
        %v6263 = vcombine.high %v6245, 0.0
        %v6264 = vcombine.high %v6254, 0.0
        %v6265 = vcombine.high %v6261, 0.0
        %v6266 = vcombine.low %v2943, %v5577
        %v6267 = vcombine.high %v2943, %v5577
        %v6269 = vunpack.c.l.s4 1983009808
        %v6270 = vunpack.c.0.s8 %v6269
        %v6271 = vlaneseq
        %v6272 = vshrl.u32 %v6271, 7
        %v6273 = vsub.s32 %v6270, %v6272
        %v6274 = vrot.slane %v6266, %v6273
        %v6276 = vunpack.c.l.s4 1983009808
        %v6277 = vunpack.c.0.s8 %v6276
        %v6278 = vlaneseq
        %v6279 = vshrl.u32 %v6278, 7
        %v6280 = vsub.s32 %v6277, %v6279
        %v6281 = vrot.slane %v6267, %v6280
        %v6282 = vcombine.low %v5529, %v5625
        %v6283 = vcombine.high %v5529, %v5625
        %v6285 = vunpack.c.l.s4 1983009808
        %v6286 = vunpack.c.0.s8 %v6285
        %v6287 = vlaneseq
        %v6288 = vshrl.u32 %v6287, 7
        %v6289 = vsub.s32 %v6286, %v6288
        %v6290 = vrot.slane %v6282, %v6289
        %v6292 = vunpack.c.l.s4 1983009808
        %v6293 = vunpack.c.0.s8 %v6292
        %v6294 = vlaneseq
        %v6295 = vshrl.u32 %v6294, 7
        %v6296 = vsub.s32 %v6293, %v6295
        %v6297 = vrot.slane %v6283, %v6296
        %v6298 = vcombine.low %v6274, %v6290
        %v6299 = vcombine.high %v6274, %v6290
        %v6301 = vunpack.c.l.s4 1934713408
        %v6302 = vunpack.c.0.s8 %v6301
        %v6303 = vlaneseq
        %v6304 = vshrl.u32 %v6303, 7
        %v6305 = vsub.s32 %v6302, %v6304
        %v6306 = vrot.slane %v6298, %v6305
        %v6308 = vunpack.c.l.s4 1934713408
        %v6309 = vunpack.c.0.s8 %v6308
        %v6310 = vlaneseq
        %v6311 = vshrl.u32 %v6310, 7
        %v6312 = vsub.s32 %v6309, %v6311
        %v6313 = vrot.slane %v6299, %v6312
        %v6314 = vcombine.low %v6281, %v6297
        %v6315 = vcombine.high %v6281, %v6297
        %v6317 = vunpack.c.l.s4 1934713408
        %v6318 = vunpack.c.0.s8 %v6317
        %v6319 = vlaneseq
        %v6320 = vshrl.u32 %v6319, 7
        %v6321 = vsub.s32 %v6318, %v6320
        %v6322 = vrot.slane %v6314, %v6321
        %v6324 = vunpack.c.l.s4 1934713408
        %v6325 = vunpack.c.0.s8 %v6324
        %v6326 = vlaneseq
        %v6327 = vshrl.u32 %v6326, 7
        %v6328 = vsub.s32 %v6325, %v6327
        %v6329 = vrot.slane %v6315, %v6328
        %v6330 = vcombine.high %v6306, 0.0
        %v6331 = vcombine.high %v6313, 0.0
        %v6332 = vcombine.high %v6322, 0.0
        %v6333 = vcombine.high %v6329, 0.0
        %v6334 = vcombine.low %v2948, %v5579
        %v6335 = vcombine.high %v2948, %v5579
        %v6337 = vunpack.c.l.s4 1983009808
        %v6338 = vunpack.c.0.s8 %v6337
        %v6339 = vlaneseq
        %v6340 = vshrl.u32 %v6339, 7
        %v6341 = vsub.s32 %v6338, %v6340
        %v6342 = vrot.slane %v6334, %v6341
        %v6344 = vunpack.c.l.s4 1983009808
        %v6345 = vunpack.c.0.s8 %v6344
        %v6346 = vlaneseq
        %v6347 = vshrl.u32 %v6346, 7
        %v6348 = vsub.s32 %v6345, %v6347
        %v6349 = vrot.slane %v6335, %v6348
        %v6350 = vcombine.low %v5531, %v5627
        %v6351 = vcombine.high %v5531, %v5627
        %v6353 = vunpack.c.l.s4 1983009808
        %v6354 = vunpack.c.0.s8 %v6353
        %v6355 = vlaneseq
        %v6356 = vshrl.u32 %v6355, 7
        %v6357 = vsub.s32 %v6354, %v6356
        %v6358 = vrot.slane %v6350, %v6357
        %v6360 = vunpack.c.l.s4 1983009808
        %v6361 = vunpack.c.0.s8 %v6360
        %v6362 = vlaneseq
        %v6363 = vshrl.u32 %v6362, 7
        %v6364 = vsub.s32 %v6361, %v6363
        %v6365 = vrot.slane %v6351, %v6364
        %v6366 = vcombine.low %v6342, %v6358
        %v6367 = vcombine.high %v6342, %v6358
        %v6369 = vunpack.c.l.s4 1934713408
        %v6370 = vunpack.c.0.s8 %v6369
        %v6371 = vlaneseq
        %v6372 = vshrl.u32 %v6371, 7
        %v6373 = vsub.s32 %v6370, %v6372
        %v6374 = vrot.slane %v6366, %v6373
        %v6376 = vunpack.c.l.s4 1934713408
        %v6377 = vunpack.c.0.s8 %v6376
        %v6378 = vlaneseq
        %v6379 = vshrl.u32 %v6378, 7
        %v6380 = vsub.s32 %v6377, %v6379
        %v6381 = vrot.slane %v6367, %v6380
        %v6382 = vcombine.low %v6349, %v6365
        %v6383 = vcombine.high %v6349, %v6365
        %v6385 = vunpack.c.l.s4 1934713408
        %v6386 = vunpack.c.0.s8 %v6385
        %v6387 = vlaneseq
        %v6388 = vshrl.u32 %v6387, 7
        %v6389 = vsub.s32 %v6386, %v6388
        %v6390 = vrot.slane %v6382, %v6389
        %v6392 = vunpack.c.l.s4 1934713408
        %v6393 = vunpack.c.0.s8 %v6392
        %v6394 = vlaneseq
        %v6395 = vshrl.u32 %v6394, 7
        %v6396 = vsub.s32 %v6393, %v6395
        %v6397 = vrot.slane %v6383, %v6396
        %v6398 = vcombine.high %v6374, 0.0
        %v6399 = vcombine.high %v6381, 0.0
        %v6400 = vcombine.high %v6390, 0.0
        %v6401 = vcombine.high %v6397, 0.0
        %v6402 = vcombine.low %v2951, %v5581
        %v6403 = vcombine.high %v2951, %v5581
        %v6405 = vunpack.c.l.s4 1983009808
        %v6406 = vunpack.c.0.s8 %v6405
        %v6407 = vlaneseq
        %v6408 = vshrl.u32 %v6407, 7
        %v6409 = vsub.s32 %v6406, %v6408
        %v6410 = vrot.slane %v6402, %v6409
        %v6412 = vunpack.c.l.s4 1983009808
        %v6413 = vunpack.c.0.s8 %v6412
        %v6414 = vlaneseq
        %v6415 = vshrl.u32 %v6414, 7
        %v6416 = vsub.s32 %v6413, %v6415
        %v6417 = vrot.slane %v6403, %v6416
        %v6418 = vcombine.low %v5533, %v5629
        %v6419 = vcombine.high %v5533, %v5629
        %v6421 = vunpack.c.l.s4 1983009808
        %v6422 = vunpack.c.0.s8 %v6421
        %v6423 = vlaneseq
        %v6424 = vshrl.u32 %v6423, 7
        %v6425 = vsub.s32 %v6422, %v6424
        %v6426 = vrot.slane %v6418, %v6425
        %v6428 = vunpack.c.l.s4 1983009808
        %v6429 = vunpack.c.0.s8 %v6428
        %v6430 = vlaneseq
        %v6431 = vshrl.u32 %v6430, 7
        %v6432 = vsub.s32 %v6429, %v6431
        %v6433 = vrot.slane %v6419, %v6432
        %v6434 = vcombine.low %v6410, %v6426
        %v6435 = vcombine.high %v6410, %v6426
        %v6437 = vunpack.c.l.s4 1934713408
        %v6438 = vunpack.c.0.s8 %v6437
        %v6439 = vlaneseq
        %v6440 = vshrl.u32 %v6439, 7
        %v6441 = vsub.s32 %v6438, %v6440
        %v6442 = vrot.slane %v6434, %v6441
        %v6444 = vunpack.c.l.s4 1934713408
        %v6445 = vunpack.c.0.s8 %v6444
        %v6446 = vlaneseq
        %v6447 = vshrl.u32 %v6446, 7
        %v6448 = vsub.s32 %v6445, %v6447
        %v6449 = vrot.slane %v6435, %v6448
        %v6450 = vcombine.low %v6417, %v6433
        %v6451 = vcombine.high %v6417, %v6433
        %v6453 = vunpack.c.l.s4 1934713408
        %v6454 = vunpack.c.0.s8 %v6453
        %v6455 = vlaneseq
        %v6456 = vshrl.u32 %v6455, 7
        %v6457 = vsub.s32 %v6454, %v6456
        %v6458 = vrot.slane %v6450, %v6457
        %v6460 = vunpack.c.l.s4 1934713408
        %v6461 = vunpack.c.0.s8 %v6460
        %v6462 = vlaneseq
        %v6463 = vshrl.u32 %v6462, 7
        %v6464 = vsub.s32 %v6461, %v6463
        %v6465 = vrot.slane %v6451, %v6464
        %v6466 = vcombine.high %v6442, 0.0
        %v6467 = vcombine.high %v6449, 0.0
        %v6468 = vcombine.high %v6458, 0.0
        %v6469 = vcombine.high %v6465, 0.0
        %v6470 = vcombine.low %v2956, %v5583
        %v6471 = vcombine.high %v2956, %v5583
        %v6473 = vunpack.c.l.s4 1983009808
        %v6474 = vunpack.c.0.s8 %v6473
        %v6475 = vlaneseq
        %v6476 = vshrl.u32 %v6475, 7
        %v6477 = vsub.s32 %v6474, %v6476
        %v6478 = vrot.slane %v6470, %v6477
        %v6480 = vunpack.c.l.s4 1983009808
        %v6481 = vunpack.c.0.s8 %v6480
        %v6482 = vlaneseq
        %v6483 = vshrl.u32 %v6482, 7
        %v6484 = vsub.s32 %v6481, %v6483
        %v6485 = vrot.slane %v6471, %v6484
        %v6486 = vcombine.low %v5535, %v5631
        %v6487 = vcombine.high %v5535, %v5631
        %v6489 = vunpack.c.l.s4 1983009808
        %v6490 = vunpack.c.0.s8 %v6489
        %v6491 = vlaneseq
        %v6492 = vshrl.u32 %v6491, 7
        %v6493 = vsub.s32 %v6490, %v6492
        %v6494 = vrot.slane %v6486, %v6493
        %v6496 = vunpack.c.l.s4 1983009808
        %v6497 = vunpack.c.0.s8 %v6496
        %v6498 = vlaneseq
        %v6499 = vshrl.u32 %v6498, 7
        %v6500 = vsub.s32 %v6497, %v6499
        %v6501 = vrot.slane %v6487, %v6500
        %v6502 = vcombine.low %v6478, %v6494
        %v6503 = vcombine.high %v6478, %v6494
        %v6505 = vunpack.c.l.s4 1934713408
        %v6506 = vunpack.c.0.s8 %v6505
        %v6507 = vlaneseq
        %v6508 = vshrl.u32 %v6507, 7
        %v6509 = vsub.s32 %v6506, %v6508
        %v6510 = vrot.slane %v6502, %v6509
        %v6512 = vunpack.c.l.s4 1934713408
        %v6513 = vunpack.c.0.s8 %v6512
        %v6514 = vlaneseq
        %v6515 = vshrl.u32 %v6514, 7
        %v6516 = vsub.s32 %v6513, %v6515
        %v6517 = vrot.slane %v6503, %v6516
        %v6518 = vcombine.low %v6485, %v6501
        %v6519 = vcombine.high %v6485, %v6501
        %v6521 = vunpack.c.l.s4 1934713408
        %v6522 = vunpack.c.0.s8 %v6521
        %v6523 = vlaneseq
        %v6524 = vshrl.u32 %v6523, 7
        %v6525 = vsub.s32 %v6522, %v6524
        %v6526 = vrot.slane %v6518, %v6525
        %v6528 = vunpack.c.l.s4 1934713408
        %v6529 = vunpack.c.0.s8 %v6528
        %v6530 = vlaneseq
        %v6531 = vshrl.u32 %v6530, 7
        %v6532 = vsub.s32 %v6529, %v6531
        %v6533 = vrot.slane %v6519, %v6532
        %v6534 = vcombine.high %v6510, 0.0
        %v6535 = vcombine.high %v6517, 0.0
        %v6536 = vcombine.high %v6526, 0.0
        %v6537 = vcombine.high %v6533, 0.0
        %v6538 = vcombine.low %v2959, %v5585
        %v6539 = vcombine.high %v2959, %v5585
        %v6541 = vunpack.c.l.s4 1983009808
        %v6542 = vunpack.c.0.s8 %v6541
        %v6543 = vlaneseq
        %v6544 = vshrl.u32 %v6543, 7
        %v6545 = vsub.s32 %v6542, %v6544
        %v6546 = vrot.slane %v6538, %v6545
        %v6548 = vunpack.c.l.s4 1983009808
        %v6549 = vunpack.c.0.s8 %v6548
        %v6550 = vlaneseq
        %v6551 = vshrl.u32 %v6550, 7
        %v6552 = vsub.s32 %v6549, %v6551
        %v6553 = vrot.slane %v6539, %v6552
        %v6554 = vcombine.low %v5537, %v5633
        %v6555 = vcombine.high %v5537, %v5633
        %v6557 = vunpack.c.l.s4 1983009808
        %v6558 = vunpack.c.0.s8 %v6557
        %v6559 = vlaneseq
        %v6560 = vshrl.u32 %v6559, 7
        %v6561 = vsub.s32 %v6558, %v6560
        %v6562 = vrot.slane %v6554, %v6561
        %v6564 = vunpack.c.l.s4 1983009808
        %v6565 = vunpack.c.0.s8 %v6564
        %v6566 = vlaneseq
        %v6567 = vshrl.u32 %v6566, 7
        %v6568 = vsub.s32 %v6565, %v6567
        %v6569 = vrot.slane %v6555, %v6568
        %v6570 = vcombine.low %v6546, %v6562
        %v6571 = vcombine.high %v6546, %v6562
        %v6573 = vunpack.c.l.s4 1934713408
        %v6574 = vunpack.c.0.s8 %v6573
        %v6575 = vlaneseq
        %v6576 = vshrl.u32 %v6575, 7
        %v6577 = vsub.s32 %v6574, %v6576
        %v6578 = vrot.slane %v6570, %v6577
        %v6580 = vunpack.c.l.s4 1934713408
        %v6581 = vunpack.c.0.s8 %v6580
        %v6582 = vlaneseq
        %v6583 = vshrl.u32 %v6582, 7
        %v6584 = vsub.s32 %v6581, %v6583
        %v6585 = vrot.slane %v6571, %v6584
        %v6586 = vcombine.low %v6553, %v6569
        %v6587 = vcombine.high %v6553, %v6569
        %v6589 = vunpack.c.l.s4 1934713408
        %v6590 = vunpack.c.0.s8 %v6589
        %v6591 = vlaneseq
        %v6592 = vshrl.u32 %v6591, 7
        %v6593 = vsub.s32 %v6590, %v6592
        %v6594 = vrot.slane %v6586, %v6593
        %v6596 = vunpack.c.l.s4 1934713408
        %v6597 = vunpack.c.0.s8 %v6596
        %v6598 = vlaneseq
        %v6599 = vshrl.u32 %v6598, 7
        %v6600 = vsub.s32 %v6597, %v6599
        %v6601 = vrot.slane %v6587, %v6600
        %v6602 = vcombine.high %v6578, 0.0
        %v6603 = vcombine.high %v6585, 0.0
        %v6604 = vcombine.high %v6594, 0.0
        %v6605 = vcombine.high %v6601, 0.0
        %v6606 = vcombine.low %v2964, %v5587
        %v6607 = vcombine.high %v2964, %v5587
        %v6609 = vunpack.c.l.s4 1983009808
        %v6610 = vunpack.c.0.s8 %v6609
        %v6611 = vlaneseq
        %v6612 = vshrl.u32 %v6611, 7
        %v6613 = vsub.s32 %v6610, %v6612
        %v6614 = vrot.slane %v6606, %v6613
        %v6616 = vunpack.c.l.s4 1983009808
        %v6617 = vunpack.c.0.s8 %v6616
        %v6618 = vlaneseq
        %v6619 = vshrl.u32 %v6618, 7
        %v6620 = vsub.s32 %v6617, %v6619
        %v6621 = vrot.slane %v6607, %v6620
        %v6622 = vcombine.low %v5539, %v5635
        %v6623 = vcombine.high %v5539, %v5635
        %v6625 = vunpack.c.l.s4 1983009808
        %v6626 = vunpack.c.0.s8 %v6625
        %v6627 = vlaneseq
        %v6628 = vshrl.u32 %v6627, 7
        %v6629 = vsub.s32 %v6626, %v6628
        %v6630 = vrot.slane %v6622, %v6629
        %v6632 = vunpack.c.l.s4 1983009808
        %v6633 = vunpack.c.0.s8 %v6632
        %v6634 = vlaneseq
        %v6635 = vshrl.u32 %v6634, 7
        %v6636 = vsub.s32 %v6633, %v6635
        %v6637 = vrot.slane %v6623, %v6636
        %v6638 = vcombine.low %v6614, %v6630
        %v6639 = vcombine.high %v6614, %v6630
        %v6641 = vunpack.c.l.s4 1934713408
        %v6642 = vunpack.c.0.s8 %v6641
        %v6643 = vlaneseq
        %v6644 = vshrl.u32 %v6643, 7
        %v6645 = vsub.s32 %v6642, %v6644
        %v6646 = vrot.slane %v6638, %v6645
        %v6648 = vunpack.c.l.s4 1934713408
        %v6649 = vunpack.c.0.s8 %v6648
        %v6650 = vlaneseq
        %v6651 = vshrl.u32 %v6650, 7
        %v6652 = vsub.s32 %v6649, %v6651
        %v6653 = vrot.slane %v6639, %v6652
        %v6654 = vcombine.low %v6621, %v6637
        %v6655 = vcombine.high %v6621, %v6637
        %v6657 = vunpack.c.l.s4 1934713408
        %v6658 = vunpack.c.0.s8 %v6657
        %v6659 = vlaneseq
        %v6660 = vshrl.u32 %v6659, 7
        %v6661 = vsub.s32 %v6658, %v6660
        %v6662 = vrot.slane %v6654, %v6661
        %v6664 = vunpack.c.l.s4 1934713408
        %v6665 = vunpack.c.0.s8 %v6664
        %v6666 = vlaneseq
        %v6667 = vshrl.u32 %v6666, 7
        %v6668 = vsub.s32 %v6665, %v6667
        %v6669 = vrot.slane %v6655, %v6668
        %v6670 = vcombine.high %v6646, 0.0
        %v6671 = vcombine.high %v6653, 0.0
        %v6672 = vcombine.high %v6662, 0.0
        %v6673 = vcombine.high %v6669, 0.0
        %v6674 = vcombine.low %v2967, %v5589
        %v6675 = vcombine.high %v2967, %v5589
        %v6677 = vunpack.c.l.s4 1983009808
        %v6678 = vunpack.c.0.s8 %v6677
        %v6679 = vlaneseq
        %v6680 = vshrl.u32 %v6679, 7
        %v6681 = vsub.s32 %v6678, %v6680
        %v6682 = vrot.slane %v6674, %v6681
        %v6684 = vunpack.c.l.s4 1983009808
        %v6685 = vunpack.c.0.s8 %v6684
        %v6686 = vlaneseq
        %v6687 = vshrl.u32 %v6686, 7
        %v6688 = vsub.s32 %v6685, %v6687
        %v6689 = vrot.slane %v6675, %v6688
        %v6690 = vcombine.low %v5541, %v5637
        %v6691 = vcombine.high %v5541, %v5637
        %v6693 = vunpack.c.l.s4 1983009808
        %v6694 = vunpack.c.0.s8 %v6693
        %v6695 = vlaneseq
        %v6696 = vshrl.u32 %v6695, 7
        %v6697 = vsub.s32 %v6694, %v6696
        %v6698 = vrot.slane %v6690, %v6697
        %v6700 = vunpack.c.l.s4 1983009808
        %v6701 = vunpack.c.0.s8 %v6700
        %v6702 = vlaneseq
        %v6703 = vshrl.u32 %v6702, 7
        %v6704 = vsub.s32 %v6701, %v6703
        %v6705 = vrot.slane %v6691, %v6704
        %v6706 = vcombine.low %v6682, %v6698
        %v6707 = vcombine.high %v6682, %v6698
        %v6709 = vunpack.c.l.s4 1934713408
        %v6710 = vunpack.c.0.s8 %v6709
        %v6711 = vlaneseq
        %v6712 = vshrl.u32 %v6711, 7
        %v6713 = vsub.s32 %v6710, %v6712
        %v6714 = vrot.slane %v6706, %v6713
        %v6716 = vunpack.c.l.s4 1934713408
        %v6717 = vunpack.c.0.s8 %v6716
        %v6718 = vlaneseq
        %v6719 = vshrl.u32 %v6718, 7
        %v6720 = vsub.s32 %v6717, %v6719
        %v6721 = vrot.slane %v6707, %v6720
        %v6722 = vcombine.low %v6689, %v6705
        %v6723 = vcombine.high %v6689, %v6705
        %v6725 = vunpack.c.l.s4 1934713408
        %v6726 = vunpack.c.0.s8 %v6725
        %v6727 = vlaneseq
        %v6728 = vshrl.u32 %v6727, 7
        %v6729 = vsub.s32 %v6726, %v6728
        %v6730 = vrot.slane %v6722, %v6729
        %v6732 = vunpack.c.l.s4 1934713408
        %v6733 = vunpack.c.0.s8 %v6732
        %v6734 = vlaneseq
        %v6735 = vshrl.u32 %v6734, 7
        %v6736 = vsub.s32 %v6733, %v6735
        %v6737 = vrot.slane %v6723, %v6736
        %v6738 = vcombine.high %v6714, 0.0
        %v6739 = vcombine.high %v6721, 0.0
        %v6740 = vcombine.high %v6730, 0.0
        %v6741 = vcombine.high %v6737, 0.0
        %v6742 = vcombine.low %v5694, %v5701
        %v6744 = vunpack.c.l.s4 1983009808
        %v6745 = vunpack.c.0.s8 %v6744
        %v6746 = vlaneseq
        %v6747 = vshrl.u32 %v6746, 7
        %v6748 = vsub.s32 %v6745, %v6747
        %v6749 = vrot.slane %v6742, %v6748
        %v6750 = vcombine.low %v5718, %v5719
        %v6752 = vunpack.c.l.s4 1983009808
        %v6753 = vunpack.c.0.s8 %v6752
        %v6754 = vlaneseq
        %v6755 = vshrl.u32 %v6754, 7
        %v6756 = vsub.s32 %v6753, %v6755
        %v6757 = vrot.slane %v6750, %v6756
        %v6758 = vcombine.low %v5710, %v5717
        %v6760 = vunpack.c.l.s4 1983009808
        %v6761 = vunpack.c.0.s8 %v6760
        %v6762 = vlaneseq
        %v6763 = vshrl.u32 %v6762, 7
        %v6764 = vsub.s32 %v6761, %v6763
        %v6765 = vrot.slane %v6758, %v6764
        %v6766 = vcombine.low %v5720, %v5721
        %v6768 = vunpack.c.l.s4 1983009808
        %v6769 = vunpack.c.0.s8 %v6768
        %v6770 = vlaneseq
        %v6771 = vshrl.u32 %v6770, 7
        %v6772 = vsub.s32 %v6769, %v6771
        %v6773 = vrot.slane %v6766, %v6772
        %v6774 = vcombine.low %v6749, %v6757
        %v6775 = vcombine.high %v6749, %v6757
        %v6777 = vunpack.c.l.s4 1934713408
        %v6778 = vunpack.c.0.s8 %v6777
        %v6779 = vlaneseq
        %v6780 = vshrl.u32 %v6779, 7
        %v6781 = vsub.s32 %v6778, %v6780
        %v6782 = vrot.slane %v6774, %v6781
        %v6784 = vunpack.c.l.s4 1934713408
        %v6785 = vunpack.c.0.s8 %v6784
        %v6786 = vlaneseq
        %v6787 = vshrl.u32 %v6786, 7
        %v6788 = vsub.s32 %v6785, %v6787
        %v6789 = vrot.slane %v6775, %v6788
        %v6790 = vcombine.low %v6765, %v6773
        %v6791 = vcombine.high %v6765, %v6773
        %v6793 = vunpack.c.l.s4 1934713408
        %v6794 = vunpack.c.0.s8 %v6793
        %v6795 = vlaneseq
        %v6796 = vshrl.u32 %v6795, 7
        %v6797 = vsub.s32 %v6794, %v6796
        %v6798 = vrot.slane %v6790, %v6797
        %v6800 = vunpack.c.l.s4 1934713408
        %v6801 = vunpack.c.0.s8 %v6800
        %v6802 = vlaneseq
        %v6803 = vshrl.u32 %v6802, 7
        %v6804 = vsub.s32 %v6801, %v6803
        %v6805 = vrot.slane %v6791, %v6804
        %v6806 = vcombine.low %v6782, %v6798
        %v6807 = vcombine.high %v6782, %v6798
        %v6808 = vcombine.low %v6789, %v6805
        %v6809 = vcombine.high %v6789, %v6805
        %v6810 = vcombine.low %v5762, %v5769
        %v6812 = vunpack.c.l.s4 1983009808
        %v6813 = vunpack.c.0.s8 %v6812
        %v6814 = vlaneseq
        %v6815 = vshrl.u32 %v6814, 7
        %v6816 = vsub.s32 %v6813, %v6815
        %v6817 = vrot.slane %v6810, %v6816
        %v6818 = vcombine.low %v5786, %v5787
        %v6820 = vunpack.c.l.s4 1983009808
        %v6821 = vunpack.c.0.s8 %v6820
        %v6822 = vlaneseq
        %v6823 = vshrl.u32 %v6822, 7
        %v6824 = vsub.s32 %v6821, %v6823
        %v6825 = vrot.slane %v6818, %v6824
        %v6826 = vcombine.low %v5778, %v5785
        %v6828 = vunpack.c.l.s4 1983009808
        %v6829 = vunpack.c.0.s8 %v6828
        %v6830 = vlaneseq
        %v6831 = vshrl.u32 %v6830, 7
        %v6832 = vsub.s32 %v6829, %v6831
        %v6833 = vrot.slane %v6826, %v6832
        %v6834 = vcombine.low %v5788, %v5789
        %v6836 = vunpack.c.l.s4 1983009808
        %v6837 = vunpack.c.0.s8 %v6836
        %v6838 = vlaneseq
        %v6839 = vshrl.u32 %v6838, 7
        %v6840 = vsub.s32 %v6837, %v6839
        %v6841 = vrot.slane %v6834, %v6840
        %v6842 = vcombine.low %v6817, %v6825
        %v6843 = vcombine.high %v6817, %v6825
        %v6845 = vunpack.c.l.s4 1934713408
        %v6846 = vunpack.c.0.s8 %v6845
        %v6847 = vlaneseq
        %v6848 = vshrl.u32 %v6847, 7
        %v6849 = vsub.s32 %v6846, %v6848
        %v6850 = vrot.slane %v6842, %v6849
        %v6852 = vunpack.c.l.s4 1934713408
        %v6853 = vunpack.c.0.s8 %v6852
        %v6854 = vlaneseq
        %v6855 = vshrl.u32 %v6854, 7
        %v6856 = vsub.s32 %v6853, %v6855
        %v6857 = vrot.slane %v6843, %v6856
        %v6858 = vcombine.low %v6833, %v6841
        %v6859 = vcombine.high %v6833, %v6841
        %v6861 = vunpack.c.l.s4 1934713408
        %v6862 = vunpack.c.0.s8 %v6861
        %v6863 = vlaneseq
        %v6864 = vshrl.u32 %v6863, 7
        %v6865 = vsub.s32 %v6862, %v6864
        %v6866 = vrot.slane %v6858, %v6865
        %v6868 = vunpack.c.l.s4 1934713408
        %v6869 = vunpack.c.0.s8 %v6868
        %v6870 = vlaneseq
        %v6871 = vshrl.u32 %v6870, 7
        %v6872 = vsub.s32 %v6869, %v6871
        %v6873 = vrot.slane %v6859, %v6872
        %v6874 = vcombine.low %v6850, %v6866
        %v6875 = vcombine.high %v6850, %v6866
        %v6876 = vcombine.low %v6857, %v6873
        %v6877 = vcombine.high %v6857, %v6873
        %v6878 = vcombine.low %v5830, %v5837
        %v6880 = vunpack.c.l.s4 1983009808
        %v6881 = vunpack.c.0.s8 %v6880
        %v6882 = vlaneseq
        %v6883 = vshrl.u32 %v6882, 7
        %v6884 = vsub.s32 %v6881, %v6883
        %v6885 = vrot.slane %v6878, %v6884
        %v6886 = vcombine.low %v5854, %v5855
        %v6888 = vunpack.c.l.s4 1983009808
        %v6889 = vunpack.c.0.s8 %v6888
        %v6890 = vlaneseq
        %v6891 = vshrl.u32 %v6890, 7
        %v6892 = vsub.s32 %v6889, %v6891
        %v6893 = vrot.slane %v6886, %v6892
        %v6894 = vcombine.low %v5846, %v5853
        %v6896 = vunpack.c.l.s4 1983009808
        %v6897 = vunpack.c.0.s8 %v6896
        %v6898 = vlaneseq
        %v6899 = vshrl.u32 %v6898, 7
        %v6900 = vsub.s32 %v6897, %v6899
        %v6901 = vrot.slane %v6894, %v6900
        %v6902 = vcombine.low %v5856, %v5857
        %v6904 = vunpack.c.l.s4 1983009808
        %v6905 = vunpack.c.0.s8 %v6904
        %v6906 = vlaneseq
        %v6907 = vshrl.u32 %v6906, 7
        %v6908 = vsub.s32 %v6905, %v6907
        %v6909 = vrot.slane %v6902, %v6908
        %v6910 = vcombine.low %v6885, %v6893
        %v6911 = vcombine.high %v6885, %v6893
        %v6913 = vunpack.c.l.s4 1934713408
        %v6914 = vunpack.c.0.s8 %v6913
        %v6915 = vlaneseq
        %v6916 = vshrl.u32 %v6915, 7
        %v6917 = vsub.s32 %v6914, %v6916
        %v6918 = vrot.slane %v6910, %v6917
        %v6920 = vunpack.c.l.s4 1934713408
        %v6921 = vunpack.c.0.s8 %v6920
        %v6922 = vlaneseq
        %v6923 = vshrl.u32 %v6922, 7
        %v6924 = vsub.s32 %v6921, %v6923
        %v6925 = vrot.slane %v6911, %v6924
        %v6926 = vcombine.low %v6901, %v6909
        %v6927 = vcombine.high %v6901, %v6909
        %v6929 = vunpack.c.l.s4 1934713408
        %v6930 = vunpack.c.0.s8 %v6929
        %v6931 = vlaneseq
        %v6932 = vshrl.u32 %v6931, 7
        %v6933 = vsub.s32 %v6930, %v6932
        %v6934 = vrot.slane %v6926, %v6933
        %v6936 = vunpack.c.l.s4 1934713408
        %v6937 = vunpack.c.0.s8 %v6936
        %v6938 = vlaneseq
        %v6939 = vshrl.u32 %v6938, 7
        %v6940 = vsub.s32 %v6937, %v6939
        %v6941 = vrot.slane %v6927, %v6940
        %v6942 = vcombine.low %v6918, %v6934
        %v6943 = vcombine.high %v6918, %v6934
        %v6944 = vcombine.low %v6925, %v6941
        %v6945 = vcombine.high %v6925, %v6941
        %v6946 = vcombine.low %v5898, %v5905
        %v6948 = vunpack.c.l.s4 1983009808
        %v6949 = vunpack.c.0.s8 %v6948
        %v6950 = vlaneseq
        %v6951 = vshrl.u32 %v6950, 7
        %v6952 = vsub.s32 %v6949, %v6951
        %v6953 = vrot.slane %v6946, %v6952
        %v6954 = vcombine.low %v5922, %v5923
        %v6956 = vunpack.c.l.s4 1983009808
        %v6957 = vunpack.c.0.s8 %v6956
        %v6958 = vlaneseq
        %v6959 = vshrl.u32 %v6958, 7
        %v6960 = vsub.s32 %v6957, %v6959
        %v6961 = vrot.slane %v6954, %v6960
        %v6962 = vcombine.low %v5914, %v5921
        %v6964 = vunpack.c.l.s4 1983009808
        %v6965 = vunpack.c.0.s8 %v6964
        %v6966 = vlaneseq
        %v6967 = vshrl.u32 %v6966, 7
        %v6968 = vsub.s32 %v6965, %v6967
        %v6969 = vrot.slane %v6962, %v6968
        %v6970 = vcombine.low %v5924, %v5925
        %v6972 = vunpack.c.l.s4 1983009808
        %v6973 = vunpack.c.0.s8 %v6972
        %v6974 = vlaneseq
        %v6975 = vshrl.u32 %v6974, 7
        %v6976 = vsub.s32 %v6973, %v6975
        %v6977 = vrot.slane %v6970, %v6976
        %v6978 = vcombine.low %v6953, %v6961
        %v6979 = vcombine.high %v6953, %v6961
        %v6981 = vunpack.c.l.s4 1934713408
        %v6982 = vunpack.c.0.s8 %v6981
        %v6983 = vlaneseq
        %v6984 = vshrl.u32 %v6983, 7
        %v6985 = vsub.s32 %v6982, %v6984
        %v6986 = vrot.slane %v6978, %v6985
        %v6988 = vunpack.c.l.s4 1934713408
        %v6989 = vunpack.c.0.s8 %v6988
        %v6990 = vlaneseq
        %v6991 = vshrl.u32 %v6990, 7
        %v6992 = vsub.s32 %v6989, %v6991
        %v6993 = vrot.slane %v6979, %v6992
        %v6994 = vcombine.low %v6969, %v6977
        %v6995 = vcombine.high %v6969, %v6977
        %v6997 = vunpack.c.l.s4 1934713408
        %v6998 = vunpack.c.0.s8 %v6997
        %v6999 = vlaneseq
        %v7000 = vshrl.u32 %v6999, 7
        %v7001 = vsub.s32 %v6998, %v7000
        %v7002 = vrot.slane %v6994, %v7001
        %v7004 = vunpack.c.l.s4 1934713408
        %v7005 = vunpack.c.0.s8 %v7004
        %v7006 = vlaneseq
        %v7007 = vshrl.u32 %v7006, 7
        %v7008 = vsub.s32 %v7005, %v7007
        %v7009 = vrot.slane %v6995, %v7008
        %v7010 = vcombine.low %v6986, %v7002
        %v7011 = vcombine.high %v6986, %v7002
        %v7012 = vcombine.low %v6993, %v7009
        %v7013 = vcombine.high %v6993, %v7009
        %v7014 = vcombine.low %v5966, %v5973
        %v7016 = vunpack.c.l.s4 1983009808
        %v7017 = vunpack.c.0.s8 %v7016
        %v7018 = vlaneseq
        %v7019 = vshrl.u32 %v7018, 7
        %v7020 = vsub.s32 %v7017, %v7019
        %v7021 = vrot.slane %v7014, %v7020
        %v7022 = vcombine.low %v5990, %v5991
        %v7024 = vunpack.c.l.s4 1983009808
        %v7025 = vunpack.c.0.s8 %v7024
        %v7026 = vlaneseq
        %v7027 = vshrl.u32 %v7026, 7
        %v7028 = vsub.s32 %v7025, %v7027
        %v7029 = vrot.slane %v7022, %v7028
        %v7030 = vcombine.low %v5982, %v5989
        %v7032 = vunpack.c.l.s4 1983009808
        %v7033 = vunpack.c.0.s8 %v7032
        %v7034 = vlaneseq
        %v7035 = vshrl.u32 %v7034, 7
        %v7036 = vsub.s32 %v7033, %v7035
        %v7037 = vrot.slane %v7030, %v7036
        %v7038 = vcombine.low %v5992, %v5993
        %v7040 = vunpack.c.l.s4 1983009808
        %v7041 = vunpack.c.0.s8 %v7040
        %v7042 = vlaneseq
        %v7043 = vshrl.u32 %v7042, 7
        %v7044 = vsub.s32 %v7041, %v7043
        %v7045 = vrot.slane %v7038, %v7044
        %v7046 = vcombine.low %v7021, %v7029
        %v7047 = vcombine.high %v7021, %v7029
        %v7049 = vunpack.c.l.s4 1934713408
        %v7050 = vunpack.c.0.s8 %v7049
        %v7051 = vlaneseq
        %v7052 = vshrl.u32 %v7051, 7
        %v7053 = vsub.s32 %v7050, %v7052
        %v7054 = vrot.slane %v7046, %v7053
        %v7056 = vunpack.c.l.s4 1934713408
        %v7057 = vunpack.c.0.s8 %v7056
        %v7058 = vlaneseq
        %v7059 = vshrl.u32 %v7058, 7
        %v7060 = vsub.s32 %v7057, %v7059
        %v7061 = vrot.slane %v7047, %v7060
        %v7062 = vcombine.low %v7037, %v7045
        %v7063 = vcombine.high %v7037, %v7045
        %v7065 = vunpack.c.l.s4 1934713408
        %v7066 = vunpack.c.0.s8 %v7065
        %v7067 = vlaneseq
        %v7068 = vshrl.u32 %v7067, 7
        %v7069 = vsub.s32 %v7066, %v7068
        %v7070 = vrot.slane %v7062, %v7069
        %v7072 = vunpack.c.l.s4 1934713408
        %v7073 = vunpack.c.0.s8 %v7072
        %v7074 = vlaneseq
        %v7075 = vshrl.u32 %v7074, 7
        %v7076 = vsub.s32 %v7073, %v7075
        %v7077 = vrot.slane %v7063, %v7076
        %v7078 = vcombine.low %v7054, %v7070
        %v7079 = vcombine.high %v7054, %v7070
        %v7080 = vcombine.low %v7061, %v7077
        %v7081 = vcombine.high %v7061, %v7077
        %v7082 = vcombine.low %v6034, %v6041
        %v7084 = vunpack.c.l.s4 1983009808
        %v7085 = vunpack.c.0.s8 %v7084
        %v7086 = vlaneseq
        %v7087 = vshrl.u32 %v7086, 7
        %v7088 = vsub.s32 %v7085, %v7087
        %v7089 = vrot.slane %v7082, %v7088
        %v7090 = vcombine.low %v6058, %v6059
        %v7092 = vunpack.c.l.s4 1983009808
        %v7093 = vunpack.c.0.s8 %v7092
        %v7094 = vlaneseq
        %v7095 = vshrl.u32 %v7094, 7
        %v7096 = vsub.s32 %v7093, %v7095
        %v7097 = vrot.slane %v7090, %v7096
        %v7098 = vcombine.low %v6050, %v6057
        %v7100 = vunpack.c.l.s4 1983009808
        %v7101 = vunpack.c.0.s8 %v7100
        %v7102 = vlaneseq
        %v7103 = vshrl.u32 %v7102, 7
        %v7104 = vsub.s32 %v7101, %v7103
        %v7105 = vrot.slane %v7098, %v7104
        %v7106 = vcombine.low %v6060, %v6061
        %v7108 = vunpack.c.l.s4 1983009808
        %v7109 = vunpack.c.0.s8 %v7108
        %v7110 = vlaneseq
        %v7111 = vshrl.u32 %v7110, 7
        %v7112 = vsub.s32 %v7109, %v7111
        %v7113 = vrot.slane %v7106, %v7112
        %v7114 = vcombine.low %v7089, %v7097
        %v7115 = vcombine.high %v7089, %v7097
        %v7117 = vunpack.c.l.s4 1934713408
        %v7118 = vunpack.c.0.s8 %v7117
        %v7119 = vlaneseq
        %v7120 = vshrl.u32 %v7119, 7
        %v7121 = vsub.s32 %v7118, %v7120
        %v7122 = vrot.slane %v7114, %v7121
        %v7124 = vunpack.c.l.s4 1934713408
        %v7125 = vunpack.c.0.s8 %v7124
        %v7126 = vlaneseq
        %v7127 = vshrl.u32 %v7126, 7
        %v7128 = vsub.s32 %v7125, %v7127
        %v7129 = vrot.slane %v7115, %v7128
        %v7130 = vcombine.low %v7105, %v7113
        %v7131 = vcombine.high %v7105, %v7113
        %v7133 = vunpack.c.l.s4 1934713408
        %v7134 = vunpack.c.0.s8 %v7133
        %v7135 = vlaneseq
        %v7136 = vshrl.u32 %v7135, 7
        %v7137 = vsub.s32 %v7134, %v7136
        %v7138 = vrot.slane %v7130, %v7137
        %v7140 = vunpack.c.l.s4 1934713408
        %v7141 = vunpack.c.0.s8 %v7140
        %v7142 = vlaneseq
        %v7143 = vshrl.u32 %v7142, 7
        %v7144 = vsub.s32 %v7141, %v7143
        %v7145 = vrot.slane %v7131, %v7144
        %v7146 = vcombine.low %v7122, %v7138
        %v7147 = vcombine.high %v7122, %v7138
        %v7148 = vcombine.low %v7129, %v7145
        %v7149 = vcombine.high %v7129, %v7145
        %v7150 = vcombine.low %v6102, %v6109
        %v7152 = vunpack.c.l.s4 1983009808
        %v7153 = vunpack.c.0.s8 %v7152
        %v7154 = vlaneseq
        %v7155 = vshrl.u32 %v7154, 7
        %v7156 = vsub.s32 %v7153, %v7155
        %v7157 = vrot.slane %v7150, %v7156
        %v7158 = vcombine.low %v6126, %v6127
        %v7160 = vunpack.c.l.s4 1983009808
        %v7161 = vunpack.c.0.s8 %v7160
        %v7162 = vlaneseq
        %v7163 = vshrl.u32 %v7162, 7
        %v7164 = vsub.s32 %v7161, %v7163
        %v7165 = vrot.slane %v7158, %v7164
        %v7166 = vcombine.low %v6118, %v6125
        %v7168 = vunpack.c.l.s4 1983009808
        %v7169 = vunpack.c.0.s8 %v7168
        %v7170 = vlaneseq
        %v7171 = vshrl.u32 %v7170, 7
        %v7172 = vsub.s32 %v7169, %v7171
        %v7173 = vrot.slane %v7166, %v7172
        %v7174 = vcombine.low %v6128, %v6129
        %v7176 = vunpack.c.l.s4 1983009808
        %v7177 = vunpack.c.0.s8 %v7176
        %v7178 = vlaneseq
        %v7179 = vshrl.u32 %v7178, 7
        %v7180 = vsub.s32 %v7177, %v7179
        %v7181 = vrot.slane %v7174, %v7180
        %v7182 = vcombine.low %v7157, %v7165
        %v7183 = vcombine.high %v7157, %v7165
        %v7185 = vunpack.c.l.s4 1934713408
        %v7186 = vunpack.c.0.s8 %v7185
        %v7187 = vlaneseq
        %v7188 = vshrl.u32 %v7187, 7
        %v7189 = vsub.s32 %v7186, %v7188
        %v7190 = vrot.slane %v7182, %v7189
        %v7192 = vunpack.c.l.s4 1934713408
        %v7193 = vunpack.c.0.s8 %v7192
        %v7194 = vlaneseq
        %v7195 = vshrl.u32 %v7194, 7
        %v7196 = vsub.s32 %v7193, %v7195
        %v7197 = vrot.slane %v7183, %v7196
        %v7198 = vcombine.low %v7173, %v7181
        %v7199 = vcombine.high %v7173, %v7181
        %v7201 = vunpack.c.l.s4 1934713408
        %v7202 = vunpack.c.0.s8 %v7201
        %v7203 = vlaneseq
        %v7204 = vshrl.u32 %v7203, 7
        %v7205 = vsub.s32 %v7202, %v7204
        %v7206 = vrot.slane %v7198, %v7205
        %v7208 = vunpack.c.l.s4 1934713408
        %v7209 = vunpack.c.0.s8 %v7208
        %v7210 = vlaneseq
        %v7211 = vshrl.u32 %v7210, 7
        %v7212 = vsub.s32 %v7209, %v7211
        %v7213 = vrot.slane %v7199, %v7212
        %v7214 = vcombine.low %v7190, %v7206
        %v7215 = vcombine.high %v7190, %v7206
        %v7216 = vcombine.low %v7197, %v7213
        %v7217 = vcombine.high %v7197, %v7213
        %v7218 = vcombine.low %v6170, %v6177
        %v7220 = vunpack.c.l.s4 1983009808
        %v7221 = vunpack.c.0.s8 %v7220
        %v7222 = vlaneseq
        %v7223 = vshrl.u32 %v7222, 7
        %v7224 = vsub.s32 %v7221, %v7223
        %v7225 = vrot.slane %v7218, %v7224
        %v7226 = vcombine.low %v6194, %v6195
        %v7228 = vunpack.c.l.s4 1983009808
        %v7229 = vunpack.c.0.s8 %v7228
        %v7230 = vlaneseq
        %v7231 = vshrl.u32 %v7230, 7
        %v7232 = vsub.s32 %v7229, %v7231
        %v7233 = vrot.slane %v7226, %v7232
        %v7234 = vcombine.low %v6186, %v6193
        %v7236 = vunpack.c.l.s4 1983009808
        %v7237 = vunpack.c.0.s8 %v7236
        %v7238 = vlaneseq
        %v7239 = vshrl.u32 %v7238, 7
        %v7240 = vsub.s32 %v7237, %v7239
        %v7241 = vrot.slane %v7234, %v7240
        %v7242 = vcombine.low %v6196, %v6197
        %v7244 = vunpack.c.l.s4 1983009808
        %v7245 = vunpack.c.0.s8 %v7244
        %v7246 = vlaneseq
        %v7247 = vshrl.u32 %v7246, 7
        %v7248 = vsub.s32 %v7245, %v7247
        %v7249 = vrot.slane %v7242, %v7248
        %v7250 = vcombine.low %v7225, %v7233
        %v7251 = vcombine.high %v7225, %v7233
        %v7253 = vunpack.c.l.s4 1934713408
        %v7254 = vunpack.c.0.s8 %v7253
        %v7255 = vlaneseq
        %v7256 = vshrl.u32 %v7255, 7
        %v7257 = vsub.s32 %v7254, %v7256
        %v7258 = vrot.slane %v7250, %v7257
        %v7260 = vunpack.c.l.s4 1934713408
        %v7261 = vunpack.c.0.s8 %v7260
        %v7262 = vlaneseq
        %v7263 = vshrl.u32 %v7262, 7
        %v7264 = vsub.s32 %v7261, %v7263
        %v7265 = vrot.slane %v7251, %v7264
        %v7266 = vcombine.low %v7241, %v7249
        %v7267 = vcombine.high %v7241, %v7249
        %v7269 = vunpack.c.l.s4 1934713408
        %v7270 = vunpack.c.0.s8 %v7269
        %v7271 = vlaneseq
        %v7272 = vshrl.u32 %v7271, 7
        %v7273 = vsub.s32 %v7270, %v7272
        %v7274 = vrot.slane %v7266, %v7273
        %v7276 = vunpack.c.l.s4 1934713408
        %v7277 = vunpack.c.0.s8 %v7276
        %v7278 = vlaneseq
        %v7279 = vshrl.u32 %v7278, 7
        %v7280 = vsub.s32 %v7277, %v7279
        %v7281 = vrot.slane %v7267, %v7280
        %v7282 = vcombine.low %v7258, %v7274
        %v7283 = vcombine.high %v7258, %v7274
        %v7284 = vcombine.low %v7265, %v7281
        %v7285 = vcombine.high %v7265, %v7281
        %v7286 = vcombine.low %v6238, %v6245
        %v7288 = vunpack.c.l.s4 1983009808
        %v7289 = vunpack.c.0.s8 %v7288
        %v7290 = vlaneseq
        %v7291 = vshrl.u32 %v7290, 7
        %v7292 = vsub.s32 %v7289, %v7291
        %v7293 = vrot.slane %v7286, %v7292
        %v7294 = vcombine.low %v6262, %v6263
        %v7296 = vunpack.c.l.s4 1983009808
        %v7297 = vunpack.c.0.s8 %v7296
        %v7298 = vlaneseq
        %v7299 = vshrl.u32 %v7298, 7
        %v7300 = vsub.s32 %v7297, %v7299
        %v7301 = vrot.slane %v7294, %v7300
        %v7302 = vcombine.low %v6254, %v6261
        %v7304 = vunpack.c.l.s4 1983009808
        %v7305 = vunpack.c.0.s8 %v7304
        %v7306 = vlaneseq
        %v7307 = vshrl.u32 %v7306, 7
        %v7308 = vsub.s32 %v7305, %v7307
        %v7309 = vrot.slane %v7302, %v7308
        %v7310 = vcombine.low %v6264, %v6265
        %v7312 = vunpack.c.l.s4 1983009808
        %v7313 = vunpack.c.0.s8 %v7312
        %v7314 = vlaneseq
        %v7315 = vshrl.u32 %v7314, 7
        %v7316 = vsub.s32 %v7313, %v7315
        %v7317 = vrot.slane %v7310, %v7316
        %v7318 = vcombine.low %v7293, %v7301
        %v7319 = vcombine.high %v7293, %v7301
        %v7321 = vunpack.c.l.s4 1934713408
        %v7322 = vunpack.c.0.s8 %v7321
        %v7323 = vlaneseq
        %v7324 = vshrl.u32 %v7323, 7
        %v7325 = vsub.s32 %v7322, %v7324
        %v7326 = vrot.slane %v7318, %v7325
        %v7328 = vunpack.c.l.s4 1934713408
        %v7329 = vunpack.c.0.s8 %v7328
        %v7330 = vlaneseq
        %v7331 = vshrl.u32 %v7330, 7
        %v7332 = vsub.s32 %v7329, %v7331
        %v7333 = vrot.slane %v7319, %v7332
        %v7334 = vcombine.low %v7309, %v7317
        %v7335 = vcombine.high %v7309, %v7317
        %v7337 = vunpack.c.l.s4 1934713408
        %v7338 = vunpack.c.0.s8 %v7337
        %v7339 = vlaneseq
        %v7340 = vshrl.u32 %v7339, 7
        %v7341 = vsub.s32 %v7338, %v7340
        %v7342 = vrot.slane %v7334, %v7341
        %v7344 = vunpack.c.l.s4 1934713408
        %v7345 = vunpack.c.0.s8 %v7344
        %v7346 = vlaneseq
        %v7347 = vshrl.u32 %v7346, 7
        %v7348 = vsub.s32 %v7345, %v7347
        %v7349 = vrot.slane %v7335, %v7348
        %v7350 = vcombine.low %v7326, %v7342
        %v7351 = vcombine.high %v7326, %v7342
        %v7352 = vcombine.low %v7333, %v7349
        %v7353 = vcombine.high %v7333, %v7349
        %v7354 = vcombine.low %v6306, %v6313
        %v7356 = vunpack.c.l.s4 1983009808
        %v7357 = vunpack.c.0.s8 %v7356
        %v7358 = vlaneseq
        %v7359 = vshrl.u32 %v7358, 7
        %v7360 = vsub.s32 %v7357, %v7359
        %v7361 = vrot.slane %v7354, %v7360
        %v7362 = vcombine.low %v6330, %v6331
        %v7364 = vunpack.c.l.s4 1983009808
        %v7365 = vunpack.c.0.s8 %v7364
        %v7366 = vlaneseq
        %v7367 = vshrl.u32 %v7366, 7
        %v7368 = vsub.s32 %v7365, %v7367
        %v7369 = vrot.slane %v7362, %v7368
        %v7370 = vcombine.low %v6322, %v6329
        %v7372 = vunpack.c.l.s4 1983009808
        %v7373 = vunpack.c.0.s8 %v7372
        %v7374 = vlaneseq
        %v7375 = vshrl.u32 %v7374, 7
        %v7376 = vsub.s32 %v7373, %v7375
        %v7377 = vrot.slane %v7370, %v7376
        %v7378 = vcombine.low %v6332, %v6333
        %v7380 = vunpack.c.l.s4 1983009808
        %v7381 = vunpack.c.0.s8 %v7380
        %v7382 = vlaneseq
        %v7383 = vshrl.u32 %v7382, 7
        %v7384 = vsub.s32 %v7381, %v7383
        %v7385 = vrot.slane %v7378, %v7384
        %v7386 = vcombine.low %v7361, %v7369
        %v7387 = vcombine.high %v7361, %v7369
        %v7389 = vunpack.c.l.s4 1934713408
        %v7390 = vunpack.c.0.s8 %v7389
        %v7391 = vlaneseq
        %v7392 = vshrl.u32 %v7391, 7
        %v7393 = vsub.s32 %v7390, %v7392
        %v7394 = vrot.slane %v7386, %v7393
        %v7396 = vunpack.c.l.s4 1934713408
        %v7397 = vunpack.c.0.s8 %v7396
        %v7398 = vlaneseq
        %v7399 = vshrl.u32 %v7398, 7
        %v7400 = vsub.s32 %v7397, %v7399
        %v7401 = vrot.slane %v7387, %v7400
        %v7402 = vcombine.low %v7377, %v7385
        %v7403 = vcombine.high %v7377, %v7385
        %v7405 = vunpack.c.l.s4 1934713408
        %v7406 = vunpack.c.0.s8 %v7405
        %v7407 = vlaneseq
        %v7408 = vshrl.u32 %v7407, 7
        %v7409 = vsub.s32 %v7406, %v7408
        %v7410 = vrot.slane %v7402, %v7409
        %v7412 = vunpack.c.l.s4 1934713408
        %v7413 = vunpack.c.0.s8 %v7412
        %v7414 = vlaneseq
        %v7415 = vshrl.u32 %v7414, 7
        %v7416 = vsub.s32 %v7413, %v7415
        %v7417 = vrot.slane %v7403, %v7416
        %v7418 = vcombine.low %v7394, %v7410
        %v7419 = vcombine.high %v7394, %v7410
        %v7420 = vcombine.low %v7401, %v7417
        %v7421 = vcombine.high %v7401, %v7417
        %v7422 = vcombine.low %v6374, %v6381
        %v7424 = vunpack.c.l.s4 1983009808
        %v7425 = vunpack.c.0.s8 %v7424
        %v7426 = vlaneseq
        %v7427 = vshrl.u32 %v7426, 7
        %v7428 = vsub.s32 %v7425, %v7427
        %v7429 = vrot.slane %v7422, %v7428
        %v7430 = vcombine.low %v6398, %v6399
        %v7432 = vunpack.c.l.s4 1983009808
        %v7433 = vunpack.c.0.s8 %v7432
        %v7434 = vlaneseq
        %v7435 = vshrl.u32 %v7434, 7
        %v7436 = vsub.s32 %v7433, %v7435
        %v7437 = vrot.slane %v7430, %v7436
        %v7438 = vcombine.low %v6390, %v6397
        %v7440 = vunpack.c.l.s4 1983009808
        %v7441 = vunpack.c.0.s8 %v7440
        %v7442 = vlaneseq
        %v7443 = vshrl.u32 %v7442, 7
        %v7444 = vsub.s32 %v7441, %v7443
        %v7445 = vrot.slane %v7438, %v7444
        %v7446 = vcombine.low %v6400, %v6401
        %v7448 = vunpack.c.l.s4 1983009808
        %v7449 = vunpack.c.0.s8 %v7448
        %v7450 = vlaneseq
        %v7451 = vshrl.u32 %v7450, 7
        %v7452 = vsub.s32 %v7449, %v7451
        %v7453 = vrot.slane %v7446, %v7452
        %v7454 = vcombine.low %v7429, %v7437
        %v7455 = vcombine.high %v7429, %v7437
        %v7457 = vunpack.c.l.s4 1934713408
        %v7458 = vunpack.c.0.s8 %v7457
        %v7459 = vlaneseq
        %v7460 = vshrl.u32 %v7459, 7
        %v7461 = vsub.s32 %v7458, %v7460
        %v7462 = vrot.slane %v7454, %v7461
        %v7464 = vunpack.c.l.s4 1934713408
        %v7465 = vunpack.c.0.s8 %v7464
        %v7466 = vlaneseq
        %v7467 = vshrl.u32 %v7466, 7
        %v7468 = vsub.s32 %v7465, %v7467
        %v7469 = vrot.slane %v7455, %v7468
        %v7470 = vcombine.low %v7445, %v7453
        %v7471 = vcombine.high %v7445, %v7453
        %v7473 = vunpack.c.l.s4 1934713408
        %v7474 = vunpack.c.0.s8 %v7473
        %v7475 = vlaneseq
        %v7476 = vshrl.u32 %v7475, 7
        %v7477 = vsub.s32 %v7474, %v7476
        %v7478 = vrot.slane %v7470, %v7477
        %v7480 = vunpack.c.l.s4 1934713408
        %v7481 = vunpack.c.0.s8 %v7480
        %v7482 = vlaneseq
        %v7483 = vshrl.u32 %v7482, 7
        %v7484 = vsub.s32 %v7481, %v7483
        %v7485 = vrot.slane %v7471, %v7484
        %v7486 = vcombine.low %v7462, %v7478
        %v7487 = vcombine.high %v7462, %v7478
        %v7488 = vcombine.low %v7469, %v7485
        %v7489 = vcombine.high %v7469, %v7485
        %v7490 = vcombine.low %v6442, %v6449
        %v7492 = vunpack.c.l.s4 1983009808
        %v7493 = vunpack.c.0.s8 %v7492
        %v7494 = vlaneseq
        %v7495 = vshrl.u32 %v7494, 7
        %v7496 = vsub.s32 %v7493, %v7495
        %v7497 = vrot.slane %v7490, %v7496
        %v7498 = vcombine.low %v6466, %v6467
        %v7500 = vunpack.c.l.s4 1983009808
        %v7501 = vunpack.c.0.s8 %v7500
        %v7502 = vlaneseq
        %v7503 = vshrl.u32 %v7502, 7
        %v7504 = vsub.s32 %v7501, %v7503
        %v7505 = vrot.slane %v7498, %v7504
        %v7506 = vcombine.low %v6458, %v6465
        %v7508 = vunpack.c.l.s4 1983009808
        %v7509 = vunpack.c.0.s8 %v7508
        %v7510 = vlaneseq
        %v7511 = vshrl.u32 %v7510, 7
        %v7512 = vsub.s32 %v7509, %v7511
        %v7513 = vrot.slane %v7506, %v7512
        %v7514 = vcombine.low %v6468, %v6469
        %v7516 = vunpack.c.l.s4 1983009808
        %v7517 = vunpack.c.0.s8 %v7516
        %v7518 = vlaneseq
        %v7519 = vshrl.u32 %v7518, 7
        %v7520 = vsub.s32 %v7517, %v7519
        %v7521 = vrot.slane %v7514, %v7520
        %v7522 = vcombine.low %v7497, %v7505
        %v7523 = vcombine.high %v7497, %v7505
        %v7525 = vunpack.c.l.s4 1934713408
        %v7526 = vunpack.c.0.s8 %v7525
        %v7527 = vlaneseq
        %v7528 = vshrl.u32 %v7527, 7
        %v7529 = vsub.s32 %v7526, %v7528
        %v7530 = vrot.slane %v7522, %v7529
        %v7532 = vunpack.c.l.s4 1934713408
        %v7533 = vunpack.c.0.s8 %v7532
        %v7534 = vlaneseq
        %v7535 = vshrl.u32 %v7534, 7
        %v7536 = vsub.s32 %v7533, %v7535
        %v7537 = vrot.slane %v7523, %v7536
        %v7538 = vcombine.low %v7513, %v7521
        %v7539 = vcombine.high %v7513, %v7521
        %v7541 = vunpack.c.l.s4 1934713408
        %v7542 = vunpack.c.0.s8 %v7541
        %v7543 = vlaneseq
        %v7544 = vshrl.u32 %v7543, 7
        %v7545 = vsub.s32 %v7542, %v7544
        %v7546 = vrot.slane %v7538, %v7545
        %v7548 = vunpack.c.l.s4 1934713408
        %v7549 = vunpack.c.0.s8 %v7548
        %v7550 = vlaneseq
        %v7551 = vshrl.u32 %v7550, 7
        %v7552 = vsub.s32 %v7549, %v7551
        %v7553 = vrot.slane %v7539, %v7552
        %v7554 = vcombine.low %v7530, %v7546
        %v7555 = vcombine.high %v7530, %v7546
        %v7556 = vcombine.low %v7537, %v7553
        %v7557 = vcombine.high %v7537, %v7553
        %v7558 = vcombine.low %v6510, %v6517
        %v7560 = vunpack.c.l.s4 1983009808
        %v7561 = vunpack.c.0.s8 %v7560
        %v7562 = vlaneseq
        %v7563 = vshrl.u32 %v7562, 7
        %v7564 = vsub.s32 %v7561, %v7563
        %v7565 = vrot.slane %v7558, %v7564
        %v7566 = vcombine.low %v6534, %v6535
        %v7568 = vunpack.c.l.s4 1983009808
        %v7569 = vunpack.c.0.s8 %v7568
        %v7570 = vlaneseq
        %v7571 = vshrl.u32 %v7570, 7
        %v7572 = vsub.s32 %v7569, %v7571
        %v7573 = vrot.slane %v7566, %v7572
        %v7574 = vcombine.low %v6526, %v6533
        %v7576 = vunpack.c.l.s4 1983009808
        %v7577 = vunpack.c.0.s8 %v7576
        %v7578 = vlaneseq
        %v7579 = vshrl.u32 %v7578, 7
        %v7580 = vsub.s32 %v7577, %v7579
        %v7581 = vrot.slane %v7574, %v7580
        %v7582 = vcombine.low %v6536, %v6537
        %v7584 = vunpack.c.l.s4 1983009808
        %v7585 = vunpack.c.0.s8 %v7584
        %v7586 = vlaneseq
        %v7587 = vshrl.u32 %v7586, 7
        %v7588 = vsub.s32 %v7585, %v7587
        %v7589 = vrot.slane %v7582, %v7588
        %v7590 = vcombine.low %v7565, %v7573
        %v7591 = vcombine.high %v7565, %v7573
        %v7593 = vunpack.c.l.s4 1934713408
        %v7594 = vunpack.c.0.s8 %v7593
        %v7595 = vlaneseq
        %v7596 = vshrl.u32 %v7595, 7
        %v7597 = vsub.s32 %v7594, %v7596
        %v7598 = vrot.slane %v7590, %v7597
        %v7600 = vunpack.c.l.s4 1934713408
        %v7601 = vunpack.c.0.s8 %v7600
        %v7602 = vlaneseq
        %v7603 = vshrl.u32 %v7602, 7
        %v7604 = vsub.s32 %v7601, %v7603
        %v7605 = vrot.slane %v7591, %v7604
        %v7606 = vcombine.low %v7581, %v7589
        %v7607 = vcombine.high %v7581, %v7589
        %v7609 = vunpack.c.l.s4 1934713408
        %v7610 = vunpack.c.0.s8 %v7609
        %v7611 = vlaneseq
        %v7612 = vshrl.u32 %v7611, 7
        %v7613 = vsub.s32 %v7610, %v7612
        %v7614 = vrot.slane %v7606, %v7613
        %v7616 = vunpack.c.l.s4 1934713408
        %v7617 = vunpack.c.0.s8 %v7616
        %v7618 = vlaneseq
        %v7619 = vshrl.u32 %v7618, 7
        %v7620 = vsub.s32 %v7617, %v7619
        %v7621 = vrot.slane %v7607, %v7620
        %v7622 = vcombine.low %v7598, %v7614
        %v7623 = vcombine.high %v7598, %v7614
        %v7624 = vcombine.low %v7605, %v7621
        %v7625 = vcombine.high %v7605, %v7621
        %v7626 = vcombine.low %v6578, %v6585
        %v7628 = vunpack.c.l.s4 1983009808
        %v7629 = vunpack.c.0.s8 %v7628
        %v7630 = vlaneseq
        %v7631 = vshrl.u32 %v7630, 7
        %v7632 = vsub.s32 %v7629, %v7631
        %v7633 = vrot.slane %v7626, %v7632
        %v7634 = vcombine.low %v6602, %v6603
        %v7636 = vunpack.c.l.s4 1983009808
        %v7637 = vunpack.c.0.s8 %v7636
        %v7638 = vlaneseq
        %v7639 = vshrl.u32 %v7638, 7
        %v7640 = vsub.s32 %v7637, %v7639
        %v7641 = vrot.slane %v7634, %v7640
        %v7642 = vcombine.low %v6594, %v6601
        %v7644 = vunpack.c.l.s4 1983009808
        %v7645 = vunpack.c.0.s8 %v7644
        %v7646 = vlaneseq
        %v7647 = vshrl.u32 %v7646, 7
        %v7648 = vsub.s32 %v7645, %v7647
        %v7649 = vrot.slane %v7642, %v7648
        %v7650 = vcombine.low %v6604, %v6605
        %v7652 = vunpack.c.l.s4 1983009808
        %v7653 = vunpack.c.0.s8 %v7652
        %v7654 = vlaneseq
        %v7655 = vshrl.u32 %v7654, 7
        %v7656 = vsub.s32 %v7653, %v7655
        %v7657 = vrot.slane %v7650, %v7656
        %v7658 = vcombine.low %v7633, %v7641
        %v7659 = vcombine.high %v7633, %v7641
        %v7661 = vunpack.c.l.s4 1934713408
        %v7662 = vunpack.c.0.s8 %v7661
        %v7663 = vlaneseq
        %v7664 = vshrl.u32 %v7663, 7
        %v7665 = vsub.s32 %v7662, %v7664
        %v7666 = vrot.slane %v7658, %v7665
        %v7668 = vunpack.c.l.s4 1934713408
        %v7669 = vunpack.c.0.s8 %v7668
        %v7670 = vlaneseq
        %v7671 = vshrl.u32 %v7670, 7
        %v7672 = vsub.s32 %v7669, %v7671
        %v7673 = vrot.slane %v7659, %v7672
        %v7674 = vcombine.low %v7649, %v7657
        %v7675 = vcombine.high %v7649, %v7657
        %v7677 = vunpack.c.l.s4 1934713408
        %v7678 = vunpack.c.0.s8 %v7677
        %v7679 = vlaneseq
        %v7680 = vshrl.u32 %v7679, 7
        %v7681 = vsub.s32 %v7678, %v7680
        %v7682 = vrot.slane %v7674, %v7681
        %v7684 = vunpack.c.l.s4 1934713408
        %v7685 = vunpack.c.0.s8 %v7684
        %v7686 = vlaneseq
        %v7687 = vshrl.u32 %v7686, 7
        %v7688 = vsub.s32 %v7685, %v7687
        %v7689 = vrot.slane %v7675, %v7688
        %v7690 = vcombine.low %v7666, %v7682
        %v7691 = vcombine.high %v7666, %v7682
        %v7692 = vcombine.low %v7673, %v7689
        %v7693 = vcombine.high %v7673, %v7689
        %v7694 = vcombine.low %v6646, %v6653
        %v7696 = vunpack.c.l.s4 1983009808
        %v7697 = vunpack.c.0.s8 %v7696
        %v7698 = vlaneseq
        %v7699 = vshrl.u32 %v7698, 7
        %v7700 = vsub.s32 %v7697, %v7699
        %v7701 = vrot.slane %v7694, %v7700
        %v7702 = vcombine.low %v6670, %v6671
        %v7704 = vunpack.c.l.s4 1983009808
        %v7705 = vunpack.c.0.s8 %v7704
        %v7706 = vlaneseq
        %v7707 = vshrl.u32 %v7706, 7
        %v7708 = vsub.s32 %v7705, %v7707
        %v7709 = vrot.slane %v7702, %v7708
        %v7710 = vcombine.low %v6662, %v6669
        %v7712 = vunpack.c.l.s4 1983009808
        %v7713 = vunpack.c.0.s8 %v7712
        %v7714 = vlaneseq
        %v7715 = vshrl.u32 %v7714, 7
        %v7716 = vsub.s32 %v7713, %v7715
        %v7717 = vrot.slane %v7710, %v7716
        %v7718 = vcombine.low %v6672, %v6673
        %v7720 = vunpack.c.l.s4 1983009808
        %v7721 = vunpack.c.0.s8 %v7720
        %v7722 = vlaneseq
        %v7723 = vshrl.u32 %v7722, 7
        %v7724 = vsub.s32 %v7721, %v7723
        %v7725 = vrot.slane %v7718, %v7724
        %v7726 = vcombine.low %v7701, %v7709
        %v7727 = vcombine.high %v7701, %v7709
        %v7729 = vunpack.c.l.s4 1934713408
        %v7730 = vunpack.c.0.s8 %v7729
        %v7731 = vlaneseq
        %v7732 = vshrl.u32 %v7731, 7
        %v7733 = vsub.s32 %v7730, %v7732
        %v7734 = vrot.slane %v7726, %v7733
        %v7736 = vunpack.c.l.s4 1934713408
        %v7737 = vunpack.c.0.s8 %v7736
        %v7738 = vlaneseq
        %v7739 = vshrl.u32 %v7738, 7
        %v7740 = vsub.s32 %v7737, %v7739
        %v7741 = vrot.slane %v7727, %v7740
        %v7742 = vcombine.low %v7717, %v7725
        %v7743 = vcombine.high %v7717, %v7725
        %v7745 = vunpack.c.l.s4 1934713408
        %v7746 = vunpack.c.0.s8 %v7745
        %v7747 = vlaneseq
        %v7748 = vshrl.u32 %v7747, 7
        %v7749 = vsub.s32 %v7746, %v7748
        %v7750 = vrot.slane %v7742, %v7749
        %v7752 = vunpack.c.l.s4 1934713408
        %v7753 = vunpack.c.0.s8 %v7752
        %v7754 = vlaneseq
        %v7755 = vshrl.u32 %v7754, 7
        %v7756 = vsub.s32 %v7753, %v7755
        %v7757 = vrot.slane %v7743, %v7756
        %v7758 = vcombine.low %v7734, %v7750
        %v7759 = vcombine.high %v7734, %v7750
        %v7760 = vcombine.low %v7741, %v7757
        %v7761 = vcombine.high %v7741, %v7757
        %v7762 = vcombine.low %v6714, %v6721
        %v7764 = vunpack.c.l.s4 1983009808
        %v7765 = vunpack.c.0.s8 %v7764
        %v7766 = vlaneseq
        %v7767 = vshrl.u32 %v7766, 7
        %v7768 = vsub.s32 %v7765, %v7767
        %v7769 = vrot.slane %v7762, %v7768
        %v7770 = vcombine.low %v6738, %v6739
        %v7772 = vunpack.c.l.s4 1983009808
        %v7773 = vunpack.c.0.s8 %v7772
        %v7774 = vlaneseq
        %v7775 = vshrl.u32 %v7774, 7
        %v7776 = vsub.s32 %v7773, %v7775
        %v7777 = vrot.slane %v7770, %v7776
        %v7778 = vcombine.low %v6730, %v6737
        %v7780 = vunpack.c.l.s4 1983009808
        %v7781 = vunpack.c.0.s8 %v7780
        %v7782 = vlaneseq
        %v7783 = vshrl.u32 %v7782, 7
        %v7784 = vsub.s32 %v7781, %v7783
        %v7785 = vrot.slane %v7778, %v7784
        %v7786 = vcombine.low %v6740, %v6741
        %v7788 = vunpack.c.l.s4 1983009808
        %v7789 = vunpack.c.0.s8 %v7788
        %v7790 = vlaneseq
        %v7791 = vshrl.u32 %v7790, 7
        %v7792 = vsub.s32 %v7789, %v7791
        %v7793 = vrot.slane %v7786, %v7792
        %v7794 = vcombine.low %v7769, %v7777
        %v7795 = vcombine.high %v7769, %v7777
        %v7797 = vunpack.c.l.s4 1934713408
        %v7798 = vunpack.c.0.s8 %v7797
        %v7799 = vlaneseq
        %v7800 = vshrl.u32 %v7799, 7
        %v7801 = vsub.s32 %v7798, %v7800
        %v7802 = vrot.slane %v7794, %v7801
        %v7804 = vunpack.c.l.s4 1934713408
        %v7805 = vunpack.c.0.s8 %v7804
        %v7806 = vlaneseq
        %v7807 = vshrl.u32 %v7806, 7
        %v7808 = vsub.s32 %v7805, %v7807
        %v7809 = vrot.slane %v7795, %v7808
        %v7810 = vcombine.low %v7785, %v7793
        %v7811 = vcombine.high %v7785, %v7793
        %v7813 = vunpack.c.l.s4 1934713408
        %v7814 = vunpack.c.0.s8 %v7813
        %v7815 = vlaneseq
        %v7816 = vshrl.u32 %v7815, 7
        %v7817 = vsub.s32 %v7814, %v7816
        %v7818 = vrot.slane %v7810, %v7817
        %v7820 = vunpack.c.l.s4 1934713408
        %v7821 = vunpack.c.0.s8 %v7820
        %v7822 = vlaneseq
        %v7823 = vshrl.u32 %v7822, 7
        %v7824 = vsub.s32 %v7821, %v7823
        %v7825 = vrot.slane %v7811, %v7824
        %v7826 = vcombine.low %v7802, %v7818
        %v7827 = vcombine.high %v7802, %v7818
        %v7828 = vcombine.low %v7809, %v7825
        %v7829 = vcombine.high %v7809, %v7825
        %v7830 = vpack.c.bf16 %v6874, %v6806
        %v7831 = vpack.c.bf16 %v7010, %v6942
        %v7832 = vpack.c.bf16 %v7146, %v7078
        %v7833 = vpack.c.bf16 %v7282, %v7214
        %v7834 = vpack.c.bf16 %v7418, %v7350
        %v7835 = vpack.c.bf16 %v7554, %v7486
        %v7836 = vpack.c.bf16 %v7690, %v7622
        %v7837 = vpack.c.bf16 %v7826, %v7758
        %v7838 = vpack.c.bf16 %v6875, %v6807
        %v7839 = vpack.c.bf16 %v7011, %v6943
        %v7840 = vpack.c.bf16 %v7147, %v7079
        %v7841 = vpack.c.bf16 %v7283, %v7215
        %v7842 = vpack.c.bf16 %v7419, %v7351
        %v7843 = vpack.c.bf16 %v7555, %v7487
        %v7844 = vpack.c.bf16 %v7691, %v7623
        %v7845 = vpack.c.bf16 %v7827, %v7759
        %v7846 = vpack.c.bf16 %v6876, %v6808
        %v7847 = vpack.c.bf16 %v7012, %v6944
        %v7848 = vpack.c.bf16 %v7148, %v7080
        %v7849 = vpack.c.bf16 %v7284, %v7216
        %v7850 = vpack.c.bf16 %v7420, %v7352
        %v7851 = vpack.c.bf16 %v7556, %v7488
        %v7852 = vpack.c.bf16 %v7692, %v7624
        %v7853 = vpack.c.bf16 %v7828, %v7760
        %v7854 = vpack.c.bf16 %v6877, %v6809
        %v7855 = vpack.c.bf16 %v7013, %v6945
        %v7856 = vpack.c.bf16 %v7149, %v7081
        %v7857 = vpack.c.bf16 %v7285, %v7217
        %v7858 = vpack.c.bf16 %v7421, %v7353
        %v7859 = vpack.c.bf16 %v7557, %v7489
        %v7860 = vpack.c.bf16 %v7693, %v7625
        %v7861 = vpack.c.bf16 %v7829, %v7761
        %v7863 = vlaneseq
        %v7864 = vshrl.u32 %v7863, 7
        %v7865 = vsub.s32 0, %v7864
        %v7866 = vrot.slane %v2975, %v7865
        %v7869 = vsel %vm1844, %v3122, 0
        %v7872 = vsel %vm1844, %v5462, 0
        %v7875 = vsel %vm1844, %v5463, 0
        %v7878 = vsel %vm1844, %v5464, 0
        %v7881 = vsel %vm1844, %v5465, 0
        %v7884 = vsel %vm1844, %v5466, 0
        %v7887 = vsel %vm1844, %v5467, 0
        %v7890 = vsel %vm1844, %v5468, 0
        %v7893 = vsel %vm1844, %v5469, 0
        %7895 = vmatprep.subr.bf16.mxu0 0
        %7896 = vmatpush1.bf16.xpose.msra.mxu0 %v7872
        %7897 = vmatprep.subr.bf16.mxu0 0
        %7898 = vmatpush1.bf16.xpose.msra.mxu0 %v7875
        %7899 = vmatprep.subr.bf16.mxu0 0
        %7900 = vmatpush1.bf16.xpose.msra.mxu0 %v7878
        %7901 = vmatprep.subr.bf16.mxu0 0
        %7902 = vmatpush1.bf16.xpose.msra.mxu0 %v7881
        %7903 = vmatprep.subr.bf16.mxu0 0
        %7904 = vmatpush1.bf16.xpose.msra.mxu0 %v7884
        %7905 = vmatprep.subr.bf16.mxu0 0
        %7906 = vmatpush1.bf16.xpose.msra.mxu0 %v7887
        %7907 = vmatprep.subr.bf16.mxu0 0
        %7908 = vmatpush1.bf16.xpose.msra.mxu0 %v7890
        %7909 = vmatprep.subr.bf16.mxu0 0
        %7910 = vmatpush1.bf16.xpose.msra.mxu0 %v7893
        %7911 = vmatprep.subr.bf16.mxu0 0
        %7912 = vmatpush1.bf16.xpose.msra.mxu0 0
        %7913 = vmatprep.subr.bf16.mxu0 0
        %7914 = vmatpush1.bf16.xpose.msra.mxu0 0
        %7915 = vmatprep.subr.bf16.mxu0 0
        %7916 = vmatpush1.bf16.xpose.msra.mxu0 0
        %7917 = vmatprep.subr.bf16.mxu0 0
        %7918 = vmatpush1.bf16.xpose.msra.mxu0 0
        %7919 = vmatprep.subr.bf16.mxu0 0
        %7920 = vmatpush1.bf16.xpose.msra.mxu0 0
        %7921 = vmatprep.subr.bf16.mxu0 0
        %7922 = vmatpush1.bf16.xpose.msra.mxu0 0
        %7923 = vmatprep.subr.bf16.mxu0 0
        %7924 = vmatpush1.bf16.xpose.msra.mxu0 0
        %7925 = vmatprep.subr.bf16.mxu0 0
        %7926 = vmatpush1.bf16.xpose.msra.mxu0 0
        %7927 = vmatprep.mubr.bf16.mxu0 0
        %7928 = vmatmul.mubr.bf16.gmra.mrb[0].mxu0 %v7869
        %v7929 = vpop.f32.mrb[0].mxu0
        %v7930 = vadd.f32 %v7866, %v7929
        %v7931 = vpop.f32.mrb[0].mxu0
        %v7932 = vpop.f32.mrb[0].mxu0
        %v7933 = vpop.f32.mrb[0].mxu0
        %7934 = vdwg.mxu0
        %v7936 = vsel %vm1844, %v3123, 0
        %v7939 = vsel %vm1844, %v5470, 0
        %v7942 = vsel %vm1844, %v5471, 0
        %v7945 = vsel %vm1844, %v5472, 0
        %v7948 = vsel %vm1844, %v5473, 0
        %v7951 = vsel %vm1844, %v5474, 0
        %v7954 = vsel %vm1844, %v5475, 0
        %v7957 = vsel %vm1844, %v5476, 0
        %v7960 = vsel %vm1844, %v5477, 0
        %7962 = vmatprep.subr.bf16.mxu0 0
        %7963 = vmatpush1.bf16.xpose.msra.mxu0 %v7939
        %7964 = vmatprep.subr.bf16.mxu0 0
        %7965 = vmatpush1.bf16.xpose.msra.mxu0 %v7942
        %7966 = vmatprep.subr.bf16.mxu0 0
        %7967 = vmatpush1.bf16.xpose.msra.mxu0 %v7945
        %7968 = vmatprep.subr.bf16.mxu0 0
        %7969 = vmatpush1.bf16.xpose.msra.mxu0 %v7948
        %7970 = vmatprep.subr.bf16.mxu0 0
        %7971 = vmatpush1.bf16.xpose.msra.mxu0 %v7951
        %7972 = vmatprep.subr.bf16.mxu0 0
        %7973 = vmatpush1.bf16.xpose.msra.mxu0 %v7954
        %7974 = vmatprep.subr.bf16.mxu0 0
        %7975 = vmatpush1.bf16.xpose.msra.mxu0 %v7957
        %7976 = vmatprep.subr.bf16.mxu0 0
        %7977 = vmatpush1.bf16.xpose.msra.mxu0 %v7960
        %7978 = vmatprep.subr.bf16.mxu0 0
        %7979 = vmatpush1.bf16.xpose.msra.mxu0 0
        %7980 = vmatprep.subr.bf16.mxu0 0
        %7981 = vmatpush1.bf16.xpose.msra.mxu0 0
        %7982 = vmatprep.subr.bf16.mxu0 0
        %7983 = vmatpush1.bf16.xpose.msra.mxu0 0
        %7984 = vmatprep.subr.bf16.mxu0 0
        %7985 = vmatpush1.bf16.xpose.msra.mxu0 0
        %7986 = vmatprep.subr.bf16.mxu0 0
        %7987 = vmatpush1.bf16.xpose.msra.mxu0 0
        %7988 = vmatprep.subr.bf16.mxu0 0
        %7989 = vmatpush1.bf16.xpose.msra.mxu0 0
        %7990 = vmatprep.subr.bf16.mxu0 0
        %7991 = vmatpush1.bf16.xpose.msra.mxu0 0
        %7992 = vmatprep.subr.bf16.mxu0 0
        %7993 = vmatpush1.bf16.xpose.msra.mxu0 0
        %7994 = vmatprep.mubr.bf16.mxu0 0
        %7995 = vmatmul.mubr.bf16.gmra.mrb[0].mxu0 %v7936
        %v7996 = vpop.f32.mrb[0].mxu0
        %v7997 = vadd.f32 %v7866, %v7996
        %v7998 = vpop.f32.mrb[0].mxu0
        %v7999 = vpop.f32.mrb[0].mxu0
        %v8000 = vpop.f32.mrb[0].mxu0
        %8001 = vdwg.mxu0
        %v8003 = vsel %vm1844, %v3124, 0
        %v8006 = vsel %vm1844, %v5478, 0
        %v8009 = vsel %vm1844, %v5479, 0
        %v8012 = vsel %vm1844, %v5480, 0
        %v8015 = vsel %vm1844, %v5481, 0
        %v8018 = vsel %vm1844, %v5482, 0
        %v8021 = vsel %vm1844, %v5483, 0
        %v8024 = vsel %vm1844, %v5484, 0
        %v8027 = vsel %vm1844, %v5485, 0
        %8029 = vmatprep.subr.bf16.mxu0 0
        %8030 = vmatpush1.bf16.xpose.msra.mxu0 %v8006
        %8031 = vmatprep.subr.bf16.mxu0 0
        %8032 = vmatpush1.bf16.xpose.msra.mxu0 %v8009
        %8033 = vmatprep.subr.bf16.mxu0 0
        %8034 = vmatpush1.bf16.xpose.msra.mxu0 %v8012
        %8035 = vmatprep.subr.bf16.mxu0 0
        %8036 = vmatpush1.bf16.xpose.msra.mxu0 %v8015
        %8037 = vmatprep.subr.bf16.mxu0 0
        %8038 = vmatpush1.bf16.xpose.msra.mxu0 %v8018
        %8039 = vmatprep.subr.bf16.mxu0 0
        %8040 = vmatpush1.bf16.xpose.msra.mxu0 %v8021
        %8041 = vmatprep.subr.bf16.mxu0 0
        %8042 = vmatpush1.bf16.xpose.msra.mxu0 %v8024
        %8043 = vmatprep.subr.bf16.mxu0 0
        %8044 = vmatpush1.bf16.xpose.msra.mxu0 %v8027
        %8045 = vmatprep.subr.bf16.mxu0 0
        %8046 = vmatpush1.bf16.xpose.msra.mxu0 0
        %8047 = vmatprep.subr.bf16.mxu0 0
        %8048 = vmatpush1.bf16.xpose.msra.mxu0 0
        %8049 = vmatprep.subr.bf16.mxu0 0
        %8050 = vmatpush1.bf16.xpose.msra.mxu0 0
        %8051 = vmatprep.subr.bf16.mxu0 0
        %8052 = vmatpush1.bf16.xpose.msra.mxu0 0
        %8053 = vmatprep.subr.bf16.mxu0 0
        %8054 = vmatpush1.bf16.xpose.msra.mxu0 0
        %8055 = vmatprep.subr.bf16.mxu0 0
        %8056 = vmatpush1.bf16.xpose.msra.mxu0 0
        %8057 = vmatprep.subr.bf16.mxu0 0
        %8058 = vmatpush1.bf16.xpose.msra.mxu0 0
        %8059 = vmatprep.subr.bf16.mxu0 0
        %8060 = vmatpush1.bf16.xpose.msra.mxu0 0
        %8061 = vmatprep.mubr.bf16.mxu0 0
        %8062 = vmatmul.mubr.bf16.gmra.mrb[0].mxu0 %v8003
        %v8063 = vpop.f32.mrb[0].mxu0
        %v8064 = vadd.f32 %v7866, %v8063
        %v8065 = vpop.f32.mrb[0].mxu0
        %v8066 = vpop.f32.mrb[0].mxu0
        %v8067 = vpop.f32.mrb[0].mxu0
        %8068 = vdwg.mxu0
        %v8070 = vsel %vm1844, %v3125, 0
        %v8073 = vsel %vm1844, %v5486, 0
        %v8076 = vsel %vm1844, %v5487, 0
        %v8079 = vsel %vm1844, %v5488, 0
        %v8082 = vsel %vm1844, %v5489, 0
        %v8085 = vsel %vm1844, %v5490, 0
        %v8088 = vsel %vm1844, %v5491, 0
        %v8091 = vsel %vm1844, %v5492, 0
        %v8094 = vsel %vm1844, %v5493, 0
        %8096 = vmatprep.subr.bf16.mxu0 0
        %8097 = vmatpush1.bf16.xpose.msra.mxu0 %v8073
        %8098 = vmatprep.subr.bf16.mxu0 0
        %8099 = vmatpush1.bf16.xpose.msra.mxu0 %v8076
        %8100 = vmatprep.subr.bf16.mxu0 0
        %8101 = vmatpush1.bf16.xpose.msra.mxu0 %v8079
        %8102 = vmatprep.subr.bf16.mxu0 0
        %8103 = vmatpush1.bf16.xpose.msra.mxu0 %v8082
        %8104 = vmatprep.subr.bf16.mxu0 0
        %8105 = vmatpush1.bf16.xpose.msra.mxu0 %v8085
        %8106 = vmatprep.subr.bf16.mxu0 0
        %8107 = vmatpush1.bf16.xpose.msra.mxu0 %v8088
        %8108 = vmatprep.subr.bf16.mxu0 0
        %8109 = vmatpush1.bf16.xpose.msra.mxu0 %v8091
        %8110 = vmatprep.subr.bf16.mxu0 0
        %8111 = vmatpush1.bf16.xpose.msra.mxu0 %v8094
        %8112 = vmatprep.subr.bf16.mxu0 0
        %8113 = vmatpush1.bf16.xpose.msra.mxu0 0
        %8114 = vmatprep.subr.bf16.mxu0 0
        %8115 = vmatpush1.bf16.xpose.msra.mxu0 0
        %8116 = vmatprep.subr.bf16.mxu0 0
        %8117 = vmatpush1.bf16.xpose.msra.mxu0 0
        %8118 = vmatprep.subr.bf16.mxu0 0
        %8119 = vmatpush1.bf16.xpose.msra.mxu0 0
        %8120 = vmatprep.subr.bf16.mxu0 0
        %8121 = vmatpush1.bf16.xpose.msra.mxu0 0
        %8122 = vmatprep.subr.bf16.mxu0 0
        %8123 = vmatpush1.bf16.xpose.msra.mxu0 0
        %8124 = vmatprep.subr.bf16.mxu0 0
        %8125 = vmatpush1.bf16.xpose.msra.mxu0 0
        %8126 = vmatprep.subr.bf16.mxu0 0
        %8127 = vmatpush1.bf16.xpose.msra.mxu0 0
        %8128 = vmatprep.mubr.bf16.mxu0 0
        %8129 = vmatmul.mubr.bf16.gmra.mrb[0].mxu0 %v8070
        %v8130 = vpop.f32.mrb[0].mxu0
        %v8131 = vadd.f32 %v7866, %v8130
        %v8132 = vpop.f32.mrb[0].mxu0
        %v8133 = vpop.f32.mrb[0].mxu0
        %v8134 = vpop.f32.mrb[0].mxu0
        %8135 = vdwg.mxu0
        %8136 = vmax.xlane.f32.xlu0 %v7930
        %v8137 = vpop.xlane.xlu0 %8136
        %8138 = vmax.xlane.f32.xlu0 %v7997
        %v8139 = vpop.xlane.xlu0 %8138
        %8140 = vmax.xlane.f32.xlu0 %v8064
        %v8141 = vpop.xlane.xlu0 %8140
        %8142 = vmax.xlane.f32.xlu0 %v8131
        %v8143 = vpop.xlane.xlu0 %8142
        %v8144 = vsub.f32 %v7930, %v8137
        %v8145 = vsub.f32 %v7997, %v8139
        %v8146 = vsub.f32 %v8064, %v8141
        %v8147 = vsub.f32 %v8131, %v8143
        %v8148 = vmul.f32 %v8144, 1.442695
        %v8149 = vpow.pop %v8148
        %v8150 = vmul.f32 %v8145, 1.442695
        %v8151 = vpow.pop %v8150
        %v8152 = vmul.f32 %v8146, 1.442695
        %v8153 = vpow.pop %v8152
        %v8154 = vmul.f32 %v8147, 1.442695
        %v8155 = vpow.pop %v8154
        %8156 = vadd.xlane.f32.xlu0 %v8149
        %v8157 = vpop.xlane.xlu0 %8156
        %8158 = vadd.xlane.f32.xlu0 %v8151
        %v8159 = vpop.xlane.xlu0 %8158
        %8160 = vadd.xlane.f32.xlu0 %v8153
        %v8161 = vpop.xlane.xlu0 %8160
        %8162 = vadd.xlane.f32.xlu0 %v8155
        %v8163 = vpop.xlane.xlu0 %8162
        %v8164 = vrcp.pop %v8157
        %v8165 = vrcp.pop %v8159
        %v8166 = vrcp.pop %v8161
        %v8167 = vrcp.pop %v8163
        %v8168 = vmul.f32 %v8149, %v8164
        %v8169 = vmul.f32 %v8151, %v8165
        %v8170 = vmul.f32 %v8153, %v8166
        %v8171 = vmul.f32 %v8155, %v8167
        %v8172 = vpack.c.bf16 %v8168, %v8168
        %v8173 = vpack.c.bf16 %v8169, %v8169
        %v8174 = vpack.c.bf16 %v8170, %v8170
        %v8175 = vpack.c.bf16 %v8171, %v8171
        %8176 = vmatprep.subr.bf16.mxu0 0
        %8177 = vmatpush1.bf16.msra.mxu0 %v7830
        %8178 = vmatprep.subr.bf16.mxu0 0
        %8179 = vmatpush1.bf16.msra.mxu0 %v7831
        %8180 = vmatprep.subr.bf16.mxu0 0
        %8181 = vmatpush1.bf16.msra.mxu0 %v7832
        %8182 = vmatprep.subr.bf16.mxu0 0
        %8183 = vmatpush1.bf16.msra.mxu0 %v7833
        %8184 = vmatprep.subr.bf16.mxu0 0
        %8185 = vmatpush1.bf16.msra.mxu0 %v7834
        %8186 = vmatprep.subr.bf16.mxu0 0
        %8187 = vmatpush1.bf16.msra.mxu0 %v7835
        %8188 = vmatprep.subr.bf16.mxu0 0
        %8189 = vmatpush1.bf16.msra.mxu0 %v7836
        %8190 = vmatprep.subr.bf16.mxu0 0
        %8191 = vmatpush1.bf16.msra.mxu0 %v7837
        %8192 = vmatprep.subr.bf16.mxu0 0
        %8193 = vmatpush1.bf16.msra.mxu0 0
        %8194 = vmatprep.subr.bf16.mxu0 0
        %8195 = vmatpush1.bf16.msra.mxu0 0
        %8196 = vmatprep.subr.bf16.mxu0 0
        %8197 = vmatpush1.bf16.msra.mxu0 0
        %8198 = vmatprep.subr.bf16.mxu0 0
        %8199 = vmatpush1.bf16.msra.mxu0 0
        %8200 = vmatprep.subr.bf16.mxu0 0
        %8201 = vmatpush1.bf16.msra.mxu0 0
        %8202 = vmatprep.subr.bf16.mxu0 0
        %8203 = vmatpush1.bf16.msra.mxu0 0
        %8204 = vmatprep.subr.bf16.mxu0 0
        %8205 = vmatpush1.bf16.msra.mxu0 0
        %8206 = vmatprep.subr.bf16.mxu0 0
        %8207 = vmatpush1.bf16.msra.mxu0 0
        %8208 = vmatprep.mubr.bf16.mxu0 0
        %8209 = vmatmul.mubr.bf16.gmra.mrb[0].mxu0 %v8172
        %v8210 = vpop.f32.mrb[0].mxu0
        %v8211 = vadd.f32 0.0, %v8210
        %v8212 = vpop.f32.mrb[0].mxu0
        %v8213 = vpop.f32.mrb[0].mxu0
        %v8214 = vpop.f32.mrb[0].mxu0
        %8215 = vdwg.mxu0
        %8216 = vmatprep.subr.bf16.mxu0 0
        %8217 = vmatpush1.bf16.msra.mxu0 %v7838
        %8218 = vmatprep.subr.bf16.mxu0 0
        %8219 = vmatpush1.bf16.msra.mxu0 %v7839
        %8220 = vmatprep.subr.bf16.mxu0 0
        %8221 = vmatpush1.bf16.msra.mxu0 %v7840
        %8222 = vmatprep.subr.bf16.mxu0 0
        %8223 = vmatpush1.bf16.msra.mxu0 %v7841
        %8224 = vmatprep.subr.bf16.mxu0 0
        %8225 = vmatpush1.bf16.msra.mxu0 %v7842
        %8226 = vmatprep.subr.bf16.mxu0 0
        %8227 = vmatpush1.bf16.msra.mxu0 %v7843
        %8228 = vmatprep.subr.bf16.mxu0 0
        %8229 = vmatpush1.bf16.msra.mxu0 %v7844
        %8230 = vmatprep.subr.bf16.mxu0 0
        %8231 = vmatpush1.bf16.msra.mxu0 %v7845
        %8232 = vmatprep.subr.bf16.mxu0 0
        %8233 = vmatpush1.bf16.msra.mxu0 0
        %8234 = vmatprep.subr.bf16.mxu0 0
        %8235 = vmatpush1.bf16.msra.mxu0 0
        %8236 = vmatprep.subr.bf16.mxu0 0
        %8237 = vmatpush1.bf16.msra.mxu0 0
        %8238 = vmatprep.subr.bf16.mxu0 0
        %8239 = vmatpush1.bf16.msra.mxu0 0
        %8240 = vmatprep.subr.bf16.mxu0 0
        %8241 = vmatpush1.bf16.msra.mxu0 0
        %8242 = vmatprep.subr.bf16.mxu0 0
        %8243 = vmatpush1.bf16.msra.mxu0 0
        %8244 = vmatprep.subr.bf16.mxu0 0
        %8245 = vmatpush1.bf16.msra.mxu0 0
        %8246 = vmatprep.subr.bf16.mxu0 0
        %8247 = vmatpush1.bf16.msra.mxu0 0
        %8248 = vmatprep.mubr.bf16.mxu0 0
        %8249 = vmatmul.mubr.bf16.gmra.mrb[0].mxu0 %v8173
        %v8250 = vpop.f32.mrb[0].mxu0
        %v8251 = vadd.f32 0.0, %v8250
        %v8252 = vpop.f32.mrb[0].mxu0
        %v8253 = vpop.f32.mrb[0].mxu0
        %v8254 = vpop.f32.mrb[0].mxu0
        %8255 = vdwg.mxu0
        %8256 = vmatprep.subr.bf16.mxu0 0
        %8257 = vmatpush1.bf16.msra.mxu0 %v7846
        %8258 = vmatprep.subr.bf16.mxu0 0
        %8259 = vmatpush1.bf16.msra.mxu0 %v7847
        %8260 = vmatprep.subr.bf16.mxu0 0
        %8261 = vmatpush1.bf16.msra.mxu0 %v7848
        %8262 = vmatprep.subr.bf16.mxu0 0
        %8263 = vmatpush1.bf16.msra.mxu0 %v7849
        %8264 = vmatprep.subr.bf16.mxu0 0
        %8265 = vmatpush1.bf16.msra.mxu0 %v7850
        %8266 = vmatprep.subr.bf16.mxu0 0
        %8267 = vmatpush1.bf16.msra.mxu0 %v7851
        %8268 = vmatprep.subr.bf16.mxu0 0
        %8269 = vmatpush1.bf16.msra.mxu0 %v7852
        %8270 = vmatprep.subr.bf16.mxu0 0
        %8271 = vmatpush1.bf16.msra.mxu0 %v7853
        %8272 = vmatprep.subr.bf16.mxu0 0
        %8273 = vmatpush1.bf16.msra.mxu0 0
        %8274 = vmatprep.subr.bf16.mxu0 0
        %8275 = vmatpush1.bf16.msra.mxu0 0
        %8276 = vmatprep.subr.bf16.mxu0 0
        %8277 = vmatpush1.bf16.msra.mxu0 0
        %8278 = vmatprep.subr.bf16.mxu0 0
        %8279 = vmatpush1.bf16.msra.mxu0 0
        %8280 = vmatprep.subr.bf16.mxu0 0
        %8281 = vmatpush1.bf16.msra.mxu0 0
        %8282 = vmatprep.subr.bf16.mxu0 0
        %8283 = vmatpush1.bf16.msra.mxu0 0
        %8284 = vmatprep.subr.bf16.mxu0 0
        %8285 = vmatpush1.bf16.msra.mxu0 0
        %8286 = vmatprep.subr.bf16.mxu0 0
        %8287 = vmatpush1.bf16.msra.mxu0 0
        %8288 = vmatprep.mubr.bf16.mxu0 0
        %8289 = vmatmul.mubr.bf16.gmra.mrb[0].mxu0 %v8174
        %v8290 = vpop.f32.mrb[0].mxu0
        %v8291 = vadd.f32 0.0, %v8290
        %v8292 = vpop.f32.mrb[0].mxu0
        %v8293 = vpop.f32.mrb[0].mxu0
        %v8294 = vpop.f32.mrb[0].mxu0
        %8295 = vdwg.mxu0
        %8296 = vmatprep.subr.bf16.mxu0 0
        %8297 = vmatpush1.bf16.msra.mxu0 %v7854
        %8298 = vmatprep.subr.bf16.mxu0 0
        %8299 = vmatpush1.bf16.msra.mxu0 %v7855
        %8300 = vmatprep.subr.bf16.mxu0 0
        %8301 = vmatpush1.bf16.msra.mxu0 %v7856
        %8302 = vmatprep.subr.bf16.mxu0 0
        %8303 = vmatpush1.bf16.msra.mxu0 %v7857
        %8304 = vmatprep.subr.bf16.mxu0 0
        %8305 = vmatpush1.bf16.msra.mxu0 %v7858
        %8306 = vmatprep.subr.bf16.mxu0 0
        %8307 = vmatpush1.bf16.msra.mxu0 %v7859
        %8308 = vmatprep.subr.bf16.mxu0 0
        %8309 = vmatpush1.bf16.msra.mxu0 %v7860
        %8310 = vmatprep.subr.bf16.mxu0 0
        %8311 = vmatpush1.bf16.msra.mxu0 %v7861
        %8312 = vmatprep.subr.bf16.mxu0 0
        %8313 = vmatpush1.bf16.msra.mxu0 0
        %8314 = vmatprep.subr.bf16.mxu0 0
        %8315 = vmatpush1.bf16.msra.mxu0 0
        %8316 = vmatprep.subr.bf16.mxu0 0
        %8317 = vmatpush1.bf16.msra.mxu0 0
        %8318 = vmatprep.subr.bf16.mxu0 0
        %8319 = vmatpush1.bf16.msra.mxu0 0
        %8320 = vmatprep.subr.bf16.mxu0 0
        %8321 = vmatpush1.bf16.msra.mxu0 0
        %8322 = vmatprep.subr.bf16.mxu0 0
        %8323 = vmatpush1.bf16.msra.mxu0 0
        %8324 = vmatprep.subr.bf16.mxu0 0
        %8325 = vmatpush1.bf16.msra.mxu0 0
        %8326 = vmatprep.subr.bf16.mxu0 0
        %8327 = vmatpush1.bf16.msra.mxu0 0
        %8328 = vmatprep.mubr.bf16.mxu0 0
        %8329 = vmatmul.mubr.bf16.gmra.mrb[0].mxu0 %v8175
        %v8330 = vpop.f32.mrb[0].mxu0
        %v8331 = vadd.f32 0.0, %v8330
        %v8332 = vpop.f32.mrb[0].mxu0
        %v8333 = vpop.f32.mrb[0].mxu0
        %v8334 = vpop.f32.mrb[0].mxu0
        %8335 = vdwg.mxu0
        %v8336 = vcombine.low %v8211, %v8291
        %v8337 = vcombine.high %v8211, %v8291
        %v8339 = vunpack.c.l.s4 1983009808
        %v8340 = vunpack.c.0.s8 %v8339
        %v8341 = vlaneseq
        %v8342 = vshrl.u32 %v8341, 7
        %v8343 = vsub.s32 %v8340, %v8342
        %v8344 = vrot.slane %v8336, %v8343
        %v8346 = vunpack.c.l.s4 1983009808
        %v8347 = vunpack.c.0.s8 %v8346
        %v8348 = vlaneseq
        %v8349 = vshrl.u32 %v8348, 7
        %v8350 = vsub.s32 %v8347, %v8349
        %v8351 = vrot.slane %v8337, %v8350
        %v8352 = vcombine.low %v8251, %v8331
        %v8353 = vcombine.high %v8251, %v8331
        %v8355 = vunpack.c.l.s4 1983009808
        %v8356 = vunpack.c.0.s8 %v8355
        %v8357 = vlaneseq
        %v8358 = vshrl.u32 %v8357, 7
        %v8359 = vsub.s32 %v8356, %v8358
        %v8360 = vrot.slane %v8352, %v8359
        %v8362 = vunpack.c.l.s4 1983009808
        %v8363 = vunpack.c.0.s8 %v8362
        %v8364 = vlaneseq
        %v8365 = vshrl.u32 %v8364, 7
        %v8366 = vsub.s32 %v8363, %v8365
        %v8367 = vrot.slane %v8353, %v8366
        %v8368 = vcombine.low %v8344, %v8360
        %v8369 = vcombine.high %v8344, %v8360
        %v8371 = vunpack.c.l.s4 1934713408
        %v8372 = vunpack.c.0.s8 %v8371
        %v8373 = vlaneseq
        %v8374 = vshrl.u32 %v8373, 7
        %v8375 = vsub.s32 %v8372, %v8374
        %v8376 = vrot.slane %v8368, %v8375
        %v8378 = vunpack.c.l.s4 1934713408
        %v8379 = vunpack.c.0.s8 %v8378
        %v8380 = vlaneseq
        %v8381 = vshrl.u32 %v8380, 7
        %v8382 = vsub.s32 %v8379, %v8381
        %v8383 = vrot.slane %v8369, %v8382
        %v8384 = vcombine.low %v8351, %v8367
        %v8385 = vcombine.high %v8351, %v8367
        %v8387 = vunpack.c.l.s4 1934713408
        %v8388 = vunpack.c.0.s8 %v8387
        %v8389 = vlaneseq
        %v8390 = vshrl.u32 %v8389, 7
        %v8391 = vsub.s32 %v8388, %v8390
        %v8392 = vrot.slane %v8384, %v8391
        %v8394 = vunpack.c.l.s4 1934713408
        %v8395 = vunpack.c.0.s8 %v8394
        %v8396 = vlaneseq
        %v8397 = vshrl.u32 %v8396, 7
        %v8398 = vsub.s32 %v8395, %v8397
        %v8399 = vrot.slane %v8385, %v8398
        %v8400 = vcombine.high %v8376, 0.0
        %v8401 = vcombine.high %v8383, 0.0
        %v8402 = vcombine.high %v8392, 0.0
        %v8403 = vcombine.high %v8399, 0.0
        %v8404 = vcombine.low %v8376, %v8383
        %v8406 = vunpack.c.l.s4 1983009808
        %v8407 = vunpack.c.0.s8 %v8406
        %v8408 = vlaneseq
        %v8409 = vshrl.u32 %v8408, 7
        %v8410 = vsub.s32 %v8407, %v8409
        %v8411 = vrot.slane %v8404, %v8410
        %v8412 = vcombine.low %v8400, %v8401
        %v8414 = vunpack.c.l.s4 1983009808
        %v8415 = vunpack.c.0.s8 %v8414
        %v8416 = vlaneseq
        %v8417 = vshrl.u32 %v8416, 7
        %v8418 = vsub.s32 %v8415, %v8417
        %v8419 = vrot.slane %v8412, %v8418
        %v8420 = vcombine.low %v8392, %v8399
        %v8422 = vunpack.c.l.s4 1983009808
        %v8423 = vunpack.c.0.s8 %v8422
        %v8424 = vlaneseq
        %v8425 = vshrl.u32 %v8424, 7
        %v8426 = vsub.s32 %v8423, %v8425
        %v8427 = vrot.slane %v8420, %v8426
        %v8428 = vcombine.low %v8402, %v8403
        %v8430 = vunpack.c.l.s4 1983009808
        %v8431 = vunpack.c.0.s8 %v8430
        %v8432 = vlaneseq
        %v8433 = vshrl.u32 %v8432, 7
        %v8434 = vsub.s32 %v8431, %v8433
        %v8435 = vrot.slane %v8428, %v8434
        %v8436 = vcombine.low %v8411, %v8419
        %v8437 = vcombine.high %v8411, %v8419
        %v8439 = vunpack.c.l.s4 1934713408
        %v8440 = vunpack.c.0.s8 %v8439
        %v8441 = vlaneseq
        %v8442 = vshrl.u32 %v8441, 7
        %v8443 = vsub.s32 %v8440, %v8442
        %v8444 = vrot.slane %v8436, %v8443
        %v8446 = vunpack.c.l.s4 1934713408
        %v8447 = vunpack.c.0.s8 %v8446
        %v8448 = vlaneseq
        %v8449 = vshrl.u32 %v8448, 7
        %v8450 = vsub.s32 %v8447, %v8449
        %v8451 = vrot.slane %v8437, %v8450
        %v8452 = vcombine.low %v8427, %v8435
        %v8453 = vcombine.high %v8427, %v8435
        %v8455 = vunpack.c.l.s4 1934713408
        %v8456 = vunpack.c.0.s8 %v8455
        %v8457 = vlaneseq
        %v8458 = vshrl.u32 %v8457, 7
        %v8459 = vsub.s32 %v8456, %v8458
        %v8460 = vrot.slane %v8452, %v8459
        %v8462 = vunpack.c.l.s4 1934713408
        %v8463 = vunpack.c.0.s8 %v8462
        %v8464 = vlaneseq
        %v8465 = vshrl.u32 %v8464, 7
        %v8466 = vsub.s32 %v8463, %v8465
        %v8467 = vrot.slane %v8453, %v8466
        %v8468 = vcombine.low %v8444, %v8460
        %v8469 = vcombine.high %v8444, %v8460
        %v8470 = vcombine.low %v8451, %v8467
        %v8471 = vcombine.high %v8451, %v8467
        %8473 = vrot.lane.b32.xlu0 %v8469, 8
        %v8474 = vpop.permute.xlu0 %8473
        %8477 = vrot.lane.b32.xlu0 %v8470, 16
        %v8478 = vpop.permute.xlu0 %8477
        %8481 = vrot.lane.b32.xlu0 %v8471, 24
        %v8482 = vpop.permute.xlu0 %8481
        %v8484 = vsel %vm1844, %v8468, %v8474
        %v8485 = vsel %vm2411, %v8484, %v8478
        %v8486 = vsel %vm2413, %v8485, %v8482
        %v8487 = vpack.c.bf16 %v8486, %v8486
        %v8489 = vlaneseq
        %v8490 = vshrl.u32 %v8489, 7
        %v8491 = vsub.s32 0, %v8490
        %v8492 = vrot.slane %v2974, %v8491
        %v8498 = vunpack.c.l.b16 %v2970
        %v8499 = vunpack.c.l.b16 %v2971
        %v8500 = vunpack.c.l.b16 %v2972
        %v8501 = vunpack.c.l.b16 %v2973
        %v8502 = vpack.c.b16 %v8499, %v8498
        %v8503 = vpack.c.b16 %v8501, %v8500
        %v8507 = vsel %vm1276, %v8487, 0
        %8509 = vmatprep.subr.bf16.mxu0 0
        %8510 = vmatpush1.bf16.msra.mxu0 %v8502
        %8511 = vmatprep.subr.bf16.mxu0 0
        %8512 = vmatpush1.bf16.msra.mxu0 %v8503
        %8513 = vmatprep.subr.bf16.mxu0 0
        %8514 = vmatpush1.bf16.msra.mxu0 0
        %8515 = vmatprep.subr.bf16.mxu0 0
        %8516 = vmatpush1.bf16.msra.mxu0 0
        %8517 = vmatprep.subr.bf16.mxu0 0
        %8518 = vmatpush1.bf16.msra.mxu0 0
        %8519 = vmatprep.subr.bf16.mxu0 0
        %8520 = vmatpush1.bf16.msra.mxu0 0
        %8521 = vmatprep.subr.bf16.mxu0 0
        %8522 = vmatpush1.bf16.msra.mxu0 0
        %8523 = vmatprep.subr.bf16.mxu0 0
        %8524 = vmatpush1.bf16.msra.mxu0 0
        %8525 = vmatprep.subr.bf16.mxu0 0
        %8526 = vmatpush1.bf16.msra.mxu0 0
        %8527 = vmatprep.subr.bf16.mxu0 0
        %8528 = vmatpush1.bf16.msra.mxu0 0
        %8529 = vmatprep.subr.bf16.mxu0 0
        %8530 = vmatpush1.bf16.msra.mxu0 0
        %8531 = vmatprep.subr.bf16.mxu0 0
        %8532 = vmatpush1.bf16.msra.mxu0 0
        %8533 = vmatprep.subr.bf16.mxu0 0
        %8534 = vmatpush1.bf16.msra.mxu0 0
        %8535 = vmatprep.subr.bf16.mxu0 0
        %8536 = vmatpush1.bf16.msra.mxu0 0
        %8537 = vmatprep.subr.bf16.mxu0 0
        %8538 = vmatpush1.bf16.msra.mxu0 0
        %8539 = vmatprep.subr.bf16.mxu0 0
        %8540 = vmatpush1.bf16.msra.mxu0 0
        %8541 = vmatprep.mubr.bf16.mxu0 0
        %8542 = vmatmul.mubr.bf16.gmra.mrb[0].mxu0 %v8507
        %v8543 = vpop.f32.mrb[0].mxu0
        %v8544 = vadd.f32 %v8492, %v8543
        %v8545 = vpop.f32.mrb[0].mxu0
        %v8546 = vpop.f32.mrb[0].mxu0
        %v8547 = vpop.f32.mrb[0].mxu0
        %8548 = vdwg.mxu0
        %v8549 = vadd.f32 %v2501, %v8544
        %v8550 = vsel %vm1276, %v8549, 0.0
        %8551 = vadd.xlane.f32.xlu0 %v8550
        %v8552 = vpop.xlane.xlu0 %8551
        %v8553 = vmul.f32 %v8552, %v2481
        %v8554 = vsub.f32 %v8549, %v8553
        %v8555 = vmul.f32 %v8554, %v8554
        %v8556 = vsel %vm1276, %v8555, 0.0
        %8557 = vadd.xlane.f32.xlu0 %v8556
        %v8558 = vpop.xlane.xlu0 %8557
        %v8559 = vmul.f32 %v8558, %v2481
        %v8560 = vadd.f32 %v8559, 1e-05
        %v8561 = vrsqrt.pop %v8560
        %v8562 = vmul.f32 %v8554, %v8561
        %v8563 = vlaneseq
        %v8564 = vshrl.u32 %v8563, 7
        %v8565 = vsub.s32 1, %v8564
        %v8566 = vrot.slane %v1249, %v8565
        %v8567 = vmul.f32 %v8562, %v8566
        %v8568 = vlaneseq
        %v8569 = vshrl.u32 %v8568, 7
        %v8570 = vsub.s32 1, %v8569
        %v8571 = vrot.slane %v1250, %v8570
        %v8572 = vadd.f32 %v8567, %v8571
        %v8573 = vpack.c.bf16 %v8572, %v8572
        %v8574 = vld [vmem:[%s1219] sm:$0xf]
        %v8575 = vld [vmem:[%s1219 + $0x4] sm:$0xf]
        %v8576 = vld [vmem:[%s1219 + $0x8] sm:$0xf]
        %v8577 = vld [vmem:[%s1219 + $0xc] sm:$0xf]
        %v8578 = vld [vmem:[%s1222] sm:$0x1]
        %v8580 = vlaneseq
        %v8581 = vshrl.u32 %v8580, 7
        %v8582 = vsub.s32 0, %v8581
        %v8583 = vrot.slane %v8578, %v8582
        %v8589 = vunpack.c.l.b16 %v8574
        %v8590 = vunpack.c.l.b16 %v8575
        %v8591 = vunpack.c.l.b16 %v8576
        %v8592 = vunpack.c.l.b16 %v8577
        %v8593 = vpack.c.b16 %v8590, %v8589
        %v8594 = vpack.c.b16 %v8592, %v8591
        %v8598 = vsel %vm1276, %v8573, 0
        %8600 = vmatprep.subr.bf16.mxu0 0
        %8601 = vmatpush1.bf16.msra.mxu0 %v8593
        %8602 = vmatprep.subr.bf16.mxu0 0
        %8603 = vmatpush1.bf16.msra.mxu0 %v8594
        %8604 = vmatprep.subr.bf16.mxu0 0
        %8605 = vmatpush1.bf16.msra.mxu0 0
        %8606 = vmatprep.subr.bf16.mxu0 0
        %8607 = vmatpush1.bf16.msra.mxu0 0
        %8608 = vmatprep.subr.bf16.mxu0 0
        %8609 = vmatpush1.bf16.msra.mxu0 0
        %8610 = vmatprep.subr.bf16.mxu0 0
        %8611 = vmatpush1.bf16.msra.mxu0 0
        %8612 = vmatprep.subr.bf16.mxu0 0
        %8613 = vmatpush1.bf16.msra.mxu0 0
        %8614 = vmatprep.subr.bf16.mxu0 0
        %8615 = vmatpush1.bf16.msra.mxu0 0
        %8616 = vmatprep.subr.bf16.mxu0 0
        %8617 = vmatpush1.bf16.msra.mxu0 0
        %8618 = vmatprep.subr.bf16.mxu0 0
        %8619 = vmatpush1.bf16.msra.mxu0 0
        %8620 = vmatprep.subr.bf16.mxu0 0
        %8621 = vmatpush1.bf16.msra.mxu0 0
        %8622 = vmatprep.subr.bf16.mxu0 0
        %8623 = vmatpush1.bf16.msra.mxu0 0
        %8624 = vmatprep.subr.bf16.mxu0 0
        %8625 = vmatpush1.bf16.msra.mxu0 0
        %8626 = vmatprep.subr.bf16.mxu0 0
        %8627 = vmatpush1.bf16.msra.mxu0 0
        %8628 = vmatprep.subr.bf16.mxu0 0
        %8629 = vmatpush1.bf16.msra.mxu0 0
        %8630 = vmatprep.subr.bf16.mxu0 0
        %8631 = vmatpush1.bf16.msra.mxu0 0
        %8632 = vmatprep.mubr.bf16.mxu0 0
        %8633 = vmatmul.mubr.bf16.gmra.mrb[0].mxu0 %v8598
        %v8634 = vpop.f32.mrb[0].mxu0
        %v8635 = vadd.f32 %v8583, %v8634
        %v8636 = vpop.f32.mrb[0].mxu0
        %v8637 = vpop.f32.mrb[0].mxu0
        %v8638 = vpop.f32.mrb[0].mxu0
        %8639 = vdwg.mxu0
        %v8640 = vmax.f32 %v8635, 0.0
        %v8641 = vpack.c.bf16 %v8640, %v8640
        %v8642 = vld [vmem:[%s1227] sm:$0xf]
        %v8643 = vld [vmem:[%s1227 + $0x4] sm:$0xf]
        %v8644 = vld [vmem:[%s1227 + $0x8] sm:$0xf]
        %v8645 = vld [vmem:[%s1227 + $0xc] sm:$0xf]
        %v8646 = vld [vmem:[%s1227 + $0x10] sm:$0xf]
        %v8647 = vld [vmem:[%s1227 + $0x14] sm:$0xf]
        %v8648 = vld [vmem:[%s1227 + $0x18] sm:$0xf]
        %v8649 = vld [vmem:[%s1227 + $0x1c] sm:$0xf]
        %v8650 = vld [vmem:[%s1230] sm:$0x1]
        %v8652 = vlaneseq
        %v8653 = vshrl.u32 %v8652, 7
        %v8654 = vsub.s32 0, %v8653
        %v8655 = vrot.slane %v8650, %v8654
        %v8665 = vunpack.c.l.b16 %v8642
        %v8666 = vunpack.c.l.b16 %v8643
        %v8667 = vunpack.c.l.b16 %v8644
        %v8668 = vunpack.c.l.b16 %v8645
        %v8669 = vunpack.c.l.b16 %v8646
        %v8670 = vunpack.c.l.b16 %v8647
        %v8671 = vunpack.c.l.b16 %v8648
        %v8672 = vunpack.c.l.b16 %v8649
        %v8673 = vpack.c.b16 %v8666, %v8665
        %v8674 = vpack.c.b16 %v8668, %v8667
        %v8675 = vpack.c.b16 %v8670, %v8669
        %v8676 = vpack.c.b16 %v8672, %v8671
        %vm8681 = vcmask 523264
        %v8683 = vsel %vm8681, %v8641, 0
        %8685 = vmatprep.subr.bf16.mxu0 0
        %8686 = vmatpush1.bf16.msra.mxu0 %v8673
        %8687 = vmatprep.subr.bf16.mxu0 0
        %8688 = vmatpush1.bf16.msra.mxu0 %v8674
        %8689 = vmatprep.subr.bf16.mxu0 0
        %8690 = vmatpush1.bf16.msra.mxu0 %v8675
        %8691 = vmatprep.subr.bf16.mxu0 0
        %8692 = vmatpush1.bf16.msra.mxu0 %v8676
        %8693 = vmatprep.subr.bf16.mxu0 0
        %8694 = vmatpush1.bf16.msra.mxu0 0
        %8695 = vmatprep.subr.bf16.mxu0 0
        %8696 = vmatpush1.bf16.msra.mxu0 0
        %8697 = vmatprep.subr.bf16.mxu0 0
        %8698 = vmatpush1.bf16.msra.mxu0 0
        %8699 = vmatprep.subr.bf16.mxu0 0
        %8700 = vmatpush1.bf16.msra.mxu0 0
        %8701 = vmatprep.subr.bf16.mxu0 0
        %8702 = vmatpush1.bf16.msra.mxu0 0
        %8703 = vmatprep.subr.bf16.mxu0 0
        %8704 = vmatpush1.bf16.msra.mxu0 0
        %8705 = vmatprep.subr.bf16.mxu0 0
        %8706 = vmatpush1.bf16.msra.mxu0 0
        %8707 = vmatprep.subr.bf16.mxu0 0
        %8708 = vmatpush1.bf16.msra.mxu0 0
        %8709 = vmatprep.subr.bf16.mxu0 0
        %8710 = vmatpush1.bf16.msra.mxu0 0
        %8711 = vmatprep.subr.bf16.mxu0 0
        %8712 = vmatpush1.bf16.msra.mxu0 0
        %8713 = vmatprep.subr.bf16.mxu0 0
        %8714 = vmatpush1.bf16.msra.mxu0 0
        %8715 = vmatprep.subr.bf16.mxu0 0
        %8716 = vmatpush1.bf16.msra.mxu0 0
        %8717 = vmatprep.mubr.bf16.mxu0 0
        %8718 = vmatmul.mubr.bf16.gmra.mrb[0].mxu0 %v8683
        %v8719 = vpop.f32.mrb[0].mxu0
        %v8720 = vadd.f32 %v8655, %v8719
        %v8721 = vpop.f32.mrb[0].mxu0
        %v8722 = vpop.f32.mrb[0].mxu0
        %v8723 = vpop.f32.mrb[0].mxu0
        %8724 = vdwg.mxu0
        %v8725 = vadd.f32 %v8572, %v8720
        %v8726 = vsel %vm1276, %v8725, 0.0
        %8727 = vadd.xlane.f32.xlu0 %v8726
        %v8728 = vpop.xlane.xlu0 %8727
        %v8729 = vmul.f32 %v8728, %v2481
        %v8730 = vsub.f32 %v8725, %v8729
        %v8731 = vmul.f32 %v8730, %v8730
        %v8732 = vsel %vm1276, %v8731, 0.0
        %8733 = vadd.xlane.f32.xlu0 %v8732
        %v8734 = vpop.xlane.xlu0 %8733
        %v8735 = vmul.f32 %v8734, %v2481
        %v8736 = vadd.f32 %v8735, 1e-05
        %v8737 = vrsqrt.pop %v8736
        %v8738 = vmul.f32 %v8730, %v8737
        %v8739 = vlaneseq
        %v8740 = vshrl.u32 %v8739, 7
        %v8741 = vsub.s32 2, %v8740
        %v8742 = vrot.slane %v1249, %v8741
        %v8743 = vmul.f32 %v8738, %v8742
        %v8744 = vlaneseq
        %v8745 = vshrl.u32 %v8744, 7
        %v8746 = vsub.s32 2, %v8745
        %v8747 = vrot.slane %v1250, %v8746
        %v8748 = vadd.f32 %v8743, %v8747
        %8749 = vst.msk [vmem:[#allocation2] sm:$0xff] %vm1276, %v8748
        %v8750 = vld [vmem:[%s25] sm:$0x1]
        %v8751 = vld [vmem:[%s26] sm:$0x1]
        %v8752 = vsel %vm1276, %v8748, 0.0
        %8753 = vadd.xlane.f32.xlu0 %v8752
        %v8754 = vpop.xlane.xlu0 %8753
        %v8755 = vmul.f32 %v8754, %v2481
        %v8756 = vsub.f32 %v8748, %v8755
        %v8757 = vmul.f32 %v8756, %v8756
        %v8758 = vsel %vm1276, %v8757, 0.0
        %8759 = vadd.xlane.f32.xlu0 %v8758
        %v8760 = vpop.xlane.xlu0 %8759
        %v8761 = vmul.f32 %v8760, %v2481
        %v8762 = vadd.f32 %v8761, 1e-05
        %v8763 = vrsqrt.pop %v8762
        %v8764 = vmul.f32 %v8756, %v8763
        %v8766 = vlaneseq
        %v8767 = vshrl.u32 %v8766, 7
        %v8768 = vsub.s32 0, %v8767
        %v8769 = vrot.slane %v8750, %v8768
        %v8771 = vmul.f32 %v8764, %v8769
        %v8773 = vlaneseq
        %v8774 = vshrl.u32 %v8773, 7
        %v8775 = vsub.s32 0, %v8774
        %v8776 = vrot.slane %v8751, %v8775
        %v8778 = vadd.f32 %v8771, %v8776
        %8779 = vst.msk [vmem:[%s1137] sm:$0xff] %vm1276, %v8778
        %s8780 = sand.u32 %s755, 1
        %s8781 = scalar_lea.sflag [#allocation4], %s8780
        %s8782 = sand.u32 %s755, 1
        %s8783 = smul.addr %s8782, 8
        %s8784 = scalar_lea.vmem [#allocation3], %s8783
        // Predicated region
        $region133: #{tpu_custom_call.1} parent=127 // pred_check
          %p8785 = pneg %p765
        $region134: #{tpu_custom_call.1} parent=127 // pred_check_branch
          %8787 = sbr.rel (%p8785) target = $region136
        $region135: #{tpu_custom_call.1} parent=127 // pred_region
          %s8789 = ssub.s32 128, 128
          %8790 = vsyncadd %s8781, %s8789
          %s8791 = smul.addr %s46, 2
          %s8792 = sadd.s32 %s45, %s8791
          %s8793 = smul.addr %s8792, 128
          %s8794 = scalar_lea.hbm %s27, %s8793
          %s8796 = sshll.u32 %s8784, 4
          %s8797 = int_to_ptr.vmem [resolvable:$true] %s8796
          %8799 = dma.vmem_to_hbm [thread:$0]  %s8797, 128, %s8794, %s8781
        $region136: #{tpu_custom_call.1} parent=127 // pred_fallthru
          _
      $region128: #{tpu_custom_call.1} parent=5 // pred_fallthru
        _
      %p8800 = scmp.le.s32.totalorder 2, %s36
      // Predicated region
      $region137: #{tpu_custom_call.1} parent=5 // pred_check
        %p8801 = pneg %p8800
      $region138: #{tpu_custom_call.1} parent=5 // pred_check_branch
        %8803 = sbr.rel (%p8801) target = $region140
      $region139: #{tpu_custom_call.1} parent=5 // pred_region
        %s8804 = ssub.s32 %s36, 2
        // Predicated region
        $region141: #{tpu_custom_call.1} parent=139 // pred_check
          %p8805 = pneg %p771
        $region142: #{tpu_custom_call.1} parent=139 // pred_check_branch
          %8807 = sbr.rel (%p8805) target = $region144
        $region143: #{tpu_custom_call.1} parent=139 // pred_region
          %s8808 = sand.u32 %s756, 1
          %s8809 = scalar_lea.sflag [#allocation4], %s8808
          %s8810 = sand.u32 %s756, 1
          %s8811 = smul.addr %s8810, 8
          %s8812 = scalar_lea.vmem [#allocation3], %s8811
          %8813 = dma.done %s8809, 128
        $region144: #{tpu_custom_call.1} parent=139 // pred_fallthru
          _
      $region140: #{tpu_custom_call.1} parent=5 // pred_fallthru
        _
    $region6: #{tpu_custom_call.1} parent=1 // loop_footer
      %s40 = sadd.s32 1, %s36
    $region7: #{tpu_custom_call.1} parent=1 // loop_footer_branch
      %35 = sbr.rel target = $region3
    $region8: #{tpu_custom_call.1} parent=1 // loop_exit
      _
    %8814 = vsyncpa [#allocation4], 1
    %s8815 = scalar_lea.sflag [#allocation4], 1
    %8816 = vsyncpa %s8815, 1

</llo_original>
